<compile_context>
chip_gen: v5e
topology: v5e:2x2
jax: 0.10.0
libtpu: 0.0.40
codegen_flags: <defaults>
</compile_context>

<pallas_src>
import jax
import jax.numpy as jnp
from jax import lax
from jax.experimental import pallas as pl
from jax.experimental.pallas import tpu as pltpu

K = 7          # conv kernel size
PAD = K // 2   # reflect padding = 3


def _fmap_kernel(x_ref, w_ref, b_ref, o_ref):
    """Direct 7x7 convolution, W-on-lanes VPU formulation.

    x_ref: (1, Cin, H+6, W+6)   VMEM  reflect-padded image (resident per batch)
    w_ref: (Cin*7*7*Cout,)      SMEM  weights permuted to (Cin, Kh, Kw, Cout), flat
    b_ref: (Cout,)              SMEM  bias
    o_ref: (1, Cout, TH, W)     VMEM  one output row tile
    """
    cin = x_ref.shape[1]
    cout, th, w = o_ref.shape[1], o_ref.shape[2], o_ref.shape[3]

    t = pl.program_id(1)                       # row-tile index
    row0 = pl.multiple_of(t * th, th)          # first output row of this tile

    # Bounded accumulators: Cout slabs of (TH, W) f32, bias fused into the init.
    acc = [jnp.full((th, w), b_ref[co], jnp.float32) for co in range(cout)]

    # 49 * Cin shifted-window FMAs on the VPU.  Window shifts are sublane (kh) /
    # lane (kw) only -> no materialized patch copies, no MXU, no reshapes.
    # Row window is loaded from VMEM once per (ci, kh) and re-sliced in-register
    # for the 7 kw taps; the innermost co loop reads consecutive SMEM scalars.
    for ci in range(cin):
        for kh in range(K):
            rows = x_ref[0, ci, pl.ds(row0 + kh, th), :]       # (TH, W+6)
            for kw in range(K):
                patch = rows[:, kw:kw + w]                     # lane shift only
                base = ((ci * K + kh) * K + kw) * cout
                for co in range(cout):
                    w_s = w_ref[base + co]                     # sequential SMEM read
                    acc[co] = acc[co] + w_s * patch

    for co in range(cout):
        o_ref[0, co, :, :] = acc[co].astype(o_ref.dtype)


def _pick_row_tile(h):
    """Largest candidate row tile that divides H and leaves >= 2 tiles (so the
    parallel grid has work for both v7x TensorCores); falls back to full H."""
    for cand in (256, 128, 64, 32, 16, 8):
        if h % cand == 0 and h // cand >= 2:
            return cand
    return h


@jax.jit
def feature_map_block(x_nchw, weight, bias):
    """Forward pass of FeatureMapBlock.

    x_nchw : (N, Cin, H, W)      float32, PyTorch NCHW convention (kept end-to-end)
    weight : (Cout, Cin, 7, 7)   PyTorch conv weight layout
    bias   : (Cout,)
    returns: (N, Cout, H, W)
    """
    n, cin, h, w = x_nchw.shape
    cout = weight.shape[0]
    th = _pick_row_tile(h)

    # Only remaining wrapper pass: the 3-pixel reflect pad (needs H, W >= 4).
    x_pad = jnp.pad(x_nchw, ((0, 0), (0, 0), (PAD, PAD), (PAD, PAD)),
                    mode="reflect")
    hp, wp = h + 2 * PAD, w + 2 * PAD

    # Permute weights to (Cin, Kh, Kw, Cout) so the kernel's innermost Cout loop
    # reads consecutive SMEM words.  Done once in the wrapper (tiny tensor).
    w_flat = jnp.transpose(weight, (1, 2, 3, 0)).reshape(-1)

    # Double-buffered block footprint (input block + output block), plus slack.
    in_block_bytes = cin * hp * wp * 4
    out_block_bytes = cout * th * w * 4
    vmem_limit = min(60 * 1024 * 1024,
                     max(16 * 1024 * 1024,
                         2 * in_block_bytes + 2 * out_block_bytes
                         + 4 * 1024 * 1024))

    cost = pl.CostEstimate(
        flops=2 * n * cout * h * w * cin * K * K,
        transcendentals=0,
        bytes_accessed=(n * in_block_bytes
                        + n * cout * h * w * 4
                        + w_flat.size * 4 + bias.size * 4),
    )

    out = pl.pallas_call(
        _fmap_kernel,
        out_shape=jax.ShapeDtypeStruct((n, cout, h, w), x_nchw.dtype),
        grid_spec=pltpu.PrefetchScalarGridSpec(
            num_scalar_prefetch=0,
            grid=(n, h // th),
            in_specs=[
                # Padded image for batch b: block index constant across the
                # row-tile axis -> DMA'd once per batch, reused for all tiles.
                pl.BlockSpec((1, cin, hp, wp), lambda b, t: (b, 0, 0, 0)),
                # Weights / bias as SMEM scalars (broadcast-FMA operands).
                pl.BlockSpec(memory_space=pltpu.MemorySpace.SMEM),
                pl.BlockSpec(memory_space=pltpu.MemorySpace.SMEM),
            ],
            out_specs=pl.BlockSpec((1, cout, th, w), lambda b, t: (b, 0, t, 0)),
        ),
        compiler_params=pltpu.CompilerParams(
            dimension_semantics=("parallel", "parallel"),
            vmem_limit_bytes=vmem_limit,
        ),
        cost_estimate=cost,
    )(x_pad, w_flat, bias)
    return out


def _init_params(key, cin, cout):
    """Deterministic init mimicking PyTorch Conv2d default (uniform +/- 1/sqrt(fan_in))."""
    fan_in = cin * K * K
    bound = 1.0 / jnp.sqrt(jnp.float32(fan_in))
    kw_key, kb_key = jax.random.split(key)
    weight = jax.random.uniform(
        kw_key, (cout, cin, K, K), jnp.float32, -bound, bound
    )
    bias = jax.random.uniform(kb_key, (cout,), jnp.float32, -bound, bound)
    return weight, bias


if __name__ == "__main__":
    key = jax.random.PRNGKey(0)
    kx, kp = jax.random.split(key)

    N, CIN, H, W = 2, 4, 16, 16
    COUT = 3

    x = jax.random.normal(kx, (N, CIN, H, W), jnp.float32)
    weight, bias = _init_params(kp, CIN, COUT)

    out = jax.block_until_ready(feature_map_block(x, weight, bias))
    assert out.shape == (N, COUT, H, W)

    # Reference check against XLA conv on the same reflect-padded input.
    x_pad = jnp.pad(x, ((0, 0), (0, 0), (PAD, PAD), (PAD, PAD)), mode="reflect")
    ref = lax.conv_general_dilated(
        x_pad, weight, window_strides=(1, 1), padding="VALID",
        dimension_numbers=("NCHW", "OIHW", "NCHW"),
    ) + bias.reshape(1, COUT, 1, 1)
    assert jnp.allclose(out, ref, atol=1e-4, rtol=1e-4), "mismatch vs reference"

    print("KERNEL_OK")
</pallas_src>

<mosaic_0001>
module attributes {stable_mosaic.version = 11 : i64} {
  func.func @_fmap_kernel(%arg0: i32, %arg1: i32, %arg2: memref<1x4x22x22xf32, #tpu.memory_space<vmem>>, %arg3: memref<588xf32, #tpu.memory_space<smem>>, %arg4: memref<3xf32, #tpu.memory_space<smem>>, %arg5: memref<1x3x8x16xf32, #tpu.memory_space<vmem>>) attributes {dimension_semantics = [#tpu.dimension_semantics<parallel>, #tpu.dimension_semantics<parallel>], iteration_bounds = array<i64: 2, 2>, scalar_prefetch = 0 : i64, scratch_operands = 0 : i64, tpu.core_type = #tpu.core_type<tc>, window_params = [{transform_indices = @transform_0, window_bounds = array<i64: 1, 4, 22, 22>}, {transform_indices = @transform_1, window_bounds = array<i64: 588>}, {transform_indices = @transform_2, window_bounds = array<i64: 3>}, {transform_indices = @transform_3, window_bounds = array<i64: 1, 3, 8, 16>}]} {
    %c8_i32 = arith.constant 8 : i32
    %0 = arith.muli %arg1, %c8_i32 : i32
    %1 = tpu.assume_multiple %0, 8 : i32
    %c0 = arith.constant 0 : index
    %2 = memref.load %arg4[%c0] : memref<3xf32, #tpu.memory_space<smem>>
    %3 = vector.broadcast %2 : f32 to vector<8x16xf32>
    %c1 = arith.constant 1 : index
    %4 = memref.load %arg4[%c1] : memref<3xf32, #tpu.memory_space<smem>>
    %5 = vector.broadcast %4 : f32 to vector<8x16xf32>
    %c2 = arith.constant 2 : index
    %6 = memref.load %arg4[%c2] : memref<3xf32, #tpu.memory_space<smem>>
    %7 = vector.broadcast %6 : f32 to vector<8x16xf32>
    %c0_i32 = arith.constant 0 : i32
    %8 = arith.addi %1, %c0_i32 : i32
    %c0_0 = arith.constant 0 : index
    %c0_1 = arith.constant 0 : index
    %9 = arith.index_cast %8 : i32 to index
    %c0_2 = arith.constant 0 : index
    %10 = vector.load %arg2[%c0_0, %c0_1, %9, %c0_2] : memref<1x4x22x22xf32, #tpu.memory_space<vmem>>, vector<1x1x8x22xf32>
    %11 = vector.shape_cast %10 : vector<1x1x8x22xf32> to vector<8x22xf32>
    %12 = vector.extract_strided_slice %11 {offsets = [0, 0], sizes = [8, 16], strides = [1, 1]} : vector<8x22xf32> to vector<8x16xf32>
    %c0_3 = arith.constant 0 : index
    %13 = memref.load %arg3[%c0_3] : memref<588xf32, #tpu.memory_space<smem>>
    %14 = vector.broadcast %13 : f32 to vector<8x16xf32>
    %15 = arith.mulf %14, %12 : vector<8x16xf32>
    %16 = arith.addf %3, %15 : vector<8x16xf32>
    %c1_4 = arith.constant 1 : index
    %17 = memref.load %arg3[%c1_4] : memref<588xf32, #tpu.memory_space<smem>>
    %18 = vector.broadcast %17 : f32 to vector<8x16xf32>
    %19 = arith.mulf %18, %12 : vector<8x16xf32>
    %20 = arith.addf %5, %19 : vector<8x16xf32>
    %c2_5 = arith.constant 2 : index
    %21 = memref.load %arg3[%c2_5] : memref<588xf32, #tpu.memory_space<smem>>
    %22 = vector.broadcast %21 : f32 to vector<8x16xf32>
    %23 = arith.mulf %22, %12 : vector<8x16xf32>
    %24 = arith.addf %7, %23 : vector<8x16xf32>
    %25 = vector.extract_strided_slice %11 {offsets = [0, 1], sizes = [8, 16], strides = [1, 1]} : vector<8x22xf32> to vector<8x16xf32>
    %c3 = arith.constant 3 : index
    %26 = memref.load %arg3[%c3] : memref<588xf32, #tpu.memory_space<smem>>
    %27 = vector.broadcast %26 : f32 to vector<8x16xf32>
    %28 = arith.mulf %27, %25 : vector<8x16xf32>
    %29 = arith.addf %16, %28 : vector<8x16xf32>
    %c4 = arith.constant 4 : index
    %30 = memref.load %arg3[%c4] : memref<588xf32, #tpu.memory_space<smem>>
    %31 = vector.broadcast %30 : f32 to vector<8x16xf32>
    %32 = arith.mulf %31, %25 : vector<8x16xf32>
    %33 = arith.addf %20, %32 : vector<8x16xf32>
    %c5 = arith.constant 5 : index
    %34 = memref.load %arg3[%c5] : memref<588xf32, #tpu.memory_space<smem>>
    %35 = vector.broadcast %34 : f32 to vector<8x16xf32>
    %36 = arith.mulf %35, %25 : vector<8x16xf32>
    %37 = arith.addf %24, %36 : vector<8x16xf32>
    %38 = vector.extract_strided_slice %11 {offsets = [0, 2], sizes = [8, 16], strides = [1, 1]} : vector<8x22xf32> to vector<8x16xf32>
    %c6 = arith.constant 6 : index
    %39 = memref.load %arg3[%c6] : memref<588xf32, #tpu.memory_space<smem>>
    %40 = vector.broadcast %39 : f32 to vector<8x16xf32>
    %41 = arith.mulf %40, %38 : vector<8x16xf32>
    %42 = arith.addf %29, %41 : vector<8x16xf32>
    %c7 = arith.constant 7 : index
    %43 = memref.load %arg3[%c7] : memref<588xf32, #tpu.memory_space<smem>>
    %44 = vector.broadcast %43 : f32 to vector<8x16xf32>
    %45 = arith.mulf %44, %38 : vector<8x16xf32>
    %46 = arith.addf %33, %45 : vector<8x16xf32>
    %c8 = arith.constant 8 : index
    %47 = memref.load %arg3[%c8] : memref<588xf32, #tpu.memory_space<smem>>
    %48 = vector.broadcast %47 : f32 to vector<8x16xf32>
    %49 = arith.mulf %48, %38 : vector<8x16xf32>
    %50 = arith.addf %37, %49 : vector<8x16xf32>
    %51 = vector.extract_strided_slice %11 {offsets = [0, 3], sizes = [8, 16], strides = [1, 1]} : vector<8x22xf32> to vector<8x16xf32>
    %c9 = arith.constant 9 : index
    %52 = memref.load %arg3[%c9] : memref<588xf32, #tpu.memory_space<smem>>
    %53 = vector.broadcast %52 : f32 to vector<8x16xf32>
    %54 = arith.mulf %53, %51 : vector<8x16xf32>
    %55 = arith.addf %42, %54 : vector<8x16xf32>
    %c10 = arith.constant 10 : index
    %56 = memref.load %arg3[%c10] : memref<588xf32, #tpu.memory_space<smem>>
    %57 = vector.broadcast %56 : f32 to vector<8x16xf32>
    %58 = arith.mulf %57, %51 : vector<8x16xf32>
    %59 = arith.addf %46, %58 : vector<8x16xf32>
    %c11 = arith.constant 11 : index
    %60 = memref.load %arg3[%c11] : memref<588xf32, #tpu.memory_space<smem>>
    %61 = vector.broadcast %60 : f32 to vector<8x16xf32>
    %62 = arith.mulf %61, %51 : vector<8x16xf32>
    %63 = arith.addf %50, %62 : vector<8x16xf32>
    %64 = vector.extract_strided_slice %11 {offsets = [0, 4], sizes = [8, 16], strides = [1, 1]} : vector<8x22xf32> to vector<8x16xf32>
    %c12 = arith.constant 12 : index
    %65 = memref.load %arg3[%c12] : memref<588xf32, #tpu.memory_space<smem>>
    %66 = vector.broadcast %65 : f32 to vector<8x16xf32>
    %67 = arith.mulf %66, %64 : vector<8x16xf32>
    %68 = arith.addf %55, %67 : vector<8x16xf32>
    %c13 = arith.constant 13 : index
    %69 = memref.load %arg3[%c13] : memref<588xf32, #tpu.memory_space<smem>>
    %70 = vector.broadcast %69 : f32 to vector<8x16xf32>
    %71 = arith.mulf %70, %64 : vector<8x16xf32>
    %72 = arith.addf %59, %71 : vector<8x16xf32>
    %c14 = arith.constant 14 : index
    %73 = memref.load %arg3[%c14] : memref<588xf32, #tpu.memory_space<smem>>
    %74 = vector.broadcast %73 : f32 to vector<8x16xf32>
    %75 = arith.mulf %74, %64 : vector<8x16xf32>
    %76 = arith.addf %63, %75 : vector<8x16xf32>
    %77 = vector.extract_strided_slice %11 {offsets = [0, 5], sizes = [8, 16], strides = [1, 1]} : vector<8x22xf32> to vector<8x16xf32>
    %c15 = arith.constant 15 : index
    %78 = memref.load %arg3[%c15] : memref<588xf32, #tpu.memory_space<smem>>
    %79 = vector.broadcast %78 : f32 to vector<8x16xf32>
    %80 = arith.mulf %79, %77 : vector<8x16xf32>
    %81 = arith.addf %68, %80 : vector<8x16xf32>
    %c16 = arith.constant 16 : index
    %82 = memref.load %arg3[%c16] : memref<588xf32, #tpu.memory_space<smem>>
    %83 = vector.broadcast %82 : f32 to vector<8x16xf32>
    %84 = arith.mulf %83, %77 : vector<8x16xf32>
    %85 = arith.addf %72, %84 : vector<8x16xf32>
    %c17 = arith.constant 17 : index
    %86 = memref.load %arg3[%c17] : memref<588xf32, #tpu.memory_space<smem>>
    %87 = vector.broadcast %86 : f32 to vector<8x16xf32>
    %88 = arith.mulf %87, %77 : vector<8x16xf32>
    %89 = arith.addf %76, %88 : vector<8x16xf32>
    %90 = vector.extract_strided_slice %11 {offsets = [0, 6], sizes = [8, 16], strides = [1, 1]} : vector<8x22xf32> to vector<8x16xf32>
    %c18 = arith.constant 18 : index
    %91 = memref.load %arg3[%c18] : memref<588xf32, #tpu.memory_space<smem>>
    %92 = vector.broadcast %91 : f32 to vector<8x16xf32>
    %93 = arith.mulf %92, %90 : vector<8x16xf32>
    %94 = arith.addf %81, %93 : vector<8x16xf32>
    %c19 = arith.constant 19 : index
    %95 = memref.load %arg3[%c19] : memref<588xf32, #tpu.memory_space<smem>>
    %96 = vector.broadcast %95 : f32 to vector<8x16xf32>
    %97 = arith.mulf %96, %90 : vector<8x16xf32>
    %98 = arith.addf %85, %97 : vector<8x16xf32>
    %c20 = arith.constant 20 : index
    %99 = memref.load %arg3[%c20] : memref<588xf32, #tpu.memory_space<smem>>
    %100 = vector.broadcast %99 : f32 to vector<8x16xf32>
    %101 = arith.mulf %100, %90 : vector<8x16xf32>
    %102 = arith.addf %89, %101 : vector<8x16xf32>
    %c1_i32 = arith.constant 1 : i32
    %103 = arith.addi %1, %c1_i32 : i32
    %c0_6 = arith.constant 0 : index
    %c0_7 = arith.constant 0 : index
    %104 = arith.index_cast %103 : i32 to index
    %c0_8 = arith.constant 0 : index
    %105 = vector.load %arg2[%c0_6, %c0_7, %104, %c0_8] : memref<1x4x22x22xf32, #tpu.memory_space<vmem>>, vector<1x1x8x22xf32>
    %106 = vector.shape_cast %105 : vector<1x1x8x22xf32> to vector<8x22xf32>
    %107 = vector.extract_strided_slice %106 {offsets = [0, 0], sizes = [8, 16], strides = [1, 1]} : vector<8x22xf32> to vector<8x16xf32>
    %c21 = arith.constant 21 : index
    %108 = memref.load %arg3[%c21] : memref<588xf32, #tpu.memory_space<smem>>
    %109 = vector.broadcast %108 : f32 to vector<8x16xf32>
    %110 = arith.mulf %109, %107 : vector<8x16xf32>
    %111 = arith.addf %94, %110 : vector<8x16xf32>
    %c22 = arith.constant 22 : index
    %112 = memref.load %arg3[%c22] : memref<588xf32, #tpu.memory_space<smem>>
    %113 = vector.broadcast %112 : f32 to vector<8x16xf32>
    %114 = arith.mulf %113, %107 : vector<8x16xf32>
    %115 = arith.addf %98, %114 : vector<8x16xf32>
    %c23 = arith.constant 23 : index
    %116 = memref.load %arg3[%c23] : memref<588xf32, #tpu.memory_space<smem>>
    %117 = vector.broadcast %116 : f32 to vector<8x16xf32>
    %118 = arith.mulf %117, %107 : vector<8x16xf32>
    %119 = arith.addf %102, %118 : vector<8x16xf32>
    %120 = vector.extract_strided_slice %106 {offsets = [0, 1], sizes = [8, 16], strides = [1, 1]} : vector<8x22xf32> to vector<8x16xf32>
    %c24 = arith.constant 24 : index
    %121 = memref.load %arg3[%c24] : memref<588xf32, #tpu.memory_space<smem>>
    %122 = vector.broadcast %121 : f32 to vector<8x16xf32>
    %123 = arith.mulf %122, %120 : vector<8x16xf32>
    %124 = arith.addf %111, %123 : vector<8x16xf32>
    %c25 = arith.constant 25 : index
    %125 = memref.load %arg3[%c25] : memref<588xf32, #tpu.memory_space<smem>>
    %126 = vector.broadcast %125 : f32 to vector<8x16xf32>
    %127 = arith.mulf %126, %120 : vector<8x16xf32>
    %128 = arith.addf %115, %127 : vector<8x16xf32>
    %c26 = arith.constant 26 : index
    %129 = memref.load %arg3[%c26] : memref<588xf32, #tpu.memory_space<smem>>
    %130 = vector.broadcast %129 : f32 to vector<8x16xf32>
    %131 = arith.mulf %130, %120 : vector<8x16xf32>
    %132 = arith.addf %119, %131 : vector<8x16xf32>
    %133 = vector.extract_strided_slice %106 {offsets = [0, 2], sizes = [8, 16], strides = [1, 1]} : vector<8x22xf32> to vector<8x16xf32>
    %c27 = arith.constant 27 : index
    %134 = memref.load %arg3[%c27] : memref<588xf32, #tpu.memory_space<smem>>
    %135 = vector.broadcast %134 : f32 to vector<8x16xf32>
    %136 = arith.mulf %135, %133 : vector<8x16xf32>
    %137 = arith.addf %124, %136 : vector<8x16xf32>
    %c28 = arith.constant 28 : index
    %138 = memref.load %arg3[%c28] : memref<588xf32, #tpu.memory_space<smem>>
    %139 = vector.broadcast %138 : f32 to vector<8x16xf32>
    %140 = arith.mulf %139, %133 : vector<8x16xf32>
    %141 = arith.addf %128, %140 : vector<8x16xf32>
    %c29 = arith.constant 29 : index
    %142 = memref.load %arg3[%c29] : memref<588xf32, #tpu.memory_space<smem>>
    %143 = vector.broadcast %142 : f32 to vector<8x16xf32>
    %144 = arith.mulf %143, %133 : vector<8x16xf32>
    %145 = arith.addf %132, %144 : vector<8x16xf32>
    %146 = vector.extract_strided_slice %106 {offsets = [0, 3], sizes = [8, 16], strides = [1, 1]} : vector<8x22xf32> to vector<8x16xf32>
    %c30 = arith.constant 30 : index
    %147 = memref.load %arg3[%c30] : memref<588xf32, #tpu.memory_space<smem>>
    %148 = vector.broadcast %147 : f32 to vector<8x16xf32>
    %149 = arith.mulf %148, %146 : vector<8x16xf32>
    %150 = arith.addf %137, %149 : vector<8x16xf32>
    %c31 = arith.constant 31 : index
    %151 = memref.load %arg3[%c31] : memref<588xf32, #tpu.memory_space<smem>>
    %152 = vector.broadcast %151 : f32 to vector<8x16xf32>
    %153 = arith.mulf %152, %146 : vector<8x16xf32>
    %154 = arith.addf %141, %153 : vector<8x16xf32>
    %c32 = arith.constant 32 : index
    %155 = memref.load %arg3[%c32] : memref<588xf32, #tpu.memory_space<smem>>
    %156 = vector.broadcast %155 : f32 to vector<8x16xf32>
    %157 = arith.mulf %156, %146 : vector<8x16xf32>
    %158 = arith.addf %145, %157 : vector<8x16xf32>
    %159 = vector.extract_strided_slice %106 {offsets = [0, 4], sizes = [8, 16], strides = [1, 1]} : vector<8x22xf32> to vector<8x16xf32>
    %c33 = arith.constant 33 : index
    %160 = memref.load %arg3[%c33] : memref<588xf32, #tpu.memory_space<smem>>
    %161 = vector.broadcast %160 : f32 to vector<8x16xf32>
    %162 = arith.mulf %161, %159 : vector<8x16xf32>
    %163 = arith.addf %150, %162 : vector<8x16xf32>
    %c34 = arith.constant 34 : index
    %164 = memref.load %arg3[%c34] : memref<588xf32, #tpu.memory_space<smem>>
    %165 = vector.broadcast %164 : f32 to vector<8x16xf32>
    %166 = arith.mulf %165, %159 : vector<8x16xf32>
    %167 = arith.addf %154, %166 : vector<8x16xf32>
    %c35 = arith.constant 35 : index
    %168 = memref.load %arg3[%c35] : memref<588xf32, #tpu.memory_space<smem>>
    %169 = vector.broadcast %168 : f32 to vector<8x16xf32>
    %170 = arith.mulf %169, %159 : vector<8x16xf32>
    %171 = arith.addf %158, %170 : vector<8x16xf32>
    %172 = vector.extract_strided_slice %106 {offsets = [0, 5], sizes = [8, 16], strides = [1, 1]} : vector<8x22xf32> to vector<8x16xf32>
    %c36 = arith.constant 36 : index
    %173 = memref.load %arg3[%c36] : memref<588xf32, #tpu.memory_space<smem>>
    %174 = vector.broadcast %173 : f32 to vector<8x16xf32>
    %175 = arith.mulf %174, %172 : vector<8x16xf32>
    %176 = arith.addf %163, %175 : vector<8x16xf32>
    %c37 = arith.constant 37 : index
    %177 = memref.load %arg3[%c37] : memref<588xf32, #tpu.memory_space<smem>>
    %178 = vector.broadcast %177 : f32 to vector<8x16xf32>
    %179 = arith.mulf %178, %172 : vector<8x16xf32>
    %180 = arith.addf %167, %179 : vector<8x16xf32>
    %c38 = arith.constant 38 : index
    %181 = memref.load %arg3[%c38] : memref<588xf32, #tpu.memory_space<smem>>
    %182 = vector.broadcast %181 : f32 to vector<8x16xf32>
    %183 = arith.mulf %182, %172 : vector<8x16xf32>
    %184 = arith.addf %171, %183 : vector<8x16xf32>
    %185 = vector.extract_strided_slice %106 {offsets = [0, 6], sizes = [8, 16], strides = [1, 1]} : vector<8x22xf32> to vector<8x16xf32>
    %c39 = arith.constant 39 : index
    %186 = memref.load %arg3[%c39] : memref<588xf32, #tpu.memory_space<smem>>
    %187 = vector.broadcast %186 : f32 to vector<8x16xf32>
    %188 = arith.mulf %187, %185 : vector<8x16xf32>
    %189 = arith.addf %176, %188 : vector<8x16xf32>
    %c40 = arith.constant 40 : index
    %190 = memref.load %arg3[%c40] : memref<588xf32, #tpu.memory_space<smem>>
    %191 = vector.broadcast %190 : f32 to vector<8x16xf32>
    %192 = arith.mulf %191, %185 : vector<8x16xf32>
    %193 = arith.addf %180, %192 : vector<8x16xf32>
    %c41 = arith.constant 41 : index
    %194 = memref.load %arg3[%c41] : memref<588xf32, #tpu.memory_space<smem>>
    %195 = vector.broadcast %194 : f32 to vector<8x16xf32>
    %196 = arith.mulf %195, %185 : vector<8x16xf32>
    %197 = arith.addf %184, %196 : vector<8x16xf32>
    %c2_i32 = arith.constant 2 : i32
    %198 = arith.addi %1, %c2_i32 : i32
    %c0_9 = arith.constant 0 : index
    %c0_10 = arith.constant 0 : index
    %199 = arith.index_cast %198 : i32 to index
    %c0_11 = arith.constant 0 : index
    %200 = vector.load %arg2[%c0_9, %c0_10, %199, %c0_11] : memref<1x4x22x22xf32, #tpu.memory_space<vmem>>, vector<1x1x8x22xf32>
    %201 = vector.shape_cast %200 : vector<1x1x8x22xf32> to vector<8x22xf32>
    %202 = vector.extract_strided_slice %201 {offsets = [0, 0], sizes = [8, 16], strides = [1, 1]} : vector<8x22xf32> to vector<8x16xf32>
    %c42 = arith.constant 42 : index
    %203 = memref.load %arg3[%c42] : memref<588xf32, #tpu.memory_space<smem>>
    %204 = vector.broadcast %203 : f32 to vector<8x16xf32>
    %205 = arith.mulf %204, %202 : vector<8x16xf32>
    %206 = arith.addf %189, %205 : vector<8x16xf32>
    %c43 = arith.constant 43 : index
    %207 = memref.load %arg3[%c43] : memref<588xf32, #tpu.memory_space<smem>>
    %208 = vector.broadcast %207 : f32 to vector<8x16xf32>
    %209 = arith.mulf %208, %202 : vector<8x16xf32>
    %210 = arith.addf %193, %209 : vector<8x16xf32>
    %c44 = arith.constant 44 : index
    %211 = memref.load %arg3[%c44] : memref<588xf32, #tpu.memory_space<smem>>
    %212 = vector.broadcast %211 : f32 to vector<8x16xf32>
    %213 = arith.mulf %212, %202 : vector<8x16xf32>
    %214 = arith.addf %197, %213 : vector<8x16xf32>
    %215 = vector.extract_strided_slice %201 {offsets = [0, 1], sizes = [8, 16], strides = [1, 1]} : vector<8x22xf32> to vector<8x16xf32>
    %c45 = arith.constant 45 : index
    %216 = memref.load %arg3[%c45] : memref<588xf32, #tpu.memory_space<smem>>
    %217 = vector.broadcast %216 : f32 to vector<8x16xf32>
    %218 = arith.mulf %217, %215 : vector<8x16xf32>
    %219 = arith.addf %206, %218 : vector<8x16xf32>
    %c46 = arith.constant 46 : index
    %220 = memref.load %arg3[%c46] : memref<588xf32, #tpu.memory_space<smem>>
    %221 = vector.broadcast %220 : f32 to vector<8x16xf32>
    %222 = arith.mulf %221, %215 : vector<8x16xf32>
    %223 = arith.addf %210, %222 : vector<8x16xf32>
    %c47 = arith.constant 47 : index
    %224 = memref.load %arg3[%c47] : memref<588xf32, #tpu.memory_space<smem>>
    %225 = vector.broadcast %224 : f32 to vector<8x16xf32>
    %226 = arith.mulf %225, %215 : vector<8x16xf32>
    %227 = arith.addf %214, %226 : vector<8x16xf32>
    %228 = vector.extract_strided_slice %201 {offsets = [0, 2], sizes = [8, 16], strides = [1, 1]} : vector<8x22xf32> to vector<8x16xf32>
    %c48 = arith.constant 48 : index
    %229 = memref.load %arg3[%c48] : memref<588xf32, #tpu.memory_space<smem>>
    %230 = vector.broadcast %229 : f32 to vector<8x16xf32>
    %231 = arith.mulf %230, %228 : vector<8x16xf32>
    %232 = arith.addf %219, %231 : vector<8x16xf32>
    %c49 = arith.constant 49 : index
    %233 = memref.load %arg3[%c49] : memref<588xf32, #tpu.memory_space<smem>>
    %234 = vector.broadcast %233 : f32 to vector<8x16xf32>
    %235 = arith.mulf %234, %228 : vector<8x16xf32>
    %236 = arith.addf %223, %235 : vector<8x16xf32>
    %c50 = arith.constant 50 : index
    %237 = memref.load %arg3[%c50] : memref<588xf32, #tpu.memory_space<smem>>
    %238 = vector.broadcast %237 : f32 to vector<8x16xf32>
    %239 = arith.mulf %238, %228 : vector<8x16xf32>
    %240 = arith.addf %227, %239 : vector<8x16xf32>
    %241 = vector.extract_strided_slice %201 {offsets = [0, 3], sizes = [8, 16], strides = [1, 1]} : vector<8x22xf32> to vector<8x16xf32>
    %c51 = arith.constant 51 : index
    %242 = memref.load %arg3[%c51] : memref<588xf32, #tpu.memory_space<smem>>
    %243 = vector.broadcast %242 : f32 to vector<8x16xf32>
    %244 = arith.mulf %243, %241 : vector<8x16xf32>
    %245 = arith.addf %232, %244 : vector<8x16xf32>
    %c52 = arith.constant 52 : index
    %246 = memref.load %arg3[%c52] : memref<588xf32, #tpu.memory_space<smem>>
    %247 = vector.broadcast %246 : f32 to vector<8x16xf32>
    %248 = arith.mulf %247, %241 : vector<8x16xf32>
    %249 = arith.addf %236, %248 : vector<8x16xf32>
    %c53 = arith.constant 53 : index
    %250 = memref.load %arg3[%c53] : memref<588xf32, #tpu.memory_space<smem>>
    %251 = vector.broadcast %250 : f32 to vector<8x16xf32>
    %252 = arith.mulf %251, %241 : vector<8x16xf32>
    %253 = arith.addf %240, %252 : vector<8x16xf32>
    %254 = vector.extract_strided_slice %201 {offsets = [0, 4], sizes = [8, 16], strides = [1, 1]} : vector<8x22xf32> to vector<8x16xf32>
    %c54 = arith.constant 54 : index
    %255 = memref.load %arg3[%c54] : memref<588xf32, #tpu.memory_space<smem>>
    %256 = vector.broadcast %255 : f32 to vector<8x16xf32>
    %257 = arith.mulf %256, %254 : vector<8x16xf32>
    %258 = arith.addf %245, %257 : vector<8x16xf32>
    %c55 = arith.constant 55 : index
    %259 = memref.load %arg3[%c55] : memref<588xf32, #tpu.memory_space<smem>>
    %260 = vector.broadcast %259 : f32 to vector<8x16xf32>
    %261 = arith.mulf %260, %254 : vector<8x16xf32>
    %262 = arith.addf %249, %261 : vector<8x16xf32>
    %c56 = arith.constant 56 : index
    %263 = memref.load %arg3[%c56] : memref<588xf32, #tpu.memory_space<smem>>
    %264 = vector.broadcast %263 : f32 to vector<8x16xf32>
    %265 = arith.mulf %264, %254 : vector<8x16xf32>
    %266 = arith.addf %253, %265 : vector<8x16xf32>
    %267 = vector.extract_strided_slice %201 {offsets = [0, 5], sizes = [8, 16], strides = [1, 1]} : vector<8x22xf32> to vector<8x16xf32>
    %c57 = arith.constant 57 : index
    %268 = memref.load %arg3[%c57] : memref<588xf32, #tpu.memory_space<smem>>
    %269 = vector.broadcast %268 : f32 to vector<8x16xf32>
    %270 = arith.mulf %269, %267 : vector<8x16xf32>
    %271 = arith.addf %258, %270 : vector<8x16xf32>
    %c58 = arith.constant 58 : index
    %272 = memref.load %arg3[%c58] : memref<588xf32, #tpu.memory_space<smem>>
    %273 = vector.broadcast %272 : f32 to vector<8x16xf32>
    %274 = arith.mulf %273, %267 : vector<8x16xf32>
    %275 = arith.addf %262, %274 : vector<8x16xf32>
    %c59 = arith.constant 59 : index
    %276 = memref.load %arg3[%c59] : memref<588xf32, #tpu.memory_space<smem>>
    %277 = vector.broadcast %276 : f32 to vector<8x16xf32>
    %278 = arith.mulf %277, %267 : vector<8x16xf32>
    %279 = arith.addf %266, %278 : vector<8x16xf32>
    %280 = vector.extract_strided_slice %201 {offsets = [0, 6], sizes = [8, 16], strides = [1, 1]} : vector<8x22xf32> to vector<8x16xf32>
    %c60 = arith.constant 60 : index
    %281 = memref.load %arg3[%c60] : memref<588xf32, #tpu.memory_space<smem>>
    %282 = vector.broadcast %281 : f32 to vector<8x16xf32>
    %283 = arith.mulf %282, %280 : vector<8x16xf32>
    %284 = arith.addf %271, %283 : vector<8x16xf32>
    %c61 = arith.constant 61 : index
    %285 = memref.load %arg3[%c61] : memref<588xf32, #tpu.memory_space<smem>>
    %286 = vector.broadcast %285 : f32 to vector<8x16xf32>
    %287 = arith.mulf %286, %280 : vector<8x16xf32>
    %288 = arith.addf %275, %287 : vector<8x16xf32>
    %c62 = arith.constant 62 : index
    %289 = memref.load %arg3[%c62] : memref<588xf32, #tpu.memory_space<smem>>
    %290 = vector.broadcast %289 : f32 to vector<8x16xf32>
    %291 = arith.mulf %290, %280 : vector<8x16xf32>
    %292 = arith.addf %279, %291 : vector<8x16xf32>
    %c3_i32 = arith.constant 3 : i32
    %293 = arith.addi %1, %c3_i32 : i32
    %c0_12 = arith.constant 0 : index
    %c0_13 = arith.constant 0 : index
    %294 = arith.index_cast %293 : i32 to index
    %c0_14 = arith.constant 0 : index
    %295 = vector.load %arg2[%c0_12, %c0_13, %294, %c0_14] : memref<1x4x22x22xf32, #tpu.memory_space<vmem>>, vector<1x1x8x22xf32>
    %296 = vector.shape_cast %295 : vector<1x1x8x22xf32> to vector<8x22xf32>
    %297 = vector.extract_strided_slice %296 {offsets = [0, 0], sizes = [8, 16], strides = [1, 1]} : vector<8x22xf32> to vector<8x16xf32>
    %c63 = arith.constant 63 : index
    %298 = memref.load %arg3[%c63] : memref<588xf32, #tpu.memory_space<smem>>
    %299 = vector.broadcast %298 : f32 to vector<8x16xf32>
    %300 = arith.mulf %299, %297 : vector<8x16xf32>
    %301 = arith.addf %284, %300 : vector<8x16xf32>
    %c64 = arith.constant 64 : index
    %302 = memref.load %arg3[%c64] : memref<588xf32, #tpu.memory_space<smem>>
    %303 = vector.broadcast %302 : f32 to vector<8x16xf32>
    %304 = arith.mulf %303, %297 : vector<8x16xf32>
    %305 = arith.addf %288, %304 : vector<8x16xf32>
    %c65 = arith.constant 65 : index
    %306 = memref.load %arg3[%c65] : memref<588xf32, #tpu.memory_space<smem>>
    %307 = vector.broadcast %306 : f32 to vector<8x16xf32>
    %308 = arith.mulf %307, %297 : vector<8x16xf32>
    %309 = arith.addf %292, %308 : vector<8x16xf32>
    %310 = vector.extract_strided_slice %296 {offsets = [0, 1], sizes = [8, 16], strides = [1, 1]} : vector<8x22xf32> to vector<8x16xf32>
    %c66 = arith.constant 66 : index
    %311 = memref.load %arg3[%c66] : memref<588xf32, #tpu.memory_space<smem>>
    %312 = vector.broadcast %311 : f32 to vector<8x16xf32>
    %313 = arith.mulf %312, %310 : vector<8x16xf32>
    %314 = arith.addf %301, %313 : vector<8x16xf32>
    %c67 = arith.constant 67 : index
    %315 = memref.load %arg3[%c67] : memref<588xf32, #tpu.memory_space<smem>>
    %316 = vector.broadcast %315 : f32 to vector<8x16xf32>
    %317 = arith.mulf %316, %310 : vector<8x16xf32>
    %318 = arith.addf %305, %317 : vector<8x16xf32>
    %c68 = arith.constant 68 : index
    %319 = memref.load %arg3[%c68] : memref<588xf32, #tpu.memory_space<smem>>
    %320 = vector.broadcast %319 : f32 to vector<8x16xf32>
    %321 = arith.mulf %320, %310 : vector<8x16xf32>
    %322 = arith.addf %309, %321 : vector<8x16xf32>
    %323 = vector.extract_strided_slice %296 {offsets = [0, 2], sizes = [8, 16], strides = [1, 1]} : vector<8x22xf32> to vector<8x16xf32>
    %c69 = arith.constant 69 : index
    %324 = memref.load %arg3[%c69] : memref<588xf32, #tpu.memory_space<smem>>
    %325 = vector.broadcast %324 : f32 to vector<8x16xf32>
    %326 = arith.mulf %325, %323 : vector<8x16xf32>
    %327 = arith.addf %314, %326 : vector<8x16xf32>
    %c70 = arith.constant 70 : index
    %328 = memref.load %arg3[%c70] : memref<588xf32, #tpu.memory_space<smem>>
    %329 = vector.broadcast %328 : f32 to vector<8x16xf32>
    %330 = arith.mulf %329, %323 : vector<8x16xf32>
    %331 = arith.addf %318, %330 : vector<8x16xf32>
    %c71 = arith.constant 71 : index
    %332 = memref.load %arg3[%c71] : memref<588xf32, #tpu.memory_space<smem>>
    %333 = vector.broadcast %332 : f32 to vector<8x16xf32>
    %334 = arith.mulf %333, %323 : vector<8x16xf32>
    %335 = arith.addf %322, %334 : vector<8x16xf32>
    %336 = vector.extract_strided_slice %296 {offsets = [0, 3], sizes = [8, 16], strides = [1, 1]} : vector<8x22xf32> to vector<8x16xf32>
    %c72 = arith.constant 72 : index
    %337 = memref.load %arg3[%c72] : memref<588xf32, #tpu.memory_space<smem>>
    %338 = vector.broadcast %337 : f32 to vector<8x16xf32>
    %339 = arith.mulf %338, %336 : vector<8x16xf32>
    %340 = arith.addf %327, %339 : vector<8x16xf32>
    %c73 = arith.constant 73 : index
    %341 = memref.load %arg3[%c73] : memref<588xf32, #tpu.memory_space<smem>>
    %342 = vector.broadcast %341 : f32 to vector<8x16xf32>
    %343 = arith.mulf %342, %336 : vector<8x16xf32>
    %344 = arith.addf %331, %343 : vector<8x16xf32>
    %c74 = arith.constant 74 : index
    %345 = memref.load %arg3[%c74] : memref<588xf32, #tpu.memory_space<smem>>
    %346 = vector.broadcast %345 : f32 to vector<8x16xf32>
    %347 = arith.mulf %346, %336 : vector<8x16xf32>
    %348 = arith.addf %335, %347 : vector<8x16xf32>
    %349 = vector.extract_strided_slice %296 {offsets = [0, 4], sizes = [8, 16], strides = [1, 1]} : vector<8x22xf32> to vector<8x16xf32>
    %c75 = arith.constant 75 : index
    %350 = memref.load %arg3[%c75] : memref<588xf32, #tpu.memory_space<smem>>
    %351 = vector.broadcast %350 : f32 to vector<8x16xf32>
    %352 = arith.mulf %351, %349 : vector<8x16xf32>
    %353 = arith.addf %340, %352 : vector<8x16xf32>
    %c76 = arith.constant 76 : index
    %354 = memref.load %arg3[%c76] : memref<588xf32, #tpu.memory_space<smem>>
    %355 = vector.broadcast %354 : f32 to vector<8x16xf32>
    %356 = arith.mulf %355, %349 : vector<8x16xf32>
    %357 = arith.addf %344, %356 : vector<8x16xf32>
    %c77 = arith.constant 77 : index
    %358 = memref.load %arg3[%c77] : memref<588xf32, #tpu.memory_space<smem>>
    %359 = vector.broadcast %358 : f32 to vector<8x16xf32>
    %360 = arith.mulf %359, %349 : vector<8x16xf32>
    %361 = arith.addf %348, %360 : vector<8x16xf32>
    %362 = vector.extract_strided_slice %296 {offsets = [0, 5], sizes = [8, 16], strides = [1, 1]} : vector<8x22xf32> to vector<8x16xf32>
    %c78 = arith.constant 78 : index
    %363 = memref.load %arg3[%c78] : memref<588xf32, #tpu.memory_space<smem>>
    %364 = vector.broadcast %363 : f32 to vector<8x16xf32>
    %365 = arith.mulf %364, %362 : vector<8x16xf32>
    %366 = arith.addf %353, %365 : vector<8x16xf32>
    %c79 = arith.constant 79 : index
    %367 = memref.load %arg3[%c79] : memref<588xf32, #tpu.memory_space<smem>>
    %368 = vector.broadcast %367 : f32 to vector<8x16xf32>
    %369 = arith.mulf %368, %362 : vector<8x16xf32>
    %370 = arith.addf %357, %369 : vector<8x16xf32>
    %c80 = arith.constant 80 : index
    %371 = memref.load %arg3[%c80] : memref<588xf32, #tpu.memory_space<smem>>
    %372 = vector.broadcast %371 : f32 to vector<8x16xf32>
    %373 = arith.mulf %372, %362 : vector<8x16xf32>
    %374 = arith.addf %361, %373 : vector<8x16xf32>
    %375 = vector.extract_strided_slice %296 {offsets = [0, 6], sizes = [8, 16], strides = [1, 1]} : vector<8x22xf32> to vector<8x16xf32>
    %c81 = arith.constant 81 : index
    %376 = memref.load %arg3[%c81] : memref<588xf32, #tpu.memory_space<smem>>
    %377 = vector.broadcast %376 : f32 to vector<8x16xf32>
    %378 = arith.mulf %377, %375 : vector<8x16xf32>
    %379 = arith.addf %366, %378 : vector<8x16xf32>
    %c82 = arith.constant 82 : index
    %380 = memref.load %arg3[%c82] : memref<588xf32, #tpu.memory_space<smem>>
    %381 = vector.broadcast %380 : f32 to vector<8x16xf32>
    %382 = arith.mulf %381, %375 : vector<8x16xf32>
    %383 = arith.addf %370, %382 : vector<8x16xf32>
    %c83 = arith.constant 83 : index
    %384 = memref.load %arg3[%c83] : memref<588xf32, #tpu.memory_space<smem>>
    %385 = vector.broadcast %384 : f32 to vector<8x16xf32>
    %386 = arith.mulf %385, %375 : vector<8x16xf32>
    %387 = arith.addf %374, %386 : vector<8x16xf32>
    %c4_i32 = arith.constant 4 : i32
    %388 = arith.addi %1, %c4_i32 : i32
    %c0_15 = arith.constant 0 : index
    %c0_16 = arith.constant 0 : index
    %389 = arith.index_cast %388 : i32 to index
    %c0_17 = arith.constant 0 : index
    %390 = vector.load %arg2[%c0_15, %c0_16, %389, %c0_17] : memref<1x4x22x22xf32, #tpu.memory_space<vmem>>, vector<1x1x8x22xf32>
    %391 = vector.shape_cast %390 : vector<1x1x8x22xf32> to vector<8x22xf32>
    %392 = vector.extract_strided_slice %391 {offsets = [0, 0], sizes = [8, 16], strides = [1, 1]} : vector<8x22xf32> to vector<8x16xf32>
    %c84 = arith.constant 84 : index
    %393 = memref.load %arg3[%c84] : memref<588xf32, #tpu.memory_space<smem>>
    %394 = vector.broadcast %393 : f32 to vector<8x16xf32>
    %395 = arith.mulf %394, %392 : vector<8x16xf32>
    %396 = arith.addf %379, %395 : vector<8x16xf32>
    %c85 = arith.constant 85 : index
    %397 = memref.load %arg3[%c85] : memref<588xf32, #tpu.memory_space<smem>>
    %398 = vector.broadcast %397 : f32 to vector<8x16xf32>
    %399 = arith.mulf %398, %392 : vector<8x16xf32>
    %400 = arith.addf %383, %399 : vector<8x16xf32>
    %c86 = arith.constant 86 : index
    %401 = memref.load %arg3[%c86] : memref<588xf32, #tpu.memory_space<smem>>
    %402 = vector.broadcast %401 : f32 to vector<8x16xf32>
    %403 = arith.mulf %402, %392 : vector<8x16xf32>
    %404 = arith.addf %387, %403 : vector<8x16xf32>
    %405 = vector.extract_strided_slice %391 {offsets = [0, 1], sizes = [8, 16], strides = [1, 1]} : vector<8x22xf32> to vector<8x16xf32>
    %c87 = arith.constant 87 : index
    %406 = memref.load %arg3[%c87] : memref<588xf32, #tpu.memory_space<smem>>
    %407 = vector.broadcast %406 : f32 to vector<8x16xf32>
    %408 = arith.mulf %407, %405 : vector<8x16xf32>
    %409 = arith.addf %396, %408 : vector<8x16xf32>
    %c88 = arith.constant 88 : index
    %410 = memref.load %arg3[%c88] : memref<588xf32, #tpu.memory_space<smem>>
    %411 = vector.broadcast %410 : f32 to vector<8x16xf32>
    %412 = arith.mulf %411, %405 : vector<8x16xf32>
    %413 = arith.addf %400, %412 : vector<8x16xf32>
    %c89 = arith.constant 89 : index
    %414 = memref.load %arg3[%c89] : memref<588xf32, #tpu.memory_space<smem>>
    %415 = vector.broadcast %414 : f32 to vector<8x16xf32>
    %416 = arith.mulf %415, %405 : vector<8x16xf32>
    %417 = arith.addf %404, %416 : vector<8x16xf32>
    %418 = vector.extract_strided_slice %391 {offsets = [0, 2], sizes = [8, 16], strides = [1, 1]} : vector<8x22xf32> to vector<8x16xf32>
    %c90 = arith.constant 90 : index
    %419 = memref.load %arg3[%c90] : memref<588xf32, #tpu.memory_space<smem>>
    %420 = vector.broadcast %419 : f32 to vector<8x16xf32>
    %421 = arith.mulf %420, %418 : vector<8x16xf32>
    %422 = arith.addf %409, %421 : vector<8x16xf32>
    %c91 = arith.constant 91 : index
    %423 = memref.load %arg3[%c91] : memref<588xf32, #tpu.memory_space<smem>>
    %424 = vector.broadcast %423 : f32 to vector<8x16xf32>
    %425 = arith.mulf %424, %418 : vector<8x16xf32>
    %426 = arith.addf %413, %425 : vector<8x16xf32>
    %c92 = arith.constant 92 : index
    %427 = memref.load %arg3[%c92] : memref<588xf32, #tpu.memory_space<smem>>
    %428 = vector.broadcast %427 : f32 to vector<8x16xf32>
    %429 = arith.mulf %428, %418 : vector<8x16xf32>
    %430 = arith.addf %417, %429 : vector<8x16xf32>
    %431 = vector.extract_strided_slice %391 {offsets = [0, 3], sizes = [8, 16], strides = [1, 1]} : vector<8x22xf32> to vector<8x16xf32>
    %c93 = arith.constant 93 : index
    %432 = memref.load %arg3[%c93] : memref<588xf32, #tpu.memory_space<smem>>
    %433 = vector.broadcast %432 : f32 to vector<8x16xf32>
    %434 = arith.mulf %433, %431 : vector<8x16xf32>
    %435 = arith.addf %422, %434 : vector<8x16xf32>
    %c94 = arith.constant 94 : index
    %436 = memref.load %arg3[%c94] : memref<588xf32, #tpu.memory_space<smem>>
    %437 = vector.broadcast %436 : f32 to vector<8x16xf32>
    %438 = arith.mulf %437, %431 : vector<8x16xf32>
    %439 = arith.addf %426, %438 : vector<8x16xf32>
    %c95 = arith.constant 95 : index
    %440 = memref.load %arg3[%c95] : memref<588xf32, #tpu.memory_space<smem>>
    %441 = vector.broadcast %440 : f32 to vector<8x16xf32>
    %442 = arith.mulf %441, %431 : vector<8x16xf32>
    %443 = arith.addf %430, %442 : vector<8x16xf32>
    %444 = vector.extract_strided_slice %391 {offsets = [0, 4], sizes = [8, 16], strides = [1, 1]} : vector<8x22xf32> to vector<8x16xf32>
    %c96 = arith.constant 96 : index
    %445 = memref.load %arg3[%c96] : memref<588xf32, #tpu.memory_space<smem>>
    %446 = vector.broadcast %445 : f32 to vector<8x16xf32>
    %447 = arith.mulf %446, %444 : vector<8x16xf32>
    %448 = arith.addf %435, %447 : vector<8x16xf32>
    %c97 = arith.constant 97 : index
    %449 = memref.load %arg3[%c97] : memref<588xf32, #tpu.memory_space<smem>>
    %450 = vector.broadcast %449 : f32 to vector<8x16xf32>
    %451 = arith.mulf %450, %444 : vector<8x16xf32>
    %452 = arith.addf %439, %451 : vector<8x16xf32>
    %c98 = arith.constant 98 : index
    %453 = memref.load %arg3[%c98] : memref<588xf32, #tpu.memory_space<smem>>
    %454 = vector.broadcast %453 : f32 to vector<8x16xf32>
    %455 = arith.mulf %454, %444 : vector<8x16xf32>
    %456 = arith.addf %443, %455 : vector<8x16xf32>
    %457 = vector.extract_strided_slice %391 {offsets = [0, 5], sizes = [8, 16], strides = [1, 1]} : vector<8x22xf32> to vector<8x16xf32>
    %c99 = arith.constant 99 : index
    %458 = memref.load %arg3[%c99] : memref<588xf32, #tpu.memory_space<smem>>
    %459 = vector.broadcast %458 : f32 to vector<8x16xf32>
    %460 = arith.mulf %459, %457 : vector<8x16xf32>
    %461 = arith.addf %448, %460 : vector<8x16xf32>
    %c100 = arith.constant 100 : index
    %462 = memref.load %arg3[%c100] : memref<588xf32, #tpu.memory_space<smem>>
    %463 = vector.broadcast %462 : f32 to vector<8x16xf32>
    %464 = arith.mulf %463, %457 : vector<8x16xf32>
    %465 = arith.addf %452, %464 : vector<8x16xf32>
    %c101 = arith.constant 101 : index
    %466 = memref.load %arg3[%c101] : memref<588xf32, #tpu.memory_space<smem>>
    %467 = vector.broadcast %466 : f32 to vector<8x16xf32>
    %468 = arith.mulf %467, %457 : vector<8x16xf32>
    %469 = arith.addf %456, %468 : vector<8x16xf32>
    %470 = vector.extract_strided_slice %391 {offsets = [0, 6], sizes = [8, 16], strides = [1, 1]} : vector<8x22xf32> to vector<8x16xf32>
    %c102 = arith.constant 102 : index
    %471 = memref.load %arg3[%c102] : memref<588xf32, #tpu.memory_space<smem>>
    %472 = vector.broadcast %471 : f32 to vector<8x16xf32>
    %473 = arith.mulf %472, %470 : vector<8x16xf32>
    %474 = arith.addf %461, %473 : vector<8x16xf32>
    %c103 = arith.constant 103 : index
    %475 = memref.load %arg3[%c103] : memref<588xf32, #tpu.memory_space<smem>>
    %476 = vector.broadcast %475 : f32 to vector<8x16xf32>
    %477 = arith.mulf %476, %470 : vector<8x16xf32>
    %478 = arith.addf %465, %477 : vector<8x16xf32>
    %c104 = arith.constant 104 : index
    %479 = memref.load %arg3[%c104] : memref<588xf32, #tpu.memory_space<smem>>
    %480 = vector.broadcast %479 : f32 to vector<8x16xf32>
    %481 = arith.mulf %480, %470 : vector<8x16xf32>
    %482 = arith.addf %469, %481 : vector<8x16xf32>
    %c5_i32 = arith.constant 5 : i32
    %483 = arith.addi %1, %c5_i32 : i32
    %c0_18 = arith.constant 0 : index
    %c0_19 = arith.constant 0 : index
    %484 = arith.index_cast %483 : i32 to index
    %c0_20 = arith.constant 0 : index
    %485 = vector.load %arg2[%c0_18, %c0_19, %484, %c0_20] : memref<1x4x22x22xf32, #tpu.memory_space<vmem>>, vector<1x1x8x22xf32>
    %486 = vector.shape_cast %485 : vector<1x1x8x22xf32> to vector<8x22xf32>
    %487 = vector.extract_strided_slice %486 {offsets = [0, 0], sizes = [8, 16], strides = [1, 1]} : vector<8x22xf32> to vector<8x16xf32>
    %c105 = arith.constant 105 : index
    %488 = memref.load %arg3[%c105] : memref<588xf32, #tpu.memory_space<smem>>
    %489 = vector.broadcast %488 : f32 to vector<8x16xf32>
    %490 = arith.mulf %489, %487 : vector<8x16xf32>
    %491 = arith.addf %474, %490 : vector<8x16xf32>
    %c106 = arith.constant 106 : index
    %492 = memref.load %arg3[%c106] : memref<588xf32, #tpu.memory_space<smem>>
    %493 = vector.broadcast %492 : f32 to vector<8x16xf32>
    %494 = arith.mulf %493, %487 : vector<8x16xf32>
    %495 = arith.addf %478, %494 : vector<8x16xf32>
    %c107 = arith.constant 107 : index
    %496 = memref.load %arg3[%c107] : memref<588xf32, #tpu.memory_space<smem>>
    %497 = vector.broadcast %496 : f32 to vector<8x16xf32>
    %498 = arith.mulf %497, %487 : vector<8x16xf32>
    %499 = arith.addf %482, %498 : vector<8x16xf32>
    %500 = vector.extract_strided_slice %486 {offsets = [0, 1], sizes = [8, 16], strides = [1, 1]} : vector<8x22xf32> to vector<8x16xf32>
    %c108 = arith.constant 108 : index
    %501 = memref.load %arg3[%c108] : memref<588xf32, #tpu.memory_space<smem>>
    %502 = vector.broadcast %501 : f32 to vector<8x16xf32>
    %503 = arith.mulf %502, %500 : vector<8x16xf32>
    %504 = arith.addf %491, %503 : vector<8x16xf32>
    %c109 = arith.constant 109 : index
    %505 = memref.load %arg3[%c109] : memref<588xf32, #tpu.memory_space<smem>>
    %506 = vector.broadcast %505 : f32 to vector<8x16xf32>
    %507 = arith.mulf %506, %500 : vector<8x16xf32>
    %508 = arith.addf %495, %507 : vector<8x16xf32>
    %c110 = arith.constant 110 : index
    %509 = memref.load %arg3[%c110] : memref<588xf32, #tpu.memory_space<smem>>
    %510 = vector.broadcast %509 : f32 to vector<8x16xf32>
    %511 = arith.mulf %510, %500 : vector<8x16xf32>
    %512 = arith.addf %499, %511 : vector<8x16xf32>
    %513 = vector.extract_strided_slice %486 {offsets = [0, 2], sizes = [8, 16], strides = [1, 1]} : vector<8x22xf32> to vector<8x16xf32>
    %c111 = arith.constant 111 : index
    %514 = memref.load %arg3[%c111] : memref<588xf32, #tpu.memory_space<smem>>
    %515 = vector.broadcast %514 : f32 to vector<8x16xf32>
    %516 = arith.mulf %515, %513 : vector<8x16xf32>
    %517 = arith.addf %504, %516 : vector<8x16xf32>
    %c112 = arith.constant 112 : index
    %518 = memref.load %arg3[%c112] : memref<588xf32, #tpu.memory_space<smem>>
    %519 = vector.broadcast %518 : f32 to vector<8x16xf32>
    %520 = arith.mulf %519, %513 : vector<8x16xf32>
    %521 = arith.addf %508, %520 : vector<8x16xf32>
    %c113 = arith.constant 113 : index
    %522 = memref.load %arg3[%c113] : memref<588xf32, #tpu.memory_space<smem>>
    %523 = vector.broadcast %522 : f32 to vector<8x16xf32>
    %524 = arith.mulf %523, %513 : vector<8x16xf32>
    %525 = arith.addf %512, %524 : vector<8x16xf32>
    %526 = vector.extract_strided_slice %486 {offsets = [0, 3], sizes = [8, 16], strides = [1, 1]} : vector<8x22xf32> to vector<8x16xf32>
    %c114 = arith.constant 114 : index
    %527 = memref.load %arg3[%c114] : memref<588xf32, #tpu.memory_space<smem>>
    %528 = vector.broadcast %527 : f32 to vector<8x16xf32>
    %529 = arith.mulf %528, %526 : vector<8x16xf32>
    %530 = arith.addf %517, %529 : vector<8x16xf32>
    %c115 = arith.constant 115 : index
    %531 = memref.load %arg3[%c115] : memref<588xf32, #tpu.memory_space<smem>>
    %532 = vector.broadcast %531 : f32 to vector<8x16xf32>
    %533 = arith.mulf %532, %526 : vector<8x16xf32>
    %534 = arith.addf %521, %533 : vector<8x16xf32>
    %c116 = arith.constant 116 : index
    %535 = memref.load %arg3[%c116] : memref<588xf32, #tpu.memory_space<smem>>
    %536 = vector.broadcast %535 : f32 to vector<8x16xf32>
    %537 = arith.mulf %536, %526 : vector<8x16xf32>
    %538 = arith.addf %525, %537 : vector<8x16xf32>
    %539 = vector.extract_strided_slice %486 {offsets = [0, 4], sizes = [8, 16], strides = [1, 1]} : vector<8x22xf32> to vector<8x16xf32>
    %c117 = arith.constant 117 : index
    %540 = memref.load %arg3[%c117] : memref<588xf32, #tpu.memory_space<smem>>
    %541 = vector.broadcast %540 : f32 to vector<8x16xf32>
    %542 = arith.mulf %541, %539 : vector<8x16xf32>
    %543 = arith.addf %530, %542 : vector<8x16xf32>
    %c118 = arith.constant 118 : index
    %544 = memref.load %arg3[%c118] : memref<588xf32, #tpu.memory_space<smem>>
    %545 = vector.broadcast %544 : f32 to vector<8x16xf32>
    %546 = arith.mulf %545, %539 : vector<8x16xf32>
    %547 = arith.addf %534, %546 : vector<8x16xf32>
    %c119 = arith.constant 119 : index
    %548 = memref.load %arg3[%c119] : memref<588xf32, #tpu.memory_space<smem>>
    %549 = vector.broadcast %548 : f32 to vector<8x16xf32>
    %550 = arith.mulf %549, %539 : vector<8x16xf32>
    %551 = arith.addf %538, %550 : vector<8x16xf32>
    %552 = vector.extract_strided_slice %486 {offsets = [0, 5], sizes = [8, 16], strides = [1, 1]} : vector<8x22xf32> to vector<8x16xf32>
    %c120 = arith.constant 120 : index
    %553 = memref.load %arg3[%c120] : memref<588xf32, #tpu.memory_space<smem>>
    %554 = vector.broadcast %553 : f32 to vector<8x16xf32>
    %555 = arith.mulf %554, %552 : vector<8x16xf32>
    %556 = arith.addf %543, %555 : vector<8x16xf32>
    %c121 = arith.constant 121 : index
    %557 = memref.load %arg3[%c121] : memref<588xf32, #tpu.memory_space<smem>>
    %558 = vector.broadcast %557 : f32 to vector<8x16xf32>
    %559 = arith.mulf %558, %552 : vector<8x16xf32>
    %560 = arith.addf %547, %559 : vector<8x16xf32>
    %c122 = arith.constant 122 : index
    %561 = memref.load %arg3[%c122] : memref<588xf32, #tpu.memory_space<smem>>
    %562 = vector.broadcast %561 : f32 to vector<8x16xf32>
    %563 = arith.mulf %562, %552 : vector<8x16xf32>
    %564 = arith.addf %551, %563 : vector<8x16xf32>
    %565 = vector.extract_strided_slice %486 {offsets = [0, 6], sizes = [8, 16], strides = [1, 1]} : vector<8x22xf32> to vector<8x16xf32>
    %c123 = arith.constant 123 : index
    %566 = memref.load %arg3[%c123] : memref<588xf32, #tpu.memory_space<smem>>
    %567 = vector.broadcast %566 : f32 to vector<8x16xf32>
    %568 = arith.mulf %567, %565 : vector<8x16xf32>
    %569 = arith.addf %556, %568 : vector<8x16xf32>
    %c124 = arith.constant 124 : index
    %570 = memref.load %arg3[%c124] : memref<588xf32, #tpu.memory_space<smem>>
    %571 = vector.broadcast %570 : f32 to vector<8x16xf32>
    %572 = arith.mulf %571, %565 : vector<8x16xf32>
    %573 = arith.addf %560, %572 : vector<8x16xf32>
    %c125 = arith.constant 125 : index
    %574 = memref.load %arg3[%c125] : memref<588xf32, #tpu.memory_space<smem>>
    %575 = vector.broadcast %574 : f32 to vector<8x16xf32>
    %576 = arith.mulf %575, %565 : vector<8x16xf32>
    %577 = arith.addf %564, %576 : vector<8x16xf32>
    %c6_i32 = arith.constant 6 : i32
    %578 = arith.addi %1, %c6_i32 : i32
    %c0_21 = arith.constant 0 : index
    %c0_22 = arith.constant 0 : index
    %579 = arith.index_cast %578 : i32 to index
    %c0_23 = arith.constant 0 : index
    %580 = vector.load %arg2[%c0_21, %c0_22, %579, %c0_23] : memref<1x4x22x22xf32, #tpu.memory_space<vmem>>, vector<1x1x8x22xf32>
    %581 = vector.shape_cast %580 : vector<1x1x8x22xf32> to vector<8x22xf32>
    %582 = vector.extract_strided_slice %581 {offsets = [0, 0], sizes = [8, 16], strides = [1, 1]} : vector<8x22xf32> to vector<8x16xf32>
    %c126 = arith.constant 126 : index
    %583 = memref.load %arg3[%c126] : memref<588xf32, #tpu.memory_space<smem>>
    %584 = vector.broadcast %583 : f32 to vector<8x16xf32>
    %585 = arith.mulf %584, %582 : vector<8x16xf32>
    %586 = arith.addf %569, %585 : vector<8x16xf32>
    %c127 = arith.constant 127 : index
    %587 = memref.load %arg3[%c127] : memref<588xf32, #tpu.memory_space<smem>>
    %588 = vector.broadcast %587 : f32 to vector<8x16xf32>
    %589 = arith.mulf %588, %582 : vector<8x16xf32>
    %590 = arith.addf %573, %589 : vector<8x16xf32>
    %c128 = arith.constant 128 : index
    %591 = memref.load %arg3[%c128] : memref<588xf32, #tpu.memory_space<smem>>
    %592 = vector.broadcast %591 : f32 to vector<8x16xf32>
    %593 = arith.mulf %592, %582 : vector<8x16xf32>
    %594 = arith.addf %577, %593 : vector<8x16xf32>
    %595 = vector.extract_strided_slice %581 {offsets = [0, 1], sizes = [8, 16], strides = [1, 1]} : vector<8x22xf32> to vector<8x16xf32>
    %c129 = arith.constant 129 : index
    %596 = memref.load %arg3[%c129] : memref<588xf32, #tpu.memory_space<smem>>
    %597 = vector.broadcast %596 : f32 to vector<8x16xf32>
    %598 = arith.mulf %597, %595 : vector<8x16xf32>
    %599 = arith.addf %586, %598 : vector<8x16xf32>
    %c130 = arith.constant 130 : index
    %600 = memref.load %arg3[%c130] : memref<588xf32, #tpu.memory_space<smem>>
    %601 = vector.broadcast %600 : f32 to vector<8x16xf32>
    %602 = arith.mulf %601, %595 : vector<8x16xf32>
    %603 = arith.addf %590, %602 : vector<8x16xf32>
    %c131 = arith.constant 131 : index
    %604 = memref.load %arg3[%c131] : memref<588xf32, #tpu.memory_space<smem>>
    %605 = vector.broadcast %604 : f32 to vector<8x16xf32>
    %606 = arith.mulf %605, %595 : vector<8x16xf32>
    %607 = arith.addf %594, %606 : vector<8x16xf32>
    %608 = vector.extract_strided_slice %581 {offsets = [0, 2], sizes = [8, 16], strides = [1, 1]} : vector<8x22xf32> to vector<8x16xf32>
    %c132 = arith.constant 132 : index
    %609 = memref.load %arg3[%c132] : memref<588xf32, #tpu.memory_space<smem>>
    %610 = vector.broadcast %609 : f32 to vector<8x16xf32>
    %611 = arith.mulf %610, %608 : vector<8x16xf32>
    %612 = arith.addf %599, %611 : vector<8x16xf32>
    %c133 = arith.constant 133 : index
    %613 = memref.load %arg3[%c133] : memref<588xf32, #tpu.memory_space<smem>>
    %614 = vector.broadcast %613 : f32 to vector<8x16xf32>
    %615 = arith.mulf %614, %608 : vector<8x16xf32>
    %616 = arith.addf %603, %615 : vector<8x16xf32>
    %c134 = arith.constant 134 : index
    %617 = memref.load %arg3[%c134] : memref<588xf32, #tpu.memory_space<smem>>
    %618 = vector.broadcast %617 : f32 to vector<8x16xf32>
    %619 = arith.mulf %618, %608 : vector<8x16xf32>
    %620 = arith.addf %607, %619 : vector<8x16xf32>
    %621 = vector.extract_strided_slice %581 {offsets = [0, 3], sizes = [8, 16], strides = [1, 1]} : vector<8x22xf32> to vector<8x16xf32>
    %c135 = arith.constant 135 : index
    %622 = memref.load %arg3[%c135] : memref<588xf32, #tpu.memory_space<smem>>
    %623 = vector.broadcast %622 : f32 to vector<8x16xf32>
    %624 = arith.mulf %623, %621 : vector<8x16xf32>
    %625 = arith.addf %612, %624 : vector<8x16xf32>
    %c136 = arith.constant 136 : index
    %626 = memref.load %arg3[%c136] : memref<588xf32, #tpu.memory_space<smem>>
    %627 = vector.broadcast %626 : f32 to vector<8x16xf32>
    %628 = arith.mulf %627, %621 : vector<8x16xf32>
    %629 = arith.addf %616, %628 : vector<8x16xf32>
    %c137 = arith.constant 137 : index
    %630 = memref.load %arg3[%c137] : memref<588xf32, #tpu.memory_space<smem>>
    %631 = vector.broadcast %630 : f32 to vector<8x16xf32>
    %632 = arith.mulf %631, %621 : vector<8x16xf32>
    %633 = arith.addf %620, %632 : vector<8x16xf32>
    %634 = vector.extract_strided_slice %581 {offsets = [0, 4], sizes = [8, 16], strides = [1, 1]} : vector<8x22xf32> to vector<8x16xf32>
    %c138 = arith.constant 138 : index
    %635 = memref.load %arg3[%c138] : memref<588xf32, #tpu.memory_space<smem>>
    %636 = vector.broadcast %635 : f32 to vector<8x16xf32>
    %637 = arith.mulf %636, %634 : vector<8x16xf32>
    %638 = arith.addf %625, %637 : vector<8x16xf32>
    %c139 = arith.constant 139 : index
    %639 = memref.load %arg3[%c139] : memref<588xf32, #tpu.memory_space<smem>>
    %640 = vector.broadcast %639 : f32 to vector<8x16xf32>
    %641 = arith.mulf %640, %634 : vector<8x16xf32>
    %642 = arith.addf %629, %641 : vector<8x16xf32>
    %c140 = arith.constant 140 : index
    %643 = memref.load %arg3[%c140] : memref<588xf32, #tpu.memory_space<smem>>
    %644 = vector.broadcast %643 : f32 to vector<8x16xf32>
    %645 = arith.mulf %644, %634 : vector<8x16xf32>
    %646 = arith.addf %633, %645 : vector<8x16xf32>
    %647 = vector.extract_strided_slice %581 {offsets = [0, 5], sizes = [8, 16], strides = [1, 1]} : vector<8x22xf32> to vector<8x16xf32>
    %c141 = arith.constant 141 : index
    %648 = memref.load %arg3[%c141] : memref<588xf32, #tpu.memory_space<smem>>
    %649 = vector.broadcast %648 : f32 to vector<8x16xf32>
    %650 = arith.mulf %649, %647 : vector<8x16xf32>
    %651 = arith.addf %638, %650 : vector<8x16xf32>
    %c142 = arith.constant 142 : index
    %652 = memref.load %arg3[%c142] : memref<588xf32, #tpu.memory_space<smem>>
    %653 = vector.broadcast %652 : f32 to vector<8x16xf32>
    %654 = arith.mulf %653, %647 : vector<8x16xf32>
    %655 = arith.addf %642, %654 : vector<8x16xf32>
    %c143 = arith.constant 143 : index
    %656 = memref.load %arg3[%c143] : memref<588xf32, #tpu.memory_space<smem>>
    %657 = vector.broadcast %656 : f32 to vector<8x16xf32>
    %658 = arith.mulf %657, %647 : vector<8x16xf32>
    %659 = arith.addf %646, %658 : vector<8x16xf32>
    %660 = vector.extract_strided_slice %581 {offsets = [0, 6], sizes = [8, 16], strides = [1, 1]} : vector<8x22xf32> to vector<8x16xf32>
    %c144 = arith.constant 144 : index
    %661 = memref.load %arg3[%c144] : memref<588xf32, #tpu.memory_space<smem>>
    %662 = vector.broadcast %661 : f32 to vector<8x16xf32>
    %663 = arith.mulf %662, %660 : vector<8x16xf32>
    %664 = arith.addf %651, %663 : vector<8x16xf32>
    %c145 = arith.constant 145 : index
    %665 = memref.load %arg3[%c145] : memref<588xf32, #tpu.memory_space<smem>>
    %666 = vector.broadcast %665 : f32 to vector<8x16xf32>
    %667 = arith.mulf %666, %660 : vector<8x16xf32>
    %668 = arith.addf %655, %667 : vector<8x16xf32>
    %c146 = arith.constant 146 : index
    %669 = memref.load %arg3[%c146] : memref<588xf32, #tpu.memory_space<smem>>
    %670 = vector.broadcast %669 : f32 to vector<8x16xf32>
    %671 = arith.mulf %670, %660 : vector<8x16xf32>
    %672 = arith.addf %659, %671 : vector<8x16xf32>
    %c0_i32_24 = arith.constant 0 : i32
    %673 = arith.addi %1, %c0_i32_24 : i32
    %c0_25 = arith.constant 0 : index
    %c1_26 = arith.constant 1 : index
    %674 = arith.index_cast %673 : i32 to index
    %c0_27 = arith.constant 0 : index
    %675 = vector.load %arg2[%c0_25, %c1_26, %674, %c0_27] : memref<1x4x22x22xf32, #tpu.memory_space<vmem>>, vector<1x1x8x22xf32>
    %676 = vector.shape_cast %675 : vector<1x1x8x22xf32> to vector<8x22xf32>
    %677 = vector.extract_strided_slice %676 {offsets = [0, 0], sizes = [8, 16], strides = [1, 1]} : vector<8x22xf32> to vector<8x16xf32>
    %c147 = arith.constant 147 : index
    %678 = memref.load %arg3[%c147] : memref<588xf32, #tpu.memory_space<smem>>
    %679 = vector.broadcast %678 : f32 to vector<8x16xf32>
    %680 = arith.mulf %679, %677 : vector<8x16xf32>
    %681 = arith.addf %664, %680 : vector<8x16xf32>
    %c148 = arith.constant 148 : index
    %682 = memref.load %arg3[%c148] : memref<588xf32, #tpu.memory_space<smem>>
    %683 = vector.broadcast %682 : f32 to vector<8x16xf32>
    %684 = arith.mulf %683, %677 : vector<8x16xf32>
    %685 = arith.addf %668, %684 : vector<8x16xf32>
    %c149 = arith.constant 149 : index
    %686 = memref.load %arg3[%c149] : memref<588xf32, #tpu.memory_space<smem>>
    %687 = vector.broadcast %686 : f32 to vector<8x16xf32>
    %688 = arith.mulf %687, %677 : vector<8x16xf32>
    %689 = arith.addf %672, %688 : vector<8x16xf32>
    %690 = vector.extract_strided_slice %676 {offsets = [0, 1], sizes = [8, 16], strides = [1, 1]} : vector<8x22xf32> to vector<8x16xf32>
    %c150 = arith.constant 150 : index
    %691 = memref.load %arg3[%c150] : memref<588xf32, #tpu.memory_space<smem>>
    %692 = vector.broadcast %691 : f32 to vector<8x16xf32>
    %693 = arith.mulf %692, %690 : vector<8x16xf32>
    %694 = arith.addf %681, %693 : vector<8x16xf32>
    %c151 = arith.constant 151 : index
    %695 = memref.load %arg3[%c151] : memref<588xf32, #tpu.memory_space<smem>>
    %696 = vector.broadcast %695 : f32 to vector<8x16xf32>
    %697 = arith.mulf %696, %690 : vector<8x16xf32>
    %698 = arith.addf %685, %697 : vector<8x16xf32>
    %c152 = arith.constant 152 : index
    %699 = memref.load %arg3[%c152] : memref<588xf32, #tpu.memory_space<smem>>
    %700 = vector.broadcast %699 : f32 to vector<8x16xf32>
    %701 = arith.mulf %700, %690 : vector<8x16xf32>
    %702 = arith.addf %689, %701 : vector<8x16xf32>
    %703 = vector.extract_strided_slice %676 {offsets = [0, 2], sizes = [8, 16], strides = [1, 1]} : vector<8x22xf32> to vector<8x16xf32>
    %c153 = arith.constant 153 : index
    %704 = memref.load %arg3[%c153] : memref<588xf32, #tpu.memory_space<smem>>
    %705 = vector.broadcast %704 : f32 to vector<8x16xf32>
    %706 = arith.mulf %705, %703 : vector<8x16xf32>
    %707 = arith.addf %694, %706 : vector<8x16xf32>
    %c154 = arith.constant 154 : index
    %708 = memref.load %arg3[%c154] : memref<588xf32, #tpu.memory_space<smem>>
    %709 = vector.broadcast %708 : f32 to vector<8x16xf32>
    %710 = arith.mulf %709, %703 : vector<8x16xf32>
    %711 = arith.addf %698, %710 : vector<8x16xf32>
    %c155 = arith.constant 155 : index
    %712 = memref.load %arg3[%c155] : memref<588xf32, #tpu.memory_space<smem>>
    %713 = vector.broadcast %712 : f32 to vector<8x16xf32>
    %714 = arith.mulf %713, %703 : vector<8x16xf32>
    %715 = arith.addf %702, %714 : vector<8x16xf32>
    %716 = vector.extract_strided_slice %676 {offsets = [0, 3], sizes = [8, 16], strides = [1, 1]} : vector<8x22xf32> to vector<8x16xf32>
    %c156 = arith.constant 156 : index
    %717 = memref.load %arg3[%c156] : memref<588xf32, #tpu.memory_space<smem>>
    %718 = vector.broadcast %717 : f32 to vector<8x16xf32>
    %719 = arith.mulf %718, %716 : vector<8x16xf32>
    %720 = arith.addf %707, %719 : vector<8x16xf32>
    %c157 = arith.constant 157 : index
    %721 = memref.load %arg3[%c157] : memref<588xf32, #tpu.memory_space<smem>>
    %722 = vector.broadcast %721 : f32 to vector<8x16xf32>
    %723 = arith.mulf %722, %716 : vector<8x16xf32>
    %724 = arith.addf %711, %723 : vector<8x16xf32>
    %c158 = arith.constant 158 : index
    %725 = memref.load %arg3[%c158] : memref<588xf32, #tpu.memory_space<smem>>
    %726 = vector.broadcast %725 : f32 to vector<8x16xf32>
    %727 = arith.mulf %726, %716 : vector<8x16xf32>
    %728 = arith.addf %715, %727 : vector<8x16xf32>
    %729 = vector.extract_strided_slice %676 {offsets = [0, 4], sizes = [8, 16], strides = [1, 1]} : vector<8x22xf32> to vector<8x16xf32>
    %c159 = arith.constant 159 : index
    %730 = memref.load %arg3[%c159] : memref<588xf32, #tpu.memory_space<smem>>
    %731 = vector.broadcast %730 : f32 to vector<8x16xf32>
    %732 = arith.mulf %731, %729 : vector<8x16xf32>
    %733 = arith.addf %720, %732 : vector<8x16xf32>
    %c160 = arith.constant 160 : index
    %734 = memref.load %arg3[%c160] : memref<588xf32, #tpu.memory_space<smem>>
    %735 = vector.broadcast %734 : f32 to vector<8x16xf32>
    %736 = arith.mulf %735, %729 : vector<8x16xf32>
    %737 = arith.addf %724, %736 : vector<8x16xf32>
    %c161 = arith.constant 161 : index
    %738 = memref.load %arg3[%c161] : memref<588xf32, #tpu.memory_space<smem>>
    %739 = vector.broadcast %738 : f32 to vector<8x16xf32>
    %740 = arith.mulf %739, %729 : vector<8x16xf32>
    %741 = arith.addf %728, %740 : vector<8x16xf32>
    %742 = vector.extract_strided_slice %676 {offsets = [0, 5], sizes = [8, 16], strides = [1, 1]} : vector<8x22xf32> to vector<8x16xf32>
    %c162 = arith.constant 162 : index
    %743 = memref.load %arg3[%c162] : memref<588xf32, #tpu.memory_space<smem>>
    %744 = vector.broadcast %743 : f32 to vector<8x16xf32>
    %745 = arith.mulf %744, %742 : vector<8x16xf32>
    %746 = arith.addf %733, %745 : vector<8x16xf32>
    %c163 = arith.constant 163 : index
    %747 = memref.load %arg3[%c163] : memref<588xf32, #tpu.memory_space<smem>>
    %748 = vector.broadcast %747 : f32 to vector<8x16xf32>
    %749 = arith.mulf %748, %742 : vector<8x16xf32>
    %750 = arith.addf %737, %749 : vector<8x16xf32>
    %c164 = arith.constant 164 : index
    %751 = memref.load %arg3[%c164] : memref<588xf32, #tpu.memory_space<smem>>
    %752 = vector.broadcast %751 : f32 to vector<8x16xf32>
    %753 = arith.mulf %752, %742 : vector<8x16xf32>
    %754 = arith.addf %741, %753 : vector<8x16xf32>
    %755 = vector.extract_strided_slice %676 {offsets = [0, 6], sizes = [8, 16], strides = [1, 1]} : vector<8x22xf32> to vector<8x16xf32>
    %c165 = arith.constant 165 : index
    %756 = memref.load %arg3[%c165] : memref<588xf32, #tpu.memory_space<smem>>
    %757 = vector.broadcast %756 : f32 to vector<8x16xf32>
    %758 = arith.mulf %757, %755 : vector<8x16xf32>
    %759 = arith.addf %746, %758 : vector<8x16xf32>
    %c166 = arith.constant 166 : index
    %760 = memref.load %arg3[%c166] : memref<588xf32, #tpu.memory_space<smem>>
    %761 = vector.broadcast %760 : f32 to vector<8x16xf32>
    %762 = arith.mulf %761, %755 : vector<8x16xf32>
    %763 = arith.addf %750, %762 : vector<8x16xf32>
    %c167 = arith.constant 167 : index
    %764 = memref.load %arg3[%c167] : memref<588xf32, #tpu.memory_space<smem>>
    %765 = vector.broadcast %764 : f32 to vector<8x16xf32>
    %766 = arith.mulf %765, %755 : vector<8x16xf32>
    %767 = arith.addf %754, %766 : vector<8x16xf32>
    %c1_i32_28 = arith.constant 1 : i32
    %768 = arith.addi %1, %c1_i32_28 : i32
    %c0_29 = arith.constant 0 : index
    %c1_30 = arith.constant 1 : index
    %769 = arith.index_cast %768 : i32 to index
    %c0_31 = arith.constant 0 : index
    %770 = vector.load %arg2[%c0_29, %c1_30, %769, %c0_31] : memref<1x4x22x22xf32, #tpu.memory_space<vmem>>, vector<1x1x8x22xf32>
    %771 = vector.shape_cast %770 : vector<1x1x8x22xf32> to vector<8x22xf32>
    %772 = vector.extract_strided_slice %771 {offsets = [0, 0], sizes = [8, 16], strides = [1, 1]} : vector<8x22xf32> to vector<8x16xf32>
    %c168 = arith.constant 168 : index
    %773 = memref.load %arg3[%c168] : memref<588xf32, #tpu.memory_space<smem>>
    %774 = vector.broadcast %773 : f32 to vector<8x16xf32>
    %775 = arith.mulf %774, %772 : vector<8x16xf32>
    %776 = arith.addf %759, %775 : vector<8x16xf32>
    %c169 = arith.constant 169 : index
    %777 = memref.load %arg3[%c169] : memref<588xf32, #tpu.memory_space<smem>>
    %778 = vector.broadcast %777 : f32 to vector<8x16xf32>
    %779 = arith.mulf %778, %772 : vector<8x16xf32>
    %780 = arith.addf %763, %779 : vector<8x16xf32>
    %c170 = arith.constant 170 : index
    %781 = memref.load %arg3[%c170] : memref<588xf32, #tpu.memory_space<smem>>
    %782 = vector.broadcast %781 : f32 to vector<8x16xf32>
    %783 = arith.mulf %782, %772 : vector<8x16xf32>
    %784 = arith.addf %767, %783 : vector<8x16xf32>
    %785 = vector.extract_strided_slice %771 {offsets = [0, 1], sizes = [8, 16], strides = [1, 1]} : vector<8x22xf32> to vector<8x16xf32>
    %c171 = arith.constant 171 : index
    %786 = memref.load %arg3[%c171] : memref<588xf32, #tpu.memory_space<smem>>
    %787 = vector.broadcast %786 : f32 to vector<8x16xf32>
    %788 = arith.mulf %787, %785 : vector<8x16xf32>
    %789 = arith.addf %776, %788 : vector<8x16xf32>
    %c172 = arith.constant 172 : index
    %790 = memref.load %arg3[%c172] : memref<588xf32, #tpu.memory_space<smem>>
    %791 = vector.broadcast %790 : f32 to vector<8x16xf32>
    %792 = arith.mulf %791, %785 : vector<8x16xf32>
    %793 = arith.addf %780, %792 : vector<8x16xf32>
    %c173 = arith.constant 173 : index
    %794 = memref.load %arg3[%c173] : memref<588xf32, #tpu.memory_space<smem>>
    %795 = vector.broadcast %794 : f32 to vector<8x16xf32>
    %796 = arith.mulf %795, %785 : vector<8x16xf32>
    %797 = arith.addf %784, %796 : vector<8x16xf32>
    %798 = vector.extract_strided_slice %771 {offsets = [0, 2], sizes = [8, 16], strides = [1, 1]} : vector<8x22xf32> to vector<8x16xf32>
    %c174 = arith.constant 174 : index
    %799 = memref.load %arg3[%c174] : memref<588xf32, #tpu.memory_space<smem>>
    %800 = vector.broadcast %799 : f32 to vector<8x16xf32>
    %801 = arith.mulf %800, %798 : vector<8x16xf32>
    %802 = arith.addf %789, %801 : vector<8x16xf32>
    %c175 = arith.constant 175 : index
    %803 = memref.load %arg3[%c175] : memref<588xf32, #tpu.memory_space<smem>>
    %804 = vector.broadcast %803 : f32 to vector<8x16xf32>
    %805 = arith.mulf %804, %798 : vector<8x16xf32>
    %806 = arith.addf %793, %805 : vector<8x16xf32>
    %c176 = arith.constant 176 : index
    %807 = memref.load %arg3[%c176] : memref<588xf32, #tpu.memory_space<smem>>
    %808 = vector.broadcast %807 : f32 to vector<8x16xf32>
    %809 = arith.mulf %808, %798 : vector<8x16xf32>
    %810 = arith.addf %797, %809 : vector<8x16xf32>
    %811 = vector.extract_strided_slice %771 {offsets = [0, 3], sizes = [8, 16], strides = [1, 1]} : vector<8x22xf32> to vector<8x16xf32>
    %c177 = arith.constant 177 : index
    %812 = memref.load %arg3[%c177] : memref<588xf32, #tpu.memory_space<smem>>
    %813 = vector.broadcast %812 : f32 to vector<8x16xf32>
    %814 = arith.mulf %813, %811 : vector<8x16xf32>
    %815 = arith.addf %802, %814 : vector<8x16xf32>
    %c178 = arith.constant 178 : index
    %816 = memref.load %arg3[%c178] : memref<588xf32, #tpu.memory_space<smem>>
    %817 = vector.broadcast %816 : f32 to vector<8x16xf32>
    %818 = arith.mulf %817, %811 : vector<8x16xf32>
    %819 = arith.addf %806, %818 : vector<8x16xf32>
    %c179 = arith.constant 179 : index
    %820 = memref.load %arg3[%c179] : memref<588xf32, #tpu.memory_space<smem>>
    %821 = vector.broadcast %820 : f32 to vector<8x16xf32>
    %822 = arith.mulf %821, %811 : vector<8x16xf32>
    %823 = arith.addf %810, %822 : vector<8x16xf32>
    %824 = vector.extract_strided_slice %771 {offsets = [0, 4], sizes = [8, 16], strides = [1, 1]} : vector<8x22xf32> to vector<8x16xf32>
    %c180 = arith.constant 180 : index
    %825 = memref.load %arg3[%c180] : memref<588xf32, #tpu.memory_space<smem>>
    %826 = vector.broadcast %825 : f32 to vector<8x16xf32>
    %827 = arith.mulf %826, %824 : vector<8x16xf32>
    %828 = arith.addf %815, %827 : vector<8x16xf32>
    %c181 = arith.constant 181 : index
    %829 = memref.load %arg3[%c181] : memref<588xf32, #tpu.memory_space<smem>>
    %830 = vector.broadcast %829 : f32 to vector<8x16xf32>
    %831 = arith.mulf %830, %824 : vector<8x16xf32>
    %832 = arith.addf %819, %831 : vector<8x16xf32>
    %c182 = arith.constant 182 : index
    %833 = memref.load %arg3[%c182] : memref<588xf32, #tpu.memory_space<smem>>
    %834 = vector.broadcast %833 : f32 to vector<8x16xf32>
    %835 = arith.mulf %834, %824 : vector<8x16xf32>
    %836 = arith.addf %823, %835 : vector<8x16xf32>
    %837 = vector.extract_strided_slice %771 {offsets = [0, 5], sizes = [8, 16], strides = [1, 1]} : vector<8x22xf32> to vector<8x16xf32>
    %c183 = arith.constant 183 : index
    %838 = memref.load %arg3[%c183] : memref<588xf32, #tpu.memory_space<smem>>
    %839 = vector.broadcast %838 : f32 to vector<8x16xf32>
    %840 = arith.mulf %839, %837 : vector<8x16xf32>
    %841 = arith.addf %828, %840 : vector<8x16xf32>
    %c184 = arith.constant 184 : index
    %842 = memref.load %arg3[%c184] : memref<588xf32, #tpu.memory_space<smem>>
    %843 = vector.broadcast %842 : f32 to vector<8x16xf32>
    %844 = arith.mulf %843, %837 : vector<8x16xf32>
    %845 = arith.addf %832, %844 : vector<8x16xf32>
    %c185 = arith.constant 185 : index
    %846 = memref.load %arg3[%c185] : memref<588xf32, #tpu.memory_space<smem>>
    %847 = vector.broadcast %846 : f32 to vector<8x16xf32>
    %848 = arith.mulf %847, %837 : vector<8x16xf32>
    %849 = arith.addf %836, %848 : vector<8x16xf32>
    %850 = vector.extract_strided_slice %771 {offsets = [0, 6], sizes = [8, 16], strides = [1, 1]} : vector<8x22xf32> to vector<8x16xf32>
    %c186 = arith.constant 186 : index
    %851 = memref.load %arg3[%c186] : memref<588xf32, #tpu.memory_space<smem>>
    %852 = vector.broadcast %851 : f32 to vector<8x16xf32>
    %853 = arith.mulf %852, %850 : vector<8x16xf32>
    %854 = arith.addf %841, %853 : vector<8x16xf32>
    %c187 = arith.constant 187 : index
    %855 = memref.load %arg3[%c187] : memref<588xf32, #tpu.memory_space<smem>>
    %856 = vector.broadcast %855 : f32 to vector<8x16xf32>
    %857 = arith.mulf %856, %850 : vector<8x16xf32>
    %858 = arith.addf %845, %857 : vector<8x16xf32>
    %c188 = arith.constant 188 : index
    %859 = memref.load %arg3[%c188] : memref<588xf32, #tpu.memory_space<smem>>
    %860 = vector.broadcast %859 : f32 to vector<8x16xf32>
    %861 = arith.mulf %860, %850 : vector<8x16xf32>
    %862 = arith.addf %849, %861 : vector<8x16xf32>
    %c2_i32_32 = arith.constant 2 : i32
    %863 = arith.addi %1, %c2_i32_32 : i32
    %c0_33 = arith.constant 0 : index
    %c1_34 = arith.constant 1 : index
    %864 = arith.index_cast %863 : i32 to index
    %c0_35 = arith.constant 0 : index
    %865 = vector.load %arg2[%c0_33, %c1_34, %864, %c0_35] : memref<1x4x22x22xf32, #tpu.memory_space<vmem>>, vector<1x1x8x22xf32>
    %866 = vector.shape_cast %865 : vector<1x1x8x22xf32> to vector<8x22xf32>
    %867 = vector.extract_strided_slice %866 {offsets = [0, 0], sizes = [8, 16], strides = [1, 1]} : vector<8x22xf32> to vector<8x16xf32>
    %c189 = arith.constant 189 : index
    %868 = memref.load %arg3[%c189] : memref<588xf32, #tpu.memory_space<smem>>
    %869 = vector.broadcast %868 : f32 to vector<8x16xf32>
    %870 = arith.mulf %869, %867 : vector<8x16xf32>
    %871 = arith.addf %854, %870 : vector<8x16xf32>
    %c190 = arith.constant 190 : index
    %872 = memref.load %arg3[%c190] : memref<588xf32, #tpu.memory_space<smem>>
    %873 = vector.broadcast %872 : f32 to vector<8x16xf32>
    %874 = arith.mulf %873, %867 : vector<8x16xf32>
    %875 = arith.addf %858, %874 : vector<8x16xf32>
    %c191 = arith.constant 191 : index
    %876 = memref.load %arg3[%c191] : memref<588xf32, #tpu.memory_space<smem>>
    %877 = vector.broadcast %876 : f32 to vector<8x16xf32>
    %878 = arith.mulf %877, %867 : vector<8x16xf32>
    %879 = arith.addf %862, %878 : vector<8x16xf32>
    %880 = vector.extract_strided_slice %866 {offsets = [0, 1], sizes = [8, 16], strides = [1, 1]} : vector<8x22xf32> to vector<8x16xf32>
    %c192 = arith.constant 192 : index
    %881 = memref.load %arg3[%c192] : memref<588xf32, #tpu.memory_space<smem>>
    %882 = vector.broadcast %881 : f32 to vector<8x16xf32>
    %883 = arith.mulf %882, %880 : vector<8x16xf32>
    %884 = arith.addf %871, %883 : vector<8x16xf32>
    %c193 = arith.constant 193 : index
    %885 = memref.load %arg3[%c193] : memref<588xf32, #tpu.memory_space<smem>>
    %886 = vector.broadcast %885 : f32 to vector<8x16xf32>
    %887 = arith.mulf %886, %880 : vector<8x16xf32>
    %888 = arith.addf %875, %887 : vector<8x16xf32>
    %c194 = arith.constant 194 : index
    %889 = memref.load %arg3[%c194] : memref<588xf32, #tpu.memory_space<smem>>
    %890 = vector.broadcast %889 : f32 to vector<8x16xf32>
    %891 = arith.mulf %890, %880 : vector<8x16xf32>
    %892 = arith.addf %879, %891 : vector<8x16xf32>
    %893 = vector.extract_strided_slice %866 {offsets = [0, 2], sizes = [8, 16], strides = [1, 1]} : vector<8x22xf32> to vector<8x16xf32>
    %c195 = arith.constant 195 : index
    %894 = memref.load %arg3[%c195] : memref<588xf32, #tpu.memory_space<smem>>
    %895 = vector.broadcast %894 : f32 to vector<8x16xf32>
    %896 = arith.mulf %895, %893 : vector<8x16xf32>
    %897 = arith.addf %884, %896 : vector<8x16xf32>
    %c196 = arith.constant 196 : index
    %898 = memref.load %arg3[%c196] : memref<588xf32, #tpu.memory_space<smem>>
    %899 = vector.broadcast %898 : f32 to vector<8x16xf32>
    %900 = arith.mulf %899, %893 : vector<8x16xf32>
    %901 = arith.addf %888, %900 : vector<8x16xf32>
    %c197 = arith.constant 197 : index
    %902 = memref.load %arg3[%c197] : memref<588xf32, #tpu.memory_space<smem>>
    %903 = vector.broadcast %902 : f32 to vector<8x16xf32>
    %904 = arith.mulf %903, %893 : vector<8x16xf32>
    %905 = arith.addf %892, %904 : vector<8x16xf32>
    %906 = vector.extract_strided_slice %866 {offsets = [0, 3], sizes = [8, 16], strides = [1, 1]} : vector<8x22xf32> to vector<8x16xf32>
    %c198 = arith.constant 198 : index
    %907 = memref.load %arg3[%c198] : memref<588xf32, #tpu.memory_space<smem>>
    %908 = vector.broadcast %907 : f32 to vector<8x16xf32>
    %909 = arith.mulf %908, %906 : vector<8x16xf32>
    %910 = arith.addf %897, %909 : vector<8x16xf32>
    %c199 = arith.constant 199 : index
    %911 = memref.load %arg3[%c199] : memref<588xf32, #tpu.memory_space<smem>>
    %912 = vector.broadcast %911 : f32 to vector<8x16xf32>
    %913 = arith.mulf %912, %906 : vector<8x16xf32>
    %914 = arith.addf %901, %913 : vector<8x16xf32>
    %c200 = arith.constant 200 : index
    %915 = memref.load %arg3[%c200] : memref<588xf32, #tpu.memory_space<smem>>
    %916 = vector.broadcast %915 : f32 to vector<8x16xf32>
    %917 = arith.mulf %916, %906 : vector<8x16xf32>
    %918 = arith.addf %905, %917 : vector<8x16xf32>
    %919 = vector.extract_strided_slice %866 {offsets = [0, 4], sizes = [8, 16], strides = [1, 1]} : vector<8x22xf32> to vector<8x16xf32>
    %c201 = arith.constant 201 : index
    %920 = memref.load %arg3[%c201] : memref<588xf32, #tpu.memory_space<smem>>
    %921 = vector.broadcast %920 : f32 to vector<8x16xf32>
    %922 = arith.mulf %921, %919 : vector<8x16xf32>
    %923 = arith.addf %910, %922 : vector<8x16xf32>
    %c202 = arith.constant 202 : index
    %924 = memref.load %arg3[%c202] : memref<588xf32, #tpu.memory_space<smem>>
    %925 = vector.broadcast %924 : f32 to vector<8x16xf32>
    %926 = arith.mulf %925, %919 : vector<8x16xf32>
    %927 = arith.addf %914, %926 : vector<8x16xf32>
    %c203 = arith.constant 203 : index
    %928 = memref.load %arg3[%c203] : memref<588xf32, #tpu.memory_space<smem>>
    %929 = vector.broadcast %928 : f32 to vector<8x16xf32>
    %930 = arith.mulf %929, %919 : vector<8x16xf32>
    %931 = arith.addf %918, %930 : vector<8x16xf32>
    %932 = vector.extract_strided_slice %866 {offsets = [0, 5], sizes = [8, 16], strides = [1, 1]} : vector<8x22xf32> to vector<8x16xf32>
    %c204 = arith.constant 204 : index
    %933 = memref.load %arg3[%c204] : memref<588xf32, #tpu.memory_space<smem>>
    %934 = vector.broadcast %933 : f32 to vector<8x16xf32>
    %935 = arith.mulf %934, %932 : vector<8x16xf32>
    %936 = arith.addf %923, %935 : vector<8x16xf32>
    %c205 = arith.constant 205 : index
    %937 = memref.load %arg3[%c205] : memref<588xf32, #tpu.memory_space<smem>>
    %938 = vector.broadcast %937 : f32 to vector<8x16xf32>
    %939 = arith.mulf %938, %932 : vector<8x16xf32>
    %940 = arith.addf %927, %939 : vector<8x16xf32>
    %c206 = arith.constant 206 : index
    %941 = memref.load %arg3[%c206] : memref<588xf32, #tpu.memory_space<smem>>
    %942 = vector.broadcast %941 : f32 to vector<8x16xf32>
    %943 = arith.mulf %942, %932 : vector<8x16xf32>
    %944 = arith.addf %931, %943 : vector<8x16xf32>
    %945 = vector.extract_strided_slice %866 {offsets = [0, 6], sizes = [8, 16], strides = [1, 1]} : vector<8x22xf32> to vector<8x16xf32>
    %c207 = arith.constant 207 : index
    %946 = memref.load %arg3[%c207] : memref<588xf32, #tpu.memory_space<smem>>
    %947 = vector.broadcast %946 : f32 to vector<8x16xf32>
    %948 = arith.mulf %947, %945 : vector<8x16xf32>
    %949 = arith.addf %936, %948 : vector<8x16xf32>
    %c208 = arith.constant 208 : index
    %950 = memref.load %arg3[%c208] : memref<588xf32, #tpu.memory_space<smem>>
    %951 = vector.broadcast %950 : f32 to vector<8x16xf32>
    %952 = arith.mulf %951, %945 : vector<8x16xf32>
    %953 = arith.addf %940, %952 : vector<8x16xf32>
    %c209 = arith.constant 209 : index
    %954 = memref.load %arg3[%c209] : memref<588xf32, #tpu.memory_space<smem>>
    %955 = vector.broadcast %954 : f32 to vector<8x16xf32>
    %956 = arith.mulf %955, %945 : vector<8x16xf32>
    %957 = arith.addf %944, %956 : vector<8x16xf32>
    %c3_i32_36 = arith.constant 3 : i32
    %958 = arith.addi %1, %c3_i32_36 : i32
    %c0_37 = arith.constant 0 : index
    %c1_38 = arith.constant 1 : index
    %959 = arith.index_cast %958 : i32 to index
    %c0_39 = arith.constant 0 : index
    %960 = vector.load %arg2[%c0_37, %c1_38, %959, %c0_39] : memref<1x4x22x22xf32, #tpu.memory_space<vmem>>, vector<1x1x8x22xf32>
    %961 = vector.shape_cast %960 : vector<1x1x8x22xf32> to vector<8x22xf32>
    %962 = vector.extract_strided_slice %961 {offsets = [0, 0], sizes = [8, 16], strides = [1, 1]} : vector<8x22xf32> to vector<8x16xf32>
    %c210 = arith.constant 210 : index
    %963 = memref.load %arg3[%c210] : memref<588xf32, #tpu.memory_space<smem>>
    %964 = vector.broadcast %963 : f32 to vector<8x16xf32>
    %965 = arith.mulf %964, %962 : vector<8x16xf32>
    %966 = arith.addf %949, %965 : vector<8x16xf32>
    %c211 = arith.constant 211 : index
    %967 = memref.load %arg3[%c211] : memref<588xf32, #tpu.memory_space<smem>>
    %968 = vector.broadcast %967 : f32 to vector<8x16xf32>
    %969 = arith.mulf %968, %962 : vector<8x16xf32>
    %970 = arith.addf %953, %969 : vector<8x16xf32>
    %c212 = arith.constant 212 : index
    %971 = memref.load %arg3[%c212] : memref<588xf32, #tpu.memory_space<smem>>
    %972 = vector.broadcast %971 : f32 to vector<8x16xf32>
    %973 = arith.mulf %972, %962 : vector<8x16xf32>
    %974 = arith.addf %957, %973 : vector<8x16xf32>
    %975 = vector.extract_strided_slice %961 {offsets = [0, 1], sizes = [8, 16], strides = [1, 1]} : vector<8x22xf32> to vector<8x16xf32>
    %c213 = arith.constant 213 : index
    %976 = memref.load %arg3[%c213] : memref<588xf32, #tpu.memory_space<smem>>
    %977 = vector.broadcast %976 : f32 to vector<8x16xf32>
    %978 = arith.mulf %977, %975 : vector<8x16xf32>
    %979 = arith.addf %966, %978 : vector<8x16xf32>
    %c214 = arith.constant 214 : index
    %980 = memref.load %arg3[%c214] : memref<588xf32, #tpu.memory_space<smem>>
    %981 = vector.broadcast %980 : f32 to vector<8x16xf32>
    %982 = arith.mulf %981, %975 : vector<8x16xf32>
    %983 = arith.addf %970, %982 : vector<8x16xf32>
    %c215 = arith.constant 215 : index
    %984 = memref.load %arg3[%c215] : memref<588xf32, #tpu.memory_space<smem>>
    %985 = vector.broadcast %984 : f32 to vector<8x16xf32>
    %986 = arith.mulf %985, %975 : vector<8x16xf32>
    %987 = arith.addf %974, %986 : vector<8x16xf32>
    %988 = vector.extract_strided_slice %961 {offsets = [0, 2], sizes = [8, 16], strides = [1, 1]} : vector<8x22xf32> to vector<8x16xf32>
    %c216 = arith.constant 216 : index
    %989 = memref.load %arg3[%c216] : memref<588xf32, #tpu.memory_space<smem>>
    %990 = vector.broadcast %989 : f32 to vector<8x16xf32>
    %991 = arith.mulf %990, %988 : vector<8x16xf32>
    %992 = arith.addf %979, %991 : vector<8x16xf32>
    %c217 = arith.constant 217 : index
    %993 = memref.load %arg3[%c217] : memref<588xf32, #tpu.memory_space<smem>>
    %994 = vector.broadcast %993 : f32 to vector<8x16xf32>
    %995 = arith.mulf %994, %988 : vector<8x16xf32>
    %996 = arith.addf %983, %995 : vector<8x16xf32>
    %c218 = arith.constant 218 : index
    %997 = memref.load %arg3[%c218] : memref<588xf32, #tpu.memory_space<smem>>
    %998 = vector.broadcast %997 : f32 to vector<8x16xf32>
    %999 = arith.mulf %998, %988 : vector<8x16xf32>
    %1000 = arith.addf %987, %999 : vector<8x16xf32>
    %1001 = vector.extract_strided_slice %961 {offsets = [0, 3], sizes = [8, 16], strides = [1, 1]} : vector<8x22xf32> to vector<8x16xf32>
    %c219 = arith.constant 219 : index
    %1002 = memref.load %arg3[%c219] : memref<588xf32, #tpu.memory_space<smem>>
    %1003 = vector.broadcast %1002 : f32 to vector<8x16xf32>
    %1004 = arith.mulf %1003, %1001 : vector<8x16xf32>
    %1005 = arith.addf %992, %1004 : vector<8x16xf32>
    %c220 = arith.constant 220 : index
    %1006 = memref.load %arg3[%c220] : memref<588xf32, #tpu.memory_space<smem>>
    %1007 = vector.broadcast %1006 : f32 to vector<8x16xf32>
    %1008 = arith.mulf %1007, %1001 : vector<8x16xf32>
    %1009 = arith.addf %996, %1008 : vector<8x16xf32>
    %c221 = arith.constant 221 : index
    %1010 = memref.load %arg3[%c221] : memref<588xf32, #tpu.memory_space<smem>>
    %1011 = vector.broadcast %1010 : f32 to vector<8x16xf32>
    %1012 = arith.mulf %1011, %1001 : vector<8x16xf32>
    %1013 = arith.addf %1000, %1012 : vector<8x16xf32>
    %1014 = vector.extract_strided_slice %961 {offsets = [0, 4], sizes = [8, 16], strides = [1, 1]} : vector<8x22xf32> to vector<8x16xf32>
    %c222 = arith.constant 222 : index
    %1015 = memref.load %arg3[%c222] : memref<588xf32, #tpu.memory_space<smem>>
    %1016 = vector.broadcast %1015 : f32 to vector<8x16xf32>
    %1017 = arith.mulf %1016, %1014 : vector<8x16xf32>
    %1018 = arith.addf %1005, %1017 : vector<8x16xf32>
    %c223 = arith.constant 223 : index
    %1019 = memref.load %arg3[%c223] : memref<588xf32, #tpu.memory_space<smem>>
    %1020 = vector.broadcast %1019 : f32 to vector<8x16xf32>
    %1021 = arith.mulf %1020, %1014 : vector<8x16xf32>
    %1022 = arith.addf %1009, %1021 : vector<8x16xf32>
    %c224 = arith.constant 224 : index
    %1023 = memref.load %arg3[%c224] : memref<588xf32, #tpu.memory_space<smem>>
    %1024 = vector.broadcast %1023 : f32 to vector<8x16xf32>
    %1025 = arith.mulf %1024, %1014 : vector<8x16xf32>
    %1026 = arith.addf %1013, %1025 : vector<8x16xf32>
    %1027 = vector.extract_strided_slice %961 {offsets = [0, 5], sizes = [8, 16], strides = [1, 1]} : vector<8x22xf32> to vector<8x16xf32>
    %c225 = arith.constant 225 : index
    %1028 = memref.load %arg3[%c225] : memref<588xf32, #tpu.memory_space<smem>>
    %1029 = vector.broadcast %1028 : f32 to vector<8x16xf32>
    %1030 = arith.mulf %1029, %1027 : vector<8x16xf32>
    %1031 = arith.addf %1018, %1030 : vector<8x16xf32>
    %c226 = arith.constant 226 : index
    %1032 = memref.load %arg3[%c226] : memref<588xf32, #tpu.memory_space<smem>>
    %1033 = vector.broadcast %1032 : f32 to vector<8x16xf32>
    %1034 = arith.mulf %1033, %1027 : vector<8x16xf32>
    %1035 = arith.addf %1022, %1034 : vector<8x16xf32>
    %c227 = arith.constant 227 : index
    %1036 = memref.load %arg3[%c227] : memref<588xf32, #tpu.memory_space<smem>>
    %1037 = vector.broadcast %1036 : f32 to vector<8x16xf32>
    %1038 = arith.mulf %1037, %1027 : vector<8x16xf32>
    %1039 = arith.addf %1026, %1038 : vector<8x16xf32>
    %1040 = vector.extract_strided_slice %961 {offsets = [0, 6], sizes = [8, 16], strides = [1, 1]} : vector<8x22xf32> to vector<8x16xf32>
    %c228 = arith.constant 228 : index
    %1041 = memref.load %arg3[%c228] : memref<588xf32, #tpu.memory_space<smem>>
    %1042 = vector.broadcast %1041 : f32 to vector<8x16xf32>
    %1043 = arith.mulf %1042, %1040 : vector<8x16xf32>
    %1044 = arith.addf %1031, %1043 : vector<8x16xf32>
    %c229 = arith.constant 229 : index
    %1045 = memref.load %arg3[%c229] : memref<588xf32, #tpu.memory_space<smem>>
    %1046 = vector.broadcast %1045 : f32 to vector<8x16xf32>
    %1047 = arith.mulf %1046, %1040 : vector<8x16xf32>
    %1048 = arith.addf %1035, %1047 : vector<8x16xf32>
    %c230 = arith.constant 230 : index
    %1049 = memref.load %arg3[%c230] : memref<588xf32, #tpu.memory_space<smem>>
    %1050 = vector.broadcast %1049 : f32 to vector<8x16xf32>
    %1051 = arith.mulf %1050, %1040 : vector<8x16xf32>
    %1052 = arith.addf %1039, %1051 : vector<8x16xf32>
    %c4_i32_40 = arith.constant 4 : i32
    %1053 = arith.addi %1, %c4_i32_40 : i32
    %c0_41 = arith.constant 0 : index
    %c1_42 = arith.constant 1 : index
    %1054 = arith.index_cast %1053 : i32 to index
    %c0_43 = arith.constant 0 : index
    %1055 = vector.load %arg2[%c0_41, %c1_42, %1054, %c0_43] : memref<1x4x22x22xf32, #tpu.memory_space<vmem>>, vector<1x1x8x22xf32>
    %1056 = vector.shape_cast %1055 : vector<1x1x8x22xf32> to vector<8x22xf32>
    %1057 = vector.extract_strided_slice %1056 {offsets = [0, 0], sizes = [8, 16], strides = [1, 1]} : vector<8x22xf32> to vector<8x16xf32>
    %c231 = arith.constant 231 : index
    %1058 = memref.load %arg3[%c231] : memref<588xf32, #tpu.memory_space<smem>>
    %1059 = vector.broadcast %1058 : f32 to vector<8x16xf32>
    %1060 = arith.mulf %1059, %1057 : vector<8x16xf32>
    %1061 = arith.addf %1044, %1060 : vector<8x16xf32>
    %c232 = arith.constant 232 : index
    %1062 = memref.load %arg3[%c232] : memref<588xf32, #tpu.memory_space<smem>>
    %1063 = vector.broadcast %1062 : f32 to vector<8x16xf32>
    %1064 = arith.mulf %1063, %1057 : vector<8x16xf32>
    %1065 = arith.addf %1048, %1064 : vector<8x16xf32>
    %c233 = arith.constant 233 : index
    %1066 = memref.load %arg3[%c233] : memref<588xf32, #tpu.memory_space<smem>>
    %1067 = vector.broadcast %1066 : f32 to vector<8x16xf32>
    %1068 = arith.mulf %1067, %1057 : vector<8x16xf32>
    %1069 = arith.addf %1052, %1068 : vector<8x16xf32>
    %1070 = vector.extract_strided_slice %1056 {offsets = [0, 1], sizes = [8, 16], strides = [1, 1]} : vector<8x22xf32> to vector<8x16xf32>
    %c234 = arith.constant 234 : index
    %1071 = memref.load %arg3[%c234] : memref<588xf32, #tpu.memory_space<smem>>
    %1072 = vector.broadcast %1071 : f32 to vector<8x16xf32>
    %1073 = arith.mulf %1072, %1070 : vector<8x16xf32>
    %1074 = arith.addf %1061, %1073 : vector<8x16xf32>
    %c235 = arith.constant 235 : index
    %1075 = memref.load %arg3[%c235] : memref<588xf32, #tpu.memory_space<smem>>
    %1076 = vector.broadcast %1075 : f32 to vector<8x16xf32>
    %1077 = arith.mulf %1076, %1070 : vector<8x16xf32>
    %1078 = arith.addf %1065, %1077 : vector<8x16xf32>
    %c236 = arith.constant 236 : index
    %1079 = memref.load %arg3[%c236] : memref<588xf32, #tpu.memory_space<smem>>
    %1080 = vector.broadcast %1079 : f32 to vector<8x16xf32>
    %1081 = arith.mulf %1080, %1070 : vector<8x16xf32>
    %1082 = arith.addf %1069, %1081 : vector<8x16xf32>
    %1083 = vector.extract_strided_slice %1056 {offsets = [0, 2], sizes = [8, 16], strides = [1, 1]} : vector<8x22xf32> to vector<8x16xf32>
    %c237 = arith.constant 237 : index
    %1084 = memref.load %arg3[%c237] : memref<588xf32, #tpu.memory_space<smem>>
    %1085 = vector.broadcast %1084 : f32 to vector<8x16xf32>
    %1086 = arith.mulf %1085, %1083 : vector<8x16xf32>
    %1087 = arith.addf %1074, %1086 : vector<8x16xf32>
    %c238 = arith.constant 238 : index
    %1088 = memref.load %arg3[%c238] : memref<588xf32, #tpu.memory_space<smem>>
    %1089 = vector.broadcast %1088 : f32 to vector<8x16xf32>
    %1090 = arith.mulf %1089, %1083 : vector<8x16xf32>
    %1091 = arith.addf %1078, %1090 : vector<8x16xf32>
    %c239 = arith.constant 239 : index
    %1092 = memref.load %arg3[%c239] : memref<588xf32, #tpu.memory_space<smem>>
    %1093 = vector.broadcast %1092 : f32 to vector<8x16xf32>
    %1094 = arith.mulf %1093, %1083 : vector<8x16xf32>
    %1095 = arith.addf %1082, %1094 : vector<8x16xf32>
    %1096 = vector.extract_strided_slice %1056 {offsets = [0, 3], sizes = [8, 16], strides = [1, 1]} : vector<8x22xf32> to vector<8x16xf32>
    %c240 = arith.constant 240 : index
    %1097 = memref.load %arg3[%c240] : memref<588xf32, #tpu.memory_space<smem>>
    %1098 = vector.broadcast %1097 : f32 to vector<8x16xf32>
    %1099 = arith.mulf %1098, %1096 : vector<8x16xf32>
    %1100 = arith.addf %1087, %1099 : vector<8x16xf32>
    %c241 = arith.constant 241 : index
    %1101 = memref.load %arg3[%c241] : memref<588xf32, #tpu.memory_space<smem>>
    %1102 = vector.broadcast %1101 : f32 to vector<8x16xf32>
    %1103 = arith.mulf %1102, %1096 : vector<8x16xf32>
    %1104 = arith.addf %1091, %1103 : vector<8x16xf32>
    %c242 = arith.constant 242 : index
    %1105 = memref.load %arg3[%c242] : memref<588xf32, #tpu.memory_space<smem>>
    %1106 = vector.broadcast %1105 : f32 to vector<8x16xf32>
    %1107 = arith.mulf %1106, %1096 : vector<8x16xf32>
    %1108 = arith.addf %1095, %1107 : vector<8x16xf32>
    %1109 = vector.extract_strided_slice %1056 {offsets = [0, 4], sizes = [8, 16], strides = [1, 1]} : vector<8x22xf32> to vector<8x16xf32>
    %c243 = arith.constant 243 : index
    %1110 = memref.load %arg3[%c243] : memref<588xf32, #tpu.memory_space<smem>>
    %1111 = vector.broadcast %1110 : f32 to vector<8x16xf32>
    %1112 = arith.mulf %1111, %1109 : vector<8x16xf32>
    %1113 = arith.addf %1100, %1112 : vector<8x16xf32>
    %c244 = arith.constant 244 : index
    %1114 = memref.load %arg3[%c244] : memref<588xf32, #tpu.memory_space<smem>>
    %1115 = vector.broadcast %1114 : f32 to vector<8x16xf32>
    %1116 = arith.mulf %1115, %1109 : vector<8x16xf32>
    %1117 = arith.addf %1104, %1116 : vector<8x16xf32>
    %c245 = arith.constant 245 : index
    %1118 = memref.load %arg3[%c245] : memref<588xf32, #tpu.memory_space<smem>>
    %1119 = vector.broadcast %1118 : f32 to vector<8x16xf32>
    %1120 = arith.mulf %1119, %1109 : vector<8x16xf32>
    %1121 = arith.addf %1108, %1120 : vector<8x16xf32>
    %1122 = vector.extract_strided_slice %1056 {offsets = [0, 5], sizes = [8, 16], strides = [1, 1]} : vector<8x22xf32> to vector<8x16xf32>
    %c246 = arith.constant 246 : index
    %1123 = memref.load %arg3[%c246] : memref<588xf32, #tpu.memory_space<smem>>
    %1124 = vector.broadcast %1123 : f32 to vector<8x16xf32>
    %1125 = arith.mulf %1124, %1122 : vector<8x16xf32>
    %1126 = arith.addf %1113, %1125 : vector<8x16xf32>
    %c247 = arith.constant 247 : index
    %1127 = memref.load %arg3[%c247] : memref<588xf32, #tpu.memory_space<smem>>
    %1128 = vector.broadcast %1127 : f32 to vector<8x16xf32>
    %1129 = arith.mulf %1128, %1122 : vector<8x16xf32>
    %1130 = arith.addf %1117, %1129 : vector<8x16xf32>
    %c248 = arith.constant 248 : index
    %1131 = memref.load %arg3[%c248] : memref<588xf32, #tpu.memory_space<smem>>
    %1132 = vector.broadcast %1131 : f32 to vector<8x16xf32>
    %1133 = arith.mulf %1132, %1122 : vector<8x16xf32>
    %1134 = arith.addf %1121, %1133 : vector<8x16xf32>
    %1135 = vector.extract_strided_slice %1056 {offsets = [0, 6], sizes = [8, 16], strides = [1, 1]} : vector<8x22xf32> to vector<8x16xf32>
    %c249 = arith.constant 249 : index
    %1136 = memref.load %arg3[%c249] : memref<588xf32, #tpu.memory_space<smem>>
    %1137 = vector.broadcast %1136 : f32 to vector<8x16xf32>
    %1138 = arith.mulf %1137, %1135 : vector<8x16xf32>
    %1139 = arith.addf %1126, %1138 : vector<8x16xf32>
    %c250 = arith.constant 250 : index
    %1140 = memref.load %arg3[%c250] : memref<588xf32, #tpu.memory_space<smem>>
    %1141 = vector.broadcast %1140 : f32 to vector<8x16xf32>
    %1142 = arith.mulf %1141, %1135 : vector<8x16xf32>
    %1143 = arith.addf %1130, %1142 : vector<8x16xf32>
    %c251 = arith.constant 251 : index
    %1144 = memref.load %arg3[%c251] : memref<588xf32, #tpu.memory_space<smem>>
    %1145 = vector.broadcast %1144 : f32 to vector<8x16xf32>
    %1146 = arith.mulf %1145, %1135 : vector<8x16xf32>
    %1147 = arith.addf %1134, %1146 : vector<8x16xf32>
    %c5_i32_44 = arith.constant 5 : i32
    %1148 = arith.addi %1, %c5_i32_44 : i32
    %c0_45 = arith.constant 0 : index
    %c1_46 = arith.constant 1 : index
    %1149 = arith.index_cast %1148 : i32 to index
    %c0_47 = arith.constant 0 : index
    %1150 = vector.load %arg2[%c0_45, %c1_46, %1149, %c0_47] : memref<1x4x22x22xf32, #tpu.memory_space<vmem>>, vector<1x1x8x22xf32>
    %1151 = vector.shape_cast %1150 : vector<1x1x8x22xf32> to vector<8x22xf32>
    %1152 = vector.extract_strided_slice %1151 {offsets = [0, 0], sizes = [8, 16], strides = [1, 1]} : vector<8x22xf32> to vector<8x16xf32>
    %c252 = arith.constant 252 : index
    %1153 = memref.load %arg3[%c252] : memref<588xf32, #tpu.memory_space<smem>>
    %1154 = vector.broadcast %1153 : f32 to vector<8x16xf32>
    %1155 = arith.mulf %1154, %1152 : vector<8x16xf32>
    %1156 = arith.addf %1139, %1155 : vector<8x16xf32>
    %c253 = arith.constant 253 : index
    %1157 = memref.load %arg3[%c253] : memref<588xf32, #tpu.memory_space<smem>>
    %1158 = vector.broadcast %1157 : f32 to vector<8x16xf32>
    %1159 = arith.mulf %1158, %1152 : vector<8x16xf32>
    %1160 = arith.addf %1143, %1159 : vector<8x16xf32>
    %c254 = arith.constant 254 : index
    %1161 = memref.load %arg3[%c254] : memref<588xf32, #tpu.memory_space<smem>>
    %1162 = vector.broadcast %1161 : f32 to vector<8x16xf32>
    %1163 = arith.mulf %1162, %1152 : vector<8x16xf32>
    %1164 = arith.addf %1147, %1163 : vector<8x16xf32>
    %1165 = vector.extract_strided_slice %1151 {offsets = [0, 1], sizes = [8, 16], strides = [1, 1]} : vector<8x22xf32> to vector<8x16xf32>
    %c255 = arith.constant 255 : index
    %1166 = memref.load %arg3[%c255] : memref<588xf32, #tpu.memory_space<smem>>
    %1167 = vector.broadcast %1166 : f32 to vector<8x16xf32>
    %1168 = arith.mulf %1167, %1165 : vector<8x16xf32>
    %1169 = arith.addf %1156, %1168 : vector<8x16xf32>
    %c256 = arith.constant 256 : index
    %1170 = memref.load %arg3[%c256] : memref<588xf32, #tpu.memory_space<smem>>
    %1171 = vector.broadcast %1170 : f32 to vector<8x16xf32>
    %1172 = arith.mulf %1171, %1165 : vector<8x16xf32>
    %1173 = arith.addf %1160, %1172 : vector<8x16xf32>
    %c257 = arith.constant 257 : index
    %1174 = memref.load %arg3[%c257] : memref<588xf32, #tpu.memory_space<smem>>
    %1175 = vector.broadcast %1174 : f32 to vector<8x16xf32>
    %1176 = arith.mulf %1175, %1165 : vector<8x16xf32>
    %1177 = arith.addf %1164, %1176 : vector<8x16xf32>
    %1178 = vector.extract_strided_slice %1151 {offsets = [0, 2], sizes = [8, 16], strides = [1, 1]} : vector<8x22xf32> to vector<8x16xf32>
    %c258 = arith.constant 258 : index
    %1179 = memref.load %arg3[%c258] : memref<588xf32, #tpu.memory_space<smem>>
    %1180 = vector.broadcast %1179 : f32 to vector<8x16xf32>
    %1181 = arith.mulf %1180, %1178 : vector<8x16xf32>
    %1182 = arith.addf %1169, %1181 : vector<8x16xf32>
    %c259 = arith.constant 259 : index
    %1183 = memref.load %arg3[%c259] : memref<588xf32, #tpu.memory_space<smem>>
    %1184 = vector.broadcast %1183 : f32 to vector<8x16xf32>
    %1185 = arith.mulf %1184, %1178 : vector<8x16xf32>
    %1186 = arith.addf %1173, %1185 : vector<8x16xf32>
    %c260 = arith.constant 260 : index
    %1187 = memref.load %arg3[%c260] : memref<588xf32, #tpu.memory_space<smem>>
    %1188 = vector.broadcast %1187 : f32 to vector<8x16xf32>
    %1189 = arith.mulf %1188, %1178 : vector<8x16xf32>
    %1190 = arith.addf %1177, %1189 : vector<8x16xf32>
    %1191 = vector.extract_strided_slice %1151 {offsets = [0, 3], sizes = [8, 16], strides = [1, 1]} : vector<8x22xf32> to vector<8x16xf32>
    %c261 = arith.constant 261 : index
    %1192 = memref.load %arg3[%c261] : memref<588xf32, #tpu.memory_space<smem>>
    %1193 = vector.broadcast %1192 : f32 to vector<8x16xf32>
    %1194 = arith.mulf %1193, %1191 : vector<8x16xf32>
    %1195 = arith.addf %1182, %1194 : vector<8x16xf32>
    %c262 = arith.constant 262 : index
    %1196 = memref.load %arg3[%c262] : memref<588xf32, #tpu.memory_space<smem>>
    %1197 = vector.broadcast %1196 : f32 to vector<8x16xf32>
    %1198 = arith.mulf %1197, %1191 : vector<8x16xf32>
    %1199 = arith.addf %1186, %1198 : vector<8x16xf32>
    %c263 = arith.constant 263 : index
    %1200 = memref.load %arg3[%c263] : memref<588xf32, #tpu.memory_space<smem>>
    %1201 = vector.broadcast %1200 : f32 to vector<8x16xf32>
    %1202 = arith.mulf %1201, %1191 : vector<8x16xf32>
    %1203 = arith.addf %1190, %1202 : vector<8x16xf32>
    %1204 = vector.extract_strided_slice %1151 {offsets = [0, 4], sizes = [8, 16], strides = [1, 1]} : vector<8x22xf32> to vector<8x16xf32>
    %c264 = arith.constant 264 : index
    %1205 = memref.load %arg3[%c264] : memref<588xf32, #tpu.memory_space<smem>>
    %1206 = vector.broadcast %1205 : f32 to vector<8x16xf32>
    %1207 = arith.mulf %1206, %1204 : vector<8x16xf32>
    %1208 = arith.addf %1195, %1207 : vector<8x16xf32>
    %c265 = arith.constant 265 : index
    %1209 = memref.load %arg3[%c265] : memref<588xf32, #tpu.memory_space<smem>>
    %1210 = vector.broadcast %1209 : f32 to vector<8x16xf32>
    %1211 = arith.mulf %1210, %1204 : vector<8x16xf32>
    %1212 = arith.addf %1199, %1211 : vector<8x16xf32>
    %c266 = arith.constant 266 : index
    %1213 = memref.load %arg3[%c266] : memref<588xf32, #tpu.memory_space<smem>>
    %1214 = vector.broadcast %1213 : f32 to vector<8x16xf32>
    %1215 = arith.mulf %1214, %1204 : vector<8x16xf32>
    %1216 = arith.addf %1203, %1215 : vector<8x16xf32>
    %1217 = vector.extract_strided_slice %1151 {offsets = [0, 5], sizes = [8, 16], strides = [1, 1]} : vector<8x22xf32> to vector<8x16xf32>
    %c267 = arith.constant 267 : index
    %1218 = memref.load %arg3[%c267] : memref<588xf32, #tpu.memory_space<smem>>
    %1219 = vector.broadcast %1218 : f32 to vector<8x16xf32>
    %1220 = arith.mulf %1219, %1217 : vector<8x16xf32>
    %1221 = arith.addf %1208, %1220 : vector<8x16xf32>
    %c268 = arith.constant 268 : index
    %1222 = memref.load %arg3[%c268] : memref<588xf32, #tpu.memory_space<smem>>
    %1223 = vector.broadcast %1222 : f32 to vector<8x16xf32>
    %1224 = arith.mulf %1223, %1217 : vector<8x16xf32>
    %1225 = arith.addf %1212, %1224 : vector<8x16xf32>
    %c269 = arith.constant 269 : index
    %1226 = memref.load %arg3[%c269] : memref<588xf32, #tpu.memory_space<smem>>
    %1227 = vector.broadcast %1226 : f32 to vector<8x16xf32>
    %1228 = arith.mulf %1227, %1217 : vector<8x16xf32>
    %1229 = arith.addf %1216, %1228 : vector<8x16xf32>
    %1230 = vector.extract_strided_slice %1151 {offsets = [0, 6], sizes = [8, 16], strides = [1, 1]} : vector<8x22xf32> to vector<8x16xf32>
    %c270 = arith.constant 270 : index
    %1231 = memref.load %arg3[%c270] : memref<588xf32, #tpu.memory_space<smem>>
    %1232 = vector.broadcast %1231 : f32 to vector<8x16xf32>
    %1233 = arith.mulf %1232, %1230 : vector<8x16xf32>
    %1234 = arith.addf %1221, %1233 : vector<8x16xf32>
    %c271 = arith.constant 271 : index
    %1235 = memref.load %arg3[%c271] : memref<588xf32, #tpu.memory_space<smem>>
    %1236 = vector.broadcast %1235 : f32 to vector<8x16xf32>
    %1237 = arith.mulf %1236, %1230 : vector<8x16xf32>
    %1238 = arith.addf %1225, %1237 : vector<8x16xf32>
    %c272 = arith.constant 272 : index
    %1239 = memref.load %arg3[%c272] : memref<588xf32, #tpu.memory_space<smem>>
    %1240 = vector.broadcast %1239 : f32 to vector<8x16xf32>
    %1241 = arith.mulf %1240, %1230 : vector<8x16xf32>
    %1242 = arith.addf %1229, %1241 : vector<8x16xf32>
    %c6_i32_48 = arith.constant 6 : i32
    %1243 = arith.addi %1, %c6_i32_48 : i32
    %c0_49 = arith.constant 0 : index
    %c1_50 = arith.constant 1 : index
    %1244 = arith.index_cast %1243 : i32 to index
    %c0_51 = arith.constant 0 : index
    %1245 = vector.load %arg2[%c0_49, %c1_50, %1244, %c0_51] : memref<1x4x22x22xf32, #tpu.memory_space<vmem>>, vector<1x1x8x22xf32>
    %1246 = vector.shape_cast %1245 : vector<1x1x8x22xf32> to vector<8x22xf32>
    %1247 = vector.extract_strided_slice %1246 {offsets = [0, 0], sizes = [8, 16], strides = [1, 1]} : vector<8x22xf32> to vector<8x16xf32>
    %c273 = arith.constant 273 : index
    %1248 = memref.load %arg3[%c273] : memref<588xf32, #tpu.memory_space<smem>>
    %1249 = vector.broadcast %1248 : f32 to vector<8x16xf32>
    %1250 = arith.mulf %1249, %1247 : vector<8x16xf32>
    %1251 = arith.addf %1234, %1250 : vector<8x16xf32>
    %c274 = arith.constant 274 : index
    %1252 = memref.load %arg3[%c274] : memref<588xf32, #tpu.memory_space<smem>>
    %1253 = vector.broadcast %1252 : f32 to vector<8x16xf32>
    %1254 = arith.mulf %1253, %1247 : vector<8x16xf32>
    %1255 = arith.addf %1238, %1254 : vector<8x16xf32>
    %c275 = arith.constant 275 : index
    %1256 = memref.load %arg3[%c275] : memref<588xf32, #tpu.memory_space<smem>>
    %1257 = vector.broadcast %1256 : f32 to vector<8x16xf32>
    %1258 = arith.mulf %1257, %1247 : vector<8x16xf32>
    %1259 = arith.addf %1242, %1258 : vector<8x16xf32>
    %1260 = vector.extract_strided_slice %1246 {offsets = [0, 1], sizes = [8, 16], strides = [1, 1]} : vector<8x22xf32> to vector<8x16xf32>
    %c276 = arith.constant 276 : index
    %1261 = memref.load %arg3[%c276] : memref<588xf32, #tpu.memory_space<smem>>
    %1262 = vector.broadcast %1261 : f32 to vector<8x16xf32>
    %1263 = arith.mulf %1262, %1260 : vector<8x16xf32>
    %1264 = arith.addf %1251, %1263 : vector<8x16xf32>
    %c277 = arith.constant 277 : index
    %1265 = memref.load %arg3[%c277] : memref<588xf32, #tpu.memory_space<smem>>
    %1266 = vector.broadcast %1265 : f32 to vector<8x16xf32>
    %1267 = arith.mulf %1266, %1260 : vector<8x16xf32>
    %1268 = arith.addf %1255, %1267 : vector<8x16xf32>
    %c278 = arith.constant 278 : index
    %1269 = memref.load %arg3[%c278] : memref<588xf32, #tpu.memory_space<smem>>
    %1270 = vector.broadcast %1269 : f32 to vector<8x16xf32>
    %1271 = arith.mulf %1270, %1260 : vector<8x16xf32>
    %1272 = arith.addf %1259, %1271 : vector<8x16xf32>
    %1273 = vector.extract_strided_slice %1246 {offsets = [0, 2], sizes = [8, 16], strides = [1, 1]} : vector<8x22xf32> to vector<8x16xf32>
    %c279 = arith.constant 279 : index
    %1274 = memref.load %arg3[%c279] : memref<588xf32, #tpu.memory_space<smem>>
    %1275 = vector.broadcast %1274 : f32 to vector<8x16xf32>
    %1276 = arith.mulf %1275, %1273 : vector<8x16xf32>
    %1277 = arith.addf %1264, %1276 : vector<8x16xf32>
    %c280 = arith.constant 280 : index
    %1278 = memref.load %arg3[%c280] : memref<588xf32, #tpu.memory_space<smem>>
    %1279 = vector.broadcast %1278 : f32 to vector<8x16xf32>
    %1280 = arith.mulf %1279, %1273 : vector<8x16xf32>
    %1281 = arith.addf %1268, %1280 : vector<8x16xf32>
    %c281 = arith.constant 281 : index
    %1282 = memref.load %arg3[%c281] : memref<588xf32, #tpu.memory_space<smem>>
    %1283 = vector.broadcast %1282 : f32 to vector<8x16xf32>
    %1284 = arith.mulf %1283, %1273 : vector<8x16xf32>
    %1285 = arith.addf %1272, %1284 : vector<8x16xf32>
    %1286 = vector.extract_strided_slice %1246 {offsets = [0, 3], sizes = [8, 16], strides = [1, 1]} : vector<8x22xf32> to vector<8x16xf32>
    %c282 = arith.constant 282 : index
    %1287 = memref.load %arg3[%c282] : memref<588xf32, #tpu.memory_space<smem>>
    %1288 = vector.broadcast %1287 : f32 to vector<8x16xf32>
    %1289 = arith.mulf %1288, %1286 : vector<8x16xf32>
    %1290 = arith.addf %1277, %1289 : vector<8x16xf32>
    %c283 = arith.constant 283 : index
    %1291 = memref.load %arg3[%c283] : memref<588xf32, #tpu.memory_space<smem>>
    %1292 = vector.broadcast %1291 : f32 to vector<8x16xf32>
    %1293 = arith.mulf %1292, %1286 : vector<8x16xf32>
    %1294 = arith.addf %1281, %1293 : vector<8x16xf32>
    %c284 = arith.constant 284 : index
    %1295 = memref.load %arg3[%c284] : memref<588xf32, #tpu.memory_space<smem>>
    %1296 = vector.broadcast %1295 : f32 to vector<8x16xf32>
    %1297 = arith.mulf %1296, %1286 : vector<8x16xf32>
    %1298 = arith.addf %1285, %1297 : vector<8x16xf32>
    %1299 = vector.extract_strided_slice %1246 {offsets = [0, 4], sizes = [8, 16], strides = [1, 1]} : vector<8x22xf32> to vector<8x16xf32>
    %c285 = arith.constant 285 : index
    %1300 = memref.load %arg3[%c285] : memref<588xf32, #tpu.memory_space<smem>>
    %1301 = vector.broadcast %1300 : f32 to vector<8x16xf32>
    %1302 = arith.mulf %1301, %1299 : vector<8x16xf32>
    %1303 = arith.addf %1290, %1302 : vector<8x16xf32>
    %c286 = arith.constant 286 : index
    %1304 = memref.load %arg3[%c286] : memref<588xf32, #tpu.memory_space<smem>>
    %1305 = vector.broadcast %1304 : f32 to vector<8x16xf32>
    %1306 = arith.mulf %1305, %1299 : vector<8x16xf32>
    %1307 = arith.addf %1294, %1306 : vector<8x16xf32>
    %c287 = arith.constant 287 : index
    %1308 = memref.load %arg3[%c287] : memref<588xf32, #tpu.memory_space<smem>>
    %1309 = vector.broadcast %1308 : f32 to vector<8x16xf32>
    %1310 = arith.mulf %1309, %1299 : vector<8x16xf32>
    %1311 = arith.addf %1298, %1310 : vector<8x16xf32>
    %1312 = vector.extract_strided_slice %1246 {offsets = [0, 5], sizes = [8, 16], strides = [1, 1]} : vector<8x22xf32> to vector<8x16xf32>
    %c288 = arith.constant 288 : index
    %1313 = memref.load %arg3[%c288] : memref<588xf32, #tpu.memory_space<smem>>
    %1314 = vector.broadcast %1313 : f32 to vector<8x16xf32>
    %1315 = arith.mulf %1314, %1312 : vector<8x16xf32>
    %1316 = arith.addf %1303, %1315 : vector<8x16xf32>
    %c289 = arith.constant 289 : index
    %1317 = memref.load %arg3[%c289] : memref<588xf32, #tpu.memory_space<smem>>
    %1318 = vector.broadcast %1317 : f32 to vector<8x16xf32>
    %1319 = arith.mulf %1318, %1312 : vector<8x16xf32>
    %1320 = arith.addf %1307, %1319 : vector<8x16xf32>
    %c290 = arith.constant 290 : index
    %1321 = memref.load %arg3[%c290] : memref<588xf32, #tpu.memory_space<smem>>
    %1322 = vector.broadcast %1321 : f32 to vector<8x16xf32>
    %1323 = arith.mulf %1322, %1312 : vector<8x16xf32>
    %1324 = arith.addf %1311, %1323 : vector<8x16xf32>
    %1325 = vector.extract_strided_slice %1246 {offsets = [0, 6], sizes = [8, 16], strides = [1, 1]} : vector<8x22xf32> to vector<8x16xf32>
    %c291 = arith.constant 291 : index
    %1326 = memref.load %arg3[%c291] : memref<588xf32, #tpu.memory_space<smem>>
    %1327 = vector.broadcast %1326 : f32 to vector<8x16xf32>
    %1328 = arith.mulf %1327, %1325 : vector<8x16xf32>
    %1329 = arith.addf %1316, %1328 : vector<8x16xf32>
    %c292 = arith.constant 292 : index
    %1330 = memref.load %arg3[%c292] : memref<588xf32, #tpu.memory_space<smem>>
    %1331 = vector.broadcast %1330 : f32 to vector<8x16xf32>
    %1332 = arith.mulf %1331, %1325 : vector<8x16xf32>
    %1333 = arith.addf %1320, %1332 : vector<8x16xf32>
    %c293 = arith.constant 293 : index
    %1334 = memref.load %arg3[%c293] : memref<588xf32, #tpu.memory_space<smem>>
    %1335 = vector.broadcast %1334 : f32 to vector<8x16xf32>
    %1336 = arith.mulf %1335, %1325 : vector<8x16xf32>
    %1337 = arith.addf %1324, %1336 : vector<8x16xf32>
    %c0_i32_52 = arith.constant 0 : i32
    %1338 = arith.addi %1, %c0_i32_52 : i32
    %c0_53 = arith.constant 0 : index
    %c2_54 = arith.constant 2 : index
    %1339 = arith.index_cast %1338 : i32 to index
    %c0_55 = arith.constant 0 : index
    %1340 = vector.load %arg2[%c0_53, %c2_54, %1339, %c0_55] : memref<1x4x22x22xf32, #tpu.memory_space<vmem>>, vector<1x1x8x22xf32>
    %1341 = vector.shape_cast %1340 : vector<1x1x8x22xf32> to vector<8x22xf32>
    %1342 = vector.extract_strided_slice %1341 {offsets = [0, 0], sizes = [8, 16], strides = [1, 1]} : vector<8x22xf32> to vector<8x16xf32>
    %c294 = arith.constant 294 : index
    %1343 = memref.load %arg3[%c294] : memref<588xf32, #tpu.memory_space<smem>>
    %1344 = vector.broadcast %1343 : f32 to vector<8x16xf32>
    %1345 = arith.mulf %1344, %1342 : vector<8x16xf32>
    %1346 = arith.addf %1329, %1345 : vector<8x16xf32>
    %c295 = arith.constant 295 : index
    %1347 = memref.load %arg3[%c295] : memref<588xf32, #tpu.memory_space<smem>>
    %1348 = vector.broadcast %1347 : f32 to vector<8x16xf32>
    %1349 = arith.mulf %1348, %1342 : vector<8x16xf32>
    %1350 = arith.addf %1333, %1349 : vector<8x16xf32>
    %c296 = arith.constant 296 : index
    %1351 = memref.load %arg3[%c296] : memref<588xf32, #tpu.memory_space<smem>>
    %1352 = vector.broadcast %1351 : f32 to vector<8x16xf32>
    %1353 = arith.mulf %1352, %1342 : vector<8x16xf32>
    %1354 = arith.addf %1337, %1353 : vector<8x16xf32>
    %1355 = vector.extract_strided_slice %1341 {offsets = [0, 1], sizes = [8, 16], strides = [1, 1]} : vector<8x22xf32> to vector<8x16xf32>
    %c297 = arith.constant 297 : index
    %1356 = memref.load %arg3[%c297] : memref<588xf32, #tpu.memory_space<smem>>
    %1357 = vector.broadcast %1356 : f32 to vector<8x16xf32>
    %1358 = arith.mulf %1357, %1355 : vector<8x16xf32>
    %1359 = arith.addf %1346, %1358 : vector<8x16xf32>
    %c298 = arith.constant 298 : index
    %1360 = memref.load %arg3[%c298] : memref<588xf32, #tpu.memory_space<smem>>
    %1361 = vector.broadcast %1360 : f32 to vector<8x16xf32>
    %1362 = arith.mulf %1361, %1355 : vector<8x16xf32>
    %1363 = arith.addf %1350, %1362 : vector<8x16xf32>
    %c299 = arith.constant 299 : index
    %1364 = memref.load %arg3[%c299] : memref<588xf32, #tpu.memory_space<smem>>
    %1365 = vector.broadcast %1364 : f32 to vector<8x16xf32>
    %1366 = arith.mulf %1365, %1355 : vector<8x16xf32>
    %1367 = arith.addf %1354, %1366 : vector<8x16xf32>
    %1368 = vector.extract_strided_slice %1341 {offsets = [0, 2], sizes = [8, 16], strides = [1, 1]} : vector<8x22xf32> to vector<8x16xf32>
    %c300 = arith.constant 300 : index
    %1369 = memref.load %arg3[%c300] : memref<588xf32, #tpu.memory_space<smem>>
    %1370 = vector.broadcast %1369 : f32 to vector<8x16xf32>
    %1371 = arith.mulf %1370, %1368 : vector<8x16xf32>
    %1372 = arith.addf %1359, %1371 : vector<8x16xf32>
    %c301 = arith.constant 301 : index
    %1373 = memref.load %arg3[%c301] : memref<588xf32, #tpu.memory_space<smem>>
    %1374 = vector.broadcast %1373 : f32 to vector<8x16xf32>
    %1375 = arith.mulf %1374, %1368 : vector<8x16xf32>
    %1376 = arith.addf %1363, %1375 : vector<8x16xf32>
    %c302 = arith.constant 302 : index
    %1377 = memref.load %arg3[%c302] : memref<588xf32, #tpu.memory_space<smem>>
    %1378 = vector.broadcast %1377 : f32 to vector<8x16xf32>
    %1379 = arith.mulf %1378, %1368 : vector<8x16xf32>
    %1380 = arith.addf %1367, %1379 : vector<8x16xf32>
    %1381 = vector.extract_strided_slice %1341 {offsets = [0, 3], sizes = [8, 16], strides = [1, 1]} : vector<8x22xf32> to vector<8x16xf32>
    %c303 = arith.constant 303 : index
    %1382 = memref.load %arg3[%c303] : memref<588xf32, #tpu.memory_space<smem>>
    %1383 = vector.broadcast %1382 : f32 to vector<8x16xf32>
    %1384 = arith.mulf %1383, %1381 : vector<8x16xf32>
    %1385 = arith.addf %1372, %1384 : vector<8x16xf32>
    %c304 = arith.constant 304 : index
    %1386 = memref.load %arg3[%c304] : memref<588xf32, #tpu.memory_space<smem>>
    %1387 = vector.broadcast %1386 : f32 to vector<8x16xf32>
    %1388 = arith.mulf %1387, %1381 : vector<8x16xf32>
    %1389 = arith.addf %1376, %1388 : vector<8x16xf32>
    %c305 = arith.constant 305 : index
    %1390 = memref.load %arg3[%c305] : memref<588xf32, #tpu.memory_space<smem>>
    %1391 = vector.broadcast %1390 : f32 to vector<8x16xf32>
    %1392 = arith.mulf %1391, %1381 : vector<8x16xf32>
    %1393 = arith.addf %1380, %1392 : vector<8x16xf32>
    %1394 = vector.extract_strided_slice %1341 {offsets = [0, 4], sizes = [8, 16], strides = [1, 1]} : vector<8x22xf32> to vector<8x16xf32>
    %c306 = arith.constant 306 : index
    %1395 = memref.load %arg3[%c306] : memref<588xf32, #tpu.memory_space<smem>>
    %1396 = vector.broadcast %1395 : f32 to vector<8x16xf32>
    %1397 = arith.mulf %1396, %1394 : vector<8x16xf32>
    %1398 = arith.addf %1385, %1397 : vector<8x16xf32>
    %c307 = arith.constant 307 : index
    %1399 = memref.load %arg3[%c307] : memref<588xf32, #tpu.memory_space<smem>>
    %1400 = vector.broadcast %1399 : f32 to vector<8x16xf32>
    %1401 = arith.mulf %1400, %1394 : vector<8x16xf32>
    %1402 = arith.addf %1389, %1401 : vector<8x16xf32>
    %c308 = arith.constant 308 : index
    %1403 = memref.load %arg3[%c308] : memref<588xf32, #tpu.memory_space<smem>>
    %1404 = vector.broadcast %1403 : f32 to vector<8x16xf32>
    %1405 = arith.mulf %1404, %1394 : vector<8x16xf32>
    %1406 = arith.addf %1393, %1405 : vector<8x16xf32>
    %1407 = vector.extract_strided_slice %1341 {offsets = [0, 5], sizes = [8, 16], strides = [1, 1]} : vector<8x22xf32> to vector<8x16xf32>
    %c309 = arith.constant 309 : index
    %1408 = memref.load %arg3[%c309] : memref<588xf32, #tpu.memory_space<smem>>
    %1409 = vector.broadcast %1408 : f32 to vector<8x16xf32>
    %1410 = arith.mulf %1409, %1407 : vector<8x16xf32>
    %1411 = arith.addf %1398, %1410 : vector<8x16xf32>
    %c310 = arith.constant 310 : index
    %1412 = memref.load %arg3[%c310] : memref<588xf32, #tpu.memory_space<smem>>
    %1413 = vector.broadcast %1412 : f32 to vector<8x16xf32>
    %1414 = arith.mulf %1413, %1407 : vector<8x16xf32>
    %1415 = arith.addf %1402, %1414 : vector<8x16xf32>
    %c311 = arith.constant 311 : index
    %1416 = memref.load %arg3[%c311] : memref<588xf32, #tpu.memory_space<smem>>
    %1417 = vector.broadcast %1416 : f32 to vector<8x16xf32>
    %1418 = arith.mulf %1417, %1407 : vector<8x16xf32>
    %1419 = arith.addf %1406, %1418 : vector<8x16xf32>
    %1420 = vector.extract_strided_slice %1341 {offsets = [0, 6], sizes = [8, 16], strides = [1, 1]} : vector<8x22xf32> to vector<8x16xf32>
    %c312 = arith.constant 312 : index
    %1421 = memref.load %arg3[%c312] : memref<588xf32, #tpu.memory_space<smem>>
    %1422 = vector.broadcast %1421 : f32 to vector<8x16xf32>
    %1423 = arith.mulf %1422, %1420 : vector<8x16xf32>
    %1424 = arith.addf %1411, %1423 : vector<8x16xf32>
    %c313 = arith.constant 313 : index
    %1425 = memref.load %arg3[%c313] : memref<588xf32, #tpu.memory_space<smem>>
    %1426 = vector.broadcast %1425 : f32 to vector<8x16xf32>
    %1427 = arith.mulf %1426, %1420 : vector<8x16xf32>
    %1428 = arith.addf %1415, %1427 : vector<8x16xf32>
    %c314 = arith.constant 314 : index
    %1429 = memref.load %arg3[%c314] : memref<588xf32, #tpu.memory_space<smem>>
    %1430 = vector.broadcast %1429 : f32 to vector<8x16xf32>
    %1431 = arith.mulf %1430, %1420 : vector<8x16xf32>
    %1432 = arith.addf %1419, %1431 : vector<8x16xf32>
    %c1_i32_56 = arith.constant 1 : i32
    %1433 = arith.addi %1, %c1_i32_56 : i32
    %c0_57 = arith.constant 0 : index
    %c2_58 = arith.constant 2 : index
    %1434 = arith.index_cast %1433 : i32 to index
    %c0_59 = arith.constant 0 : index
    %1435 = vector.load %arg2[%c0_57, %c2_58, %1434, %c0_59] : memref<1x4x22x22xf32, #tpu.memory_space<vmem>>, vector<1x1x8x22xf32>
    %1436 = vector.shape_cast %1435 : vector<1x1x8x22xf32> to vector<8x22xf32>
    %1437 = vector.extract_strided_slice %1436 {offsets = [0, 0], sizes = [8, 16], strides = [1, 1]} : vector<8x22xf32> to vector<8x16xf32>
    %c315 = arith.constant 315 : index
    %1438 = memref.load %arg3[%c315] : memref<588xf32, #tpu.memory_space<smem>>
    %1439 = vector.broadcast %1438 : f32 to vector<8x16xf32>
    %1440 = arith.mulf %1439, %1437 : vector<8x16xf32>
    %1441 = arith.addf %1424, %1440 : vector<8x16xf32>
    %c316 = arith.constant 316 : index
    %1442 = memref.load %arg3[%c316] : memref<588xf32, #tpu.memory_space<smem>>
    %1443 = vector.broadcast %1442 : f32 to vector<8x16xf32>
    %1444 = arith.mulf %1443, %1437 : vector<8x16xf32>
    %1445 = arith.addf %1428, %1444 : vector<8x16xf32>
    %c317 = arith.constant 317 : index
    %1446 = memref.load %arg3[%c317] : memref<588xf32, #tpu.memory_space<smem>>
    %1447 = vector.broadcast %1446 : f32 to vector<8x16xf32>
    %1448 = arith.mulf %1447, %1437 : vector<8x16xf32>
    %1449 = arith.addf %1432, %1448 : vector<8x16xf32>
    %1450 = vector.extract_strided_slice %1436 {offsets = [0, 1], sizes = [8, 16], strides = [1, 1]} : vector<8x22xf32> to vector<8x16xf32>
    %c318 = arith.constant 318 : index
    %1451 = memref.load %arg3[%c318] : memref<588xf32, #tpu.memory_space<smem>>
    %1452 = vector.broadcast %1451 : f32 to vector<8x16xf32>
    %1453 = arith.mulf %1452, %1450 : vector<8x16xf32>
    %1454 = arith.addf %1441, %1453 : vector<8x16xf32>
    %c319 = arith.constant 319 : index
    %1455 = memref.load %arg3[%c319] : memref<588xf32, #tpu.memory_space<smem>>
    %1456 = vector.broadcast %1455 : f32 to vector<8x16xf32>
    %1457 = arith.mulf %1456, %1450 : vector<8x16xf32>
    %1458 = arith.addf %1445, %1457 : vector<8x16xf32>
    %c320 = arith.constant 320 : index
    %1459 = memref.load %arg3[%c320] : memref<588xf32, #tpu.memory_space<smem>>
    %1460 = vector.broadcast %1459 : f32 to vector<8x16xf32>
    %1461 = arith.mulf %1460, %1450 : vector<8x16xf32>
    %1462 = arith.addf %1449, %1461 : vector<8x16xf32>
    %1463 = vector.extract_strided_slice %1436 {offsets = [0, 2], sizes = [8, 16], strides = [1, 1]} : vector<8x22xf32> to vector<8x16xf32>
    %c321 = arith.constant 321 : index
    %1464 = memref.load %arg3[%c321] : memref<588xf32, #tpu.memory_space<smem>>
    %1465 = vector.broadcast %1464 : f32 to vector<8x16xf32>
    %1466 = arith.mulf %1465, %1463 : vector<8x16xf32>
    %1467 = arith.addf %1454, %1466 : vector<8x16xf32>
    %c322 = arith.constant 322 : index
    %1468 = memref.load %arg3[%c322] : memref<588xf32, #tpu.memory_space<smem>>
    %1469 = vector.broadcast %1468 : f32 to vector<8x16xf32>
    %1470 = arith.mulf %1469, %1463 : vector<8x16xf32>
    %1471 = arith.addf %1458, %1470 : vector<8x16xf32>
    %c323 = arith.constant 323 : index
    %1472 = memref.load %arg3[%c323] : memref<588xf32, #tpu.memory_space<smem>>
    %1473 = vector.broadcast %1472 : f32 to vector<8x16xf32>
    %1474 = arith.mulf %1473, %1463 : vector<8x16xf32>
    %1475 = arith.addf %1462, %1474 : vector<8x16xf32>
    %1476 = vector.extract_strided_slice %1436 {offsets = [0, 3], sizes = [8, 16], strides = [1, 1]} : vector<8x22xf32> to vector<8x16xf32>
    %c324 = arith.constant 324 : index
    %1477 = memref.load %arg3[%c324] : memref<588xf32, #tpu.memory_space<smem>>
    %1478 = vector.broadcast %1477 : f32 to vector<8x16xf32>
    %1479 = arith.mulf %1478, %1476 : vector<8x16xf32>
    %1480 = arith.addf %1467, %1479 : vector<8x16xf32>
    %c325 = arith.constant 325 : index
    %1481 = memref.load %arg3[%c325] : memref<588xf32, #tpu.memory_space<smem>>
    %1482 = vector.broadcast %1481 : f32 to vector<8x16xf32>
    %1483 = arith.mulf %1482, %1476 : vector<8x16xf32>
    %1484 = arith.addf %1471, %1483 : vector<8x16xf32>
    %c326 = arith.constant 326 : index
    %1485 = memref.load %arg3[%c326] : memref<588xf32, #tpu.memory_space<smem>>
    %1486 = vector.broadcast %1485 : f32 to vector<8x16xf32>
    %1487 = arith.mulf %1486, %1476 : vector<8x16xf32>
    %1488 = arith.addf %1475, %1487 : vector<8x16xf32>
    %1489 = vector.extract_strided_slice %1436 {offsets = [0, 4], sizes = [8, 16], strides = [1, 1]} : vector<8x22xf32> to vector<8x16xf32>
    %c327 = arith.constant 327 : index
    %1490 = memref.load %arg3[%c327] : memref<588xf32, #tpu.memory_space<smem>>
    %1491 = vector.broadcast %1490 : f32 to vector<8x16xf32>
    %1492 = arith.mulf %1491, %1489 : vector<8x16xf32>
    %1493 = arith.addf %1480, %1492 : vector<8x16xf32>
    %c328 = arith.constant 328 : index
    %1494 = memref.load %arg3[%c328] : memref<588xf32, #tpu.memory_space<smem>>
    %1495 = vector.broadcast %1494 : f32 to vector<8x16xf32>
    %1496 = arith.mulf %1495, %1489 : vector<8x16xf32>
    %1497 = arith.addf %1484, %1496 : vector<8x16xf32>
    %c329 = arith.constant 329 : index
    %1498 = memref.load %arg3[%c329] : memref<588xf32, #tpu.memory_space<smem>>
    %1499 = vector.broadcast %1498 : f32 to vector<8x16xf32>
    %1500 = arith.mulf %1499, %1489 : vector<8x16xf32>
    %1501 = arith.addf %1488, %1500 : vector<8x16xf32>
    %1502 = vector.extract_strided_slice %1436 {offsets = [0, 5], sizes = [8, 16], strides = [1, 1]} : vector<8x22xf32> to vector<8x16xf32>
    %c330 = arith.constant 330 : index
    %1503 = memref.load %arg3[%c330] : memref<588xf32, #tpu.memory_space<smem>>
    %1504 = vector.broadcast %1503 : f32 to vector<8x16xf32>
    %1505 = arith.mulf %1504, %1502 : vector<8x16xf32>
    %1506 = arith.addf %1493, %1505 : vector<8x16xf32>
    %c331 = arith.constant 331 : index
    %1507 = memref.load %arg3[%c331] : memref<588xf32, #tpu.memory_space<smem>>
    %1508 = vector.broadcast %1507 : f32 to vector<8x16xf32>
    %1509 = arith.mulf %1508, %1502 : vector<8x16xf32>
    %1510 = arith.addf %1497, %1509 : vector<8x16xf32>
    %c332 = arith.constant 332 : index
    %1511 = memref.load %arg3[%c332] : memref<588xf32, #tpu.memory_space<smem>>
    %1512 = vector.broadcast %1511 : f32 to vector<8x16xf32>
    %1513 = arith.mulf %1512, %1502 : vector<8x16xf32>
    %1514 = arith.addf %1501, %1513 : vector<8x16xf32>
    %1515 = vector.extract_strided_slice %1436 {offsets = [0, 6], sizes = [8, 16], strides = [1, 1]} : vector<8x22xf32> to vector<8x16xf32>
    %c333 = arith.constant 333 : index
    %1516 = memref.load %arg3[%c333] : memref<588xf32, #tpu.memory_space<smem>>
    %1517 = vector.broadcast %1516 : f32 to vector<8x16xf32>
    %1518 = arith.mulf %1517, %1515 : vector<8x16xf32>
    %1519 = arith.addf %1506, %1518 : vector<8x16xf32>
    %c334 = arith.constant 334 : index
    %1520 = memref.load %arg3[%c334] : memref<588xf32, #tpu.memory_space<smem>>
    %1521 = vector.broadcast %1520 : f32 to vector<8x16xf32>
    %1522 = arith.mulf %1521, %1515 : vector<8x16xf32>
    %1523 = arith.addf %1510, %1522 : vector<8x16xf32>
    %c335 = arith.constant 335 : index
    %1524 = memref.load %arg3[%c335] : memref<588xf32, #tpu.memory_space<smem>>
    %1525 = vector.broadcast %1524 : f32 to vector<8x16xf32>
    %1526 = arith.mulf %1525, %1515 : vector<8x16xf32>
    %1527 = arith.addf %1514, %1526 : vector<8x16xf32>
    %c2_i32_60 = arith.constant 2 : i32
    %1528 = arith.addi %1, %c2_i32_60 : i32
    %c0_61 = arith.constant 0 : index
    %c2_62 = arith.constant 2 : index
    %1529 = arith.index_cast %1528 : i32 to index
    %c0_63 = arith.constant 0 : index
    %1530 = vector.load %arg2[%c0_61, %c2_62, %1529, %c0_63] : memref<1x4x22x22xf32, #tpu.memory_space<vmem>>, vector<1x1x8x22xf32>
    %1531 = vector.shape_cast %1530 : vector<1x1x8x22xf32> to vector<8x22xf32>
    %1532 = vector.extract_strided_slice %1531 {offsets = [0, 0], sizes = [8, 16], strides = [1, 1]} : vector<8x22xf32> to vector<8x16xf32>
    %c336 = arith.constant 336 : index
    %1533 = memref.load %arg3[%c336] : memref<588xf32, #tpu.memory_space<smem>>
    %1534 = vector.broadcast %1533 : f32 to vector<8x16xf32>
    %1535 = arith.mulf %1534, %1532 : vector<8x16xf32>
    %1536 = arith.addf %1519, %1535 : vector<8x16xf32>
    %c337 = arith.constant 337 : index
    %1537 = memref.load %arg3[%c337] : memref<588xf32, #tpu.memory_space<smem>>
    %1538 = vector.broadcast %1537 : f32 to vector<8x16xf32>
    %1539 = arith.mulf %1538, %1532 : vector<8x16xf32>
    %1540 = arith.addf %1523, %1539 : vector<8x16xf32>
    %c338 = arith.constant 338 : index
    %1541 = memref.load %arg3[%c338] : memref<588xf32, #tpu.memory_space<smem>>
    %1542 = vector.broadcast %1541 : f32 to vector<8x16xf32>
    %1543 = arith.mulf %1542, %1532 : vector<8x16xf32>
    %1544 = arith.addf %1527, %1543 : vector<8x16xf32>
    %1545 = vector.extract_strided_slice %1531 {offsets = [0, 1], sizes = [8, 16], strides = [1, 1]} : vector<8x22xf32> to vector<8x16xf32>
    %c339 = arith.constant 339 : index
    %1546 = memref.load %arg3[%c339] : memref<588xf32, #tpu.memory_space<smem>>
    %1547 = vector.broadcast %1546 : f32 to vector<8x16xf32>
    %1548 = arith.mulf %1547, %1545 : vector<8x16xf32>
    %1549 = arith.addf %1536, %1548 : vector<8x16xf32>
    %c340 = arith.constant 340 : index
    %1550 = memref.load %arg3[%c340] : memref<588xf32, #tpu.memory_space<smem>>
    %1551 = vector.broadcast %1550 : f32 to vector<8x16xf32>
    %1552 = arith.mulf %1551, %1545 : vector<8x16xf32>
    %1553 = arith.addf %1540, %1552 : vector<8x16xf32>
    %c341 = arith.constant 341 : index
    %1554 = memref.load %arg3[%c341] : memref<588xf32, #tpu.memory_space<smem>>
    %1555 = vector.broadcast %1554 : f32 to vector<8x16xf32>
    %1556 = arith.mulf %1555, %1545 : vector<8x16xf32>
    %1557 = arith.addf %1544, %1556 : vector<8x16xf32>
    %1558 = vector.extract_strided_slice %1531 {offsets = [0, 2], sizes = [8, 16], strides = [1, 1]} : vector<8x22xf32> to vector<8x16xf32>
    %c342 = arith.constant 342 : index
    %1559 = memref.load %arg3[%c342] : memref<588xf32, #tpu.memory_space<smem>>
    %1560 = vector.broadcast %1559 : f32 to vector<8x16xf32>
    %1561 = arith.mulf %1560, %1558 : vector<8x16xf32>
    %1562 = arith.addf %1549, %1561 : vector<8x16xf32>
    %c343 = arith.constant 343 : index
    %1563 = memref.load %arg3[%c343] : memref<588xf32, #tpu.memory_space<smem>>
    %1564 = vector.broadcast %1563 : f32 to vector<8x16xf32>
    %1565 = arith.mulf %1564, %1558 : vector<8x16xf32>
    %1566 = arith.addf %1553, %1565 : vector<8x16xf32>
    %c344 = arith.constant 344 : index
    %1567 = memref.load %arg3[%c344] : memref<588xf32, #tpu.memory_space<smem>>
    %1568 = vector.broadcast %1567 : f32 to vector<8x16xf32>
    %1569 = arith.mulf %1568, %1558 : vector<8x16xf32>
    %1570 = arith.addf %1557, %1569 : vector<8x16xf32>
    %1571 = vector.extract_strided_slice %1531 {offsets = [0, 3], sizes = [8, 16], strides = [1, 1]} : vector<8x22xf32> to vector<8x16xf32>
    %c345 = arith.constant 345 : index
    %1572 = memref.load %arg3[%c345] : memref<588xf32, #tpu.memory_space<smem>>
    %1573 = vector.broadcast %1572 : f32 to vector<8x16xf32>
    %1574 = arith.mulf %1573, %1571 : vector<8x16xf32>
    %1575 = arith.addf %1562, %1574 : vector<8x16xf32>
    %c346 = arith.constant 346 : index
    %1576 = memref.load %arg3[%c346] : memref<588xf32, #tpu.memory_space<smem>>
    %1577 = vector.broadcast %1576 : f32 to vector<8x16xf32>
    %1578 = arith.mulf %1577, %1571 : vector<8x16xf32>
    %1579 = arith.addf %1566, %1578 : vector<8x16xf32>
    %c347 = arith.constant 347 : index
    %1580 = memref.load %arg3[%c347] : memref<588xf32, #tpu.memory_space<smem>>
    %1581 = vector.broadcast %1580 : f32 to vector<8x16xf32>
    %1582 = arith.mulf %1581, %1571 : vector<8x16xf32>
    %1583 = arith.addf %1570, %1582 : vector<8x16xf32>
    %1584 = vector.extract_strided_slice %1531 {offsets = [0, 4], sizes = [8, 16], strides = [1, 1]} : vector<8x22xf32> to vector<8x16xf32>
    %c348 = arith.constant 348 : index
    %1585 = memref.load %arg3[%c348] : memref<588xf32, #tpu.memory_space<smem>>
    %1586 = vector.broadcast %1585 : f32 to vector<8x16xf32>
    %1587 = arith.mulf %1586, %1584 : vector<8x16xf32>
    %1588 = arith.addf %1575, %1587 : vector<8x16xf32>
    %c349 = arith.constant 349 : index
    %1589 = memref.load %arg3[%c349] : memref<588xf32, #tpu.memory_space<smem>>
    %1590 = vector.broadcast %1589 : f32 to vector<8x16xf32>
    %1591 = arith.mulf %1590, %1584 : vector<8x16xf32>
    %1592 = arith.addf %1579, %1591 : vector<8x16xf32>
    %c350 = arith.constant 350 : index
    %1593 = memref.load %arg3[%c350] : memref<588xf32, #tpu.memory_space<smem>>
    %1594 = vector.broadcast %1593 : f32 to vector<8x16xf32>
    %1595 = arith.mulf %1594, %1584 : vector<8x16xf32>
    %1596 = arith.addf %1583, %1595 : vector<8x16xf32>
    %1597 = vector.extract_strided_slice %1531 {offsets = [0, 5], sizes = [8, 16], strides = [1, 1]} : vector<8x22xf32> to vector<8x16xf32>
    %c351 = arith.constant 351 : index
    %1598 = memref.load %arg3[%c351] : memref<588xf32, #tpu.memory_space<smem>>
    %1599 = vector.broadcast %1598 : f32 to vector<8x16xf32>
    %1600 = arith.mulf %1599, %1597 : vector<8x16xf32>
    %1601 = arith.addf %1588, %1600 : vector<8x16xf32>
    %c352 = arith.constant 352 : index
    %1602 = memref.load %arg3[%c352] : memref<588xf32, #tpu.memory_space<smem>>
    %1603 = vector.broadcast %1602 : f32 to vector<8x16xf32>
    %1604 = arith.mulf %1603, %1597 : vector<8x16xf32>
    %1605 = arith.addf %1592, %1604 : vector<8x16xf32>
    %c353 = arith.constant 353 : index
    %1606 = memref.load %arg3[%c353] : memref<588xf32, #tpu.memory_space<smem>>
    %1607 = vector.broadcast %1606 : f32 to vector<8x16xf32>
    %1608 = arith.mulf %1607, %1597 : vector<8x16xf32>
    %1609 = arith.addf %1596, %1608 : vector<8x16xf32>
    %1610 = vector.extract_strided_slice %1531 {offsets = [0, 6], sizes = [8, 16], strides = [1, 1]} : vector<8x22xf32> to vector<8x16xf32>
    %c354 = arith.constant 354 : index
    %1611 = memref.load %arg3[%c354] : memref<588xf32, #tpu.memory_space<smem>>
    %1612 = vector.broadcast %1611 : f32 to vector<8x16xf32>
    %1613 = arith.mulf %1612, %1610 : vector<8x16xf32>
    %1614 = arith.addf %1601, %1613 : vector<8x16xf32>
    %c355 = arith.constant 355 : index
    %1615 = memref.load %arg3[%c355] : memref<588xf32, #tpu.memory_space<smem>>
    %1616 = vector.broadcast %1615 : f32 to vector<8x16xf32>
    %1617 = arith.mulf %1616, %1610 : vector<8x16xf32>
    %1618 = arith.addf %1605, %1617 : vector<8x16xf32>
    %c356 = arith.constant 356 : index
    %1619 = memref.load %arg3[%c356] : memref<588xf32, #tpu.memory_space<smem>>
    %1620 = vector.broadcast %1619 : f32 to vector<8x16xf32>
    %1621 = arith.mulf %1620, %1610 : vector<8x16xf32>
    %1622 = arith.addf %1609, %1621 : vector<8x16xf32>
    %c3_i32_64 = arith.constant 3 : i32
    %1623 = arith.addi %1, %c3_i32_64 : i32
    %c0_65 = arith.constant 0 : index
    %c2_66 = arith.constant 2 : index
    %1624 = arith.index_cast %1623 : i32 to index
    %c0_67 = arith.constant 0 : index
    %1625 = vector.load %arg2[%c0_65, %c2_66, %1624, %c0_67] : memref<1x4x22x22xf32, #tpu.memory_space<vmem>>, vector<1x1x8x22xf32>
    %1626 = vector.shape_cast %1625 : vector<1x1x8x22xf32> to vector<8x22xf32>
    %1627 = vector.extract_strided_slice %1626 {offsets = [0, 0], sizes = [8, 16], strides = [1, 1]} : vector<8x22xf32> to vector<8x16xf32>
    %c357 = arith.constant 357 : index
    %1628 = memref.load %arg3[%c357] : memref<588xf32, #tpu.memory_space<smem>>
    %1629 = vector.broadcast %1628 : f32 to vector<8x16xf32>
    %1630 = arith.mulf %1629, %1627 : vector<8x16xf32>
    %1631 = arith.addf %1614, %1630 : vector<8x16xf32>
    %c358 = arith.constant 358 : index
    %1632 = memref.load %arg3[%c358] : memref<588xf32, #tpu.memory_space<smem>>
    %1633 = vector.broadcast %1632 : f32 to vector<8x16xf32>
    %1634 = arith.mulf %1633, %1627 : vector<8x16xf32>
    %1635 = arith.addf %1618, %1634 : vector<8x16xf32>
    %c359 = arith.constant 359 : index
    %1636 = memref.load %arg3[%c359] : memref<588xf32, #tpu.memory_space<smem>>
    %1637 = vector.broadcast %1636 : f32 to vector<8x16xf32>
    %1638 = arith.mulf %1637, %1627 : vector<8x16xf32>
    %1639 = arith.addf %1622, %1638 : vector<8x16xf32>
    %1640 = vector.extract_strided_slice %1626 {offsets = [0, 1], sizes = [8, 16], strides = [1, 1]} : vector<8x22xf32> to vector<8x16xf32>
    %c360 = arith.constant 360 : index
    %1641 = memref.load %arg3[%c360] : memref<588xf32, #tpu.memory_space<smem>>
    %1642 = vector.broadcast %1641 : f32 to vector<8x16xf32>
    %1643 = arith.mulf %1642, %1640 : vector<8x16xf32>
    %1644 = arith.addf %1631, %1643 : vector<8x16xf32>
    %c361 = arith.constant 361 : index
    %1645 = memref.load %arg3[%c361] : memref<588xf32, #tpu.memory_space<smem>>
    %1646 = vector.broadcast %1645 : f32 to vector<8x16xf32>
    %1647 = arith.mulf %1646, %1640 : vector<8x16xf32>
    %1648 = arith.addf %1635, %1647 : vector<8x16xf32>
    %c362 = arith.constant 362 : index
    %1649 = memref.load %arg3[%c362] : memref<588xf32, #tpu.memory_space<smem>>
    %1650 = vector.broadcast %1649 : f32 to vector<8x16xf32>
    %1651 = arith.mulf %1650, %1640 : vector<8x16xf32>
    %1652 = arith.addf %1639, %1651 : vector<8x16xf32>
    %1653 = vector.extract_strided_slice %1626 {offsets = [0, 2], sizes = [8, 16], strides = [1, 1]} : vector<8x22xf32> to vector<8x16xf32>
    %c363 = arith.constant 363 : index
    %1654 = memref.load %arg3[%c363] : memref<588xf32, #tpu.memory_space<smem>>
    %1655 = vector.broadcast %1654 : f32 to vector<8x16xf32>
    %1656 = arith.mulf %1655, %1653 : vector<8x16xf32>
    %1657 = arith.addf %1644, %1656 : vector<8x16xf32>
    %c364 = arith.constant 364 : index
    %1658 = memref.load %arg3[%c364] : memref<588xf32, #tpu.memory_space<smem>>
    %1659 = vector.broadcast %1658 : f32 to vector<8x16xf32>
    %1660 = arith.mulf %1659, %1653 : vector<8x16xf32>
    %1661 = arith.addf %1648, %1660 : vector<8x16xf32>
    %c365 = arith.constant 365 : index
    %1662 = memref.load %arg3[%c365] : memref<588xf32, #tpu.memory_space<smem>>
    %1663 = vector.broadcast %1662 : f32 to vector<8x16xf32>
    %1664 = arith.mulf %1663, %1653 : vector<8x16xf32>
    %1665 = arith.addf %1652, %1664 : vector<8x16xf32>
    %1666 = vector.extract_strided_slice %1626 {offsets = [0, 3], sizes = [8, 16], strides = [1, 1]} : vector<8x22xf32> to vector<8x16xf32>
    %c366 = arith.constant 366 : index
    %1667 = memref.load %arg3[%c366] : memref<588xf32, #tpu.memory_space<smem>>
    %1668 = vector.broadcast %1667 : f32 to vector<8x16xf32>
    %1669 = arith.mulf %1668, %1666 : vector<8x16xf32>
    %1670 = arith.addf %1657, %1669 : vector<8x16xf32>
    %c367 = arith.constant 367 : index
    %1671 = memref.load %arg3[%c367] : memref<588xf32, #tpu.memory_space<smem>>
    %1672 = vector.broadcast %1671 : f32 to vector<8x16xf32>
    %1673 = arith.mulf %1672, %1666 : vector<8x16xf32>
    %1674 = arith.addf %1661, %1673 : vector<8x16xf32>
    %c368 = arith.constant 368 : index
    %1675 = memref.load %arg3[%c368] : memref<588xf32, #tpu.memory_space<smem>>
    %1676 = vector.broadcast %1675 : f32 to vector<8x16xf32>
    %1677 = arith.mulf %1676, %1666 : vector<8x16xf32>
    %1678 = arith.addf %1665, %1677 : vector<8x16xf32>
    %1679 = vector.extract_strided_slice %1626 {offsets = [0, 4], sizes = [8, 16], strides = [1, 1]} : vector<8x22xf32> to vector<8x16xf32>
    %c369 = arith.constant 369 : index
    %1680 = memref.load %arg3[%c369] : memref<588xf32, #tpu.memory_space<smem>>
    %1681 = vector.broadcast %1680 : f32 to vector<8x16xf32>
    %1682 = arith.mulf %1681, %1679 : vector<8x16xf32>
    %1683 = arith.addf %1670, %1682 : vector<8x16xf32>
    %c370 = arith.constant 370 : index
    %1684 = memref.load %arg3[%c370] : memref<588xf32, #tpu.memory_space<smem>>
    %1685 = vector.broadcast %1684 : f32 to vector<8x16xf32>
    %1686 = arith.mulf %1685, %1679 : vector<8x16xf32>
    %1687 = arith.addf %1674, %1686 : vector<8x16xf32>
    %c371 = arith.constant 371 : index
    %1688 = memref.load %arg3[%c371] : memref<588xf32, #tpu.memory_space<smem>>
    %1689 = vector.broadcast %1688 : f32 to vector<8x16xf32>
    %1690 = arith.mulf %1689, %1679 : vector<8x16xf32>
    %1691 = arith.addf %1678, %1690 : vector<8x16xf32>
    %1692 = vector.extract_strided_slice %1626 {offsets = [0, 5], sizes = [8, 16], strides = [1, 1]} : vector<8x22xf32> to vector<8x16xf32>
    %c372 = arith.constant 372 : index
    %1693 = memref.load %arg3[%c372] : memref<588xf32, #tpu.memory_space<smem>>
    %1694 = vector.broadcast %1693 : f32 to vector<8x16xf32>
    %1695 = arith.mulf %1694, %1692 : vector<8x16xf32>
    %1696 = arith.addf %1683, %1695 : vector<8x16xf32>
    %c373 = arith.constant 373 : index
    %1697 = memref.load %arg3[%c373] : memref<588xf32, #tpu.memory_space<smem>>
    %1698 = vector.broadcast %1697 : f32 to vector<8x16xf32>
    %1699 = arith.mulf %1698, %1692 : vector<8x16xf32>
    %1700 = arith.addf %1687, %1699 : vector<8x16xf32>
    %c374 = arith.constant 374 : index
    %1701 = memref.load %arg3[%c374] : memref<588xf32, #tpu.memory_space<smem>>
    %1702 = vector.broadcast %1701 : f32 to vector<8x16xf32>
    %1703 = arith.mulf %1702, %1692 : vector<8x16xf32>
    %1704 = arith.addf %1691, %1703 : vector<8x16xf32>
    %1705 = vector.extract_strided_slice %1626 {offsets = [0, 6], sizes = [8, 16], strides = [1, 1]} : vector<8x22xf32> to vector<8x16xf32>
    %c375 = arith.constant 375 : index
    %1706 = memref.load %arg3[%c375] : memref<588xf32, #tpu.memory_space<smem>>
    %1707 = vector.broadcast %1706 : f32 to vector<8x16xf32>
    %1708 = arith.mulf %1707, %1705 : vector<8x16xf32>
    %1709 = arith.addf %1696, %1708 : vector<8x16xf32>
    %c376 = arith.constant 376 : index
    %1710 = memref.load %arg3[%c376] : memref<588xf32, #tpu.memory_space<smem>>
    %1711 = vector.broadcast %1710 : f32 to vector<8x16xf32>
    %1712 = arith.mulf %1711, %1705 : vector<8x16xf32>
    %1713 = arith.addf %1700, %1712 : vector<8x16xf32>
    %c377 = arith.constant 377 : index
    %1714 = memref.load %arg3[%c377] : memref<588xf32, #tpu.memory_space<smem>>
    %1715 = vector.broadcast %1714 : f32 to vector<8x16xf32>
    %1716 = arith.mulf %1715, %1705 : vector<8x16xf32>
    %1717 = arith.addf %1704, %1716 : vector<8x16xf32>
    %c4_i32_68 = arith.constant 4 : i32
    %1718 = arith.addi %1, %c4_i32_68 : i32
    %c0_69 = arith.constant 0 : index
    %c2_70 = arith.constant 2 : index
    %1719 = arith.index_cast %1718 : i32 to index
    %c0_71 = arith.constant 0 : index
    %1720 = vector.load %arg2[%c0_69, %c2_70, %1719, %c0_71] : memref<1x4x22x22xf32, #tpu.memory_space<vmem>>, vector<1x1x8x22xf32>
    %1721 = vector.shape_cast %1720 : vector<1x1x8x22xf32> to vector<8x22xf32>
    %1722 = vector.extract_strided_slice %1721 {offsets = [0, 0], sizes = [8, 16], strides = [1, 1]} : vector<8x22xf32> to vector<8x16xf32>
    %c378 = arith.constant 378 : index
    %1723 = memref.load %arg3[%c378] : memref<588xf32, #tpu.memory_space<smem>>
    %1724 = vector.broadcast %1723 : f32 to vector<8x16xf32>
    %1725 = arith.mulf %1724, %1722 : vector<8x16xf32>
    %1726 = arith.addf %1709, %1725 : vector<8x16xf32>
    %c379 = arith.constant 379 : index
    %1727 = memref.load %arg3[%c379] : memref<588xf32, #tpu.memory_space<smem>>
    %1728 = vector.broadcast %1727 : f32 to vector<8x16xf32>
    %1729 = arith.mulf %1728, %1722 : vector<8x16xf32>
    %1730 = arith.addf %1713, %1729 : vector<8x16xf32>
    %c380 = arith.constant 380 : index
    %1731 = memref.load %arg3[%c380] : memref<588xf32, #tpu.memory_space<smem>>
    %1732 = vector.broadcast %1731 : f32 to vector<8x16xf32>
    %1733 = arith.mulf %1732, %1722 : vector<8x16xf32>
    %1734 = arith.addf %1717, %1733 : vector<8x16xf32>
    %1735 = vector.extract_strided_slice %1721 {offsets = [0, 1], sizes = [8, 16], strides = [1, 1]} : vector<8x22xf32> to vector<8x16xf32>
    %c381 = arith.constant 381 : index
    %1736 = memref.load %arg3[%c381] : memref<588xf32, #tpu.memory_space<smem>>
    %1737 = vector.broadcast %1736 : f32 to vector<8x16xf32>
    %1738 = arith.mulf %1737, %1735 : vector<8x16xf32>
    %1739 = arith.addf %1726, %1738 : vector<8x16xf32>
    %c382 = arith.constant 382 : index
    %1740 = memref.load %arg3[%c382] : memref<588xf32, #tpu.memory_space<smem>>
    %1741 = vector.broadcast %1740 : f32 to vector<8x16xf32>
    %1742 = arith.mulf %1741, %1735 : vector<8x16xf32>
    %1743 = arith.addf %1730, %1742 : vector<8x16xf32>
    %c383 = arith.constant 383 : index
    %1744 = memref.load %arg3[%c383] : memref<588xf32, #tpu.memory_space<smem>>
    %1745 = vector.broadcast %1744 : f32 to vector<8x16xf32>
    %1746 = arith.mulf %1745, %1735 : vector<8x16xf32>
    %1747 = arith.addf %1734, %1746 : vector<8x16xf32>
    %1748 = vector.extract_strided_slice %1721 {offsets = [0, 2], sizes = [8, 16], strides = [1, 1]} : vector<8x22xf32> to vector<8x16xf32>
    %c384 = arith.constant 384 : index
    %1749 = memref.load %arg3[%c384] : memref<588xf32, #tpu.memory_space<smem>>
    %1750 = vector.broadcast %1749 : f32 to vector<8x16xf32>
    %1751 = arith.mulf %1750, %1748 : vector<8x16xf32>
    %1752 = arith.addf %1739, %1751 : vector<8x16xf32>
    %c385 = arith.constant 385 : index
    %1753 = memref.load %arg3[%c385] : memref<588xf32, #tpu.memory_space<smem>>
    %1754 = vector.broadcast %1753 : f32 to vector<8x16xf32>
    %1755 = arith.mulf %1754, %1748 : vector<8x16xf32>
    %1756 = arith.addf %1743, %1755 : vector<8x16xf32>
    %c386 = arith.constant 386 : index
    %1757 = memref.load %arg3[%c386] : memref<588xf32, #tpu.memory_space<smem>>
    %1758 = vector.broadcast %1757 : f32 to vector<8x16xf32>
    %1759 = arith.mulf %1758, %1748 : vector<8x16xf32>
    %1760 = arith.addf %1747, %1759 : vector<8x16xf32>
    %1761 = vector.extract_strided_slice %1721 {offsets = [0, 3], sizes = [8, 16], strides = [1, 1]} : vector<8x22xf32> to vector<8x16xf32>
    %c387 = arith.constant 387 : index
    %1762 = memref.load %arg3[%c387] : memref<588xf32, #tpu.memory_space<smem>>
    %1763 = vector.broadcast %1762 : f32 to vector<8x16xf32>
    %1764 = arith.mulf %1763, %1761 : vector<8x16xf32>
    %1765 = arith.addf %1752, %1764 : vector<8x16xf32>
    %c388 = arith.constant 388 : index
    %1766 = memref.load %arg3[%c388] : memref<588xf32, #tpu.memory_space<smem>>
    %1767 = vector.broadcast %1766 : f32 to vector<8x16xf32>
    %1768 = arith.mulf %1767, %1761 : vector<8x16xf32>
    %1769 = arith.addf %1756, %1768 : vector<8x16xf32>
    %c389 = arith.constant 389 : index
    %1770 = memref.load %arg3[%c389] : memref<588xf32, #tpu.memory_space<smem>>
    %1771 = vector.broadcast %1770 : f32 to vector<8x16xf32>
    %1772 = arith.mulf %1771, %1761 : vector<8x16xf32>
    %1773 = arith.addf %1760, %1772 : vector<8x16xf32>
    %1774 = vector.extract_strided_slice %1721 {offsets = [0, 4], sizes = [8, 16], strides = [1, 1]} : vector<8x22xf32> to vector<8x16xf32>
    %c390 = arith.constant 390 : index
    %1775 = memref.load %arg3[%c390] : memref<588xf32, #tpu.memory_space<smem>>
    %1776 = vector.broadcast %1775 : f32 to vector<8x16xf32>
    %1777 = arith.mulf %1776, %1774 : vector<8x16xf32>
    %1778 = arith.addf %1765, %1777 : vector<8x16xf32>
    %c391 = arith.constant 391 : index
    %1779 = memref.load %arg3[%c391] : memref<588xf32, #tpu.memory_space<smem>>
    %1780 = vector.broadcast %1779 : f32 to vector<8x16xf32>
    %1781 = arith.mulf %1780, %1774 : vector<8x16xf32>
    %1782 = arith.addf %1769, %1781 : vector<8x16xf32>
    %c392 = arith.constant 392 : index
    %1783 = memref.load %arg3[%c392] : memref<588xf32, #tpu.memory_space<smem>>
    %1784 = vector.broadcast %1783 : f32 to vector<8x16xf32>
    %1785 = arith.mulf %1784, %1774 : vector<8x16xf32>
    %1786 = arith.addf %1773, %1785 : vector<8x16xf32>
    %1787 = vector.extract_strided_slice %1721 {offsets = [0, 5], sizes = [8, 16], strides = [1, 1]} : vector<8x22xf32> to vector<8x16xf32>
    %c393 = arith.constant 393 : index
    %1788 = memref.load %arg3[%c393] : memref<588xf32, #tpu.memory_space<smem>>
    %1789 = vector.broadcast %1788 : f32 to vector<8x16xf32>
    %1790 = arith.mulf %1789, %1787 : vector<8x16xf32>
    %1791 = arith.addf %1778, %1790 : vector<8x16xf32>
    %c394 = arith.constant 394 : index
    %1792 = memref.load %arg3[%c394] : memref<588xf32, #tpu.memory_space<smem>>
    %1793 = vector.broadcast %1792 : f32 to vector<8x16xf32>
    %1794 = arith.mulf %1793, %1787 : vector<8x16xf32>
    %1795 = arith.addf %1782, %1794 : vector<8x16xf32>
    %c395 = arith.constant 395 : index
    %1796 = memref.load %arg3[%c395] : memref<588xf32, #tpu.memory_space<smem>>
    %1797 = vector.broadcast %1796 : f32 to vector<8x16xf32>
    %1798 = arith.mulf %1797, %1787 : vector<8x16xf32>
    %1799 = arith.addf %1786, %1798 : vector<8x16xf32>
    %1800 = vector.extract_strided_slice %1721 {offsets = [0, 6], sizes = [8, 16], strides = [1, 1]} : vector<8x22xf32> to vector<8x16xf32>
    %c396 = arith.constant 396 : index
    %1801 = memref.load %arg3[%c396] : memref<588xf32, #tpu.memory_space<smem>>
    %1802 = vector.broadcast %1801 : f32 to vector<8x16xf32>
    %1803 = arith.mulf %1802, %1800 : vector<8x16xf32>
    %1804 = arith.addf %1791, %1803 : vector<8x16xf32>
    %c397 = arith.constant 397 : index
    %1805 = memref.load %arg3[%c397] : memref<588xf32, #tpu.memory_space<smem>>
    %1806 = vector.broadcast %1805 : f32 to vector<8x16xf32>
    %1807 = arith.mulf %1806, %1800 : vector<8x16xf32>
    %1808 = arith.addf %1795, %1807 : vector<8x16xf32>
    %c398 = arith.constant 398 : index
    %1809 = memref.load %arg3[%c398] : memref<588xf32, #tpu.memory_space<smem>>
    %1810 = vector.broadcast %1809 : f32 to vector<8x16xf32>
    %1811 = arith.mulf %1810, %1800 : vector<8x16xf32>
    %1812 = arith.addf %1799, %1811 : vector<8x16xf32>
    %c5_i32_72 = arith.constant 5 : i32
    %1813 = arith.addi %1, %c5_i32_72 : i32
    %c0_73 = arith.constant 0 : index
    %c2_74 = arith.constant 2 : index
    %1814 = arith.index_cast %1813 : i32 to index
    %c0_75 = arith.constant 0 : index
    %1815 = vector.load %arg2[%c0_73, %c2_74, %1814, %c0_75] : memref<1x4x22x22xf32, #tpu.memory_space<vmem>>, vector<1x1x8x22xf32>
    %1816 = vector.shape_cast %1815 : vector<1x1x8x22xf32> to vector<8x22xf32>
    %1817 = vector.extract_strided_slice %1816 {offsets = [0, 0], sizes = [8, 16], strides = [1, 1]} : vector<8x22xf32> to vector<8x16xf32>
    %c399 = arith.constant 399 : index
    %1818 = memref.load %arg3[%c399] : memref<588xf32, #tpu.memory_space<smem>>
    %1819 = vector.broadcast %1818 : f32 to vector<8x16xf32>
    %1820 = arith.mulf %1819, %1817 : vector<8x16xf32>
    %1821 = arith.addf %1804, %1820 : vector<8x16xf32>
    %c400 = arith.constant 400 : index
    %1822 = memref.load %arg3[%c400] : memref<588xf32, #tpu.memory_space<smem>>
    %1823 = vector.broadcast %1822 : f32 to vector<8x16xf32>
    %1824 = arith.mulf %1823, %1817 : vector<8x16xf32>
    %1825 = arith.addf %1808, %1824 : vector<8x16xf32>
    %c401 = arith.constant 401 : index
    %1826 = memref.load %arg3[%c401] : memref<588xf32, #tpu.memory_space<smem>>
    %1827 = vector.broadcast %1826 : f32 to vector<8x16xf32>
    %1828 = arith.mulf %1827, %1817 : vector<8x16xf32>
    %1829 = arith.addf %1812, %1828 : vector<8x16xf32>
    %1830 = vector.extract_strided_slice %1816 {offsets = [0, 1], sizes = [8, 16], strides = [1, 1]} : vector<8x22xf32> to vector<8x16xf32>
    %c402 = arith.constant 402 : index
    %1831 = memref.load %arg3[%c402] : memref<588xf32, #tpu.memory_space<smem>>
    %1832 = vector.broadcast %1831 : f32 to vector<8x16xf32>
    %1833 = arith.mulf %1832, %1830 : vector<8x16xf32>
    %1834 = arith.addf %1821, %1833 : vector<8x16xf32>
    %c403 = arith.constant 403 : index
    %1835 = memref.load %arg3[%c403] : memref<588xf32, #tpu.memory_space<smem>>
    %1836 = vector.broadcast %1835 : f32 to vector<8x16xf32>
    %1837 = arith.mulf %1836, %1830 : vector<8x16xf32>
    %1838 = arith.addf %1825, %1837 : vector<8x16xf32>
    %c404 = arith.constant 404 : index
    %1839 = memref.load %arg3[%c404] : memref<588xf32, #tpu.memory_space<smem>>
    %1840 = vector.broadcast %1839 : f32 to vector<8x16xf32>
    %1841 = arith.mulf %1840, %1830 : vector<8x16xf32>
    %1842 = arith.addf %1829, %1841 : vector<8x16xf32>
    %1843 = vector.extract_strided_slice %1816 {offsets = [0, 2], sizes = [8, 16], strides = [1, 1]} : vector<8x22xf32> to vector<8x16xf32>
    %c405 = arith.constant 405 : index
    %1844 = memref.load %arg3[%c405] : memref<588xf32, #tpu.memory_space<smem>>
    %1845 = vector.broadcast %1844 : f32 to vector<8x16xf32>
    %1846 = arith.mulf %1845, %1843 : vector<8x16xf32>
    %1847 = arith.addf %1834, %1846 : vector<8x16xf32>
    %c406 = arith.constant 406 : index
    %1848 = memref.load %arg3[%c406] : memref<588xf32, #tpu.memory_space<smem>>
    %1849 = vector.broadcast %1848 : f32 to vector<8x16xf32>
    %1850 = arith.mulf %1849, %1843 : vector<8x16xf32>
    %1851 = arith.addf %1838, %1850 : vector<8x16xf32>
    %c407 = arith.constant 407 : index
    %1852 = memref.load %arg3[%c407] : memref<588xf32, #tpu.memory_space<smem>>
    %1853 = vector.broadcast %1852 : f32 to vector<8x16xf32>
    %1854 = arith.mulf %1853, %1843 : vector<8x16xf32>
    %1855 = arith.addf %1842, %1854 : vector<8x16xf32>
    %1856 = vector.extract_strided_slice %1816 {offsets = [0, 3], sizes = [8, 16], strides = [1, 1]} : vector<8x22xf32> to vector<8x16xf32>
    %c408 = arith.constant 408 : index
    %1857 = memref.load %arg3[%c408] : memref<588xf32, #tpu.memory_space<smem>>
    %1858 = vector.broadcast %1857 : f32 to vector<8x16xf32>
    %1859 = arith.mulf %1858, %1856 : vector<8x16xf32>
    %1860 = arith.addf %1847, %1859 : vector<8x16xf32>
    %c409 = arith.constant 409 : index
    %1861 = memref.load %arg3[%c409] : memref<588xf32, #tpu.memory_space<smem>>
    %1862 = vector.broadcast %1861 : f32 to vector<8x16xf32>
    %1863 = arith.mulf %1862, %1856 : vector<8x16xf32>
    %1864 = arith.addf %1851, %1863 : vector<8x16xf32>
    %c410 = arith.constant 410 : index
    %1865 = memref.load %arg3[%c410] : memref<588xf32, #tpu.memory_space<smem>>
    %1866 = vector.broadcast %1865 : f32 to vector<8x16xf32>
    %1867 = arith.mulf %1866, %1856 : vector<8x16xf32>
    %1868 = arith.addf %1855, %1867 : vector<8x16xf32>
    %1869 = vector.extract_strided_slice %1816 {offsets = [0, 4], sizes = [8, 16], strides = [1, 1]} : vector<8x22xf32> to vector<8x16xf32>
    %c411 = arith.constant 411 : index
    %1870 = memref.load %arg3[%c411] : memref<588xf32, #tpu.memory_space<smem>>
    %1871 = vector.broadcast %1870 : f32 to vector<8x16xf32>
    %1872 = arith.mulf %1871, %1869 : vector<8x16xf32>
    %1873 = arith.addf %1860, %1872 : vector<8x16xf32>
    %c412 = arith.constant 412 : index
    %1874 = memref.load %arg3[%c412] : memref<588xf32, #tpu.memory_space<smem>>
    %1875 = vector.broadcast %1874 : f32 to vector<8x16xf32>
    %1876 = arith.mulf %1875, %1869 : vector<8x16xf32>
    %1877 = arith.addf %1864, %1876 : vector<8x16xf32>
    %c413 = arith.constant 413 : index
    %1878 = memref.load %arg3[%c413] : memref<588xf32, #tpu.memory_space<smem>>
    %1879 = vector.broadcast %1878 : f32 to vector<8x16xf32>
    %1880 = arith.mulf %1879, %1869 : vector<8x16xf32>
    %1881 = arith.addf %1868, %1880 : vector<8x16xf32>
    %1882 = vector.extract_strided_slice %1816 {offsets = [0, 5], sizes = [8, 16], strides = [1, 1]} : vector<8x22xf32> to vector<8x16xf32>
    %c414 = arith.constant 414 : index
    %1883 = memref.load %arg3[%c414] : memref<588xf32, #tpu.memory_space<smem>>
    %1884 = vector.broadcast %1883 : f32 to vector<8x16xf32>
    %1885 = arith.mulf %1884, %1882 : vector<8x16xf32>
    %1886 = arith.addf %1873, %1885 : vector<8x16xf32>
    %c415 = arith.constant 415 : index
    %1887 = memref.load %arg3[%c415] : memref<588xf32, #tpu.memory_space<smem>>
    %1888 = vector.broadcast %1887 : f32 to vector<8x16xf32>
    %1889 = arith.mulf %1888, %1882 : vector<8x16xf32>
    %1890 = arith.addf %1877, %1889 : vector<8x16xf32>
    %c416 = arith.constant 416 : index
    %1891 = memref.load %arg3[%c416] : memref<588xf32, #tpu.memory_space<smem>>
    %1892 = vector.broadcast %1891 : f32 to vector<8x16xf32>
    %1893 = arith.mulf %1892, %1882 : vector<8x16xf32>
    %1894 = arith.addf %1881, %1893 : vector<8x16xf32>
    %1895 = vector.extract_strided_slice %1816 {offsets = [0, 6], sizes = [8, 16], strides = [1, 1]} : vector<8x22xf32> to vector<8x16xf32>
    %c417 = arith.constant 417 : index
    %1896 = memref.load %arg3[%c417] : memref<588xf32, #tpu.memory_space<smem>>
    %1897 = vector.broadcast %1896 : f32 to vector<8x16xf32>
    %1898 = arith.mulf %1897, %1895 : vector<8x16xf32>
    %1899 = arith.addf %1886, %1898 : vector<8x16xf32>
    %c418 = arith.constant 418 : index
    %1900 = memref.load %arg3[%c418] : memref<588xf32, #tpu.memory_space<smem>>
    %1901 = vector.broadcast %1900 : f32 to vector<8x16xf32>
    %1902 = arith.mulf %1901, %1895 : vector<8x16xf32>
    %1903 = arith.addf %1890, %1902 : vector<8x16xf32>
    %c419 = arith.constant 419 : index
    %1904 = memref.load %arg3[%c419] : memref<588xf32, #tpu.memory_space<smem>>
    %1905 = vector.broadcast %1904 : f32 to vector<8x16xf32>
    %1906 = arith.mulf %1905, %1895 : vector<8x16xf32>
    %1907 = arith.addf %1894, %1906 : vector<8x16xf32>
    %c6_i32_76 = arith.constant 6 : i32
    %1908 = arith.addi %1, %c6_i32_76 : i32
    %c0_77 = arith.constant 0 : index
    %c2_78 = arith.constant 2 : index
    %1909 = arith.index_cast %1908 : i32 to index
    %c0_79 = arith.constant 0 : index
    %1910 = vector.load %arg2[%c0_77, %c2_78, %1909, %c0_79] : memref<1x4x22x22xf32, #tpu.memory_space<vmem>>, vector<1x1x8x22xf32>
    %1911 = vector.shape_cast %1910 : vector<1x1x8x22xf32> to vector<8x22xf32>
    %1912 = vector.extract_strided_slice %1911 {offsets = [0, 0], sizes = [8, 16], strides = [1, 1]} : vector<8x22xf32> to vector<8x16xf32>
    %c420 = arith.constant 420 : index
    %1913 = memref.load %arg3[%c420] : memref<588xf32, #tpu.memory_space<smem>>
    %1914 = vector.broadcast %1913 : f32 to vector<8x16xf32>
    %1915 = arith.mulf %1914, %1912 : vector<8x16xf32>
    %1916 = arith.addf %1899, %1915 : vector<8x16xf32>
    %c421 = arith.constant 421 : index
    %1917 = memref.load %arg3[%c421] : memref<588xf32, #tpu.memory_space<smem>>
    %1918 = vector.broadcast %1917 : f32 to vector<8x16xf32>
    %1919 = arith.mulf %1918, %1912 : vector<8x16xf32>
    %1920 = arith.addf %1903, %1919 : vector<8x16xf32>
    %c422 = arith.constant 422 : index
    %1921 = memref.load %arg3[%c422] : memref<588xf32, #tpu.memory_space<smem>>
    %1922 = vector.broadcast %1921 : f32 to vector<8x16xf32>
    %1923 = arith.mulf %1922, %1912 : vector<8x16xf32>
    %1924 = arith.addf %1907, %1923 : vector<8x16xf32>
    %1925 = vector.extract_strided_slice %1911 {offsets = [0, 1], sizes = [8, 16], strides = [1, 1]} : vector<8x22xf32> to vector<8x16xf32>
    %c423 = arith.constant 423 : index
    %1926 = memref.load %arg3[%c423] : memref<588xf32, #tpu.memory_space<smem>>
    %1927 = vector.broadcast %1926 : f32 to vector<8x16xf32>
    %1928 = arith.mulf %1927, %1925 : vector<8x16xf32>
    %1929 = arith.addf %1916, %1928 : vector<8x16xf32>
    %c424 = arith.constant 424 : index
    %1930 = memref.load %arg3[%c424] : memref<588xf32, #tpu.memory_space<smem>>
    %1931 = vector.broadcast %1930 : f32 to vector<8x16xf32>
    %1932 = arith.mulf %1931, %1925 : vector<8x16xf32>
    %1933 = arith.addf %1920, %1932 : vector<8x16xf32>
    %c425 = arith.constant 425 : index
    %1934 = memref.load %arg3[%c425] : memref<588xf32, #tpu.memory_space<smem>>
    %1935 = vector.broadcast %1934 : f32 to vector<8x16xf32>
    %1936 = arith.mulf %1935, %1925 : vector<8x16xf32>
    %1937 = arith.addf %1924, %1936 : vector<8x16xf32>
    %1938 = vector.extract_strided_slice %1911 {offsets = [0, 2], sizes = [8, 16], strides = [1, 1]} : vector<8x22xf32> to vector<8x16xf32>
    %c426 = arith.constant 426 : index
    %1939 = memref.load %arg3[%c426] : memref<588xf32, #tpu.memory_space<smem>>
    %1940 = vector.broadcast %1939 : f32 to vector<8x16xf32>
    %1941 = arith.mulf %1940, %1938 : vector<8x16xf32>
    %1942 = arith.addf %1929, %1941 : vector<8x16xf32>
    %c427 = arith.constant 427 : index
    %1943 = memref.load %arg3[%c427] : memref<588xf32, #tpu.memory_space<smem>>
    %1944 = vector.broadcast %1943 : f32 to vector<8x16xf32>
    %1945 = arith.mulf %1944, %1938 : vector<8x16xf32>
    %1946 = arith.addf %1933, %1945 : vector<8x16xf32>
    %c428 = arith.constant 428 : index
    %1947 = memref.load %arg3[%c428] : memref<588xf32, #tpu.memory_space<smem>>
    %1948 = vector.broadcast %1947 : f32 to vector<8x16xf32>
    %1949 = arith.mulf %1948, %1938 : vector<8x16xf32>
    %1950 = arith.addf %1937, %1949 : vector<8x16xf32>
    %1951 = vector.extract_strided_slice %1911 {offsets = [0, 3], sizes = [8, 16], strides = [1, 1]} : vector<8x22xf32> to vector<8x16xf32>
    %c429 = arith.constant 429 : index
    %1952 = memref.load %arg3[%c429] : memref<588xf32, #tpu.memory_space<smem>>
    %1953 = vector.broadcast %1952 : f32 to vector<8x16xf32>
    %1954 = arith.mulf %1953, %1951 : vector<8x16xf32>
    %1955 = arith.addf %1942, %1954 : vector<8x16xf32>
    %c430 = arith.constant 430 : index
    %1956 = memref.load %arg3[%c430] : memref<588xf32, #tpu.memory_space<smem>>
    %1957 = vector.broadcast %1956 : f32 to vector<8x16xf32>
    %1958 = arith.mulf %1957, %1951 : vector<8x16xf32>
    %1959 = arith.addf %1946, %1958 : vector<8x16xf32>
    %c431 = arith.constant 431 : index
    %1960 = memref.load %arg3[%c431] : memref<588xf32, #tpu.memory_space<smem>>
    %1961 = vector.broadcast %1960 : f32 to vector<8x16xf32>
    %1962 = arith.mulf %1961, %1951 : vector<8x16xf32>
    %1963 = arith.addf %1950, %1962 : vector<8x16xf32>
    %1964 = vector.extract_strided_slice %1911 {offsets = [0, 4], sizes = [8, 16], strides = [1, 1]} : vector<8x22xf32> to vector<8x16xf32>
    %c432 = arith.constant 432 : index
    %1965 = memref.load %arg3[%c432] : memref<588xf32, #tpu.memory_space<smem>>
    %1966 = vector.broadcast %1965 : f32 to vector<8x16xf32>
    %1967 = arith.mulf %1966, %1964 : vector<8x16xf32>
    %1968 = arith.addf %1955, %1967 : vector<8x16xf32>
    %c433 = arith.constant 433 : index
    %1969 = memref.load %arg3[%c433] : memref<588xf32, #tpu.memory_space<smem>>
    %1970 = vector.broadcast %1969 : f32 to vector<8x16xf32>
    %1971 = arith.mulf %1970, %1964 : vector<8x16xf32>
    %1972 = arith.addf %1959, %1971 : vector<8x16xf32>
    %c434 = arith.constant 434 : index
    %1973 = memref.load %arg3[%c434] : memref<588xf32, #tpu.memory_space<smem>>
    %1974 = vector.broadcast %1973 : f32 to vector<8x16xf32>
    %1975 = arith.mulf %1974, %1964 : vector<8x16xf32>
    %1976 = arith.addf %1963, %1975 : vector<8x16xf32>
    %1977 = vector.extract_strided_slice %1911 {offsets = [0, 5], sizes = [8, 16], strides = [1, 1]} : vector<8x22xf32> to vector<8x16xf32>
    %c435 = arith.constant 435 : index
    %1978 = memref.load %arg3[%c435] : memref<588xf32, #tpu.memory_space<smem>>
    %1979 = vector.broadcast %1978 : f32 to vector<8x16xf32>
    %1980 = arith.mulf %1979, %1977 : vector<8x16xf32>
    %1981 = arith.addf %1968, %1980 : vector<8x16xf32>
    %c436 = arith.constant 436 : index
    %1982 = memref.load %arg3[%c436] : memref<588xf32, #tpu.memory_space<smem>>
    %1983 = vector.broadcast %1982 : f32 to vector<8x16xf32>
    %1984 = arith.mulf %1983, %1977 : vector<8x16xf32>
    %1985 = arith.addf %1972, %1984 : vector<8x16xf32>
    %c437 = arith.constant 437 : index
    %1986 = memref.load %arg3[%c437] : memref<588xf32, #tpu.memory_space<smem>>
    %1987 = vector.broadcast %1986 : f32 to vector<8x16xf32>
    %1988 = arith.mulf %1987, %1977 : vector<8x16xf32>
    %1989 = arith.addf %1976, %1988 : vector<8x16xf32>
    %1990 = vector.extract_strided_slice %1911 {offsets = [0, 6], sizes = [8, 16], strides = [1, 1]} : vector<8x22xf32> to vector<8x16xf32>
    %c438 = arith.constant 438 : index
    %1991 = memref.load %arg3[%c438] : memref<588xf32, #tpu.memory_space<smem>>
    %1992 = vector.broadcast %1991 : f32 to vector<8x16xf32>
    %1993 = arith.mulf %1992, %1990 : vector<8x16xf32>
    %1994 = arith.addf %1981, %1993 : vector<8x16xf32>
    %c439 = arith.constant 439 : index
    %1995 = memref.load %arg3[%c439] : memref<588xf32, #tpu.memory_space<smem>>
    %1996 = vector.broadcast %1995 : f32 to vector<8x16xf32>
    %1997 = arith.mulf %1996, %1990 : vector<8x16xf32>
    %1998 = arith.addf %1985, %1997 : vector<8x16xf32>
    %c440 = arith.constant 440 : index
    %1999 = memref.load %arg3[%c440] : memref<588xf32, #tpu.memory_space<smem>>
    %2000 = vector.broadcast %1999 : f32 to vector<8x16xf32>
    %2001 = arith.mulf %2000, %1990 : vector<8x16xf32>
    %2002 = arith.addf %1989, %2001 : vector<8x16xf32>
    %c0_i32_80 = arith.constant 0 : i32
    %2003 = arith.addi %1, %c0_i32_80 : i32
    %c0_81 = arith.constant 0 : index
    %c3_82 = arith.constant 3 : index
    %2004 = arith.index_cast %2003 : i32 to index
    %c0_83 = arith.constant 0 : index
    %2005 = vector.load %arg2[%c0_81, %c3_82, %2004, %c0_83] : memref<1x4x22x22xf32, #tpu.memory_space<vmem>>, vector<1x1x8x22xf32>
    %2006 = vector.shape_cast %2005 : vector<1x1x8x22xf32> to vector<8x22xf32>
    %2007 = vector.extract_strided_slice %2006 {offsets = [0, 0], sizes = [8, 16], strides = [1, 1]} : vector<8x22xf32> to vector<8x16xf32>
    %c441 = arith.constant 441 : index
    %2008 = memref.load %arg3[%c441] : memref<588xf32, #tpu.memory_space<smem>>
    %2009 = vector.broadcast %2008 : f32 to vector<8x16xf32>
    %2010 = arith.mulf %2009, %2007 : vector<8x16xf32>
    %2011 = arith.addf %1994, %2010 : vector<8x16xf32>
    %c442 = arith.constant 442 : index
    %2012 = memref.load %arg3[%c442] : memref<588xf32, #tpu.memory_space<smem>>
    %2013 = vector.broadcast %2012 : f32 to vector<8x16xf32>
    %2014 = arith.mulf %2013, %2007 : vector<8x16xf32>
    %2015 = arith.addf %1998, %2014 : vector<8x16xf32>
    %c443 = arith.constant 443 : index
    %2016 = memref.load %arg3[%c443] : memref<588xf32, #tpu.memory_space<smem>>
    %2017 = vector.broadcast %2016 : f32 to vector<8x16xf32>
    %2018 = arith.mulf %2017, %2007 : vector<8x16xf32>
    %2019 = arith.addf %2002, %2018 : vector<8x16xf32>
    %2020 = vector.extract_strided_slice %2006 {offsets = [0, 1], sizes = [8, 16], strides = [1, 1]} : vector<8x22xf32> to vector<8x16xf32>
    %c444 = arith.constant 444 : index
    %2021 = memref.load %arg3[%c444] : memref<588xf32, #tpu.memory_space<smem>>
    %2022 = vector.broadcast %2021 : f32 to vector<8x16xf32>
    %2023 = arith.mulf %2022, %2020 : vector<8x16xf32>
    %2024 = arith.addf %2011, %2023 : vector<8x16xf32>
    %c445 = arith.constant 445 : index
    %2025 = memref.load %arg3[%c445] : memref<588xf32, #tpu.memory_space<smem>>
    %2026 = vector.broadcast %2025 : f32 to vector<8x16xf32>
    %2027 = arith.mulf %2026, %2020 : vector<8x16xf32>
    %2028 = arith.addf %2015, %2027 : vector<8x16xf32>
    %c446 = arith.constant 446 : index
    %2029 = memref.load %arg3[%c446] : memref<588xf32, #tpu.memory_space<smem>>
    %2030 = vector.broadcast %2029 : f32 to vector<8x16xf32>
    %2031 = arith.mulf %2030, %2020 : vector<8x16xf32>
    %2032 = arith.addf %2019, %2031 : vector<8x16xf32>
    %2033 = vector.extract_strided_slice %2006 {offsets = [0, 2], sizes = [8, 16], strides = [1, 1]} : vector<8x22xf32> to vector<8x16xf32>
    %c447 = arith.constant 447 : index
    %2034 = memref.load %arg3[%c447] : memref<588xf32, #tpu.memory_space<smem>>
    %2035 = vector.broadcast %2034 : f32 to vector<8x16xf32>
    %2036 = arith.mulf %2035, %2033 : vector<8x16xf32>
    %2037 = arith.addf %2024, %2036 : vector<8x16xf32>
    %c448 = arith.constant 448 : index
    %2038 = memref.load %arg3[%c448] : memref<588xf32, #tpu.memory_space<smem>>
    %2039 = vector.broadcast %2038 : f32 to vector<8x16xf32>
    %2040 = arith.mulf %2039, %2033 : vector<8x16xf32>
    %2041 = arith.addf %2028, %2040 : vector<8x16xf32>
    %c449 = arith.constant 449 : index
    %2042 = memref.load %arg3[%c449] : memref<588xf32, #tpu.memory_space<smem>>
    %2043 = vector.broadcast %2042 : f32 to vector<8x16xf32>
    %2044 = arith.mulf %2043, %2033 : vector<8x16xf32>
    %2045 = arith.addf %2032, %2044 : vector<8x16xf32>
    %2046 = vector.extract_strided_slice %2006 {offsets = [0, 3], sizes = [8, 16], strides = [1, 1]} : vector<8x22xf32> to vector<8x16xf32>
    %c450 = arith.constant 450 : index
    %2047 = memref.load %arg3[%c450] : memref<588xf32, #tpu.memory_space<smem>>
    %2048 = vector.broadcast %2047 : f32 to vector<8x16xf32>
    %2049 = arith.mulf %2048, %2046 : vector<8x16xf32>
    %2050 = arith.addf %2037, %2049 : vector<8x16xf32>
    %c451 = arith.constant 451 : index
    %2051 = memref.load %arg3[%c451] : memref<588xf32, #tpu.memory_space<smem>>
    %2052 = vector.broadcast %2051 : f32 to vector<8x16xf32>
    %2053 = arith.mulf %2052, %2046 : vector<8x16xf32>
    %2054 = arith.addf %2041, %2053 : vector<8x16xf32>
    %c452 = arith.constant 452 : index
    %2055 = memref.load %arg3[%c452] : memref<588xf32, #tpu.memory_space<smem>>
    %2056 = vector.broadcast %2055 : f32 to vector<8x16xf32>
    %2057 = arith.mulf %2056, %2046 : vector<8x16xf32>
    %2058 = arith.addf %2045, %2057 : vector<8x16xf32>
    %2059 = vector.extract_strided_slice %2006 {offsets = [0, 4], sizes = [8, 16], strides = [1, 1]} : vector<8x22xf32> to vector<8x16xf32>
    %c453 = arith.constant 453 : index
    %2060 = memref.load %arg3[%c453] : memref<588xf32, #tpu.memory_space<smem>>
    %2061 = vector.broadcast %2060 : f32 to vector<8x16xf32>
    %2062 = arith.mulf %2061, %2059 : vector<8x16xf32>
    %2063 = arith.addf %2050, %2062 : vector<8x16xf32>
    %c454 = arith.constant 454 : index
    %2064 = memref.load %arg3[%c454] : memref<588xf32, #tpu.memory_space<smem>>
    %2065 = vector.broadcast %2064 : f32 to vector<8x16xf32>
    %2066 = arith.mulf %2065, %2059 : vector<8x16xf32>
    %2067 = arith.addf %2054, %2066 : vector<8x16xf32>
    %c455 = arith.constant 455 : index
    %2068 = memref.load %arg3[%c455] : memref<588xf32, #tpu.memory_space<smem>>
    %2069 = vector.broadcast %2068 : f32 to vector<8x16xf32>
    %2070 = arith.mulf %2069, %2059 : vector<8x16xf32>
    %2071 = arith.addf %2058, %2070 : vector<8x16xf32>
    %2072 = vector.extract_strided_slice %2006 {offsets = [0, 5], sizes = [8, 16], strides = [1, 1]} : vector<8x22xf32> to vector<8x16xf32>
    %c456 = arith.constant 456 : index
    %2073 = memref.load %arg3[%c456] : memref<588xf32, #tpu.memory_space<smem>>
    %2074 = vector.broadcast %2073 : f32 to vector<8x16xf32>
    %2075 = arith.mulf %2074, %2072 : vector<8x16xf32>
    %2076 = arith.addf %2063, %2075 : vector<8x16xf32>
    %c457 = arith.constant 457 : index
    %2077 = memref.load %arg3[%c457] : memref<588xf32, #tpu.memory_space<smem>>
    %2078 = vector.broadcast %2077 : f32 to vector<8x16xf32>
    %2079 = arith.mulf %2078, %2072 : vector<8x16xf32>
    %2080 = arith.addf %2067, %2079 : vector<8x16xf32>
    %c458 = arith.constant 458 : index
    %2081 = memref.load %arg3[%c458] : memref<588xf32, #tpu.memory_space<smem>>
    %2082 = vector.broadcast %2081 : f32 to vector<8x16xf32>
    %2083 = arith.mulf %2082, %2072 : vector<8x16xf32>
    %2084 = arith.addf %2071, %2083 : vector<8x16xf32>
    %2085 = vector.extract_strided_slice %2006 {offsets = [0, 6], sizes = [8, 16], strides = [1, 1]} : vector<8x22xf32> to vector<8x16xf32>
    %c459 = arith.constant 459 : index
    %2086 = memref.load %arg3[%c459] : memref<588xf32, #tpu.memory_space<smem>>
    %2087 = vector.broadcast %2086 : f32 to vector<8x16xf32>
    %2088 = arith.mulf %2087, %2085 : vector<8x16xf32>
    %2089 = arith.addf %2076, %2088 : vector<8x16xf32>
    %c460 = arith.constant 460 : index
    %2090 = memref.load %arg3[%c460] : memref<588xf32, #tpu.memory_space<smem>>
    %2091 = vector.broadcast %2090 : f32 to vector<8x16xf32>
    %2092 = arith.mulf %2091, %2085 : vector<8x16xf32>
    %2093 = arith.addf %2080, %2092 : vector<8x16xf32>
    %c461 = arith.constant 461 : index
    %2094 = memref.load %arg3[%c461] : memref<588xf32, #tpu.memory_space<smem>>
    %2095 = vector.broadcast %2094 : f32 to vector<8x16xf32>
    %2096 = arith.mulf %2095, %2085 : vector<8x16xf32>
    %2097 = arith.addf %2084, %2096 : vector<8x16xf32>
    %c1_i32_84 = arith.constant 1 : i32
    %2098 = arith.addi %1, %c1_i32_84 : i32
    %c0_85 = arith.constant 0 : index
    %c3_86 = arith.constant 3 : index
    %2099 = arith.index_cast %2098 : i32 to index
    %c0_87 = arith.constant 0 : index
    %2100 = vector.load %arg2[%c0_85, %c3_86, %2099, %c0_87] : memref<1x4x22x22xf32, #tpu.memory_space<vmem>>, vector<1x1x8x22xf32>
    %2101 = vector.shape_cast %2100 : vector<1x1x8x22xf32> to vector<8x22xf32>
    %2102 = vector.extract_strided_slice %2101 {offsets = [0, 0], sizes = [8, 16], strides = [1, 1]} : vector<8x22xf32> to vector<8x16xf32>
    %c462 = arith.constant 462 : index
    %2103 = memref.load %arg3[%c462] : memref<588xf32, #tpu.memory_space<smem>>
    %2104 = vector.broadcast %2103 : f32 to vector<8x16xf32>
    %2105 = arith.mulf %2104, %2102 : vector<8x16xf32>
    %2106 = arith.addf %2089, %2105 : vector<8x16xf32>
    %c463 = arith.constant 463 : index
    %2107 = memref.load %arg3[%c463] : memref<588xf32, #tpu.memory_space<smem>>
    %2108 = vector.broadcast %2107 : f32 to vector<8x16xf32>
    %2109 = arith.mulf %2108, %2102 : vector<8x16xf32>
    %2110 = arith.addf %2093, %2109 : vector<8x16xf32>
    %c464 = arith.constant 464 : index
    %2111 = memref.load %arg3[%c464] : memref<588xf32, #tpu.memory_space<smem>>
    %2112 = vector.broadcast %2111 : f32 to vector<8x16xf32>
    %2113 = arith.mulf %2112, %2102 : vector<8x16xf32>
    %2114 = arith.addf %2097, %2113 : vector<8x16xf32>
    %2115 = vector.extract_strided_slice %2101 {offsets = [0, 1], sizes = [8, 16], strides = [1, 1]} : vector<8x22xf32> to vector<8x16xf32>
    %c465 = arith.constant 465 : index
    %2116 = memref.load %arg3[%c465] : memref<588xf32, #tpu.memory_space<smem>>
    %2117 = vector.broadcast %2116 : f32 to vector<8x16xf32>
    %2118 = arith.mulf %2117, %2115 : vector<8x16xf32>
    %2119 = arith.addf %2106, %2118 : vector<8x16xf32>
    %c466 = arith.constant 466 : index
    %2120 = memref.load %arg3[%c466] : memref<588xf32, #tpu.memory_space<smem>>
    %2121 = vector.broadcast %2120 : f32 to vector<8x16xf32>
    %2122 = arith.mulf %2121, %2115 : vector<8x16xf32>
    %2123 = arith.addf %2110, %2122 : vector<8x16xf32>
    %c467 = arith.constant 467 : index
    %2124 = memref.load %arg3[%c467] : memref<588xf32, #tpu.memory_space<smem>>
    %2125 = vector.broadcast %2124 : f32 to vector<8x16xf32>
    %2126 = arith.mulf %2125, %2115 : vector<8x16xf32>
    %2127 = arith.addf %2114, %2126 : vector<8x16xf32>
    %2128 = vector.extract_strided_slice %2101 {offsets = [0, 2], sizes = [8, 16], strides = [1, 1]} : vector<8x22xf32> to vector<8x16xf32>
    %c468 = arith.constant 468 : index
    %2129 = memref.load %arg3[%c468] : memref<588xf32, #tpu.memory_space<smem>>
    %2130 = vector.broadcast %2129 : f32 to vector<8x16xf32>
    %2131 = arith.mulf %2130, %2128 : vector<8x16xf32>
    %2132 = arith.addf %2119, %2131 : vector<8x16xf32>
    %c469 = arith.constant 469 : index
    %2133 = memref.load %arg3[%c469] : memref<588xf32, #tpu.memory_space<smem>>
    %2134 = vector.broadcast %2133 : f32 to vector<8x16xf32>
    %2135 = arith.mulf %2134, %2128 : vector<8x16xf32>
    %2136 = arith.addf %2123, %2135 : vector<8x16xf32>
    %c470 = arith.constant 470 : index
    %2137 = memref.load %arg3[%c470] : memref<588xf32, #tpu.memory_space<smem>>
    %2138 = vector.broadcast %2137 : f32 to vector<8x16xf32>
    %2139 = arith.mulf %2138, %2128 : vector<8x16xf32>
    %2140 = arith.addf %2127, %2139 : vector<8x16xf32>
    %2141 = vector.extract_strided_slice %2101 {offsets = [0, 3], sizes = [8, 16], strides = [1, 1]} : vector<8x22xf32> to vector<8x16xf32>
    %c471 = arith.constant 471 : index
    %2142 = memref.load %arg3[%c471] : memref<588xf32, #tpu.memory_space<smem>>
    %2143 = vector.broadcast %2142 : f32 to vector<8x16xf32>
    %2144 = arith.mulf %2143, %2141 : vector<8x16xf32>
    %2145 = arith.addf %2132, %2144 : vector<8x16xf32>
    %c472 = arith.constant 472 : index
    %2146 = memref.load %arg3[%c472] : memref<588xf32, #tpu.memory_space<smem>>
    %2147 = vector.broadcast %2146 : f32 to vector<8x16xf32>
    %2148 = arith.mulf %2147, %2141 : vector<8x16xf32>
    %2149 = arith.addf %2136, %2148 : vector<8x16xf32>
    %c473 = arith.constant 473 : index
    %2150 = memref.load %arg3[%c473] : memref<588xf32, #tpu.memory_space<smem>>
    %2151 = vector.broadcast %2150 : f32 to vector<8x16xf32>
    %2152 = arith.mulf %2151, %2141 : vector<8x16xf32>
    %2153 = arith.addf %2140, %2152 : vector<8x16xf32>
    %2154 = vector.extract_strided_slice %2101 {offsets = [0, 4], sizes = [8, 16], strides = [1, 1]} : vector<8x22xf32> to vector<8x16xf32>
    %c474 = arith.constant 474 : index
    %2155 = memref.load %arg3[%c474] : memref<588xf32, #tpu.memory_space<smem>>
    %2156 = vector.broadcast %2155 : f32 to vector<8x16xf32>
    %2157 = arith.mulf %2156, %2154 : vector<8x16xf32>
    %2158 = arith.addf %2145, %2157 : vector<8x16xf32>
    %c475 = arith.constant 475 : index
    %2159 = memref.load %arg3[%c475] : memref<588xf32, #tpu.memory_space<smem>>
    %2160 = vector.broadcast %2159 : f32 to vector<8x16xf32>
    %2161 = arith.mulf %2160, %2154 : vector<8x16xf32>
    %2162 = arith.addf %2149, %2161 : vector<8x16xf32>
    %c476 = arith.constant 476 : index
    %2163 = memref.load %arg3[%c476] : memref<588xf32, #tpu.memory_space<smem>>
    %2164 = vector.broadcast %2163 : f32 to vector<8x16xf32>
    %2165 = arith.mulf %2164, %2154 : vector<8x16xf32>
    %2166 = arith.addf %2153, %2165 : vector<8x16xf32>
    %2167 = vector.extract_strided_slice %2101 {offsets = [0, 5], sizes = [8, 16], strides = [1, 1]} : vector<8x22xf32> to vector<8x16xf32>
    %c477 = arith.constant 477 : index
    %2168 = memref.load %arg3[%c477] : memref<588xf32, #tpu.memory_space<smem>>
    %2169 = vector.broadcast %2168 : f32 to vector<8x16xf32>
    %2170 = arith.mulf %2169, %2167 : vector<8x16xf32>
    %2171 = arith.addf %2158, %2170 : vector<8x16xf32>
    %c478 = arith.constant 478 : index
    %2172 = memref.load %arg3[%c478] : memref<588xf32, #tpu.memory_space<smem>>
    %2173 = vector.broadcast %2172 : f32 to vector<8x16xf32>
    %2174 = arith.mulf %2173, %2167 : vector<8x16xf32>
    %2175 = arith.addf %2162, %2174 : vector<8x16xf32>
    %c479 = arith.constant 479 : index
    %2176 = memref.load %arg3[%c479] : memref<588xf32, #tpu.memory_space<smem>>
    %2177 = vector.broadcast %2176 : f32 to vector<8x16xf32>
    %2178 = arith.mulf %2177, %2167 : vector<8x16xf32>
    %2179 = arith.addf %2166, %2178 : vector<8x16xf32>
    %2180 = vector.extract_strided_slice %2101 {offsets = [0, 6], sizes = [8, 16], strides = [1, 1]} : vector<8x22xf32> to vector<8x16xf32>
    %c480 = arith.constant 480 : index
    %2181 = memref.load %arg3[%c480] : memref<588xf32, #tpu.memory_space<smem>>
    %2182 = vector.broadcast %2181 : f32 to vector<8x16xf32>
    %2183 = arith.mulf %2182, %2180 : vector<8x16xf32>
    %2184 = arith.addf %2171, %2183 : vector<8x16xf32>
    %c481 = arith.constant 481 : index
    %2185 = memref.load %arg3[%c481] : memref<588xf32, #tpu.memory_space<smem>>
    %2186 = vector.broadcast %2185 : f32 to vector<8x16xf32>
    %2187 = arith.mulf %2186, %2180 : vector<8x16xf32>
    %2188 = arith.addf %2175, %2187 : vector<8x16xf32>
    %c482 = arith.constant 482 : index
    %2189 = memref.load %arg3[%c482] : memref<588xf32, #tpu.memory_space<smem>>
    %2190 = vector.broadcast %2189 : f32 to vector<8x16xf32>
    %2191 = arith.mulf %2190, %2180 : vector<8x16xf32>
    %2192 = arith.addf %2179, %2191 : vector<8x16xf32>
    %c2_i32_88 = arith.constant 2 : i32
    %2193 = arith.addi %1, %c2_i32_88 : i32
    %c0_89 = arith.constant 0 : index
    %c3_90 = arith.constant 3 : index
    %2194 = arith.index_cast %2193 : i32 to index
    %c0_91 = arith.constant 0 : index
    %2195 = vector.load %arg2[%c0_89, %c3_90, %2194, %c0_91] : memref<1x4x22x22xf32, #tpu.memory_space<vmem>>, vector<1x1x8x22xf32>
    %2196 = vector.shape_cast %2195 : vector<1x1x8x22xf32> to vector<8x22xf32>
    %2197 = vector.extract_strided_slice %2196 {offsets = [0, 0], sizes = [8, 16], strides = [1, 1]} : vector<8x22xf32> to vector<8x16xf32>
    %c483 = arith.constant 483 : index
    %2198 = memref.load %arg3[%c483] : memref<588xf32, #tpu.memory_space<smem>>
    %2199 = vector.broadcast %2198 : f32 to vector<8x16xf32>
    %2200 = arith.mulf %2199, %2197 : vector<8x16xf32>
    %2201 = arith.addf %2184, %2200 : vector<8x16xf32>
    %c484 = arith.constant 484 : index
    %2202 = memref.load %arg3[%c484] : memref<588xf32, #tpu.memory_space<smem>>
    %2203 = vector.broadcast %2202 : f32 to vector<8x16xf32>
    %2204 = arith.mulf %2203, %2197 : vector<8x16xf32>
    %2205 = arith.addf %2188, %2204 : vector<8x16xf32>
    %c485 = arith.constant 485 : index
    %2206 = memref.load %arg3[%c485] : memref<588xf32, #tpu.memory_space<smem>>
    %2207 = vector.broadcast %2206 : f32 to vector<8x16xf32>
    %2208 = arith.mulf %2207, %2197 : vector<8x16xf32>
    %2209 = arith.addf %2192, %2208 : vector<8x16xf32>
    %2210 = vector.extract_strided_slice %2196 {offsets = [0, 1], sizes = [8, 16], strides = [1, 1]} : vector<8x22xf32> to vector<8x16xf32>
    %c486 = arith.constant 486 : index
    %2211 = memref.load %arg3[%c486] : memref<588xf32, #tpu.memory_space<smem>>
    %2212 = vector.broadcast %2211 : f32 to vector<8x16xf32>
    %2213 = arith.mulf %2212, %2210 : vector<8x16xf32>
    %2214 = arith.addf %2201, %2213 : vector<8x16xf32>
    %c487 = arith.constant 487 : index
    %2215 = memref.load %arg3[%c487] : memref<588xf32, #tpu.memory_space<smem>>
    %2216 = vector.broadcast %2215 : f32 to vector<8x16xf32>
    %2217 = arith.mulf %2216, %2210 : vector<8x16xf32>
    %2218 = arith.addf %2205, %2217 : vector<8x16xf32>
    %c488 = arith.constant 488 : index
    %2219 = memref.load %arg3[%c488] : memref<588xf32, #tpu.memory_space<smem>>
    %2220 = vector.broadcast %2219 : f32 to vector<8x16xf32>
    %2221 = arith.mulf %2220, %2210 : vector<8x16xf32>
    %2222 = arith.addf %2209, %2221 : vector<8x16xf32>
    %2223 = vector.extract_strided_slice %2196 {offsets = [0, 2], sizes = [8, 16], strides = [1, 1]} : vector<8x22xf32> to vector<8x16xf32>
    %c489 = arith.constant 489 : index
    %2224 = memref.load %arg3[%c489] : memref<588xf32, #tpu.memory_space<smem>>
    %2225 = vector.broadcast %2224 : f32 to vector<8x16xf32>
    %2226 = arith.mulf %2225, %2223 : vector<8x16xf32>
    %2227 = arith.addf %2214, %2226 : vector<8x16xf32>
    %c490 = arith.constant 490 : index
    %2228 = memref.load %arg3[%c490] : memref<588xf32, #tpu.memory_space<smem>>
    %2229 = vector.broadcast %2228 : f32 to vector<8x16xf32>
    %2230 = arith.mulf %2229, %2223 : vector<8x16xf32>
    %2231 = arith.addf %2218, %2230 : vector<8x16xf32>
    %c491 = arith.constant 491 : index
    %2232 = memref.load %arg3[%c491] : memref<588xf32, #tpu.memory_space<smem>>
    %2233 = vector.broadcast %2232 : f32 to vector<8x16xf32>
    %2234 = arith.mulf %2233, %2223 : vector<8x16xf32>
    %2235 = arith.addf %2222, %2234 : vector<8x16xf32>
    %2236 = vector.extract_strided_slice %2196 {offsets = [0, 3], sizes = [8, 16], strides = [1, 1]} : vector<8x22xf32> to vector<8x16xf32>
    %c492 = arith.constant 492 : index
    %2237 = memref.load %arg3[%c492] : memref<588xf32, #tpu.memory_space<smem>>
    %2238 = vector.broadcast %2237 : f32 to vector<8x16xf32>
    %2239 = arith.mulf %2238, %2236 : vector<8x16xf32>
    %2240 = arith.addf %2227, %2239 : vector<8x16xf32>
    %c493 = arith.constant 493 : index
    %2241 = memref.load %arg3[%c493] : memref<588xf32, #tpu.memory_space<smem>>
    %2242 = vector.broadcast %2241 : f32 to vector<8x16xf32>
    %2243 = arith.mulf %2242, %2236 : vector<8x16xf32>
    %2244 = arith.addf %2231, %2243 : vector<8x16xf32>
    %c494 = arith.constant 494 : index
    %2245 = memref.load %arg3[%c494] : memref<588xf32, #tpu.memory_space<smem>>
    %2246 = vector.broadcast %2245 : f32 to vector<8x16xf32>
    %2247 = arith.mulf %2246, %2236 : vector<8x16xf32>
    %2248 = arith.addf %2235, %2247 : vector<8x16xf32>
    %2249 = vector.extract_strided_slice %2196 {offsets = [0, 4], sizes = [8, 16], strides = [1, 1]} : vector<8x22xf32> to vector<8x16xf32>
    %c495 = arith.constant 495 : index
    %2250 = memref.load %arg3[%c495] : memref<588xf32, #tpu.memory_space<smem>>
    %2251 = vector.broadcast %2250 : f32 to vector<8x16xf32>
    %2252 = arith.mulf %2251, %2249 : vector<8x16xf32>
    %2253 = arith.addf %2240, %2252 : vector<8x16xf32>
    %c496 = arith.constant 496 : index
    %2254 = memref.load %arg3[%c496] : memref<588xf32, #tpu.memory_space<smem>>
    %2255 = vector.broadcast %2254 : f32 to vector<8x16xf32>
    %2256 = arith.mulf %2255, %2249 : vector<8x16xf32>
    %2257 = arith.addf %2244, %2256 : vector<8x16xf32>
    %c497 = arith.constant 497 : index
    %2258 = memref.load %arg3[%c497] : memref<588xf32, #tpu.memory_space<smem>>
    %2259 = vector.broadcast %2258 : f32 to vector<8x16xf32>
    %2260 = arith.mulf %2259, %2249 : vector<8x16xf32>
    %2261 = arith.addf %2248, %2260 : vector<8x16xf32>
    %2262 = vector.extract_strided_slice %2196 {offsets = [0, 5], sizes = [8, 16], strides = [1, 1]} : vector<8x22xf32> to vector<8x16xf32>
    %c498 = arith.constant 498 : index
    %2263 = memref.load %arg3[%c498] : memref<588xf32, #tpu.memory_space<smem>>
    %2264 = vector.broadcast %2263 : f32 to vector<8x16xf32>
    %2265 = arith.mulf %2264, %2262 : vector<8x16xf32>
    %2266 = arith.addf %2253, %2265 : vector<8x16xf32>
    %c499 = arith.constant 499 : index
    %2267 = memref.load %arg3[%c499] : memref<588xf32, #tpu.memory_space<smem>>
    %2268 = vector.broadcast %2267 : f32 to vector<8x16xf32>
    %2269 = arith.mulf %2268, %2262 : vector<8x16xf32>
    %2270 = arith.addf %2257, %2269 : vector<8x16xf32>
    %c500 = arith.constant 500 : index
    %2271 = memref.load %arg3[%c500] : memref<588xf32, #tpu.memory_space<smem>>
    %2272 = vector.broadcast %2271 : f32 to vector<8x16xf32>
    %2273 = arith.mulf %2272, %2262 : vector<8x16xf32>
    %2274 = arith.addf %2261, %2273 : vector<8x16xf32>
    %2275 = vector.extract_strided_slice %2196 {offsets = [0, 6], sizes = [8, 16], strides = [1, 1]} : vector<8x22xf32> to vector<8x16xf32>
    %c501 = arith.constant 501 : index
    %2276 = memref.load %arg3[%c501] : memref<588xf32, #tpu.memory_space<smem>>
    %2277 = vector.broadcast %2276 : f32 to vector<8x16xf32>
    %2278 = arith.mulf %2277, %2275 : vector<8x16xf32>
    %2279 = arith.addf %2266, %2278 : vector<8x16xf32>
    %c502 = arith.constant 502 : index
    %2280 = memref.load %arg3[%c502] : memref<588xf32, #tpu.memory_space<smem>>
    %2281 = vector.broadcast %2280 : f32 to vector<8x16xf32>
    %2282 = arith.mulf %2281, %2275 : vector<8x16xf32>
    %2283 = arith.addf %2270, %2282 : vector<8x16xf32>
    %c503 = arith.constant 503 : index
    %2284 = memref.load %arg3[%c503] : memref<588xf32, #tpu.memory_space<smem>>
    %2285 = vector.broadcast %2284 : f32 to vector<8x16xf32>
    %2286 = arith.mulf %2285, %2275 : vector<8x16xf32>
    %2287 = arith.addf %2274, %2286 : vector<8x16xf32>
    %c3_i32_92 = arith.constant 3 : i32
    %2288 = arith.addi %1, %c3_i32_92 : i32
    %c0_93 = arith.constant 0 : index
    %c3_94 = arith.constant 3 : index
    %2289 = arith.index_cast %2288 : i32 to index
    %c0_95 = arith.constant 0 : index
    %2290 = vector.load %arg2[%c0_93, %c3_94, %2289, %c0_95] : memref<1x4x22x22xf32, #tpu.memory_space<vmem>>, vector<1x1x8x22xf32>
    %2291 = vector.shape_cast %2290 : vector<1x1x8x22xf32> to vector<8x22xf32>
    %2292 = vector.extract_strided_slice %2291 {offsets = [0, 0], sizes = [8, 16], strides = [1, 1]} : vector<8x22xf32> to vector<8x16xf32>
    %c504 = arith.constant 504 : index
    %2293 = memref.load %arg3[%c504] : memref<588xf32, #tpu.memory_space<smem>>
    %2294 = vector.broadcast %2293 : f32 to vector<8x16xf32>
    %2295 = arith.mulf %2294, %2292 : vector<8x16xf32>
    %2296 = arith.addf %2279, %2295 : vector<8x16xf32>
    %c505 = arith.constant 505 : index
    %2297 = memref.load %arg3[%c505] : memref<588xf32, #tpu.memory_space<smem>>
    %2298 = vector.broadcast %2297 : f32 to vector<8x16xf32>
    %2299 = arith.mulf %2298, %2292 : vector<8x16xf32>
    %2300 = arith.addf %2283, %2299 : vector<8x16xf32>
    %c506 = arith.constant 506 : index
    %2301 = memref.load %arg3[%c506] : memref<588xf32, #tpu.memory_space<smem>>
    %2302 = vector.broadcast %2301 : f32 to vector<8x16xf32>
    %2303 = arith.mulf %2302, %2292 : vector<8x16xf32>
    %2304 = arith.addf %2287, %2303 : vector<8x16xf32>
    %2305 = vector.extract_strided_slice %2291 {offsets = [0, 1], sizes = [8, 16], strides = [1, 1]} : vector<8x22xf32> to vector<8x16xf32>
    %c507 = arith.constant 507 : index
    %2306 = memref.load %arg3[%c507] : memref<588xf32, #tpu.memory_space<smem>>
    %2307 = vector.broadcast %2306 : f32 to vector<8x16xf32>
    %2308 = arith.mulf %2307, %2305 : vector<8x16xf32>
    %2309 = arith.addf %2296, %2308 : vector<8x16xf32>
    %c508 = arith.constant 508 : index
    %2310 = memref.load %arg3[%c508] : memref<588xf32, #tpu.memory_space<smem>>
    %2311 = vector.broadcast %2310 : f32 to vector<8x16xf32>
    %2312 = arith.mulf %2311, %2305 : vector<8x16xf32>
    %2313 = arith.addf %2300, %2312 : vector<8x16xf32>
    %c509 = arith.constant 509 : index
    %2314 = memref.load %arg3[%c509] : memref<588xf32, #tpu.memory_space<smem>>
    %2315 = vector.broadcast %2314 : f32 to vector<8x16xf32>
    %2316 = arith.mulf %2315, %2305 : vector<8x16xf32>
    %2317 = arith.addf %2304, %2316 : vector<8x16xf32>
    %2318 = vector.extract_strided_slice %2291 {offsets = [0, 2], sizes = [8, 16], strides = [1, 1]} : vector<8x22xf32> to vector<8x16xf32>
    %c510 = arith.constant 510 : index
    %2319 = memref.load %arg3[%c510] : memref<588xf32, #tpu.memory_space<smem>>
    %2320 = vector.broadcast %2319 : f32 to vector<8x16xf32>
    %2321 = arith.mulf %2320, %2318 : vector<8x16xf32>
    %2322 = arith.addf %2309, %2321 : vector<8x16xf32>
    %c511 = arith.constant 511 : index
    %2323 = memref.load %arg3[%c511] : memref<588xf32, #tpu.memory_space<smem>>
    %2324 = vector.broadcast %2323 : f32 to vector<8x16xf32>
    %2325 = arith.mulf %2324, %2318 : vector<8x16xf32>
    %2326 = arith.addf %2313, %2325 : vector<8x16xf32>
    %c512 = arith.constant 512 : index
    %2327 = memref.load %arg3[%c512] : memref<588xf32, #tpu.memory_space<smem>>
    %2328 = vector.broadcast %2327 : f32 to vector<8x16xf32>
    %2329 = arith.mulf %2328, %2318 : vector<8x16xf32>
    %2330 = arith.addf %2317, %2329 : vector<8x16xf32>
    %2331 = vector.extract_strided_slice %2291 {offsets = [0, 3], sizes = [8, 16], strides = [1, 1]} : vector<8x22xf32> to vector<8x16xf32>
    %c513 = arith.constant 513 : index
    %2332 = memref.load %arg3[%c513] : memref<588xf32, #tpu.memory_space<smem>>
    %2333 = vector.broadcast %2332 : f32 to vector<8x16xf32>
    %2334 = arith.mulf %2333, %2331 : vector<8x16xf32>
    %2335 = arith.addf %2322, %2334 : vector<8x16xf32>
    %c514 = arith.constant 514 : index
    %2336 = memref.load %arg3[%c514] : memref<588xf32, #tpu.memory_space<smem>>
    %2337 = vector.broadcast %2336 : f32 to vector<8x16xf32>
    %2338 = arith.mulf %2337, %2331 : vector<8x16xf32>
    %2339 = arith.addf %2326, %2338 : vector<8x16xf32>
    %c515 = arith.constant 515 : index
    %2340 = memref.load %arg3[%c515] : memref<588xf32, #tpu.memory_space<smem>>
    %2341 = vector.broadcast %2340 : f32 to vector<8x16xf32>
    %2342 = arith.mulf %2341, %2331 : vector<8x16xf32>
    %2343 = arith.addf %2330, %2342 : vector<8x16xf32>
    %2344 = vector.extract_strided_slice %2291 {offsets = [0, 4], sizes = [8, 16], strides = [1, 1]} : vector<8x22xf32> to vector<8x16xf32>
    %c516 = arith.constant 516 : index
    %2345 = memref.load %arg3[%c516] : memref<588xf32, #tpu.memory_space<smem>>
    %2346 = vector.broadcast %2345 : f32 to vector<8x16xf32>
    %2347 = arith.mulf %2346, %2344 : vector<8x16xf32>
    %2348 = arith.addf %2335, %2347 : vector<8x16xf32>
    %c517 = arith.constant 517 : index
    %2349 = memref.load %arg3[%c517] : memref<588xf32, #tpu.memory_space<smem>>
    %2350 = vector.broadcast %2349 : f32 to vector<8x16xf32>
    %2351 = arith.mulf %2350, %2344 : vector<8x16xf32>
    %2352 = arith.addf %2339, %2351 : vector<8x16xf32>
    %c518 = arith.constant 518 : index
    %2353 = memref.load %arg3[%c518] : memref<588xf32, #tpu.memory_space<smem>>
    %2354 = vector.broadcast %2353 : f32 to vector<8x16xf32>
    %2355 = arith.mulf %2354, %2344 : vector<8x16xf32>
    %2356 = arith.addf %2343, %2355 : vector<8x16xf32>
    %2357 = vector.extract_strided_slice %2291 {offsets = [0, 5], sizes = [8, 16], strides = [1, 1]} : vector<8x22xf32> to vector<8x16xf32>
    %c519 = arith.constant 519 : index
    %2358 = memref.load %arg3[%c519] : memref<588xf32, #tpu.memory_space<smem>>
    %2359 = vector.broadcast %2358 : f32 to vector<8x16xf32>
    %2360 = arith.mulf %2359, %2357 : vector<8x16xf32>
    %2361 = arith.addf %2348, %2360 : vector<8x16xf32>
    %c520 = arith.constant 520 : index
    %2362 = memref.load %arg3[%c520] : memref<588xf32, #tpu.memory_space<smem>>
    %2363 = vector.broadcast %2362 : f32 to vector<8x16xf32>
    %2364 = arith.mulf %2363, %2357 : vector<8x16xf32>
    %2365 = arith.addf %2352, %2364 : vector<8x16xf32>
    %c521 = arith.constant 521 : index
    %2366 = memref.load %arg3[%c521] : memref<588xf32, #tpu.memory_space<smem>>
    %2367 = vector.broadcast %2366 : f32 to vector<8x16xf32>
    %2368 = arith.mulf %2367, %2357 : vector<8x16xf32>
    %2369 = arith.addf %2356, %2368 : vector<8x16xf32>
    %2370 = vector.extract_strided_slice %2291 {offsets = [0, 6], sizes = [8, 16], strides = [1, 1]} : vector<8x22xf32> to vector<8x16xf32>
    %c522 = arith.constant 522 : index
    %2371 = memref.load %arg3[%c522] : memref<588xf32, #tpu.memory_space<smem>>
    %2372 = vector.broadcast %2371 : f32 to vector<8x16xf32>
    %2373 = arith.mulf %2372, %2370 : vector<8x16xf32>
    %2374 = arith.addf %2361, %2373 : vector<8x16xf32>
    %c523 = arith.constant 523 : index
    %2375 = memref.load %arg3[%c523] : memref<588xf32, #tpu.memory_space<smem>>
    %2376 = vector.broadcast %2375 : f32 to vector<8x16xf32>
    %2377 = arith.mulf %2376, %2370 : vector<8x16xf32>
    %2378 = arith.addf %2365, %2377 : vector<8x16xf32>
    %c524 = arith.constant 524 : index
    %2379 = memref.load %arg3[%c524] : memref<588xf32, #tpu.memory_space<smem>>
    %2380 = vector.broadcast %2379 : f32 to vector<8x16xf32>
    %2381 = arith.mulf %2380, %2370 : vector<8x16xf32>
    %2382 = arith.addf %2369, %2381 : vector<8x16xf32>
    %c4_i32_96 = arith.constant 4 : i32
    %2383 = arith.addi %1, %c4_i32_96 : i32
    %c0_97 = arith.constant 0 : index
    %c3_98 = arith.constant 3 : index
    %2384 = arith.index_cast %2383 : i32 to index
    %c0_99 = arith.constant 0 : index
    %2385 = vector.load %arg2[%c0_97, %c3_98, %2384, %c0_99] : memref<1x4x22x22xf32, #tpu.memory_space<vmem>>, vector<1x1x8x22xf32>
    %2386 = vector.shape_cast %2385 : vector<1x1x8x22xf32> to vector<8x22xf32>
    %2387 = vector.extract_strided_slice %2386 {offsets = [0, 0], sizes = [8, 16], strides = [1, 1]} : vector<8x22xf32> to vector<8x16xf32>
    %c525 = arith.constant 525 : index
    %2388 = memref.load %arg3[%c525] : memref<588xf32, #tpu.memory_space<smem>>
    %2389 = vector.broadcast %2388 : f32 to vector<8x16xf32>
    %2390 = arith.mulf %2389, %2387 : vector<8x16xf32>
    %2391 = arith.addf %2374, %2390 : vector<8x16xf32>
    %c526 = arith.constant 526 : index
    %2392 = memref.load %arg3[%c526] : memref<588xf32, #tpu.memory_space<smem>>
    %2393 = vector.broadcast %2392 : f32 to vector<8x16xf32>
    %2394 = arith.mulf %2393, %2387 : vector<8x16xf32>
    %2395 = arith.addf %2378, %2394 : vector<8x16xf32>
    %c527 = arith.constant 527 : index
    %2396 = memref.load %arg3[%c527] : memref<588xf32, #tpu.memory_space<smem>>
    %2397 = vector.broadcast %2396 : f32 to vector<8x16xf32>
    %2398 = arith.mulf %2397, %2387 : vector<8x16xf32>
    %2399 = arith.addf %2382, %2398 : vector<8x16xf32>
    %2400 = vector.extract_strided_slice %2386 {offsets = [0, 1], sizes = [8, 16], strides = [1, 1]} : vector<8x22xf32> to vector<8x16xf32>
    %c528 = arith.constant 528 : index
    %2401 = memref.load %arg3[%c528] : memref<588xf32, #tpu.memory_space<smem>>
    %2402 = vector.broadcast %2401 : f32 to vector<8x16xf32>
    %2403 = arith.mulf %2402, %2400 : vector<8x16xf32>
    %2404 = arith.addf %2391, %2403 : vector<8x16xf32>
    %c529 = arith.constant 529 : index
    %2405 = memref.load %arg3[%c529] : memref<588xf32, #tpu.memory_space<smem>>
    %2406 = vector.broadcast %2405 : f32 to vector<8x16xf32>
    %2407 = arith.mulf %2406, %2400 : vector<8x16xf32>
    %2408 = arith.addf %2395, %2407 : vector<8x16xf32>
    %c530 = arith.constant 530 : index
    %2409 = memref.load %arg3[%c530] : memref<588xf32, #tpu.memory_space<smem>>
    %2410 = vector.broadcast %2409 : f32 to vector<8x16xf32>
    %2411 = arith.mulf %2410, %2400 : vector<8x16xf32>
    %2412 = arith.addf %2399, %2411 : vector<8x16xf32>
    %2413 = vector.extract_strided_slice %2386 {offsets = [0, 2], sizes = [8, 16], strides = [1, 1]} : vector<8x22xf32> to vector<8x16xf32>
    %c531 = arith.constant 531 : index
    %2414 = memref.load %arg3[%c531] : memref<588xf32, #tpu.memory_space<smem>>
    %2415 = vector.broadcast %2414 : f32 to vector<8x16xf32>
    %2416 = arith.mulf %2415, %2413 : vector<8x16xf32>
    %2417 = arith.addf %2404, %2416 : vector<8x16xf32>
    %c532 = arith.constant 532 : index
    %2418 = memref.load %arg3[%c532] : memref<588xf32, #tpu.memory_space<smem>>
    %2419 = vector.broadcast %2418 : f32 to vector<8x16xf32>
    %2420 = arith.mulf %2419, %2413 : vector<8x16xf32>
    %2421 = arith.addf %2408, %2420 : vector<8x16xf32>
    %c533 = arith.constant 533 : index
    %2422 = memref.load %arg3[%c533] : memref<588xf32, #tpu.memory_space<smem>>
    %2423 = vector.broadcast %2422 : f32 to vector<8x16xf32>
    %2424 = arith.mulf %2423, %2413 : vector<8x16xf32>
    %2425 = arith.addf %2412, %2424 : vector<8x16xf32>
    %2426 = vector.extract_strided_slice %2386 {offsets = [0, 3], sizes = [8, 16], strides = [1, 1]} : vector<8x22xf32> to vector<8x16xf32>
    %c534 = arith.constant 534 : index
    %2427 = memref.load %arg3[%c534] : memref<588xf32, #tpu.memory_space<smem>>
    %2428 = vector.broadcast %2427 : f32 to vector<8x16xf32>
    %2429 = arith.mulf %2428, %2426 : vector<8x16xf32>
    %2430 = arith.addf %2417, %2429 : vector<8x16xf32>
    %c535 = arith.constant 535 : index
    %2431 = memref.load %arg3[%c535] : memref<588xf32, #tpu.memory_space<smem>>
    %2432 = vector.broadcast %2431 : f32 to vector<8x16xf32>
    %2433 = arith.mulf %2432, %2426 : vector<8x16xf32>
    %2434 = arith.addf %2421, %2433 : vector<8x16xf32>
    %c536 = arith.constant 536 : index
    %2435 = memref.load %arg3[%c536] : memref<588xf32, #tpu.memory_space<smem>>
    %2436 = vector.broadcast %2435 : f32 to vector<8x16xf32>
    %2437 = arith.mulf %2436, %2426 : vector<8x16xf32>
    %2438 = arith.addf %2425, %2437 : vector<8x16xf32>
    %2439 = vector.extract_strided_slice %2386 {offsets = [0, 4], sizes = [8, 16], strides = [1, 1]} : vector<8x22xf32> to vector<8x16xf32>
    %c537 = arith.constant 537 : index
    %2440 = memref.load %arg3[%c537] : memref<588xf32, #tpu.memory_space<smem>>
    %2441 = vector.broadcast %2440 : f32 to vector<8x16xf32>
    %2442 = arith.mulf %2441, %2439 : vector<8x16xf32>
    %2443 = arith.addf %2430, %2442 : vector<8x16xf32>
    %c538 = arith.constant 538 : index
    %2444 = memref.load %arg3[%c538] : memref<588xf32, #tpu.memory_space<smem>>
    %2445 = vector.broadcast %2444 : f32 to vector<8x16xf32>
    %2446 = arith.mulf %2445, %2439 : vector<8x16xf32>
    %2447 = arith.addf %2434, %2446 : vector<8x16xf32>
    %c539 = arith.constant 539 : index
    %2448 = memref.load %arg3[%c539] : memref<588xf32, #tpu.memory_space<smem>>
    %2449 = vector.broadcast %2448 : f32 to vector<8x16xf32>
    %2450 = arith.mulf %2449, %2439 : vector<8x16xf32>
    %2451 = arith.addf %2438, %2450 : vector<8x16xf32>
    %2452 = vector.extract_strided_slice %2386 {offsets = [0, 5], sizes = [8, 16], strides = [1, 1]} : vector<8x22xf32> to vector<8x16xf32>
    %c540 = arith.constant 540 : index
    %2453 = memref.load %arg3[%c540] : memref<588xf32, #tpu.memory_space<smem>>
    %2454 = vector.broadcast %2453 : f32 to vector<8x16xf32>
    %2455 = arith.mulf %2454, %2452 : vector<8x16xf32>
    %2456 = arith.addf %2443, %2455 : vector<8x16xf32>
    %c541 = arith.constant 541 : index
    %2457 = memref.load %arg3[%c541] : memref<588xf32, #tpu.memory_space<smem>>
    %2458 = vector.broadcast %2457 : f32 to vector<8x16xf32>
    %2459 = arith.mulf %2458, %2452 : vector<8x16xf32>
    %2460 = arith.addf %2447, %2459 : vector<8x16xf32>
    %c542 = arith.constant 542 : index
    %2461 = memref.load %arg3[%c542] : memref<588xf32, #tpu.memory_space<smem>>
    %2462 = vector.broadcast %2461 : f32 to vector<8x16xf32>
    %2463 = arith.mulf %2462, %2452 : vector<8x16xf32>
    %2464 = arith.addf %2451, %2463 : vector<8x16xf32>
    %2465 = vector.extract_strided_slice %2386 {offsets = [0, 6], sizes = [8, 16], strides = [1, 1]} : vector<8x22xf32> to vector<8x16xf32>
    %c543 = arith.constant 543 : index
    %2466 = memref.load %arg3[%c543] : memref<588xf32, #tpu.memory_space<smem>>
    %2467 = vector.broadcast %2466 : f32 to vector<8x16xf32>
    %2468 = arith.mulf %2467, %2465 : vector<8x16xf32>
    %2469 = arith.addf %2456, %2468 : vector<8x16xf32>
    %c544 = arith.constant 544 : index
    %2470 = memref.load %arg3[%c544] : memref<588xf32, #tpu.memory_space<smem>>
    %2471 = vector.broadcast %2470 : f32 to vector<8x16xf32>
    %2472 = arith.mulf %2471, %2465 : vector<8x16xf32>
    %2473 = arith.addf %2460, %2472 : vector<8x16xf32>
    %c545 = arith.constant 545 : index
    %2474 = memref.load %arg3[%c545] : memref<588xf32, #tpu.memory_space<smem>>
    %2475 = vector.broadcast %2474 : f32 to vector<8x16xf32>
    %2476 = arith.mulf %2475, %2465 : vector<8x16xf32>
    %2477 = arith.addf %2464, %2476 : vector<8x16xf32>
    %c5_i32_100 = arith.constant 5 : i32
    %2478 = arith.addi %1, %c5_i32_100 : i32
    %c0_101 = arith.constant 0 : index
    %c3_102 = arith.constant 3 : index
    %2479 = arith.index_cast %2478 : i32 to index
    %c0_103 = arith.constant 0 : index
    %2480 = vector.load %arg2[%c0_101, %c3_102, %2479, %c0_103] : memref<1x4x22x22xf32, #tpu.memory_space<vmem>>, vector<1x1x8x22xf32>
    %2481 = vector.shape_cast %2480 : vector<1x1x8x22xf32> to vector<8x22xf32>
    %2482 = vector.extract_strided_slice %2481 {offsets = [0, 0], sizes = [8, 16], strides = [1, 1]} : vector<8x22xf32> to vector<8x16xf32>
    %c546 = arith.constant 546 : index
    %2483 = memref.load %arg3[%c546] : memref<588xf32, #tpu.memory_space<smem>>
    %2484 = vector.broadcast %2483 : f32 to vector<8x16xf32>
    %2485 = arith.mulf %2484, %2482 : vector<8x16xf32>
    %2486 = arith.addf %2469, %2485 : vector<8x16xf32>
    %c547 = arith.constant 547 : index
    %2487 = memref.load %arg3[%c547] : memref<588xf32, #tpu.memory_space<smem>>
    %2488 = vector.broadcast %2487 : f32 to vector<8x16xf32>
    %2489 = arith.mulf %2488, %2482 : vector<8x16xf32>
    %2490 = arith.addf %2473, %2489 : vector<8x16xf32>
    %c548 = arith.constant 548 : index
    %2491 = memref.load %arg3[%c548] : memref<588xf32, #tpu.memory_space<smem>>
    %2492 = vector.broadcast %2491 : f32 to vector<8x16xf32>
    %2493 = arith.mulf %2492, %2482 : vector<8x16xf32>
    %2494 = arith.addf %2477, %2493 : vector<8x16xf32>
    %2495 = vector.extract_strided_slice %2481 {offsets = [0, 1], sizes = [8, 16], strides = [1, 1]} : vector<8x22xf32> to vector<8x16xf32>
    %c549 = arith.constant 549 : index
    %2496 = memref.load %arg3[%c549] : memref<588xf32, #tpu.memory_space<smem>>
    %2497 = vector.broadcast %2496 : f32 to vector<8x16xf32>
    %2498 = arith.mulf %2497, %2495 : vector<8x16xf32>
    %2499 = arith.addf %2486, %2498 : vector<8x16xf32>
    %c550 = arith.constant 550 : index
    %2500 = memref.load %arg3[%c550] : memref<588xf32, #tpu.memory_space<smem>>
    %2501 = vector.broadcast %2500 : f32 to vector<8x16xf32>
    %2502 = arith.mulf %2501, %2495 : vector<8x16xf32>
    %2503 = arith.addf %2490, %2502 : vector<8x16xf32>
    %c551 = arith.constant 551 : index
    %2504 = memref.load %arg3[%c551] : memref<588xf32, #tpu.memory_space<smem>>
    %2505 = vector.broadcast %2504 : f32 to vector<8x16xf32>
    %2506 = arith.mulf %2505, %2495 : vector<8x16xf32>
    %2507 = arith.addf %2494, %2506 : vector<8x16xf32>
    %2508 = vector.extract_strided_slice %2481 {offsets = [0, 2], sizes = [8, 16], strides = [1, 1]} : vector<8x22xf32> to vector<8x16xf32>
    %c552 = arith.constant 552 : index
    %2509 = memref.load %arg3[%c552] : memref<588xf32, #tpu.memory_space<smem>>
    %2510 = vector.broadcast %2509 : f32 to vector<8x16xf32>
    %2511 = arith.mulf %2510, %2508 : vector<8x16xf32>
    %2512 = arith.addf %2499, %2511 : vector<8x16xf32>
    %c553 = arith.constant 553 : index
    %2513 = memref.load %arg3[%c553] : memref<588xf32, #tpu.memory_space<smem>>
    %2514 = vector.broadcast %2513 : f32 to vector<8x16xf32>
    %2515 = arith.mulf %2514, %2508 : vector<8x16xf32>
    %2516 = arith.addf %2503, %2515 : vector<8x16xf32>
    %c554 = arith.constant 554 : index
    %2517 = memref.load %arg3[%c554] : memref<588xf32, #tpu.memory_space<smem>>
    %2518 = vector.broadcast %2517 : f32 to vector<8x16xf32>
    %2519 = arith.mulf %2518, %2508 : vector<8x16xf32>
    %2520 = arith.addf %2507, %2519 : vector<8x16xf32>
    %2521 = vector.extract_strided_slice %2481 {offsets = [0, 3], sizes = [8, 16], strides = [1, 1]} : vector<8x22xf32> to vector<8x16xf32>
    %c555 = arith.constant 555 : index
    %2522 = memref.load %arg3[%c555] : memref<588xf32, #tpu.memory_space<smem>>
    %2523 = vector.broadcast %2522 : f32 to vector<8x16xf32>
    %2524 = arith.mulf %2523, %2521 : vector<8x16xf32>
    %2525 = arith.addf %2512, %2524 : vector<8x16xf32>
    %c556 = arith.constant 556 : index
    %2526 = memref.load %arg3[%c556] : memref<588xf32, #tpu.memory_space<smem>>
    %2527 = vector.broadcast %2526 : f32 to vector<8x16xf32>
    %2528 = arith.mulf %2527, %2521 : vector<8x16xf32>
    %2529 = arith.addf %2516, %2528 : vector<8x16xf32>
    %c557 = arith.constant 557 : index
    %2530 = memref.load %arg3[%c557] : memref<588xf32, #tpu.memory_space<smem>>
    %2531 = vector.broadcast %2530 : f32 to vector<8x16xf32>
    %2532 = arith.mulf %2531, %2521 : vector<8x16xf32>
    %2533 = arith.addf %2520, %2532 : vector<8x16xf32>
    %2534 = vector.extract_strided_slice %2481 {offsets = [0, 4], sizes = [8, 16], strides = [1, 1]} : vector<8x22xf32> to vector<8x16xf32>
    %c558 = arith.constant 558 : index
    %2535 = memref.load %arg3[%c558] : memref<588xf32, #tpu.memory_space<smem>>
    %2536 = vector.broadcast %2535 : f32 to vector<8x16xf32>
    %2537 = arith.mulf %2536, %2534 : vector<8x16xf32>
    %2538 = arith.addf %2525, %2537 : vector<8x16xf32>
    %c559 = arith.constant 559 : index
    %2539 = memref.load %arg3[%c559] : memref<588xf32, #tpu.memory_space<smem>>
    %2540 = vector.broadcast %2539 : f32 to vector<8x16xf32>
    %2541 = arith.mulf %2540, %2534 : vector<8x16xf32>
    %2542 = arith.addf %2529, %2541 : vector<8x16xf32>
    %c560 = arith.constant 560 : index
    %2543 = memref.load %arg3[%c560] : memref<588xf32, #tpu.memory_space<smem>>
    %2544 = vector.broadcast %2543 : f32 to vector<8x16xf32>
    %2545 = arith.mulf %2544, %2534 : vector<8x16xf32>
    %2546 = arith.addf %2533, %2545 : vector<8x16xf32>
    %2547 = vector.extract_strided_slice %2481 {offsets = [0, 5], sizes = [8, 16], strides = [1, 1]} : vector<8x22xf32> to vector<8x16xf32>
    %c561 = arith.constant 561 : index
    %2548 = memref.load %arg3[%c561] : memref<588xf32, #tpu.memory_space<smem>>
    %2549 = vector.broadcast %2548 : f32 to vector<8x16xf32>
    %2550 = arith.mulf %2549, %2547 : vector<8x16xf32>
    %2551 = arith.addf %2538, %2550 : vector<8x16xf32>
    %c562 = arith.constant 562 : index
    %2552 = memref.load %arg3[%c562] : memref<588xf32, #tpu.memory_space<smem>>
    %2553 = vector.broadcast %2552 : f32 to vector<8x16xf32>
    %2554 = arith.mulf %2553, %2547 : vector<8x16xf32>
    %2555 = arith.addf %2542, %2554 : vector<8x16xf32>
    %c563 = arith.constant 563 : index
    %2556 = memref.load %arg3[%c563] : memref<588xf32, #tpu.memory_space<smem>>
    %2557 = vector.broadcast %2556 : f32 to vector<8x16xf32>
    %2558 = arith.mulf %2557, %2547 : vector<8x16xf32>
    %2559 = arith.addf %2546, %2558 : vector<8x16xf32>
    %2560 = vector.extract_strided_slice %2481 {offsets = [0, 6], sizes = [8, 16], strides = [1, 1]} : vector<8x22xf32> to vector<8x16xf32>
    %c564 = arith.constant 564 : index
    %2561 = memref.load %arg3[%c564] : memref<588xf32, #tpu.memory_space<smem>>
    %2562 = vector.broadcast %2561 : f32 to vector<8x16xf32>
    %2563 = arith.mulf %2562, %2560 : vector<8x16xf32>
    %2564 = arith.addf %2551, %2563 : vector<8x16xf32>
    %c565 = arith.constant 565 : index
    %2565 = memref.load %arg3[%c565] : memref<588xf32, #tpu.memory_space<smem>>
    %2566 = vector.broadcast %2565 : f32 to vector<8x16xf32>
    %2567 = arith.mulf %2566, %2560 : vector<8x16xf32>
    %2568 = arith.addf %2555, %2567 : vector<8x16xf32>
    %c566 = arith.constant 566 : index
    %2569 = memref.load %arg3[%c566] : memref<588xf32, #tpu.memory_space<smem>>
    %2570 = vector.broadcast %2569 : f32 to vector<8x16xf32>
    %2571 = arith.mulf %2570, %2560 : vector<8x16xf32>
    %2572 = arith.addf %2559, %2571 : vector<8x16xf32>
    %c6_i32_104 = arith.constant 6 : i32
    %2573 = arith.addi %1, %c6_i32_104 : i32
    %c0_105 = arith.constant 0 : index
    %c3_106 = arith.constant 3 : index
    %2574 = arith.index_cast %2573 : i32 to index
    %c0_107 = arith.constant 0 : index
    %2575 = vector.load %arg2[%c0_105, %c3_106, %2574, %c0_107] : memref<1x4x22x22xf32, #tpu.memory_space<vmem>>, vector<1x1x8x22xf32>
    %2576 = vector.shape_cast %2575 : vector<1x1x8x22xf32> to vector<8x22xf32>
    %2577 = vector.extract_strided_slice %2576 {offsets = [0, 0], sizes = [8, 16], strides = [1, 1]} : vector<8x22xf32> to vector<8x16xf32>
    %c567 = arith.constant 567 : index
    %2578 = memref.load %arg3[%c567] : memref<588xf32, #tpu.memory_space<smem>>
    %2579 = vector.broadcast %2578 : f32 to vector<8x16xf32>
    %2580 = arith.mulf %2579, %2577 : vector<8x16xf32>
    %2581 = arith.addf %2564, %2580 : vector<8x16xf32>
    %c568 = arith.constant 568 : index
    %2582 = memref.load %arg3[%c568] : memref<588xf32, #tpu.memory_space<smem>>
    %2583 = vector.broadcast %2582 : f32 to vector<8x16xf32>
    %2584 = arith.mulf %2583, %2577 : vector<8x16xf32>
    %2585 = arith.addf %2568, %2584 : vector<8x16xf32>
    %c569 = arith.constant 569 : index
    %2586 = memref.load %arg3[%c569] : memref<588xf32, #tpu.memory_space<smem>>
    %2587 = vector.broadcast %2586 : f32 to vector<8x16xf32>
    %2588 = arith.mulf %2587, %2577 : vector<8x16xf32>
    %2589 = arith.addf %2572, %2588 : vector<8x16xf32>
    %2590 = vector.extract_strided_slice %2576 {offsets = [0, 1], sizes = [8, 16], strides = [1, 1]} : vector<8x22xf32> to vector<8x16xf32>
    %c570 = arith.constant 570 : index
    %2591 = memref.load %arg3[%c570] : memref<588xf32, #tpu.memory_space<smem>>
    %2592 = vector.broadcast %2591 : f32 to vector<8x16xf32>
    %2593 = arith.mulf %2592, %2590 : vector<8x16xf32>
    %2594 = arith.addf %2581, %2593 : vector<8x16xf32>
    %c571 = arith.constant 571 : index
    %2595 = memref.load %arg3[%c571] : memref<588xf32, #tpu.memory_space<smem>>
    %2596 = vector.broadcast %2595 : f32 to vector<8x16xf32>
    %2597 = arith.mulf %2596, %2590 : vector<8x16xf32>
    %2598 = arith.addf %2585, %2597 : vector<8x16xf32>
    %c572 = arith.constant 572 : index
    %2599 = memref.load %arg3[%c572] : memref<588xf32, #tpu.memory_space<smem>>
    %2600 = vector.broadcast %2599 : f32 to vector<8x16xf32>
    %2601 = arith.mulf %2600, %2590 : vector<8x16xf32>
    %2602 = arith.addf %2589, %2601 : vector<8x16xf32>
    %2603 = vector.extract_strided_slice %2576 {offsets = [0, 2], sizes = [8, 16], strides = [1, 1]} : vector<8x22xf32> to vector<8x16xf32>
    %c573 = arith.constant 573 : index
    %2604 = memref.load %arg3[%c573] : memref<588xf32, #tpu.memory_space<smem>>
    %2605 = vector.broadcast %2604 : f32 to vector<8x16xf32>
    %2606 = arith.mulf %2605, %2603 : vector<8x16xf32>
    %2607 = arith.addf %2594, %2606 : vector<8x16xf32>
    %c574 = arith.constant 574 : index
    %2608 = memref.load %arg3[%c574] : memref<588xf32, #tpu.memory_space<smem>>
    %2609 = vector.broadcast %2608 : f32 to vector<8x16xf32>
    %2610 = arith.mulf %2609, %2603 : vector<8x16xf32>
    %2611 = arith.addf %2598, %2610 : vector<8x16xf32>
    %c575 = arith.constant 575 : index
    %2612 = memref.load %arg3[%c575] : memref<588xf32, #tpu.memory_space<smem>>
    %2613 = vector.broadcast %2612 : f32 to vector<8x16xf32>
    %2614 = arith.mulf %2613, %2603 : vector<8x16xf32>
    %2615 = arith.addf %2602, %2614 : vector<8x16xf32>
    %2616 = vector.extract_strided_slice %2576 {offsets = [0, 3], sizes = [8, 16], strides = [1, 1]} : vector<8x22xf32> to vector<8x16xf32>
    %c576 = arith.constant 576 : index
    %2617 = memref.load %arg3[%c576] : memref<588xf32, #tpu.memory_space<smem>>
    %2618 = vector.broadcast %2617 : f32 to vector<8x16xf32>
    %2619 = arith.mulf %2618, %2616 : vector<8x16xf32>
    %2620 = arith.addf %2607, %2619 : vector<8x16xf32>
    %c577 = arith.constant 577 : index
    %2621 = memref.load %arg3[%c577] : memref<588xf32, #tpu.memory_space<smem>>
    %2622 = vector.broadcast %2621 : f32 to vector<8x16xf32>
    %2623 = arith.mulf %2622, %2616 : vector<8x16xf32>
    %2624 = arith.addf %2611, %2623 : vector<8x16xf32>
    %c578 = arith.constant 578 : index
    %2625 = memref.load %arg3[%c578] : memref<588xf32, #tpu.memory_space<smem>>
    %2626 = vector.broadcast %2625 : f32 to vector<8x16xf32>
    %2627 = arith.mulf %2626, %2616 : vector<8x16xf32>
    %2628 = arith.addf %2615, %2627 : vector<8x16xf32>
    %2629 = vector.extract_strided_slice %2576 {offsets = [0, 4], sizes = [8, 16], strides = [1, 1]} : vector<8x22xf32> to vector<8x16xf32>
    %c579 = arith.constant 579 : index
    %2630 = memref.load %arg3[%c579] : memref<588xf32, #tpu.memory_space<smem>>
    %2631 = vector.broadcast %2630 : f32 to vector<8x16xf32>
    %2632 = arith.mulf %2631, %2629 : vector<8x16xf32>
    %2633 = arith.addf %2620, %2632 : vector<8x16xf32>
    %c580 = arith.constant 580 : index
    %2634 = memref.load %arg3[%c580] : memref<588xf32, #tpu.memory_space<smem>>
    %2635 = vector.broadcast %2634 : f32 to vector<8x16xf32>
    %2636 = arith.mulf %2635, %2629 : vector<8x16xf32>
    %2637 = arith.addf %2624, %2636 : vector<8x16xf32>
    %c581 = arith.constant 581 : index
    %2638 = memref.load %arg3[%c581] : memref<588xf32, #tpu.memory_space<smem>>
    %2639 = vector.broadcast %2638 : f32 to vector<8x16xf32>
    %2640 = arith.mulf %2639, %2629 : vector<8x16xf32>
    %2641 = arith.addf %2628, %2640 : vector<8x16xf32>
    %2642 = vector.extract_strided_slice %2576 {offsets = [0, 5], sizes = [8, 16], strides = [1, 1]} : vector<8x22xf32> to vector<8x16xf32>
    %c582 = arith.constant 582 : index
    %2643 = memref.load %arg3[%c582] : memref<588xf32, #tpu.memory_space<smem>>
    %2644 = vector.broadcast %2643 : f32 to vector<8x16xf32>
    %2645 = arith.mulf %2644, %2642 : vector<8x16xf32>
    %2646 = arith.addf %2633, %2645 : vector<8x16xf32>
    %c583 = arith.constant 583 : index
    %2647 = memref.load %arg3[%c583] : memref<588xf32, #tpu.memory_space<smem>>
    %2648 = vector.broadcast %2647 : f32 to vector<8x16xf32>
    %2649 = arith.mulf %2648, %2642 : vector<8x16xf32>
    %2650 = arith.addf %2637, %2649 : vector<8x16xf32>
    %c584 = arith.constant 584 : index
    %2651 = memref.load %arg3[%c584] : memref<588xf32, #tpu.memory_space<smem>>
    %2652 = vector.broadcast %2651 : f32 to vector<8x16xf32>
    %2653 = arith.mulf %2652, %2642 : vector<8x16xf32>
    %2654 = arith.addf %2641, %2653 : vector<8x16xf32>
    %2655 = vector.extract_strided_slice %2576 {offsets = [0, 6], sizes = [8, 16], strides = [1, 1]} : vector<8x22xf32> to vector<8x16xf32>
    %c585 = arith.constant 585 : index
    %2656 = memref.load %arg3[%c585] : memref<588xf32, #tpu.memory_space<smem>>
    %2657 = vector.broadcast %2656 : f32 to vector<8x16xf32>
    %2658 = arith.mulf %2657, %2655 : vector<8x16xf32>
    %2659 = arith.addf %2646, %2658 : vector<8x16xf32>
    %c586 = arith.constant 586 : index
    %2660 = memref.load %arg3[%c586] : memref<588xf32, #tpu.memory_space<smem>>
    %2661 = vector.broadcast %2660 : f32 to vector<8x16xf32>
    %2662 = arith.mulf %2661, %2655 : vector<8x16xf32>
    %2663 = arith.addf %2650, %2662 : vector<8x16xf32>
    %c587 = arith.constant 587 : index
    %2664 = memref.load %arg3[%c587] : memref<588xf32, #tpu.memory_space<smem>>
    %2665 = vector.broadcast %2664 : f32 to vector<8x16xf32>
    %2666 = arith.mulf %2665, %2655 : vector<8x16xf32>
    %2667 = arith.addf %2654, %2666 : vector<8x16xf32>
    %c0_108 = arith.constant 0 : index
    %c0_109 = arith.constant 0 : index
    %c0_110 = arith.constant 0 : index
    %c0_111 = arith.constant 0 : index
    %2668 = vector.load %arg5[%c0_108, %c0_109, %c0_110, %c0_111] : memref<1x3x8x16xf32, #tpu.memory_space<vmem>>, vector<1x1x8x16xf32>
    %2669 = vector.shape_cast %2668 : vector<1x1x8x16xf32> to vector<8x16xf32>
    %2670 = vector.shape_cast %2659 : vector<8x16xf32> to vector<1x1x8x16xf32>
    tpu.vector_store %arg5[%c0_108, %c0_109, %c0_110, %c0_111], %2670 {strides = array<i32>} : memref<1x3x8x16xf32, #tpu.memory_space<vmem>>, vector<1x1x8x16xf32>,
    %c0_112 = arith.constant 0 : index
    %c1_113 = arith.constant 1 : index
    %c0_114 = arith.constant 0 : index
    %c0_115 = arith.constant 0 : index
    %2671 = vector.load %arg5[%c0_112, %c1_113, %c0_114, %c0_115] : memref<1x3x8x16xf32, #tpu.memory_space<vmem>>, vector<1x1x8x16xf32>
    %2672 = vector.shape_cast %2671 : vector<1x1x8x16xf32> to vector<8x16xf32>
    %2673 = vector.shape_cast %2663 : vector<8x16xf32> to vector<1x1x8x16xf32>
    tpu.vector_store %arg5[%c0_112, %c1_113, %c0_114, %c0_115], %2673 {strides = array<i32>} : memref<1x3x8x16xf32, #tpu.memory_space<vmem>>, vector<1x1x8x16xf32>,
    %c0_116 = arith.constant 0 : index
    %c2_117 = arith.constant 2 : index
    %c0_118 = arith.constant 0 : index
    %c0_119 = arith.constant 0 : index
    %2674 = vector.load %arg5[%c0_116, %c2_117, %c0_118, %c0_119] : memref<1x3x8x16xf32, #tpu.memory_space<vmem>>, vector<1x1x8x16xf32>
    %2675 = vector.shape_cast %2674 : vector<1x1x8x16xf32> to vector<8x16xf32>
    %2676 = vector.shape_cast %2667 : vector<8x16xf32> to vector<1x1x8x16xf32>
    tpu.vector_store %arg5[%c0_116, %c2_117, %c0_118, %c0_119], %2676 {strides = array<i32>} : memref<1x3x8x16xf32, #tpu.memory_space<vmem>>, vector<1x1x8x16xf32>,
    return
  }
  func.func @transform_0(%arg0: i32, %arg1: i32) -> (i32, i32, i32, i32) {
    %c0_i32 = arith.constant 0 : i32
    %c0_i32_0 = arith.constant 0 : i32
    %c0_i32_1 = arith.constant 0 : i32
    %c0_i32_2 = arith.constant 0 : i32
    return %arg0, %c0_i32, %c0_i32_0, %c0_i32_1 : i32, i32, i32, i32
  }
  func.func @transform_1(%arg0: i32, %arg1: i32) -> i32 {
    %c0_i32 = arith.constant 0 : i32
    %c0_i32_0 = arith.constant 0 : i32
    return %c0_i32 : i32
  }
  func.func @transform_2(%arg0: i32, %arg1: i32) -> i32 {
    %c0_i32 = arith.constant 0 : i32
    %c0_i32_0 = arith.constant 0 : i32
    return %c0_i32 : i32
  }
  func.func @transform_3(%arg0: i32, %arg1: i32) -> (i32, i32, i32, i32) {
    %c0_i32 = arith.constant 0 : i32
    %c0_i32_0 = arith.constant 0 : i32
    %c0_i32_1 = arith.constant 0 : i32
    return %arg0, %c0_i32, %arg1, %c0_i32_0 : i32, i32, i32, i32
  }
}

</mosaic_0001>

<llo_original>
// kernel: feature_map_block.1
$region0: #{feature_map_block.1}
  #allocation0 [shape = 'u32[]', space=smem, size = 0x4, offset = 0x4, fixed_abs, tag = 'smem constant byte address 0x4 - core index']
  #allocation1 [shape = 'u32[72,128]{1,0:T(1,128)}', space=vmem, size = 0x9000, scoped, tag = 'internal scratch']
  %s0 = inlined_call_operand.vmem [shape: f32[2,4,22,22], index: 0, kind: input, shape index: {}]
  %s1 = inlined_call_operand.vmem [shape: f32[588], index: 1, kind: input, shape index: {}]
  %s2 = inlined_call_operand.vmem [shape: f32[3], index: 2, kind: input, shape index: {}]
  %s3 = inlined_call_operand.hbm [shape: f32[2,3,16,16], index: 3, kind: output, shape index: {}]
  %s4 = sld [smem:[#allocation0]]
  $region53: #{feature_map_block.1} parent=0
    _
  %s6 = ssub.s32 1, %s4
  %s7 = scalar_select 0, %s6, %s4
  $region1: #{feature_map_block.1} parent=0
    #allocation2 [shape = 'u8[2560]{0}', space=smem, size = 0xa00, scoped, tag = 'input window, operand 1, single buffered']
    #allocation3 [shape = 's32[2]{0}', space=sflag, size = 0x8, scoped, tag = 'scoped memory for feature_map_block.1']
    #allocation4 [shape = 's32[2]{0}', space=sflag, size = 0x8, scoped, tag = 'scoped memory for feature_map_block.1']
    #allocation5 [shape = 'u8[512]{0}', space=smem, size = 0x200, scoped, tag = 'input window, operand 2, single buffered']
    #allocation6 [shape = 's32[1]{0}', space=sflag, size = 0x4, scoped, tag = 'scoped memory for feature_map_block.1']
    #allocation7 [shape = 'u8[24576]{0}', space=vmem, size = 0x6000, scoped, tag = 'output window, operand 0']
    %8 = vsyncpa [#allocation4], 0
    %9 = vsyncpa [#allocation6], 0
    %10 = vsyncpa [#allocation3], 0
    %s11 = scalar_lea.sflag [#allocation3], 1
    %12 = vsyncpa %s11, 0
    loop: start=0, step=1, limit=6
    $region2: #{feature_map_block.1} parent=1 // loop_pre_header
      _
    $region3: #{feature_map_block.1} parent=1 // loop_header
      %s14 = sphi 0, %s18
      %p15 = scmp.ge.s32.totalorder %s14, 6
      %s21 = sphi 0, %s33
      %s22 = sphi 0, %s29
      %s23 = sphi 0, %s21
      %s24 = sphi 0, %s22
      %s25 = sphi 0, %s23
      %s26 = sphi 0, %s24
      %s36 = sphi 0, %s38
      %s39 = sphi 0, %s36
      %s40 = sphi 0, %s39
      %s56 = sphi 0, %s40
      %s60 = sphi 0, %s60
      %s62 = sphi 0, %s60
      %s63 = sphi 0, %s62
      %s77 = sphi 0, %s63
      %s81 = sphi 0, %s81
      %s83 = sphi 0, %s81
      %s84 = sphi 0, %s83
      %s98 = sphi 0, %s84
      %s106 = sphi 0, %s108
      %s109 = sphi 0, %s106
      %s110 = sphi 0, %s109
      %s126 = sphi 0, %s110
    $region4: #{feature_map_block.1} parent=1 // loop_header_branch
      %17 = sbr.rel (%p15) target = $region8
    $region5: #{feature_map_block.1} parent=1 // loop_body
      %s19 = ssub.s32 %s14, 1
      %s20 = ssub.s32 %s14, 2
      %s27 = sadd.s32 1, %s22
      %p28 = scmp.ge.s32.totalorder %s27, 2
      %s29 = scalar_select %p28, 0, %s27
      %s30 = sadd.s32 1, %s21
      %s31 = scalar_select %p28, %s30, %s21
      %p32 = scmp.ge.s32.totalorder %s31, 2
      %s33 = scalar_select %p32, 0, %s31
      %s34 = ssub.s32 %s21, %s33
      %p35 = scmp.eq.s32.totalorder %s34, 0
      %s37 = sadd.s32 %s36, 1
      %s38 = scalar_select %p35, %s36, %s37
      %p41 = pneg %p35
      %p42 = scmp.eq.s32.totalorder %s14, 3
      %p43 = por %p41, %p42
      %p44 = scmp.ne.s32.totalorder %s36, %s39
      %p45 = scmp.eq.s32.totalorder %s14, 0
      %p46 = por %p44, %p45
      %p47 = scmp.ne.s32.totalorder %s36, %s39
      %p48 = scmp.eq.s32.totalorder %s19, 3
      %p49 = por %p47, %p48
      %p50 = scmp.ne.s32.totalorder %s39, %s40
      %p51 = scmp.eq.s32.totalorder %s19, 0
      %p52 = por %p50, %p51
      %p53 = scmp.ne.s32.totalorder %s39, %s40
      %p54 = scmp.eq.s32.totalorder %s20, 3
      %p55 = por %p53, %p54
      %p57 = scmp.ne.s32.totalorder %s40, %s56
      %p58 = scmp.eq.s32.totalorder %s20, 0
      %p59 = por %p57, %p58
      %s61 = sadd.s32 %s60, 1
      %p64 = scmp.eq.s32.totalorder %s14, 3
      %p65 = scmp.ne.s32.totalorder %s60, %s62
      %p66 = scmp.eq.s32.totalorder %s14, 0
      %p67 = por %p65, %p66
      %p68 = scmp.ne.s32.totalorder %s60, %s62
      %p69 = scmp.eq.s32.totalorder %s19, 3
      %p70 = por %p68, %p69
      %p71 = scmp.ne.s32.totalorder %s62, %s63
      %p72 = scmp.eq.s32.totalorder %s19, 0
      %p73 = por %p71, %p72
      %p74 = scmp.ne.s32.totalorder %s62, %s63
      %p75 = scmp.eq.s32.totalorder %s20, 3
      %p76 = por %p74, %p75
      %p78 = scmp.ne.s32.totalorder %s63, %s77
      %p79 = scmp.eq.s32.totalorder %s20, 0
      %p80 = por %p78, %p79
      %s82 = sadd.s32 %s81, 1
      %p85 = scmp.eq.s32.totalorder %s14, 3
      %p86 = scmp.ne.s32.totalorder %s81, %s83
      %p87 = scmp.eq.s32.totalorder %s14, 0
      %p88 = por %p86, %p87
      %p89 = scmp.ne.s32.totalorder %s81, %s83
      %p90 = scmp.eq.s32.totalorder %s19, 3
      %p91 = por %p89, %p90
      %p92 = scmp.ne.s32.totalorder %s83, %s84
      %p93 = scmp.eq.s32.totalorder %s19, 0
      %p94 = por %p92, %p93
      %p95 = scmp.ne.s32.totalorder %s83, %s84
      %p96 = scmp.eq.s32.totalorder %s20, 3
      %p97 = por %p95, %p96
      %p99 = scmp.ne.s32.totalorder %s84, %s98
      %p100 = scmp.eq.s32.totalorder %s20, 0
      %p101 = por %p99, %p100
      %s102 = ssub.s32 %s21, %s33
      %s103 = ssub.s32 %s22, %s29
      %s104 = sor.u32 %s102, %s103
      %p105 = scmp.eq.s32.totalorder %s104, 0
      %s107 = sadd.s32 %s106, 1
      %s108 = scalar_select %p105, %s106, %s107
      %p111 = pneg %p105
      %p112 = scmp.eq.s32.totalorder %s14, 3
      %p113 = por %p111, %p112
      %p114 = scmp.ne.s32.totalorder %s106, %s109
      %p115 = scmp.eq.s32.totalorder %s14, 0
      %p116 = por %p114, %p115
      %p117 = scmp.ne.s32.totalorder %s106, %s109
      %p118 = scmp.eq.s32.totalorder %s19, 3
      %p119 = por %p117, %p118
      %p120 = scmp.ne.s32.totalorder %s109, %s110
      %p121 = scmp.eq.s32.totalorder %s19, 0
      %p122 = por %p120, %p121
      %p123 = scmp.ne.s32.totalorder %s109, %s110
      %p124 = scmp.eq.s32.totalorder %s20, 3
      %p125 = por %p123, %p124
      %p127 = scmp.ne.s32.totalorder %s110, %s126
      %p128 = scmp.eq.s32.totalorder %s20, 0
      %p129 = por %p127, %p128
      %p130 = scmp.le.s32.totalorder 1, %s14
      %p131 = scmp.lt.s32.totalorder %s14, 5
      %p132 = pnand %p130, %p131
      %p133 = pneg %p132
      // Predicated region
      $region9: #{feature_map_block.1} parent=5 // pred_check
        _
      $region10: #{feature_map_block.1} parent=5 // pred_check_branch
        %135 = sbr.rel (%p132) target = $region12
      $region11: #{feature_map_block.1} parent=5 // pred_region
        %s136 = ssub.s32 %s14, 1
        // Predicated region
        $region13: #{feature_map_block.1} parent=11 // pred_check
          %p137 = pneg %p73
        $region14: #{feature_map_block.1} parent=11 // pred_check_branch
          %139 = sbr.rel (%p137) target = $region16
        $region15: #{feature_map_block.1} parent=11 // pred_region
          %141 = vsyncadd [#allocation4], 0
          %s143 = sshll.u32 %s1, 4
          %s144 = int_to_ptr.vmem [resolvable:$true] %s143
          %146 = dma.vmem_to_smem %s144, 80, [#allocation2], [#allocation4]
        $region16: #{feature_map_block.1} parent=11 // pred_fallthru
          _
        // Predicated region
        $region17: #{feature_map_block.1} parent=11 // pred_check
          %p147 = pneg %p94
        $region18: #{feature_map_block.1} parent=11 // pred_check_branch
          %149 = sbr.rel (%p147) target = $region20
        $region19: #{feature_map_block.1} parent=11 // pred_region
          %151 = vsyncadd [#allocation6], 0
          %s153 = sshll.u32 %s2, 4
          %s154 = int_to_ptr.vmem [resolvable:$true] %s153
          %156 = dma.vmem_to_smem %s154, 16, [#allocation5], [#allocation6]
        $region20: #{feature_map_block.1} parent=11 // pred_fallthru
          _
      $region12: #{feature_map_block.1} parent=5 // pred_fallthru
        _
      %p157 = scmp.lt.s32.totalorder %s14, 4
      // Predicated region
      $region21: #{feature_map_block.1} parent=5 // pred_check
        %p158 = pneg %p157
      $region22: #{feature_map_block.1} parent=5 // pred_check_branch
        %160 = sbr.rel (%p158) target = $region24
      $region23: #{feature_map_block.1} parent=5 // pred_region
        // Predicated region
        $region25: #{feature_map_block.1} parent=23 // pred_check
          %p161 = pneg %p46
        $region26: #{feature_map_block.1} parent=23 // pred_check_branch
          %163 = sbr.rel (%p161) target = $region28
        $region27: #{feature_map_block.1} parent=23 // pred_region
          %p164 = scmp.lt.s32.totalorder %s21, 1
          %s165 = scalar_select %p164, %s21, 1
          %s166 = smul.addr %s165, 12
          %s167 = smul.addr %s166, 8
          %s168 = scalar_lea.vmem %s0, %s167
        $region28: #{feature_map_block.1} parent=23 // pred_fallthru
          _
      $region24: #{feature_map_block.1} parent=5 // pred_fallthru
        _
      %p169 = scmp.le.s32.totalorder 1, %s14
      %p170 = scmp.lt.s32.totalorder %s14, 5
      %p171 = pnand %p169, %p170
      %p172 = pneg %p171
      // Predicated region
      $region29: #{feature_map_block.1} parent=5 // pred_check
        _
      $region30: #{feature_map_block.1} parent=5 // pred_check_branch
        %174 = sbr.rel (%p171) target = $region32
      $region31: #{feature_map_block.1} parent=5 // pred_region
        %s175 = ssub.s32 %s14, 1
        // Predicated region
        $region33: #{feature_map_block.1} parent=31 // pred_check
          %p176 = pneg %p73
        $region34: #{feature_map_block.1} parent=31 // pred_check_branch
          %178 = sbr.rel (%p176) target = $region36
        $region35: #{feature_map_block.1} parent=31 // pred_region
          %180 = dma.done [#allocation4], 80
        $region36: #{feature_map_block.1} parent=31 // pred_fallthru
          _
        // Predicated region
        $region37: #{feature_map_block.1} parent=31 // pred_check
          %p181 = pneg %p94
        $region38: #{feature_map_block.1} parent=31 // pred_check_branch
          %183 = sbr.rel (%p181) target = $region40
        $region39: #{feature_map_block.1} parent=31 // pred_region
          %185 = dma.done [#allocation6], 16
        $region40: #{feature_map_block.1} parent=31 // pred_fallthru
          _
        %186 = sfence
        %p187 = scmp.lt.s32.totalorder %s23, 1
        %s188 = scalar_select %p187, %s23, 1
        %s189 = smul.addr %s188, 12
        %s190 = smul.addr %s189, 8
        %s191 = scalar_lea.vmem %s0, %s190
        %p192 = pneg %p52
        %p193 = pneg %p49
        %p194 = pneg %p73
        %p195 = pneg %p70
        %p196 = pneg %p94
        %p197 = pneg %p91
        %p198 = pneg %p122
        %p199 = pneg %p119
        %s200 = sand.u32 %s109, 1
        %s201 = scalar_lea.sflag [#allocation3], %s200
        %s202 = sand.u32 %s109, 1
        %s203 = smul.addr %s202, 24
        %s204 = scalar_lea.vmem [#allocation7], %s203
        %p205 = scmp.lt.s32.totalorder %s23, 1
        %s206 = scalar_select %p205, %s23, 1
        %s207 = smul.addr %s206, 12
        %s208 = smul.addr %s207, 8
        %s209 = scalar_lea.vmem %s0, %s208
        %s210 = smul.u32 %s24, 8
        %s211 = sld [smem:[#allocation5]]
        %v212 = vstv %s211
        %s213 = sld [smem:[#allocation5 + $0x1]]
        %v214 = vstv %s213
        %s215 = sld [smem:[#allocation5 + $0x2]]
        %v216 = vstv %s215
        %s217 = scalar_lea.vmem %s209, %s210
        %v218 = vld [vmem:[%s217] sm:$0xff]
        %s219 = sld [smem:[#allocation2]]
        %v220 = vstv %s219
        %v221 = vmul.f32 %v220, %v218
        %v222 = vadd.f32 %v212, %v221
        %s223 = sld [smem:[#allocation2 + $0x1]]
        %v224 = vstv %s223
        %v225 = vmul.f32 %v224, %v218
        %v226 = vadd.f32 %v214, %v225
        %s227 = sld [smem:[#allocation2 + $0x2]]
        %v228 = vstv %s227
        %v229 = vmul.f32 %v228, %v218
        %v230 = vadd.f32 %v216, %v229
        %s231 = sld [smem:[#allocation2 + $0x3]]
        %v232 = vstv %s231
        %v233 = vmul.f32 %v232, %v218
        %235 = vrot.lane.b32.xlu0 %v233, 127
        %v236 = vpop.permute.xlu0 %235
        %v238 = vadd.f32 %v222, %v236
        %s239 = sld [smem:[#allocation2 + $0x4]]
        %v240 = vstv %s239
        %v241 = vmul.f32 %v240, %v218
        %243 = vrot.lane.b32.xlu0 %v241, 127
        %v244 = vpop.permute.xlu0 %243
        %v246 = vadd.f32 %v226, %v244
        %s247 = sld [smem:[#allocation2 + $0x5]]
        %v248 = vstv %s247
        %v249 = vmul.f32 %v248, %v218
        %251 = vrot.lane.b32.xlu0 %v249, 127
        %v252 = vpop.permute.xlu0 %251
        %v254 = vadd.f32 %v230, %v252
        %s255 = sld [smem:[#allocation2 + $0x6]]
        %v256 = vstv %s255
        %v257 = vmul.f32 %v256, %v218
        %259 = vrot.lane.b32.xlu0 %v257, 126
        %v260 = vpop.permute.xlu0 %259
        %v262 = vadd.f32 %v238, %v260
        %s263 = sld [smem:[#allocation2 + $0x7]]
        %v264 = vstv %s263
        %v265 = vmul.f32 %v264, %v218
        %267 = vrot.lane.b32.xlu0 %v265, 126
        %v268 = vpop.permute.xlu0 %267
        %v270 = vadd.f32 %v246, %v268
        %s271 = sld [smem:[#allocation2 + $0x8]]
        %v272 = vstv %s271
        %v273 = vmul.f32 %v272, %v218
        %275 = vrot.lane.b32.xlu0 %v273, 126
        %v276 = vpop.permute.xlu0 %275
        %v278 = vadd.f32 %v254, %v276
        %s279 = sld [smem:[#allocation2 + $0x9]]
        %v280 = vstv %s279
        %v281 = vmul.f32 %v280, %v218
        %283 = vrot.lane.b32.xlu0 %v281, 125
        %v284 = vpop.permute.xlu0 %283
        %v286 = vadd.f32 %v262, %v284
        %s287 = sld [smem:[#allocation2 + $0xa]]
        %v288 = vstv %s287
        %v289 = vmul.f32 %v288, %v218
        %291 = vrot.lane.b32.xlu0 %v289, 125
        %v292 = vpop.permute.xlu0 %291
        %v294 = vadd.f32 %v270, %v292
        %s295 = sld [smem:[#allocation2 + $0xb]]
        %v296 = vstv %s295
        %v297 = vmul.f32 %v296, %v218
        %299 = vrot.lane.b32.xlu0 %v297, 125
        %v300 = vpop.permute.xlu0 %299
        %v302 = vadd.f32 %v278, %v300
        %s303 = sld [smem:[#allocation2 + $0xc]]
        %v304 = vstv %s303
        %v305 = vmul.f32 %v304, %v218
        %307 = vrot.lane.b32.xlu0 %v305, 124
        %v308 = vpop.permute.xlu0 %307
        %v310 = vadd.f32 %v286, %v308
        %s311 = sld [smem:[#allocation2 + $0xd]]
        %v312 = vstv %s311
        %v313 = vmul.f32 %v312, %v218
        %315 = vrot.lane.b32.xlu0 %v313, 124
        %v316 = vpop.permute.xlu0 %315
        %v318 = vadd.f32 %v294, %v316
        %s319 = sld [smem:[#allocation2 + $0xe]]
        %v320 = vstv %s319
        %v321 = vmul.f32 %v320, %v218
        %323 = vrot.lane.b32.xlu0 %v321, 124
        %v324 = vpop.permute.xlu0 %323
        %v326 = vadd.f32 %v302, %v324
        %s327 = sld [smem:[#allocation2 + $0xf]]
        %v328 = vstv %s327
        %v329 = vmul.f32 %v328, %v218
        %331 = vrot.lane.b32.xlu0 %v329, 123
        %v332 = vpop.permute.xlu0 %331
        %v334 = vadd.f32 %v310, %v332
        %s335 = sld [smem:[#allocation2 + $0x10]]
        %v336 = vstv %s335
        %v337 = vmul.f32 %v336, %v218
        %339 = vrot.lane.b32.xlu0 %v337, 123
        %v340 = vpop.permute.xlu0 %339
        %v342 = vadd.f32 %v318, %v340
        %s343 = sld [smem:[#allocation2 + $0x11]]
        %v344 = vstv %s343
        %v345 = vmul.f32 %v344, %v218
        %347 = vrot.lane.b32.xlu0 %v345, 123
        %v348 = vpop.permute.xlu0 %347
        %v350 = vadd.f32 %v326, %v348
        %s351 = sld [smem:[#allocation2 + $0x12]]
        %v352 = vstv %s351
        %v353 = vmul.f32 %v352, %v218
        %355 = vrot.lane.b32.xlu0 %v353, 122
        %v356 = vpop.permute.xlu0 %355
        %v358 = vadd.f32 %v334, %v356
        %s359 = sld [smem:[#allocation2 + $0x13]]
        %v360 = vstv %s359
        %v361 = vmul.f32 %v360, %v218
        %363 = vrot.lane.b32.xlu0 %v361, 122
        %v364 = vpop.permute.xlu0 %363
        %v366 = vadd.f32 %v342, %v364
        %s367 = sld [smem:[#allocation2 + $0x14]]
        %v368 = vstv %s367
        %v369 = vmul.f32 %v368, %v218
        %371 = vrot.lane.b32.xlu0 %v369, 122
        %v372 = vpop.permute.xlu0 %371
        %v374 = vadd.f32 %v350, %v372
        %s375 = sadd.s32 %s210, 1
        %s376 = scalar_lea.vmem %s209, %s375
        %v377 = vld [vmem:[%s376] sm:$0xff]
        %s378 = sld [smem:[#allocation2 + $0x15]]
        %v379 = vstv %s378
        %v380 = vmul.f32 %v379, %v377
        %v381 = vadd.f32 %v358, %v380
        %s382 = sld [smem:[#allocation2 + $0x16]]
        %v383 = vstv %s382
        %v384 = vmul.f32 %v383, %v377
        %v385 = vadd.f32 %v366, %v384
        %s386 = sld [smem:[#allocation2 + $0x17]]
        %v387 = vstv %s386
        %v388 = vmul.f32 %v387, %v377
        %v389 = vadd.f32 %v374, %v388
        %s390 = sld [smem:[#allocation2 + $0x18]]
        %v391 = vstv %s390
        %v392 = vmul.f32 %v391, %v377
        %394 = vrot.lane.b32.xlu0 %v392, 127
        %v395 = vpop.permute.xlu0 %394
        %v397 = vadd.f32 %v381, %v395
        %s398 = sld [smem:[#allocation2 + $0x19]]
        %v399 = vstv %s398
        %v400 = vmul.f32 %v399, %v377
        %402 = vrot.lane.b32.xlu0 %v400, 127
        %v403 = vpop.permute.xlu0 %402
        %v405 = vadd.f32 %v385, %v403
        %s406 = sld [smem:[#allocation2 + $0x1a]]
        %v407 = vstv %s406
        %v408 = vmul.f32 %v407, %v377
        %410 = vrot.lane.b32.xlu0 %v408, 127
        %v411 = vpop.permute.xlu0 %410
        %v413 = vadd.f32 %v389, %v411
        %s414 = sld [smem:[#allocation2 + $0x1b]]
        %v415 = vstv %s414
        %v416 = vmul.f32 %v415, %v377
        %418 = vrot.lane.b32.xlu0 %v416, 126
        %v419 = vpop.permute.xlu0 %418
        %v421 = vadd.f32 %v397, %v419
        %s422 = sld [smem:[#allocation2 + $0x1c]]
        %v423 = vstv %s422
        %v424 = vmul.f32 %v423, %v377
        %426 = vrot.lane.b32.xlu0 %v424, 126
        %v427 = vpop.permute.xlu0 %426
        %v429 = vadd.f32 %v405, %v427
        %s430 = sld [smem:[#allocation2 + $0x1d]]
        %v431 = vstv %s430
        %v432 = vmul.f32 %v431, %v377
        %434 = vrot.lane.b32.xlu0 %v432, 126
        %v435 = vpop.permute.xlu0 %434
        %v437 = vadd.f32 %v413, %v435
        %s438 = sld [smem:[#allocation2 + $0x1e]]
        %v439 = vstv %s438
        %v440 = vmul.f32 %v439, %v377
        %442 = vrot.lane.b32.xlu0 %v440, 125
        %v443 = vpop.permute.xlu0 %442
        %v445 = vadd.f32 %v421, %v443
        %s446 = sld [smem:[#allocation2 + $0x1f]]
        %v447 = vstv %s446
        %v448 = vmul.f32 %v447, %v377
        %450 = vrot.lane.b32.xlu0 %v448, 125
        %v451 = vpop.permute.xlu0 %450
        %v453 = vadd.f32 %v429, %v451
        %s454 = sld [smem:[#allocation2 + $0x20]]
        %v455 = vstv %s454
        %v456 = vmul.f32 %v455, %v377
        %458 = vrot.lane.b32.xlu0 %v456, 125
        %v459 = vpop.permute.xlu0 %458
        %v461 = vadd.f32 %v437, %v459
        %s462 = sld [smem:[#allocation2 + $0x21]]
        %v463 = vstv %s462
        %v464 = vmul.f32 %v463, %v377
        %466 = vrot.lane.b32.xlu0 %v464, 124
        %v467 = vpop.permute.xlu0 %466
        %v469 = vadd.f32 %v445, %v467
        %s470 = sld [smem:[#allocation2 + $0x22]]
        %v471 = vstv %s470
        %v472 = vmul.f32 %v471, %v377
        %474 = vrot.lane.b32.xlu0 %v472, 124
        %v475 = vpop.permute.xlu0 %474
        %v477 = vadd.f32 %v453, %v475
        %s478 = sld [smem:[#allocation2 + $0x23]]
        %v479 = vstv %s478
        %v480 = vmul.f32 %v479, %v377
        %482 = vrot.lane.b32.xlu0 %v480, 124
        %v483 = vpop.permute.xlu0 %482
        %v485 = vadd.f32 %v461, %v483
        %s486 = sld [smem:[#allocation2 + $0x24]]
        %v487 = vstv %s486
        %v488 = vmul.f32 %v487, %v377
        %490 = vrot.lane.b32.xlu0 %v488, 123
        %v491 = vpop.permute.xlu0 %490
        %v493 = vadd.f32 %v469, %v491
        %s494 = sld [smem:[#allocation2 + $0x25]]
        %v495 = vstv %s494
        %v496 = vmul.f32 %v495, %v377
        %498 = vrot.lane.b32.xlu0 %v496, 123
        %v499 = vpop.permute.xlu0 %498
        %v501 = vadd.f32 %v477, %v499
        %s502 = sld [smem:[#allocation2 + $0x26]]
        %v503 = vstv %s502
        %v504 = vmul.f32 %v503, %v377
        %506 = vrot.lane.b32.xlu0 %v504, 123
        %v507 = vpop.permute.xlu0 %506
        %v509 = vadd.f32 %v485, %v507
        %s510 = sld [smem:[#allocation2 + $0x27]]
        %v511 = vstv %s510
        %v512 = vmul.f32 %v511, %v377
        %514 = vrot.lane.b32.xlu0 %v512, 122
        %v515 = vpop.permute.xlu0 %514
        %v517 = vadd.f32 %v493, %v515
        %s518 = sld [smem:[#allocation2 + $0x28]]
        %v519 = vstv %s518
        %v520 = vmul.f32 %v519, %v377
        %522 = vrot.lane.b32.xlu0 %v520, 122
        %v523 = vpop.permute.xlu0 %522
        %v525 = vadd.f32 %v501, %v523
        %s526 = sld [smem:[#allocation2 + $0x29]]
        %v527 = vstv %s526
        %v528 = vmul.f32 %v527, %v377
        %530 = vrot.lane.b32.xlu0 %v528, 122
        %v531 = vpop.permute.xlu0 %530
        %v533 = vadd.f32 %v509, %v531
        %s534 = sadd.s32 %s210, 2
        %s535 = scalar_lea.vmem %s209, %s534
        %v536 = vld [vmem:[%s535] sm:$0xff]
        %s537 = sld [smem:[#allocation2 + $0x2a]]
        %v538 = vstv %s537
        %v539 = vmul.f32 %v538, %v536
        %v540 = vadd.f32 %v517, %v539
        %s541 = sld [smem:[#allocation2 + $0x2b]]
        %v542 = vstv %s541
        %v543 = vmul.f32 %v542, %v536
        %v544 = vadd.f32 %v525, %v543
        %s545 = sld [smem:[#allocation2 + $0x2c]]
        %v546 = vstv %s545
        %v547 = vmul.f32 %v546, %v536
        %v548 = vadd.f32 %v533, %v547
        %s549 = sld [smem:[#allocation2 + $0x2d]]
        %v550 = vstv %s549
        %v551 = vmul.f32 %v550, %v536
        %553 = vrot.lane.b32.xlu0 %v551, 127
        %v554 = vpop.permute.xlu0 %553
        %v556 = vadd.f32 %v540, %v554
        %s557 = sld [smem:[#allocation2 + $0x2e]]
        %v558 = vstv %s557
        %v559 = vmul.f32 %v558, %v536
        %561 = vrot.lane.b32.xlu0 %v559, 127
        %v562 = vpop.permute.xlu0 %561
        %v564 = vadd.f32 %v544, %v562
        %s565 = sld [smem:[#allocation2 + $0x2f]]
        %v566 = vstv %s565
        %v567 = vmul.f32 %v566, %v536
        %569 = vrot.lane.b32.xlu0 %v567, 127
        %v570 = vpop.permute.xlu0 %569
        %v572 = vadd.f32 %v548, %v570
        %s573 = sld [smem:[#allocation2 + $0x30]]
        %v574 = vstv %s573
        %v575 = vmul.f32 %v574, %v536
        %577 = vrot.lane.b32.xlu0 %v575, 126
        %v578 = vpop.permute.xlu0 %577
        %v580 = vadd.f32 %v556, %v578
        %s581 = sld [smem:[#allocation2 + $0x31]]
        %v582 = vstv %s581
        %v583 = vmul.f32 %v582, %v536
        %585 = vrot.lane.b32.xlu0 %v583, 126
        %v586 = vpop.permute.xlu0 %585
        %v588 = vadd.f32 %v564, %v586
        %s589 = sld [smem:[#allocation2 + $0x32]]
        %v590 = vstv %s589
        %v591 = vmul.f32 %v590, %v536
        %593 = vrot.lane.b32.xlu0 %v591, 126
        %v594 = vpop.permute.xlu0 %593
        %v596 = vadd.f32 %v572, %v594
        %s597 = sld [smem:[#allocation2 + $0x33]]
        %v598 = vstv %s597
        %v599 = vmul.f32 %v598, %v536
        %601 = vrot.lane.b32.xlu0 %v599, 125
        %v602 = vpop.permute.xlu0 %601
        %v604 = vadd.f32 %v580, %v602
        %s605 = sld [smem:[#allocation2 + $0x34]]
        %v606 = vstv %s605
        %v607 = vmul.f32 %v606, %v536
        %609 = vrot.lane.b32.xlu0 %v607, 125
        %v610 = vpop.permute.xlu0 %609
        %v612 = vadd.f32 %v588, %v610
        %s613 = sld [smem:[#allocation2 + $0x35]]
        %v614 = vstv %s613
        %v615 = vmul.f32 %v614, %v536
        %617 = vrot.lane.b32.xlu0 %v615, 125
        %v618 = vpop.permute.xlu0 %617
        %v620 = vadd.f32 %v596, %v618
        %s621 = sld [smem:[#allocation2 + $0x36]]
        %v622 = vstv %s621
        %v623 = vmul.f32 %v622, %v536
        %625 = vrot.lane.b32.xlu0 %v623, 124
        %v626 = vpop.permute.xlu0 %625
        %v628 = vadd.f32 %v604, %v626
        %s629 = sld [smem:[#allocation2 + $0x37]]
        %v630 = vstv %s629
        %v631 = vmul.f32 %v630, %v536
        %633 = vrot.lane.b32.xlu0 %v631, 124
        %v634 = vpop.permute.xlu0 %633
        %v636 = vadd.f32 %v612, %v634
        %s637 = sld [smem:[#allocation2 + $0x38]]
        %v638 = vstv %s637
        %v639 = vmul.f32 %v638, %v536
        %641 = vrot.lane.b32.xlu0 %v639, 124
        %v642 = vpop.permute.xlu0 %641
        %v644 = vadd.f32 %v620, %v642
        %s645 = sld [smem:[#allocation2 + $0x39]]
        %v646 = vstv %s645
        %v647 = vmul.f32 %v646, %v536
        %649 = vrot.lane.b32.xlu0 %v647, 123
        %v650 = vpop.permute.xlu0 %649
        %v652 = vadd.f32 %v628, %v650
        %s653 = sld [smem:[#allocation2 + $0x3a]]
        %v654 = vstv %s653
        %v655 = vmul.f32 %v654, %v536
        %657 = vrot.lane.b32.xlu0 %v655, 123
        %v658 = vpop.permute.xlu0 %657
        %v660 = vadd.f32 %v636, %v658
        %s661 = sld [smem:[#allocation2 + $0x3b]]
        %v662 = vstv %s661
        %v663 = vmul.f32 %v662, %v536
        %665 = vrot.lane.b32.xlu0 %v663, 123
        %v666 = vpop.permute.xlu0 %665
        %v668 = vadd.f32 %v644, %v666
        %s669 = sld [smem:[#allocation2 + $0x3c]]
        %v670 = vstv %s669
        %v671 = vmul.f32 %v670, %v536
        %673 = vrot.lane.b32.xlu0 %v671, 122
        %v674 = vpop.permute.xlu0 %673
        %v676 = vadd.f32 %v652, %v674
        %s677 = sld [smem:[#allocation2 + $0x3d]]
        %v678 = vstv %s677
        %v679 = vmul.f32 %v678, %v536
        %681 = vrot.lane.b32.xlu0 %v679, 122
        %v682 = vpop.permute.xlu0 %681
        %v684 = vadd.f32 %v660, %v682
        %s685 = sld [smem:[#allocation2 + $0x3e]]
        %v686 = vstv %s685
        %v687 = vmul.f32 %v686, %v536
        %689 = vrot.lane.b32.xlu0 %v687, 122
        %v690 = vpop.permute.xlu0 %689
        %v692 = vadd.f32 %v668, %v690
        %s693 = sadd.s32 %s210, 3
        %s694 = scalar_lea.vmem %s209, %s693
        %v695 = vld [vmem:[%s694] sm:$0xff]
        %s696 = sld [smem:[#allocation2 + $0x3f]]
        %v697 = vstv %s696
        %v698 = vmul.f32 %v697, %v695
        %v699 = vadd.f32 %v676, %v698
        %s700 = sld [smem:[#allocation2 + $0x40]]
        %v701 = vstv %s700
        %v702 = vmul.f32 %v701, %v695
        %v703 = vadd.f32 %v684, %v702
        %s704 = sld [smem:[#allocation2 + $0x41]]
        %v705 = vstv %s704
        %v706 = vmul.f32 %v705, %v695
        %v707 = vadd.f32 %v692, %v706
        %s708 = sld [smem:[#allocation2 + $0x42]]
        %v709 = vstv %s708
        %v710 = vmul.f32 %v709, %v695
        %712 = vrot.lane.b32.xlu0 %v710, 127
        %v713 = vpop.permute.xlu0 %712
        %v715 = vadd.f32 %v699, %v713
        %s716 = sld [smem:[#allocation2 + $0x43]]
        %v717 = vstv %s716
        %v718 = vmul.f32 %v717, %v695
        %720 = vrot.lane.b32.xlu0 %v718, 127
        %v721 = vpop.permute.xlu0 %720
        %v723 = vadd.f32 %v703, %v721
        %s724 = sld [smem:[#allocation2 + $0x44]]
        %v725 = vstv %s724
        %v726 = vmul.f32 %v725, %v695
        %728 = vrot.lane.b32.xlu0 %v726, 127
        %v729 = vpop.permute.xlu0 %728
        %v731 = vadd.f32 %v707, %v729
        %s732 = sld [smem:[#allocation2 + $0x45]]
        %v733 = vstv %s732
        %v734 = vmul.f32 %v733, %v695
        %736 = vrot.lane.b32.xlu0 %v734, 126
        %v737 = vpop.permute.xlu0 %736
        %v739 = vadd.f32 %v715, %v737
        %s740 = sld [smem:[#allocation2 + $0x46]]
        %v741 = vstv %s740
        %v742 = vmul.f32 %v741, %v695
        %744 = vrot.lane.b32.xlu0 %v742, 126
        %v745 = vpop.permute.xlu0 %744
        %v747 = vadd.f32 %v723, %v745
        %s748 = sld [smem:[#allocation2 + $0x47]]
        %v749 = vstv %s748
        %v750 = vmul.f32 %v749, %v695
        %752 = vrot.lane.b32.xlu0 %v750, 126
        %v753 = vpop.permute.xlu0 %752
        %v755 = vadd.f32 %v731, %v753
        %s756 = sld [smem:[#allocation2 + $0x48]]
        %v757 = vstv %s756
        %v758 = vmul.f32 %v757, %v695
        %760 = vrot.lane.b32.xlu0 %v758, 125
        %v761 = vpop.permute.xlu0 %760
        %v763 = vadd.f32 %v739, %v761
        %s764 = sld [smem:[#allocation2 + $0x49]]
        %v765 = vstv %s764
        %v766 = vmul.f32 %v765, %v695
        %768 = vrot.lane.b32.xlu0 %v766, 125
        %v769 = vpop.permute.xlu0 %768
        %v771 = vadd.f32 %v747, %v769
        %s772 = sld [smem:[#allocation2 + $0x4a]]
        %v773 = vstv %s772
        %v774 = vmul.f32 %v773, %v695
        %776 = vrot.lane.b32.xlu0 %v774, 125
        %v777 = vpop.permute.xlu0 %776
        %v779 = vadd.f32 %v755, %v777
        %s780 = sld [smem:[#allocation2 + $0x4b]]
        %v781 = vstv %s780
        %v782 = vmul.f32 %v781, %v695
        %784 = vrot.lane.b32.xlu0 %v782, 124
        %v785 = vpop.permute.xlu0 %784
        %v787 = vadd.f32 %v763, %v785
        %s788 = sld [smem:[#allocation2 + $0x4c]]
        %v789 = vstv %s788
        %v790 = vmul.f32 %v789, %v695
        %792 = vrot.lane.b32.xlu0 %v790, 124
        %v793 = vpop.permute.xlu0 %792
        %v795 = vadd.f32 %v771, %v793
        %s796 = sld [smem:[#allocation2 + $0x4d]]
        %v797 = vstv %s796
        %v798 = vmul.f32 %v797, %v695
        %800 = vrot.lane.b32.xlu0 %v798, 124
        %v801 = vpop.permute.xlu0 %800
        %v803 = vadd.f32 %v779, %v801
        %s804 = sld [smem:[#allocation2 + $0x4e]]
        %v805 = vstv %s804
        %v806 = vmul.f32 %v805, %v695
        %808 = vrot.lane.b32.xlu0 %v806, 123
        %v809 = vpop.permute.xlu0 %808
        %v811 = vadd.f32 %v787, %v809
        %s812 = sld [smem:[#allocation2 + $0x4f]]
        %v813 = vstv %s812
        %v814 = vmul.f32 %v813, %v695
        %816 = vrot.lane.b32.xlu0 %v814, 123
        %v817 = vpop.permute.xlu0 %816
        %v819 = vadd.f32 %v795, %v817
        %s820 = sld [smem:[#allocation2 + $0x50]]
        %v821 = vstv %s820
        %v822 = vmul.f32 %v821, %v695
        %824 = vrot.lane.b32.xlu0 %v822, 123
        %v825 = vpop.permute.xlu0 %824
        %v827 = vadd.f32 %v803, %v825
        %s828 = sld [smem:[#allocation2 + $0x51]]
        %v829 = vstv %s828
        %v830 = vmul.f32 %v829, %v695
        %832 = vrot.lane.b32.xlu0 %v830, 122
        %v833 = vpop.permute.xlu0 %832
        %v835 = vadd.f32 %v811, %v833
        %s836 = sld [smem:[#allocation2 + $0x52]]
        %v837 = vstv %s836
        %v838 = vmul.f32 %v837, %v695
        %840 = vrot.lane.b32.xlu0 %v838, 122
        %v841 = vpop.permute.xlu0 %840
        %v843 = vadd.f32 %v819, %v841
        %s844 = sld [smem:[#allocation2 + $0x53]]
        %v845 = vstv %s844
        %v846 = vmul.f32 %v845, %v695
        %848 = vrot.lane.b32.xlu0 %v846, 122
        %v849 = vpop.permute.xlu0 %848
        %v851 = vadd.f32 %v827, %v849
        %s852 = sadd.s32 %s210, 4
        %s853 = scalar_lea.vmem %s209, %s852
        %v854 = vld [vmem:[%s853] sm:$0xff]
        %s855 = sld [smem:[#allocation2 + $0x54]]
        %v856 = vstv %s855
        %v857 = vmul.f32 %v856, %v854
        %v858 = vadd.f32 %v835, %v857
        %s859 = sld [smem:[#allocation2 + $0x55]]
        %v860 = vstv %s859
        %v861 = vmul.f32 %v860, %v854
        %v862 = vadd.f32 %v843, %v861
        %s863 = sld [smem:[#allocation2 + $0x56]]
        %v864 = vstv %s863
        %v865 = vmul.f32 %v864, %v854
        %v866 = vadd.f32 %v851, %v865
        %s867 = sld [smem:[#allocation2 + $0x57]]
        %v868 = vstv %s867
        %v869 = vmul.f32 %v868, %v854
        %871 = vrot.lane.b32.xlu0 %v869, 127
        %v872 = vpop.permute.xlu0 %871
        %v874 = vadd.f32 %v858, %v872
        %s875 = sld [smem:[#allocation2 + $0x58]]
        %v876 = vstv %s875
        %v877 = vmul.f32 %v876, %v854
        %879 = vrot.lane.b32.xlu0 %v877, 127
        %v880 = vpop.permute.xlu0 %879
        %v882 = vadd.f32 %v862, %v880
        %s883 = sld [smem:[#allocation2 + $0x59]]
        %v884 = vstv %s883
        %v885 = vmul.f32 %v884, %v854
        %887 = vrot.lane.b32.xlu0 %v885, 127
        %v888 = vpop.permute.xlu0 %887
        %v890 = vadd.f32 %v866, %v888
        %s891 = sld [smem:[#allocation2 + $0x5a]]
        %v892 = vstv %s891
        %v893 = vmul.f32 %v892, %v854
        %895 = vrot.lane.b32.xlu0 %v893, 126
        %v896 = vpop.permute.xlu0 %895
        %v898 = vadd.f32 %v874, %v896
        %s899 = sld [smem:[#allocation2 + $0x5b]]
        %v900 = vstv %s899
        %v901 = vmul.f32 %v900, %v854
        %903 = vrot.lane.b32.xlu0 %v901, 126
        %v904 = vpop.permute.xlu0 %903
        %v906 = vadd.f32 %v882, %v904
        %s907 = sld [smem:[#allocation2 + $0x5c]]
        %v908 = vstv %s907
        %v909 = vmul.f32 %v908, %v854
        %911 = vrot.lane.b32.xlu0 %v909, 126
        %v912 = vpop.permute.xlu0 %911
        %v914 = vadd.f32 %v890, %v912
        %s915 = sld [smem:[#allocation2 + $0x5d]]
        %v916 = vstv %s915
        %v917 = vmul.f32 %v916, %v854
        %919 = vrot.lane.b32.xlu0 %v917, 125
        %v920 = vpop.permute.xlu0 %919
        %v922 = vadd.f32 %v898, %v920
        %s923 = sld [smem:[#allocation2 + $0x5e]]
        %v924 = vstv %s923
        %v925 = vmul.f32 %v924, %v854
        %927 = vrot.lane.b32.xlu0 %v925, 125
        %v928 = vpop.permute.xlu0 %927
        %v930 = vadd.f32 %v906, %v928
        %s931 = sld [smem:[#allocation2 + $0x5f]]
        %v932 = vstv %s931
        %v933 = vmul.f32 %v932, %v854
        %935 = vrot.lane.b32.xlu0 %v933, 125
        %v936 = vpop.permute.xlu0 %935
        %v938 = vadd.f32 %v914, %v936
        %s939 = sld [smem:[#allocation2 + $0x60]]
        %v940 = vstv %s939
        %v941 = vmul.f32 %v940, %v854
        %943 = vrot.lane.b32.xlu0 %v941, 124
        %v944 = vpop.permute.xlu0 %943
        %v946 = vadd.f32 %v922, %v944
        %s947 = sld [smem:[#allocation2 + $0x61]]
        %v948 = vstv %s947
        %v949 = vmul.f32 %v948, %v854
        %951 = vrot.lane.b32.xlu0 %v949, 124
        %v952 = vpop.permute.xlu0 %951
        %v954 = vadd.f32 %v930, %v952
        %s955 = sld [smem:[#allocation2 + $0x62]]
        %v956 = vstv %s955
        %v957 = vmul.f32 %v956, %v854
        %959 = vrot.lane.b32.xlu0 %v957, 124
        %v960 = vpop.permute.xlu0 %959
        %v962 = vadd.f32 %v938, %v960
        %s963 = sld [smem:[#allocation2 + $0x63]]
        %v964 = vstv %s963
        %v965 = vmul.f32 %v964, %v854
        %967 = vrot.lane.b32.xlu0 %v965, 123
        %v968 = vpop.permute.xlu0 %967
        %v970 = vadd.f32 %v946, %v968
        %s971 = sld [smem:[#allocation2 + $0x64]]
        %v972 = vstv %s971
        %v973 = vmul.f32 %v972, %v854
        %975 = vrot.lane.b32.xlu0 %v973, 123
        %v976 = vpop.permute.xlu0 %975
        %v978 = vadd.f32 %v954, %v976
        %s979 = sld [smem:[#allocation2 + $0x65]]
        %v980 = vstv %s979
        %v981 = vmul.f32 %v980, %v854
        %983 = vrot.lane.b32.xlu0 %v981, 123
        %v984 = vpop.permute.xlu0 %983
        %v986 = vadd.f32 %v962, %v984
        %s987 = sld [smem:[#allocation2 + $0x66]]
        %v988 = vstv %s987
        %v989 = vmul.f32 %v988, %v854
        %991 = vrot.lane.b32.xlu0 %v989, 122
        %v992 = vpop.permute.xlu0 %991
        %v994 = vadd.f32 %v970, %v992
        %s995 = sld [smem:[#allocation2 + $0x67]]
        %v996 = vstv %s995
        %v997 = vmul.f32 %v996, %v854
        %999 = vrot.lane.b32.xlu0 %v997, 122
        %v1000 = vpop.permute.xlu0 %999
        %v1002 = vadd.f32 %v978, %v1000
        %s1003 = sld [smem:[#allocation2 + $0x68]]
        %v1004 = vstv %s1003
        %v1005 = vmul.f32 %v1004, %v854
        %1007 = vrot.lane.b32.xlu0 %v1005, 122
        %v1008 = vpop.permute.xlu0 %1007
        %v1010 = vadd.f32 %v986, %v1008
        %s1011 = sadd.s32 %s210, 5
        %s1012 = scalar_lea.vmem %s209, %s1011
        %v1013 = vld [vmem:[%s1012] sm:$0xff]
        %s1014 = sld [smem:[#allocation2 + $0x69]]
        %v1015 = vstv %s1014
        %v1016 = vmul.f32 %v1015, %v1013
        %v1017 = vadd.f32 %v994, %v1016
        %s1018 = sld [smem:[#allocation2 + $0x6a]]
        %v1019 = vstv %s1018
        %v1020 = vmul.f32 %v1019, %v1013
        %v1021 = vadd.f32 %v1002, %v1020
        %s1022 = sld [smem:[#allocation2 + $0x6b]]
        %v1023 = vstv %s1022
        %v1024 = vmul.f32 %v1023, %v1013
        %v1025 = vadd.f32 %v1010, %v1024
        %s1026 = sld [smem:[#allocation2 + $0x6c]]
        %v1027 = vstv %s1026
        %v1028 = vmul.f32 %v1027, %v1013
        %1030 = vrot.lane.b32.xlu0 %v1028, 127
        %v1031 = vpop.permute.xlu0 %1030
        %v1033 = vadd.f32 %v1017, %v1031
        %s1034 = sld [smem:[#allocation2 + $0x6d]]
        %v1035 = vstv %s1034
        %v1036 = vmul.f32 %v1035, %v1013
        %1038 = vrot.lane.b32.xlu0 %v1036, 127
        %v1039 = vpop.permute.xlu0 %1038
        %v1041 = vadd.f32 %v1021, %v1039
        %s1042 = sld [smem:[#allocation2 + $0x6e]]
        %v1043 = vstv %s1042
        %v1044 = vmul.f32 %v1043, %v1013
        %1046 = vrot.lane.b32.xlu0 %v1044, 127
        %v1047 = vpop.permute.xlu0 %1046
        %v1049 = vadd.f32 %v1025, %v1047
        %s1050 = sld [smem:[#allocation2 + $0x6f]]
        %v1051 = vstv %s1050
        %v1052 = vmul.f32 %v1051, %v1013
        %1054 = vrot.lane.b32.xlu0 %v1052, 126
        %v1055 = vpop.permute.xlu0 %1054
        %v1057 = vadd.f32 %v1033, %v1055
        %s1058 = sld [smem:[#allocation2 + $0x70]]
        %v1059 = vstv %s1058
        %v1060 = vmul.f32 %v1059, %v1013
        %1062 = vrot.lane.b32.xlu0 %v1060, 126
        %v1063 = vpop.permute.xlu0 %1062
        %v1065 = vadd.f32 %v1041, %v1063
        %s1066 = sld [smem:[#allocation2 + $0x71]]
        %v1067 = vstv %s1066
        %v1068 = vmul.f32 %v1067, %v1013
        %1070 = vrot.lane.b32.xlu0 %v1068, 126
        %v1071 = vpop.permute.xlu0 %1070
        %v1073 = vadd.f32 %v1049, %v1071
        %s1074 = sld [smem:[#allocation2 + $0x72]]
        %v1075 = vstv %s1074
        %v1076 = vmul.f32 %v1075, %v1013
        %1078 = vrot.lane.b32.xlu0 %v1076, 125
        %v1079 = vpop.permute.xlu0 %1078
        %v1081 = vadd.f32 %v1057, %v1079
        %s1082 = sld [smem:[#allocation2 + $0x73]]
        %v1083 = vstv %s1082
        %v1084 = vmul.f32 %v1083, %v1013
        %1086 = vrot.lane.b32.xlu0 %v1084, 125
        %v1087 = vpop.permute.xlu0 %1086
        %v1089 = vadd.f32 %v1065, %v1087
        %s1090 = sld [smem:[#allocation2 + $0x74]]
        %v1091 = vstv %s1090
        %v1092 = vmul.f32 %v1091, %v1013
        %1094 = vrot.lane.b32.xlu0 %v1092, 125
        %v1095 = vpop.permute.xlu0 %1094
        %v1097 = vadd.f32 %v1073, %v1095
        %s1098 = sld [smem:[#allocation2 + $0x75]]
        %v1099 = vstv %s1098
        %v1100 = vmul.f32 %v1099, %v1013
        %1102 = vrot.lane.b32.xlu0 %v1100, 124
        %v1103 = vpop.permute.xlu0 %1102
        %v1105 = vadd.f32 %v1081, %v1103
        %s1106 = sld [smem:[#allocation2 + $0x76]]
        %v1107 = vstv %s1106
        %v1108 = vmul.f32 %v1107, %v1013
        %1110 = vrot.lane.b32.xlu0 %v1108, 124
        %v1111 = vpop.permute.xlu0 %1110
        %v1113 = vadd.f32 %v1089, %v1111
        %s1114 = sld [smem:[#allocation2 + $0x77]]
        %v1115 = vstv %s1114
        %v1116 = vmul.f32 %v1115, %v1013
        %1118 = vrot.lane.b32.xlu0 %v1116, 124
        %v1119 = vpop.permute.xlu0 %1118
        %v1121 = vadd.f32 %v1097, %v1119
        %s1122 = sld [smem:[#allocation2 + $0x78]]
        %v1123 = vstv %s1122
        %v1124 = vmul.f32 %v1123, %v1013
        %1126 = vrot.lane.b32.xlu0 %v1124, 123
        %v1127 = vpop.permute.xlu0 %1126
        %v1129 = vadd.f32 %v1105, %v1127
        %s1130 = sld [smem:[#allocation2 + $0x79]]
        %v1131 = vstv %s1130
        %v1132 = vmul.f32 %v1131, %v1013
        %1134 = vrot.lane.b32.xlu0 %v1132, 123
        %v1135 = vpop.permute.xlu0 %1134
        %v1137 = vadd.f32 %v1113, %v1135
        %s1138 = sld [smem:[#allocation2 + $0x7a]]
        %v1139 = vstv %s1138
        %v1140 = vmul.f32 %v1139, %v1013
        %1142 = vrot.lane.b32.xlu0 %v1140, 123
        %v1143 = vpop.permute.xlu0 %1142
        %v1145 = vadd.f32 %v1121, %v1143
        %s1146 = sld [smem:[#allocation2 + $0x7b]]
        %v1147 = vstv %s1146
        %v1148 = vmul.f32 %v1147, %v1013
        %1150 = vrot.lane.b32.xlu0 %v1148, 122
        %v1151 = vpop.permute.xlu0 %1150
        %v1153 = vadd.f32 %v1129, %v1151
        %s1154 = sld [smem:[#allocation2 + $0x7c]]
        %v1155 = vstv %s1154
        %v1156 = vmul.f32 %v1155, %v1013
        %1158 = vrot.lane.b32.xlu0 %v1156, 122
        %v1159 = vpop.permute.xlu0 %1158
        %v1161 = vadd.f32 %v1137, %v1159
        %s1162 = sld [smem:[#allocation2 + $0x7d]]
        %v1163 = vstv %s1162
        %v1164 = vmul.f32 %v1163, %v1013
        %1166 = vrot.lane.b32.xlu0 %v1164, 122
        %v1167 = vpop.permute.xlu0 %1166
        %v1169 = vadd.f32 %v1145, %v1167
        %s1170 = sadd.s32 %s210, 6
        %s1171 = scalar_lea.vmem %s209, %s1170
        %v1172 = vld [vmem:[%s1171] sm:$0xff]
        %s1173 = sld [smem:[#allocation2 + $0x7e]]
        %v1174 = vstv %s1173
        %v1175 = vmul.f32 %v1174, %v1172
        %v1176 = vadd.f32 %v1153, %v1175
        %s1177 = sld [smem:[#allocation2 + $0x7f]]
        %v1178 = vstv %s1177
        %v1179 = vmul.f32 %v1178, %v1172
        %v1180 = vadd.f32 %v1161, %v1179
        %s1181 = sld [smem:[#allocation2 + $0x80]]
        %v1182 = vstv %s1181
        %v1183 = vmul.f32 %v1182, %v1172
        %v1184 = vadd.f32 %v1169, %v1183
        %s1185 = sld [smem:[#allocation2 + $0x81]]
        %v1186 = vstv %s1185
        %v1187 = vmul.f32 %v1186, %v1172
        %1189 = vrot.lane.b32.xlu0 %v1187, 127
        %v1190 = vpop.permute.xlu0 %1189
        %v1192 = vadd.f32 %v1176, %v1190
        %s1193 = sld [smem:[#allocation2 + $0x82]]
        %v1194 = vstv %s1193
        %v1195 = vmul.f32 %v1194, %v1172
        %1197 = vrot.lane.b32.xlu0 %v1195, 127
        %v1198 = vpop.permute.xlu0 %1197
        %v1200 = vadd.f32 %v1180, %v1198
        %s1201 = sld [smem:[#allocation2 + $0x83]]
        %v1202 = vstv %s1201
        %v1203 = vmul.f32 %v1202, %v1172
        %1205 = vrot.lane.b32.xlu0 %v1203, 127
        %v1206 = vpop.permute.xlu0 %1205
        %v1208 = vadd.f32 %v1184, %v1206
        %s1209 = sld [smem:[#allocation2 + $0x84]]
        %v1210 = vstv %s1209
        %v1211 = vmul.f32 %v1210, %v1172
        %1213 = vrot.lane.b32.xlu0 %v1211, 126
        %v1214 = vpop.permute.xlu0 %1213
        %v1216 = vadd.f32 %v1192, %v1214
        %s1217 = sld [smem:[#allocation2 + $0x85]]
        %v1218 = vstv %s1217
        %v1219 = vmul.f32 %v1218, %v1172
        %1221 = vrot.lane.b32.xlu0 %v1219, 126
        %v1222 = vpop.permute.xlu0 %1221
        %v1224 = vadd.f32 %v1200, %v1222
        %s1225 = sld [smem:[#allocation2 + $0x86]]
        %v1226 = vstv %s1225
        %v1227 = vmul.f32 %v1226, %v1172
        %1229 = vrot.lane.b32.xlu0 %v1227, 126
        %v1230 = vpop.permute.xlu0 %1229
        %v1232 = vadd.f32 %v1208, %v1230
        %s1233 = sld [smem:[#allocation2 + $0x87]]
        %v1234 = vstv %s1233
        %v1235 = vmul.f32 %v1234, %v1172
        %1237 = vrot.lane.b32.xlu0 %v1235, 125
        %v1238 = vpop.permute.xlu0 %1237
        %v1240 = vadd.f32 %v1216, %v1238
        %s1241 = sld [smem:[#allocation2 + $0x88]]
        %v1242 = vstv %s1241
        %v1243 = vmul.f32 %v1242, %v1172
        %1245 = vrot.lane.b32.xlu0 %v1243, 125
        %v1246 = vpop.permute.xlu0 %1245
        %v1248 = vadd.f32 %v1224, %v1246
        %s1249 = sld [smem:[#allocation2 + $0x89]]
        %v1250 = vstv %s1249
        %v1251 = vmul.f32 %v1250, %v1172
        %1253 = vrot.lane.b32.xlu0 %v1251, 125
        %v1254 = vpop.permute.xlu0 %1253
        %v1256 = vadd.f32 %v1232, %v1254
        %s1257 = sld [smem:[#allocation2 + $0x8a]]
        %v1258 = vstv %s1257
        %v1259 = vmul.f32 %v1258, %v1172
        %1261 = vrot.lane.b32.xlu0 %v1259, 124
        %v1262 = vpop.permute.xlu0 %1261
        %v1264 = vadd.f32 %v1240, %v1262
        %s1265 = sld [smem:[#allocation2 + $0x8b]]
        %v1266 = vstv %s1265
        %v1267 = vmul.f32 %v1266, %v1172
        %1269 = vrot.lane.b32.xlu0 %v1267, 124
        %v1270 = vpop.permute.xlu0 %1269
        %v1272 = vadd.f32 %v1248, %v1270
        %s1273 = sld [smem:[#allocation2 + $0x8c]]
        %v1274 = vstv %s1273
        %v1275 = vmul.f32 %v1274, %v1172
        %1277 = vrot.lane.b32.xlu0 %v1275, 124
        %v1278 = vpop.permute.xlu0 %1277
        %v1280 = vadd.f32 %v1256, %v1278
        %s1281 = sld [smem:[#allocation2 + $0x8d]]
        %v1282 = vstv %s1281
        %v1283 = vmul.f32 %v1282, %v1172
        %1285 = vrot.lane.b32.xlu0 %v1283, 123
        %v1286 = vpop.permute.xlu0 %1285
        %v1288 = vadd.f32 %v1264, %v1286
        %s1289 = sld [smem:[#allocation2 + $0x8e]]
        %v1290 = vstv %s1289
        %v1291 = vmul.f32 %v1290, %v1172
        %1293 = vrot.lane.b32.xlu0 %v1291, 123
        %v1294 = vpop.permute.xlu0 %1293
        %v1296 = vadd.f32 %v1272, %v1294
        %s1297 = sld [smem:[#allocation2 + $0x8f]]
        %v1298 = vstv %s1297
        %v1299 = vmul.f32 %v1298, %v1172
        %1301 = vrot.lane.b32.xlu0 %v1299, 123
        %v1302 = vpop.permute.xlu0 %1301
        %v1304 = vadd.f32 %v1280, %v1302
        %s1305 = sld [smem:[#allocation2 + $0x90]]
        %v1306 = vstv %s1305
        %v1307 = vmul.f32 %v1306, %v1172
        %1309 = vrot.lane.b32.xlu0 %v1307, 122
        %v1310 = vpop.permute.xlu0 %1309
        %v1312 = vadd.f32 %v1288, %v1310
        %s1313 = sld [smem:[#allocation2 + $0x91]]
        %v1314 = vstv %s1313
        %v1315 = vmul.f32 %v1314, %v1172
        %1317 = vrot.lane.b32.xlu0 %v1315, 122
        %v1318 = vpop.permute.xlu0 %1317
        %v1320 = vadd.f32 %v1296, %v1318
        %s1321 = sld [smem:[#allocation2 + $0x92]]
        %v1322 = vstv %s1321
        %v1323 = vmul.f32 %v1322, %v1172
        %1325 = vrot.lane.b32.xlu0 %v1323, 122
        %v1326 = vpop.permute.xlu0 %1325
        %v1328 = vadd.f32 %v1304, %v1326
        %s1329 = sadd.s32 %s210, 24
        %s1330 = scalar_lea.vmem %s209, %s1329
        %v1331 = vld [vmem:[%s1330] sm:$0xff]
        %s1332 = sld [smem:[#allocation2 + $0x93]]
        %v1333 = vstv %s1332
        %v1334 = vmul.f32 %v1333, %v1331
        %v1335 = vadd.f32 %v1312, %v1334
        %s1336 = sld [smem:[#allocation2 + $0x94]]
        %v1337 = vstv %s1336
        %v1338 = vmul.f32 %v1337, %v1331
        %v1339 = vadd.f32 %v1320, %v1338
        %s1340 = sld [smem:[#allocation2 + $0x95]]
        %v1341 = vstv %s1340
        %v1342 = vmul.f32 %v1341, %v1331
        %v1343 = vadd.f32 %v1328, %v1342
        %s1344 = sld [smem:[#allocation2 + $0x96]]
        %v1345 = vstv %s1344
        %v1346 = vmul.f32 %v1345, %v1331
        %1348 = vrot.lane.b32.xlu0 %v1346, 127
        %v1349 = vpop.permute.xlu0 %1348
        %v1351 = vadd.f32 %v1335, %v1349
        %s1352 = sld [smem:[#allocation2 + $0x97]]
        %v1353 = vstv %s1352
        %v1354 = vmul.f32 %v1353, %v1331
        %1356 = vrot.lane.b32.xlu0 %v1354, 127
        %v1357 = vpop.permute.xlu0 %1356
        %v1359 = vadd.f32 %v1339, %v1357
        %s1360 = sld [smem:[#allocation2 + $0x98]]
        %v1361 = vstv %s1360
        %v1362 = vmul.f32 %v1361, %v1331
        %1364 = vrot.lane.b32.xlu0 %v1362, 127
        %v1365 = vpop.permute.xlu0 %1364
        %v1367 = vadd.f32 %v1343, %v1365
        %s1368 = sld [smem:[#allocation2 + $0x99]]
        %v1369 = vstv %s1368
        %v1370 = vmul.f32 %v1369, %v1331
        %1372 = vrot.lane.b32.xlu0 %v1370, 126
        %v1373 = vpop.permute.xlu0 %1372
        %v1375 = vadd.f32 %v1351, %v1373
        %s1376 = sld [smem:[#allocation2 + $0x9a]]
        %v1377 = vstv %s1376
        %v1378 = vmul.f32 %v1377, %v1331
        %1380 = vrot.lane.b32.xlu0 %v1378, 126
        %v1381 = vpop.permute.xlu0 %1380
        %v1383 = vadd.f32 %v1359, %v1381
        %s1384 = sld [smem:[#allocation2 + $0x9b]]
        %v1385 = vstv %s1384
        %v1386 = vmul.f32 %v1385, %v1331
        %1388 = vrot.lane.b32.xlu0 %v1386, 126
        %v1389 = vpop.permute.xlu0 %1388
        %v1391 = vadd.f32 %v1367, %v1389
        %s1392 = sld [smem:[#allocation2 + $0x9c]]
        %v1393 = vstv %s1392
        %v1394 = vmul.f32 %v1393, %v1331
        %1396 = vrot.lane.b32.xlu0 %v1394, 125
        %v1397 = vpop.permute.xlu0 %1396
        %v1399 = vadd.f32 %v1375, %v1397
        %s1400 = sld [smem:[#allocation2 + $0x9d]]
        %v1401 = vstv %s1400
        %v1402 = vmul.f32 %v1401, %v1331
        %1404 = vrot.lane.b32.xlu0 %v1402, 125
        %v1405 = vpop.permute.xlu0 %1404
        %v1407 = vadd.f32 %v1383, %v1405
        %s1408 = sld [smem:[#allocation2 + $0x9e]]
        %v1409 = vstv %s1408
        %v1410 = vmul.f32 %v1409, %v1331
        %1412 = vrot.lane.b32.xlu0 %v1410, 125
        %v1413 = vpop.permute.xlu0 %1412
        %v1415 = vadd.f32 %v1391, %v1413
        %s1416 = sld [smem:[#allocation2 + $0x9f]]
        %v1417 = vstv %s1416
        %v1418 = vmul.f32 %v1417, %v1331
        %1420 = vrot.lane.b32.xlu0 %v1418, 124
        %v1421 = vpop.permute.xlu0 %1420
        %v1423 = vadd.f32 %v1399, %v1421
        %s1424 = sld [smem:[#allocation2 + $0xa0]]
        %v1425 = vstv %s1424
        %v1426 = vmul.f32 %v1425, %v1331
        %1428 = vrot.lane.b32.xlu0 %v1426, 124
        %v1429 = vpop.permute.xlu0 %1428
        %v1431 = vadd.f32 %v1407, %v1429
        %s1432 = sld [smem:[#allocation2 + $0xa1]]
        %v1433 = vstv %s1432
        %v1434 = vmul.f32 %v1433, %v1331
        %1436 = vrot.lane.b32.xlu0 %v1434, 124
        %v1437 = vpop.permute.xlu0 %1436
        %v1439 = vadd.f32 %v1415, %v1437
        %s1440 = sld [smem:[#allocation2 + $0xa2]]
        %v1441 = vstv %s1440
        %v1442 = vmul.f32 %v1441, %v1331
        %1444 = vrot.lane.b32.xlu0 %v1442, 123
        %v1445 = vpop.permute.xlu0 %1444
        %v1447 = vadd.f32 %v1423, %v1445
        %s1448 = sld [smem:[#allocation2 + $0xa3]]
        %v1449 = vstv %s1448
        %v1450 = vmul.f32 %v1449, %v1331
        %1452 = vrot.lane.b32.xlu0 %v1450, 123
        %v1453 = vpop.permute.xlu0 %1452
        %v1455 = vadd.f32 %v1431, %v1453
        %s1456 = sld [smem:[#allocation2 + $0xa4]]
        %v1457 = vstv %s1456
        %v1458 = vmul.f32 %v1457, %v1331
        %1460 = vrot.lane.b32.xlu0 %v1458, 123
        %v1461 = vpop.permute.xlu0 %1460
        %v1463 = vadd.f32 %v1439, %v1461
        %s1464 = sld [smem:[#allocation2 + $0xa5]]
        %v1465 = vstv %s1464
        %v1466 = vmul.f32 %v1465, %v1331
        %1468 = vrot.lane.b32.xlu0 %v1466, 122
        %v1469 = vpop.permute.xlu0 %1468
        %v1471 = vadd.f32 %v1447, %v1469
        %s1472 = sld [smem:[#allocation2 + $0xa6]]
        %v1473 = vstv %s1472
        %v1474 = vmul.f32 %v1473, %v1331
        %1476 = vrot.lane.b32.xlu0 %v1474, 122
        %v1477 = vpop.permute.xlu0 %1476
        %v1479 = vadd.f32 %v1455, %v1477
        %s1480 = sld [smem:[#allocation2 + $0xa7]]
        %v1481 = vstv %s1480
        %v1482 = vmul.f32 %v1481, %v1331
        %1484 = vrot.lane.b32.xlu0 %v1482, 122
        %v1485 = vpop.permute.xlu0 %1484
        %v1487 = vadd.f32 %v1463, %v1485
        %s1488 = sadd.s32 %s375, 24
        %s1489 = scalar_lea.vmem %s209, %s1488
        %v1490 = vld [vmem:[%s1489] sm:$0xff]
        %s1491 = sld [smem:[#allocation2 + $0xa8]]
        %v1492 = vstv %s1491
        %v1493 = vmul.f32 %v1492, %v1490
        %v1494 = vadd.f32 %v1471, %v1493
        %s1495 = sld [smem:[#allocation2 + $0xa9]]
        %v1496 = vstv %s1495
        %v1497 = vmul.f32 %v1496, %v1490
        %v1498 = vadd.f32 %v1479, %v1497
        %s1499 = sld [smem:[#allocation2 + $0xaa]]
        %v1500 = vstv %s1499
        %v1501 = vmul.f32 %v1500, %v1490
        %v1502 = vadd.f32 %v1487, %v1501
        %s1503 = sld [smem:[#allocation2 + $0xab]]
        %v1504 = vstv %s1503
        %v1505 = vmul.f32 %v1504, %v1490
        %1507 = vrot.lane.b32.xlu0 %v1505, 127
        %v1508 = vpop.permute.xlu0 %1507
        %v1510 = vadd.f32 %v1494, %v1508
        %s1511 = sld [smem:[#allocation2 + $0xac]]
        %v1512 = vstv %s1511
        %v1513 = vmul.f32 %v1512, %v1490
        %1515 = vrot.lane.b32.xlu0 %v1513, 127
        %v1516 = vpop.permute.xlu0 %1515
        %v1518 = vadd.f32 %v1498, %v1516
        %s1519 = sld [smem:[#allocation2 + $0xad]]
        %v1520 = vstv %s1519
        %v1521 = vmul.f32 %v1520, %v1490
        %1523 = vrot.lane.b32.xlu0 %v1521, 127
        %v1524 = vpop.permute.xlu0 %1523
        %v1526 = vadd.f32 %v1502, %v1524
        %s1527 = sld [smem:[#allocation2 + $0xae]]
        %v1528 = vstv %s1527
        %v1529 = vmul.f32 %v1528, %v1490
        %1531 = vrot.lane.b32.xlu0 %v1529, 126
        %v1532 = vpop.permute.xlu0 %1531
        %v1534 = vadd.f32 %v1510, %v1532
        %s1535 = sld [smem:[#allocation2 + $0xaf]]
        %v1536 = vstv %s1535
        %v1537 = vmul.f32 %v1536, %v1490
        %1539 = vrot.lane.b32.xlu0 %v1537, 126
        %v1540 = vpop.permute.xlu0 %1539
        %v1542 = vadd.f32 %v1518, %v1540
        %s1543 = sld [smem:[#allocation2 + $0xb0]]
        %v1544 = vstv %s1543
        %v1545 = vmul.f32 %v1544, %v1490
        %1547 = vrot.lane.b32.xlu0 %v1545, 126
        %v1548 = vpop.permute.xlu0 %1547
        %v1550 = vadd.f32 %v1526, %v1548
        %s1551 = sld [smem:[#allocation2 + $0xb1]]
        %v1552 = vstv %s1551
        %v1553 = vmul.f32 %v1552, %v1490
        %1555 = vrot.lane.b32.xlu0 %v1553, 125
        %v1556 = vpop.permute.xlu0 %1555
        %v1558 = vadd.f32 %v1534, %v1556
        %s1559 = sld [smem:[#allocation2 + $0xb2]]
        %v1560 = vstv %s1559
        %v1561 = vmul.f32 %v1560, %v1490
        %1563 = vrot.lane.b32.xlu0 %v1561, 125
        %v1564 = vpop.permute.xlu0 %1563
        %v1566 = vadd.f32 %v1542, %v1564
        %s1567 = sld [smem:[#allocation2 + $0xb3]]
        %v1568 = vstv %s1567
        %v1569 = vmul.f32 %v1568, %v1490
        %1571 = vrot.lane.b32.xlu0 %v1569, 125
        %v1572 = vpop.permute.xlu0 %1571
        %v1574 = vadd.f32 %v1550, %v1572
        %s1575 = sld [smem:[#allocation2 + $0xb4]]
        %v1576 = vstv %s1575
        %v1577 = vmul.f32 %v1576, %v1490
        %1579 = vrot.lane.b32.xlu0 %v1577, 124
        %v1580 = vpop.permute.xlu0 %1579
        %v1582 = vadd.f32 %v1558, %v1580
        %s1583 = sld [smem:[#allocation2 + $0xb5]]
        %v1584 = vstv %s1583
        %v1585 = vmul.f32 %v1584, %v1490
        %1587 = vrot.lane.b32.xlu0 %v1585, 124
        %v1588 = vpop.permute.xlu0 %1587
        %v1590 = vadd.f32 %v1566, %v1588
        %s1591 = sld [smem:[#allocation2 + $0xb6]]
        %v1592 = vstv %s1591
        %v1593 = vmul.f32 %v1592, %v1490
        %1595 = vrot.lane.b32.xlu0 %v1593, 124
        %v1596 = vpop.permute.xlu0 %1595
        %v1598 = vadd.f32 %v1574, %v1596
        %s1599 = sld [smem:[#allocation2 + $0xb7]]
        %v1600 = vstv %s1599
        %v1601 = vmul.f32 %v1600, %v1490
        %1603 = vrot.lane.b32.xlu0 %v1601, 123
        %v1604 = vpop.permute.xlu0 %1603
        %v1606 = vadd.f32 %v1582, %v1604
        %s1607 = sld [smem:[#allocation2 + $0xb8]]
        %v1608 = vstv %s1607
        %v1609 = vmul.f32 %v1608, %v1490
        %1611 = vrot.lane.b32.xlu0 %v1609, 123
        %v1612 = vpop.permute.xlu0 %1611
        %v1614 = vadd.f32 %v1590, %v1612
        %s1615 = sld [smem:[#allocation2 + $0xb9]]
        %v1616 = vstv %s1615
        %v1617 = vmul.f32 %v1616, %v1490
        %1619 = vrot.lane.b32.xlu0 %v1617, 123
        %v1620 = vpop.permute.xlu0 %1619
        %v1622 = vadd.f32 %v1598, %v1620
        %s1623 = sld [smem:[#allocation2 + $0xba]]
        %v1624 = vstv %s1623
        %v1625 = vmul.f32 %v1624, %v1490
        %1627 = vrot.lane.b32.xlu0 %v1625, 122
        %v1628 = vpop.permute.xlu0 %1627
        %v1630 = vadd.f32 %v1606, %v1628
        %s1631 = sld [smem:[#allocation2 + $0xbb]]
        %v1632 = vstv %s1631
        %v1633 = vmul.f32 %v1632, %v1490
        %1635 = vrot.lane.b32.xlu0 %v1633, 122
        %v1636 = vpop.permute.xlu0 %1635
        %v1638 = vadd.f32 %v1614, %v1636
        %s1639 = sld [smem:[#allocation2 + $0xbc]]
        %v1640 = vstv %s1639
        %v1641 = vmul.f32 %v1640, %v1490
        %1643 = vrot.lane.b32.xlu0 %v1641, 122
        %v1644 = vpop.permute.xlu0 %1643
        %v1646 = vadd.f32 %v1622, %v1644
        %s1647 = sadd.s32 %s534, 24
        %s1648 = scalar_lea.vmem %s209, %s1647
        %v1649 = vld [vmem:[%s1648] sm:$0xff]
        %s1650 = sld [smem:[#allocation2 + $0xbd]]
        %v1651 = vstv %s1650
        %v1652 = vmul.f32 %v1651, %v1649
        %v1653 = vadd.f32 %v1630, %v1652
        %s1654 = sld [smem:[#allocation2 + $0xbe]]
        %v1655 = vstv %s1654
        %v1656 = vmul.f32 %v1655, %v1649
        %v1657 = vadd.f32 %v1638, %v1656
        %s1658 = sld [smem:[#allocation2 + $0xbf]]
        %v1659 = vstv %s1658
        %v1660 = vmul.f32 %v1659, %v1649
        %v1661 = vadd.f32 %v1646, %v1660
        %s1662 = sld [smem:[#allocation2 + $0xc0]]
        %v1663 = vstv %s1662
        %v1664 = vmul.f32 %v1663, %v1649
        %1666 = vrot.lane.b32.xlu0 %v1664, 127
        %v1667 = vpop.permute.xlu0 %1666
        %v1669 = vadd.f32 %v1653, %v1667
        %s1670 = sld [smem:[#allocation2 + $0xc1]]
        %v1671 = vstv %s1670
        %v1672 = vmul.f32 %v1671, %v1649
        %1674 = vrot.lane.b32.xlu0 %v1672, 127
        %v1675 = vpop.permute.xlu0 %1674
        %v1677 = vadd.f32 %v1657, %v1675
        %s1678 = sld [smem:[#allocation2 + $0xc2]]
        %v1679 = vstv %s1678
        %v1680 = vmul.f32 %v1679, %v1649
        %1682 = vrot.lane.b32.xlu0 %v1680, 127
        %v1683 = vpop.permute.xlu0 %1682
        %v1685 = vadd.f32 %v1661, %v1683
        %s1686 = sld [smem:[#allocation2 + $0xc3]]
        %v1687 = vstv %s1686
        %v1688 = vmul.f32 %v1687, %v1649
        %1690 = vrot.lane.b32.xlu0 %v1688, 126
        %v1691 = vpop.permute.xlu0 %1690
        %v1693 = vadd.f32 %v1669, %v1691
        %s1694 = sld [smem:[#allocation2 + $0xc4]]
        %v1695 = vstv %s1694
        %v1696 = vmul.f32 %v1695, %v1649
        %1698 = vrot.lane.b32.xlu0 %v1696, 126
        %v1699 = vpop.permute.xlu0 %1698
        %v1701 = vadd.f32 %v1677, %v1699
        %s1702 = sld [smem:[#allocation2 + $0xc5]]
        %v1703 = vstv %s1702
        %v1704 = vmul.f32 %v1703, %v1649
        %1706 = vrot.lane.b32.xlu0 %v1704, 126
        %v1707 = vpop.permute.xlu0 %1706
        %v1709 = vadd.f32 %v1685, %v1707
        %s1710 = sld [smem:[#allocation2 + $0xc6]]
        %v1711 = vstv %s1710
        %v1712 = vmul.f32 %v1711, %v1649
        %1714 = vrot.lane.b32.xlu0 %v1712, 125
        %v1715 = vpop.permute.xlu0 %1714
        %v1717 = vadd.f32 %v1693, %v1715
        %s1718 = sld [smem:[#allocation2 + $0xc7]]
        %v1719 = vstv %s1718
        %v1720 = vmul.f32 %v1719, %v1649
        %1722 = vrot.lane.b32.xlu0 %v1720, 125
        %v1723 = vpop.permute.xlu0 %1722
        %v1725 = vadd.f32 %v1701, %v1723
        %s1726 = sld [smem:[#allocation2 + $0xc8]]
        %v1727 = vstv %s1726
        %v1728 = vmul.f32 %v1727, %v1649
        %1730 = vrot.lane.b32.xlu0 %v1728, 125
        %v1731 = vpop.permute.xlu0 %1730
        %v1733 = vadd.f32 %v1709, %v1731
        %s1734 = sld [smem:[#allocation2 + $0xc9]]
        %v1735 = vstv %s1734
        %v1736 = vmul.f32 %v1735, %v1649
        %1738 = vrot.lane.b32.xlu0 %v1736, 124
        %v1739 = vpop.permute.xlu0 %1738
        %v1741 = vadd.f32 %v1717, %v1739
        %s1742 = sld [smem:[#allocation2 + $0xca]]
        %v1743 = vstv %s1742
        %v1744 = vmul.f32 %v1743, %v1649
        %1746 = vrot.lane.b32.xlu0 %v1744, 124
        %v1747 = vpop.permute.xlu0 %1746
        %v1749 = vadd.f32 %v1725, %v1747
        %s1750 = sld [smem:[#allocation2 + $0xcb]]
        %v1751 = vstv %s1750
        %v1752 = vmul.f32 %v1751, %v1649
        %1754 = vrot.lane.b32.xlu0 %v1752, 124
        %v1755 = vpop.permute.xlu0 %1754
        %v1757 = vadd.f32 %v1733, %v1755
        %s1758 = sld [smem:[#allocation2 + $0xcc]]
        %v1759 = vstv %s1758
        %v1760 = vmul.f32 %v1759, %v1649
        %1762 = vrot.lane.b32.xlu0 %v1760, 123
        %v1763 = vpop.permute.xlu0 %1762
        %v1765 = vadd.f32 %v1741, %v1763
        %s1766 = sld [smem:[#allocation2 + $0xcd]]
        %v1767 = vstv %s1766
        %v1768 = vmul.f32 %v1767, %v1649
        %1770 = vrot.lane.b32.xlu0 %v1768, 123
        %v1771 = vpop.permute.xlu0 %1770
        %v1773 = vadd.f32 %v1749, %v1771
        %s1774 = sld [smem:[#allocation2 + $0xce]]
        %v1775 = vstv %s1774
        %v1776 = vmul.f32 %v1775, %v1649
        %1778 = vrot.lane.b32.xlu0 %v1776, 123
        %v1779 = vpop.permute.xlu0 %1778
        %v1781 = vadd.f32 %v1757, %v1779
        %s1782 = sld [smem:[#allocation2 + $0xcf]]
        %v1783 = vstv %s1782
        %v1784 = vmul.f32 %v1783, %v1649
        %1786 = vrot.lane.b32.xlu0 %v1784, 122
        %v1787 = vpop.permute.xlu0 %1786
        %v1789 = vadd.f32 %v1765, %v1787
        %s1790 = sld [smem:[#allocation2 + $0xd0]]
        %v1791 = vstv %s1790
        %v1792 = vmul.f32 %v1791, %v1649
        %1794 = vrot.lane.b32.xlu0 %v1792, 122
        %v1795 = vpop.permute.xlu0 %1794
        %v1797 = vadd.f32 %v1773, %v1795
        %s1798 = sld [smem:[#allocation2 + $0xd1]]
        %v1799 = vstv %s1798
        %v1800 = vmul.f32 %v1799, %v1649
        %1802 = vrot.lane.b32.xlu0 %v1800, 122
        %v1803 = vpop.permute.xlu0 %1802
        %v1805 = vadd.f32 %v1781, %v1803
        %s1806 = sadd.s32 %s693, 24
        %s1807 = scalar_lea.vmem %s209, %s1806
        %v1808 = vld [vmem:[%s1807] sm:$0xff]
        %s1809 = sld [smem:[#allocation2 + $0xd2]]
        %v1810 = vstv %s1809
        %v1811 = vmul.f32 %v1810, %v1808
        %v1812 = vadd.f32 %v1789, %v1811
        %s1813 = sld [smem:[#allocation2 + $0xd3]]
        %v1814 = vstv %s1813
        %v1815 = vmul.f32 %v1814, %v1808
        %v1816 = vadd.f32 %v1797, %v1815
        %s1817 = sld [smem:[#allocation2 + $0xd4]]
        %v1818 = vstv %s1817
        %v1819 = vmul.f32 %v1818, %v1808
        %v1820 = vadd.f32 %v1805, %v1819
        %s1821 = sld [smem:[#allocation2 + $0xd5]]
        %v1822 = vstv %s1821
        %v1823 = vmul.f32 %v1822, %v1808
        %1825 = vrot.lane.b32.xlu0 %v1823, 127
        %v1826 = vpop.permute.xlu0 %1825
        %v1828 = vadd.f32 %v1812, %v1826
        %s1829 = sld [smem:[#allocation2 + $0xd6]]
        %v1830 = vstv %s1829
        %v1831 = vmul.f32 %v1830, %v1808
        %1833 = vrot.lane.b32.xlu0 %v1831, 127
        %v1834 = vpop.permute.xlu0 %1833
        %v1836 = vadd.f32 %v1816, %v1834
        %s1837 = sld [smem:[#allocation2 + $0xd7]]
        %v1838 = vstv %s1837
        %v1839 = vmul.f32 %v1838, %v1808
        %1841 = vrot.lane.b32.xlu0 %v1839, 127
        %v1842 = vpop.permute.xlu0 %1841
        %v1844 = vadd.f32 %v1820, %v1842
        %s1845 = sld [smem:[#allocation2 + $0xd8]]
        %v1846 = vstv %s1845
        %v1847 = vmul.f32 %v1846, %v1808
        %1849 = vrot.lane.b32.xlu0 %v1847, 126
        %v1850 = vpop.permute.xlu0 %1849
        %v1852 = vadd.f32 %v1828, %v1850
        %s1853 = sld [smem:[#allocation2 + $0xd9]]
        %v1854 = vstv %s1853
        %v1855 = vmul.f32 %v1854, %v1808
        %1857 = vrot.lane.b32.xlu0 %v1855, 126
        %v1858 = vpop.permute.xlu0 %1857
        %v1860 = vadd.f32 %v1836, %v1858
        %s1861 = sld [smem:[#allocation2 + $0xda]]
        %v1862 = vstv %s1861
        %v1863 = vmul.f32 %v1862, %v1808
        %1865 = vrot.lane.b32.xlu0 %v1863, 126
        %v1866 = vpop.permute.xlu0 %1865
        %v1868 = vadd.f32 %v1844, %v1866
        %s1869 = sld [smem:[#allocation2 + $0xdb]]
        %v1870 = vstv %s1869
        %v1871 = vmul.f32 %v1870, %v1808
        %1873 = vrot.lane.b32.xlu0 %v1871, 125
        %v1874 = vpop.permute.xlu0 %1873
        %v1876 = vadd.f32 %v1852, %v1874
        %s1877 = sld [smem:[#allocation2 + $0xdc]]
        %v1878 = vstv %s1877
        %v1879 = vmul.f32 %v1878, %v1808
        %1881 = vrot.lane.b32.xlu0 %v1879, 125
        %v1882 = vpop.permute.xlu0 %1881
        %v1884 = vadd.f32 %v1860, %v1882
        %s1885 = sld [smem:[#allocation2 + $0xdd]]
        %v1886 = vstv %s1885
        %v1887 = vmul.f32 %v1886, %v1808
        %1889 = vrot.lane.b32.xlu0 %v1887, 125
        %v1890 = vpop.permute.xlu0 %1889
        %v1892 = vadd.f32 %v1868, %v1890
        %s1893 = sld [smem:[#allocation2 + $0xde]]
        %v1894 = vstv %s1893
        %v1895 = vmul.f32 %v1894, %v1808
        %1897 = vrot.lane.b32.xlu0 %v1895, 124
        %v1898 = vpop.permute.xlu0 %1897
        %v1900 = vadd.f32 %v1876, %v1898
        %s1901 = sld [smem:[#allocation2 + $0xdf]]
        %v1902 = vstv %s1901
        %v1903 = vmul.f32 %v1902, %v1808
        %1905 = vrot.lane.b32.xlu0 %v1903, 124
        %v1906 = vpop.permute.xlu0 %1905
        %v1908 = vadd.f32 %v1884, %v1906
        %s1909 = sld [smem:[#allocation2 + $0xe0]]
        %v1910 = vstv %s1909
        %v1911 = vmul.f32 %v1910, %v1808
        %1913 = vrot.lane.b32.xlu0 %v1911, 124
        %v1914 = vpop.permute.xlu0 %1913
        %v1916 = vadd.f32 %v1892, %v1914
        %s1917 = sld [smem:[#allocation2 + $0xe1]]
        %v1918 = vstv %s1917
        %v1919 = vmul.f32 %v1918, %v1808
        %1921 = vrot.lane.b32.xlu0 %v1919, 123
        %v1922 = vpop.permute.xlu0 %1921
        %v1924 = vadd.f32 %v1900, %v1922
        %s1925 = sld [smem:[#allocation2 + $0xe2]]
        %v1926 = vstv %s1925
        %v1927 = vmul.f32 %v1926, %v1808
        %1929 = vrot.lane.b32.xlu0 %v1927, 123
        %v1930 = vpop.permute.xlu0 %1929
        %v1932 = vadd.f32 %v1908, %v1930
        %s1933 = sld [smem:[#allocation2 + $0xe3]]
        %v1934 = vstv %s1933
        %v1935 = vmul.f32 %v1934, %v1808
        %1937 = vrot.lane.b32.xlu0 %v1935, 123
        %v1938 = vpop.permute.xlu0 %1937
        %v1940 = vadd.f32 %v1916, %v1938
        %s1941 = sld [smem:[#allocation2 + $0xe4]]
        %v1942 = vstv %s1941
        %v1943 = vmul.f32 %v1942, %v1808
        %1945 = vrot.lane.b32.xlu0 %v1943, 122
        %v1946 = vpop.permute.xlu0 %1945
        %v1948 = vadd.f32 %v1924, %v1946
        %s1949 = sld [smem:[#allocation2 + $0xe5]]
        %v1950 = vstv %s1949
        %v1951 = vmul.f32 %v1950, %v1808
        %1953 = vrot.lane.b32.xlu0 %v1951, 122
        %v1954 = vpop.permute.xlu0 %1953
        %v1956 = vadd.f32 %v1932, %v1954
        %s1957 = sld [smem:[#allocation2 + $0xe6]]
        %v1958 = vstv %s1957
        %v1959 = vmul.f32 %v1958, %v1808
        %1961 = vrot.lane.b32.xlu0 %v1959, 122
        %v1962 = vpop.permute.xlu0 %1961
        %v1964 = vadd.f32 %v1940, %v1962
        %s1965 = sadd.s32 %s852, 24
        %s1966 = scalar_lea.vmem %s209, %s1965
        %v1967 = vld [vmem:[%s1966] sm:$0xff]
        %s1968 = sld [smem:[#allocation2 + $0xe7]]
        %v1969 = vstv %s1968
        %v1970 = vmul.f32 %v1969, %v1967
        %v1971 = vadd.f32 %v1948, %v1970
        %s1972 = sld [smem:[#allocation2 + $0xe8]]
        %v1973 = vstv %s1972
        %v1974 = vmul.f32 %v1973, %v1967
        %v1975 = vadd.f32 %v1956, %v1974
        %s1976 = sld [smem:[#allocation2 + $0xe9]]
        %v1977 = vstv %s1976
        %v1978 = vmul.f32 %v1977, %v1967
        %v1979 = vadd.f32 %v1964, %v1978
        %s1980 = sld [smem:[#allocation2 + $0xea]]
        %v1981 = vstv %s1980
        %v1982 = vmul.f32 %v1981, %v1967
        %1984 = vrot.lane.b32.xlu0 %v1982, 127
        %v1985 = vpop.permute.xlu0 %1984
        %v1987 = vadd.f32 %v1971, %v1985
        %s1988 = sld [smem:[#allocation2 + $0xeb]]
        %v1989 = vstv %s1988
        %v1990 = vmul.f32 %v1989, %v1967
        %1992 = vrot.lane.b32.xlu0 %v1990, 127
        %v1993 = vpop.permute.xlu0 %1992
        %v1995 = vadd.f32 %v1975, %v1993
        %s1996 = sld [smem:[#allocation2 + $0xec]]
        %v1997 = vstv %s1996
        %v1998 = vmul.f32 %v1997, %v1967
        %2000 = vrot.lane.b32.xlu0 %v1998, 127
        %v2001 = vpop.permute.xlu0 %2000
        %v2003 = vadd.f32 %v1979, %v2001
        %s2004 = sld [smem:[#allocation2 + $0xed]]
        %v2005 = vstv %s2004
        %v2006 = vmul.f32 %v2005, %v1967
        %2008 = vrot.lane.b32.xlu0 %v2006, 126
        %v2009 = vpop.permute.xlu0 %2008
        %v2011 = vadd.f32 %v1987, %v2009
        %s2012 = sld [smem:[#allocation2 + $0xee]]
        %v2013 = vstv %s2012
        %v2014 = vmul.f32 %v2013, %v1967
        %2016 = vrot.lane.b32.xlu0 %v2014, 126
        %v2017 = vpop.permute.xlu0 %2016
        %v2019 = vadd.f32 %v1995, %v2017
        %s2020 = sld [smem:[#allocation2 + $0xef]]
        %v2021 = vstv %s2020
        %v2022 = vmul.f32 %v2021, %v1967
        %2024 = vrot.lane.b32.xlu0 %v2022, 126
        %v2025 = vpop.permute.xlu0 %2024
        %v2027 = vadd.f32 %v2003, %v2025
        %s2028 = sld [smem:[#allocation2 + $0xf0]]
        %v2029 = vstv %s2028
        %v2030 = vmul.f32 %v2029, %v1967
        %2032 = vrot.lane.b32.xlu0 %v2030, 125
        %v2033 = vpop.permute.xlu0 %2032
        %v2035 = vadd.f32 %v2011, %v2033
        %s2036 = sld [smem:[#allocation2 + $0xf1]]
        %v2037 = vstv %s2036
        %v2038 = vmul.f32 %v2037, %v1967
        %2040 = vrot.lane.b32.xlu0 %v2038, 125
        %v2041 = vpop.permute.xlu0 %2040
        %v2043 = vadd.f32 %v2019, %v2041
        %s2044 = sld [smem:[#allocation2 + $0xf2]]
        %v2045 = vstv %s2044
        %v2046 = vmul.f32 %v2045, %v1967
        %2048 = vrot.lane.b32.xlu0 %v2046, 125
        %v2049 = vpop.permute.xlu0 %2048
        %v2051 = vadd.f32 %v2027, %v2049
        %s2052 = sld [smem:[#allocation2 + $0xf3]]
        %v2053 = vstv %s2052
        %v2054 = vmul.f32 %v2053, %v1967
        %2056 = vrot.lane.b32.xlu0 %v2054, 124
        %v2057 = vpop.permute.xlu0 %2056
        %v2059 = vadd.f32 %v2035, %v2057
        %s2060 = sld [smem:[#allocation2 + $0xf4]]
        %v2061 = vstv %s2060
        %v2062 = vmul.f32 %v2061, %v1967
        %2064 = vrot.lane.b32.xlu0 %v2062, 124
        %v2065 = vpop.permute.xlu0 %2064
        %v2067 = vadd.f32 %v2043, %v2065
        %s2068 = sld [smem:[#allocation2 + $0xf5]]
        %v2069 = vstv %s2068
        %v2070 = vmul.f32 %v2069, %v1967
        %2072 = vrot.lane.b32.xlu0 %v2070, 124
        %v2073 = vpop.permute.xlu0 %2072
        %v2075 = vadd.f32 %v2051, %v2073
        %s2076 = sld [smem:[#allocation2 + $0xf6]]
        %v2077 = vstv %s2076
        %v2078 = vmul.f32 %v2077, %v1967
        %2080 = vrot.lane.b32.xlu0 %v2078, 123
        %v2081 = vpop.permute.xlu0 %2080
        %v2083 = vadd.f32 %v2059, %v2081
        %s2084 = sld [smem:[#allocation2 + $0xf7]]
        %v2085 = vstv %s2084
        %v2086 = vmul.f32 %v2085, %v1967
        %2088 = vrot.lane.b32.xlu0 %v2086, 123
        %v2089 = vpop.permute.xlu0 %2088
        %v2091 = vadd.f32 %v2067, %v2089
        %s2092 = sld [smem:[#allocation2 + $0xf8]]
        %v2093 = vstv %s2092
        %v2094 = vmul.f32 %v2093, %v1967
        %2096 = vrot.lane.b32.xlu0 %v2094, 123
        %v2097 = vpop.permute.xlu0 %2096
        %v2099 = vadd.f32 %v2075, %v2097
        %s2100 = sld [smem:[#allocation2 + $0xf9]]
        %v2101 = vstv %s2100
        %v2102 = vmul.f32 %v2101, %v1967
        %2104 = vrot.lane.b32.xlu0 %v2102, 122
        %v2105 = vpop.permute.xlu0 %2104
        %v2107 = vadd.f32 %v2083, %v2105
        %s2108 = sld [smem:[#allocation2 + $0xfa]]
        %v2109 = vstv %s2108
        %v2110 = vmul.f32 %v2109, %v1967
        %2112 = vrot.lane.b32.xlu0 %v2110, 122
        %v2113 = vpop.permute.xlu0 %2112
        %v2115 = vadd.f32 %v2091, %v2113
        %s2116 = sld [smem:[#allocation2 + $0xfb]]
        %v2117 = vstv %s2116
        %v2118 = vmul.f32 %v2117, %v1967
        %2120 = vrot.lane.b32.xlu0 %v2118, 122
        %v2121 = vpop.permute.xlu0 %2120
        %v2123 = vadd.f32 %v2099, %v2121
        %s2124 = sadd.s32 %s1011, 24
        %s2125 = scalar_lea.vmem %s209, %s2124
        %v2126 = vld [vmem:[%s2125] sm:$0xff]
        %s2127 = sld [smem:[#allocation2 + $0xfc]]
        %v2128 = vstv %s2127
        %v2129 = vmul.f32 %v2128, %v2126
        %v2130 = vadd.f32 %v2107, %v2129
        %s2131 = sld [smem:[#allocation2 + $0xfd]]
        %v2132 = vstv %s2131
        %v2133 = vmul.f32 %v2132, %v2126
        %v2134 = vadd.f32 %v2115, %v2133
        %s2135 = sld [smem:[#allocation2 + $0xfe]]
        %v2136 = vstv %s2135
        %v2137 = vmul.f32 %v2136, %v2126
        %v2138 = vadd.f32 %v2123, %v2137
        %s2139 = sld [smem:[#allocation2 + $0xff]]
        %v2140 = vstv %s2139
        %v2141 = vmul.f32 %v2140, %v2126
        %2143 = vrot.lane.b32.xlu0 %v2141, 127
        %v2144 = vpop.permute.xlu0 %2143
        %v2146 = vadd.f32 %v2130, %v2144
        %s2147 = sld [smem:[#allocation2 + $0x100]]
        %v2148 = vstv %s2147
        %v2149 = vmul.f32 %v2148, %v2126
        %2151 = vrot.lane.b32.xlu0 %v2149, 127
        %v2152 = vpop.permute.xlu0 %2151
        %v2154 = vadd.f32 %v2134, %v2152
        %s2155 = sld [smem:[#allocation2 + $0x101]]
        %v2156 = vstv %s2155
        %v2157 = vmul.f32 %v2156, %v2126
        %2159 = vrot.lane.b32.xlu0 %v2157, 127
        %v2160 = vpop.permute.xlu0 %2159
        %v2162 = vadd.f32 %v2138, %v2160
        %s2163 = sld [smem:[#allocation2 + $0x102]]
        %v2164 = vstv %s2163
        %v2165 = vmul.f32 %v2164, %v2126
        %2167 = vrot.lane.b32.xlu0 %v2165, 126
        %v2168 = vpop.permute.xlu0 %2167
        %v2170 = vadd.f32 %v2146, %v2168
        %s2171 = sld [smem:[#allocation2 + $0x103]]
        %v2172 = vstv %s2171
        %v2173 = vmul.f32 %v2172, %v2126
        %2175 = vrot.lane.b32.xlu0 %v2173, 126
        %v2176 = vpop.permute.xlu0 %2175
        %v2178 = vadd.f32 %v2154, %v2176
        %s2179 = sld [smem:[#allocation2 + $0x104]]
        %v2180 = vstv %s2179
        %v2181 = vmul.f32 %v2180, %v2126
        %2183 = vrot.lane.b32.xlu0 %v2181, 126
        %v2184 = vpop.permute.xlu0 %2183
        %v2186 = vadd.f32 %v2162, %v2184
        %s2187 = sld [smem:[#allocation2 + $0x105]]
        %v2188 = vstv %s2187
        %v2189 = vmul.f32 %v2188, %v2126
        %2191 = vrot.lane.b32.xlu0 %v2189, 125
        %v2192 = vpop.permute.xlu0 %2191
        %v2194 = vadd.f32 %v2170, %v2192
        %s2195 = sld [smem:[#allocation2 + $0x106]]
        %v2196 = vstv %s2195
        %v2197 = vmul.f32 %v2196, %v2126
        %2199 = vrot.lane.b32.xlu0 %v2197, 125
        %v2200 = vpop.permute.xlu0 %2199
        %v2202 = vadd.f32 %v2178, %v2200
        %s2203 = sld [smem:[#allocation2 + $0x107]]
        %v2204 = vstv %s2203
        %v2205 = vmul.f32 %v2204, %v2126
        %2207 = vrot.lane.b32.xlu0 %v2205, 125
        %v2208 = vpop.permute.xlu0 %2207
        %v2210 = vadd.f32 %v2186, %v2208
        %s2211 = sld [smem:[#allocation2 + $0x108]]
        %v2212 = vstv %s2211
        %v2213 = vmul.f32 %v2212, %v2126
        %2215 = vrot.lane.b32.xlu0 %v2213, 124
        %v2216 = vpop.permute.xlu0 %2215
        %v2218 = vadd.f32 %v2194, %v2216
        %s2219 = sld [smem:[#allocation2 + $0x109]]
        %v2220 = vstv %s2219
        %v2221 = vmul.f32 %v2220, %v2126
        %2223 = vrot.lane.b32.xlu0 %v2221, 124
        %v2224 = vpop.permute.xlu0 %2223
        %v2226 = vadd.f32 %v2202, %v2224
        %s2227 = sld [smem:[#allocation2 + $0x10a]]
        %v2228 = vstv %s2227
        %v2229 = vmul.f32 %v2228, %v2126
        %2231 = vrot.lane.b32.xlu0 %v2229, 124
        %v2232 = vpop.permute.xlu0 %2231
        %v2234 = vadd.f32 %v2210, %v2232
        %s2235 = sld [smem:[#allocation2 + $0x10b]]
        %v2236 = vstv %s2235
        %v2237 = vmul.f32 %v2236, %v2126
        %2239 = vrot.lane.b32.xlu0 %v2237, 123
        %v2240 = vpop.permute.xlu0 %2239
        %v2242 = vadd.f32 %v2218, %v2240
        %s2243 = sld [smem:[#allocation2 + $0x10c]]
        %v2244 = vstv %s2243
        %v2245 = vmul.f32 %v2244, %v2126
        %2247 = vrot.lane.b32.xlu0 %v2245, 123
        %v2248 = vpop.permute.xlu0 %2247
        %v2250 = vadd.f32 %v2226, %v2248
        %s2251 = sld [smem:[#allocation2 + $0x10d]]
        %v2252 = vstv %s2251
        %v2253 = vmul.f32 %v2252, %v2126
        %2255 = vrot.lane.b32.xlu0 %v2253, 123
        %v2256 = vpop.permute.xlu0 %2255
        %v2258 = vadd.f32 %v2234, %v2256
        %s2259 = sld [smem:[#allocation2 + $0x10e]]
        %v2260 = vstv %s2259
        %v2261 = vmul.f32 %v2260, %v2126
        %2263 = vrot.lane.b32.xlu0 %v2261, 122
        %v2264 = vpop.permute.xlu0 %2263
        %v2266 = vadd.f32 %v2242, %v2264
        %s2267 = sld [smem:[#allocation2 + $0x10f]]
        %v2268 = vstv %s2267
        %v2269 = vmul.f32 %v2268, %v2126
        %2271 = vrot.lane.b32.xlu0 %v2269, 122
        %v2272 = vpop.permute.xlu0 %2271
        %v2274 = vadd.f32 %v2250, %v2272
        %s2275 = sld [smem:[#allocation2 + $0x110]]
        %v2276 = vstv %s2275
        %v2277 = vmul.f32 %v2276, %v2126
        %2279 = vrot.lane.b32.xlu0 %v2277, 122
        %v2280 = vpop.permute.xlu0 %2279
        %v2282 = vadd.f32 %v2258, %v2280
        %s2283 = sadd.s32 %s1170, 24
        %s2284 = scalar_lea.vmem %s209, %s2283
        %v2285 = vld [vmem:[%s2284] sm:$0xff]
        %s2286 = sld [smem:[#allocation2 + $0x111]]
        %v2287 = vstv %s2286
        %v2288 = vmul.f32 %v2287, %v2285
        %v2289 = vadd.f32 %v2266, %v2288
        %s2290 = sld [smem:[#allocation2 + $0x112]]
        %v2291 = vstv %s2290
        %v2292 = vmul.f32 %v2291, %v2285
        %v2293 = vadd.f32 %v2274, %v2292
        %s2294 = sld [smem:[#allocation2 + $0x113]]
        %v2295 = vstv %s2294
        %v2296 = vmul.f32 %v2295, %v2285
        %v2297 = vadd.f32 %v2282, %v2296
        %s2298 = sld [smem:[#allocation2 + $0x114]]
        %v2299 = vstv %s2298
        %v2300 = vmul.f32 %v2299, %v2285
        %2302 = vrot.lane.b32.xlu0 %v2300, 127
        %v2303 = vpop.permute.xlu0 %2302
        %v2305 = vadd.f32 %v2289, %v2303
        %s2306 = sld [smem:[#allocation2 + $0x115]]
        %v2307 = vstv %s2306
        %v2308 = vmul.f32 %v2307, %v2285
        %2310 = vrot.lane.b32.xlu0 %v2308, 127
        %v2311 = vpop.permute.xlu0 %2310
        %v2313 = vadd.f32 %v2293, %v2311
        %s2314 = sld [smem:[#allocation2 + $0x116]]
        %v2315 = vstv %s2314
        %v2316 = vmul.f32 %v2315, %v2285
        %2318 = vrot.lane.b32.xlu0 %v2316, 127
        %v2319 = vpop.permute.xlu0 %2318
        %v2321 = vadd.f32 %v2297, %v2319
        %s2322 = sld [smem:[#allocation2 + $0x117]]
        %v2323 = vstv %s2322
        %v2324 = vmul.f32 %v2323, %v2285
        %2326 = vrot.lane.b32.xlu0 %v2324, 126
        %v2327 = vpop.permute.xlu0 %2326
        %v2329 = vadd.f32 %v2305, %v2327
        %s2330 = sld [smem:[#allocation2 + $0x118]]
        %v2331 = vstv %s2330
        %v2332 = vmul.f32 %v2331, %v2285
        %2334 = vrot.lane.b32.xlu0 %v2332, 126
        %v2335 = vpop.permute.xlu0 %2334
        %v2337 = vadd.f32 %v2313, %v2335
        %s2338 = sld [smem:[#allocation2 + $0x119]]
        %v2339 = vstv %s2338
        %v2340 = vmul.f32 %v2339, %v2285
        %2342 = vrot.lane.b32.xlu0 %v2340, 126
        %v2343 = vpop.permute.xlu0 %2342
        %v2345 = vadd.f32 %v2321, %v2343
        %s2346 = sld [smem:[#allocation2 + $0x11a]]
        %v2347 = vstv %s2346
        %v2348 = vmul.f32 %v2347, %v2285
        %2350 = vrot.lane.b32.xlu0 %v2348, 125
        %v2351 = vpop.permute.xlu0 %2350
        %v2353 = vadd.f32 %v2329, %v2351
        %s2354 = sld [smem:[#allocation2 + $0x11b]]
        %v2355 = vstv %s2354
        %v2356 = vmul.f32 %v2355, %v2285
        %2358 = vrot.lane.b32.xlu0 %v2356, 125
        %v2359 = vpop.permute.xlu0 %2358
        %v2361 = vadd.f32 %v2337, %v2359
        %s2362 = sld [smem:[#allocation2 + $0x11c]]
        %v2363 = vstv %s2362
        %v2364 = vmul.f32 %v2363, %v2285
        %2366 = vrot.lane.b32.xlu0 %v2364, 125
        %v2367 = vpop.permute.xlu0 %2366
        %v2369 = vadd.f32 %v2345, %v2367
        %s2370 = sld [smem:[#allocation2 + $0x11d]]
        %v2371 = vstv %s2370
        %v2372 = vmul.f32 %v2371, %v2285
        %2374 = vrot.lane.b32.xlu0 %v2372, 124
        %v2375 = vpop.permute.xlu0 %2374
        %v2377 = vadd.f32 %v2353, %v2375
        %s2378 = sld [smem:[#allocation2 + $0x11e]]
        %v2379 = vstv %s2378
        %v2380 = vmul.f32 %v2379, %v2285
        %2382 = vrot.lane.b32.xlu0 %v2380, 124
        %v2383 = vpop.permute.xlu0 %2382
        %v2385 = vadd.f32 %v2361, %v2383
        %s2386 = sld [smem:[#allocation2 + $0x11f]]
        %v2387 = vstv %s2386
        %v2388 = vmul.f32 %v2387, %v2285
        %2390 = vrot.lane.b32.xlu0 %v2388, 124
        %v2391 = vpop.permute.xlu0 %2390
        %v2393 = vadd.f32 %v2369, %v2391
        %s2394 = sld [smem:[#allocation2 + $0x120]]
        %v2395 = vstv %s2394
        %v2396 = vmul.f32 %v2395, %v2285
        %2398 = vrot.lane.b32.xlu0 %v2396, 123
        %v2399 = vpop.permute.xlu0 %2398
        %v2401 = vadd.f32 %v2377, %v2399
        %s2402 = sld [smem:[#allocation2 + $0x121]]
        %v2403 = vstv %s2402
        %v2404 = vmul.f32 %v2403, %v2285
        %2406 = vrot.lane.b32.xlu0 %v2404, 123
        %v2407 = vpop.permute.xlu0 %2406
        %v2409 = vadd.f32 %v2385, %v2407
        %s2410 = sld [smem:[#allocation2 + $0x122]]
        %v2411 = vstv %s2410
        %v2412 = vmul.f32 %v2411, %v2285
        %2414 = vrot.lane.b32.xlu0 %v2412, 123
        %v2415 = vpop.permute.xlu0 %2414
        %v2417 = vadd.f32 %v2393, %v2415
        %s2418 = sld [smem:[#allocation2 + $0x123]]
        %v2419 = vstv %s2418
        %v2420 = vmul.f32 %v2419, %v2285
        %2422 = vrot.lane.b32.xlu0 %v2420, 122
        %v2423 = vpop.permute.xlu0 %2422
        %v2425 = vadd.f32 %v2401, %v2423
        %s2426 = sld [smem:[#allocation2 + $0x124]]
        %v2427 = vstv %s2426
        %v2428 = vmul.f32 %v2427, %v2285
        %2430 = vrot.lane.b32.xlu0 %v2428, 122
        %v2431 = vpop.permute.xlu0 %2430
        %v2433 = vadd.f32 %v2409, %v2431
        %s2434 = sld [smem:[#allocation2 + $0x125]]
        %v2435 = vstv %s2434
        %v2436 = vmul.f32 %v2435, %v2285
        %2438 = vrot.lane.b32.xlu0 %v2436, 122
        %v2439 = vpop.permute.xlu0 %2438
        %v2441 = vadd.f32 %v2417, %v2439
        %s2442 = sadd.s32 %s210, 48
        %s2443 = scalar_lea.vmem %s209, %s2442
        %v2444 = vld [vmem:[%s2443] sm:$0xff]
        %s2445 = sld [smem:[#allocation2 + $0x126]]
        %v2446 = vstv %s2445
        %v2447 = vmul.f32 %v2446, %v2444
        %v2448 = vadd.f32 %v2425, %v2447
        %s2449 = sld [smem:[#allocation2 + $0x127]]
        %v2450 = vstv %s2449
        %v2451 = vmul.f32 %v2450, %v2444
        %v2452 = vadd.f32 %v2433, %v2451
        %s2453 = sld [smem:[#allocation2 + $0x128]]
        %v2454 = vstv %s2453
        %v2455 = vmul.f32 %v2454, %v2444
        %v2456 = vadd.f32 %v2441, %v2455
        %s2457 = sld [smem:[#allocation2 + $0x129]]
        %v2458 = vstv %s2457
        %v2459 = vmul.f32 %v2458, %v2444
        %2461 = vrot.lane.b32.xlu0 %v2459, 127
        %v2462 = vpop.permute.xlu0 %2461
        %v2464 = vadd.f32 %v2448, %v2462
        %s2465 = sld [smem:[#allocation2 + $0x12a]]
        %v2466 = vstv %s2465
        %v2467 = vmul.f32 %v2466, %v2444
        %2469 = vrot.lane.b32.xlu0 %v2467, 127
        %v2470 = vpop.permute.xlu0 %2469
        %v2472 = vadd.f32 %v2452, %v2470
        %s2473 = sld [smem:[#allocation2 + $0x12b]]
        %v2474 = vstv %s2473
        %v2475 = vmul.f32 %v2474, %v2444
        %2477 = vrot.lane.b32.xlu0 %v2475, 127
        %v2478 = vpop.permute.xlu0 %2477
        %v2480 = vadd.f32 %v2456, %v2478
        %s2481 = sld [smem:[#allocation2 + $0x12c]]
        %v2482 = vstv %s2481
        %v2483 = vmul.f32 %v2482, %v2444
        %2485 = vrot.lane.b32.xlu0 %v2483, 126
        %v2486 = vpop.permute.xlu0 %2485
        %v2488 = vadd.f32 %v2464, %v2486
        %s2489 = sld [smem:[#allocation2 + $0x12d]]
        %v2490 = vstv %s2489
        %v2491 = vmul.f32 %v2490, %v2444
        %2493 = vrot.lane.b32.xlu0 %v2491, 126
        %v2494 = vpop.permute.xlu0 %2493
        %v2496 = vadd.f32 %v2472, %v2494
        %s2497 = sld [smem:[#allocation2 + $0x12e]]
        %v2498 = vstv %s2497
        %v2499 = vmul.f32 %v2498, %v2444
        %2501 = vrot.lane.b32.xlu0 %v2499, 126
        %v2502 = vpop.permute.xlu0 %2501
        %v2504 = vadd.f32 %v2480, %v2502
        %s2505 = sld [smem:[#allocation2 + $0x12f]]
        %v2506 = vstv %s2505
        %v2507 = vmul.f32 %v2506, %v2444
        %2509 = vrot.lane.b32.xlu0 %v2507, 125
        %v2510 = vpop.permute.xlu0 %2509
        %v2512 = vadd.f32 %v2488, %v2510
        %s2513 = sld [smem:[#allocation2 + $0x130]]
        %v2514 = vstv %s2513
        %v2515 = vmul.f32 %v2514, %v2444
        %2517 = vrot.lane.b32.xlu0 %v2515, 125
        %v2518 = vpop.permute.xlu0 %2517
        %v2520 = vadd.f32 %v2496, %v2518
        %s2521 = sld [smem:[#allocation2 + $0x131]]
        %v2522 = vstv %s2521
        %v2523 = vmul.f32 %v2522, %v2444
        %2525 = vrot.lane.b32.xlu0 %v2523, 125
        %v2526 = vpop.permute.xlu0 %2525
        %v2528 = vadd.f32 %v2504, %v2526
        %s2529 = sld [smem:[#allocation2 + $0x132]]
        %v2530 = vstv %s2529
        %v2531 = vmul.f32 %v2530, %v2444
        %2533 = vrot.lane.b32.xlu0 %v2531, 124
        %v2534 = vpop.permute.xlu0 %2533
        %v2536 = vadd.f32 %v2512, %v2534
        %s2537 = sld [smem:[#allocation2 + $0x133]]
        %v2538 = vstv %s2537
        %v2539 = vmul.f32 %v2538, %v2444
        %2541 = vrot.lane.b32.xlu0 %v2539, 124
        %v2542 = vpop.permute.xlu0 %2541
        %v2544 = vadd.f32 %v2520, %v2542
        %s2545 = sld [smem:[#allocation2 + $0x134]]
        %v2546 = vstv %s2545
        %v2547 = vmul.f32 %v2546, %v2444
        %2549 = vrot.lane.b32.xlu0 %v2547, 124
        %v2550 = vpop.permute.xlu0 %2549
        %v2552 = vadd.f32 %v2528, %v2550
        %s2553 = sld [smem:[#allocation2 + $0x135]]
        %v2554 = vstv %s2553
        %v2555 = vmul.f32 %v2554, %v2444
        %2557 = vrot.lane.b32.xlu0 %v2555, 123
        %v2558 = vpop.permute.xlu0 %2557
        %v2560 = vadd.f32 %v2536, %v2558
        %s2561 = sld [smem:[#allocation2 + $0x136]]
        %v2562 = vstv %s2561
        %v2563 = vmul.f32 %v2562, %v2444
        %2565 = vrot.lane.b32.xlu0 %v2563, 123
        %v2566 = vpop.permute.xlu0 %2565
        %v2568 = vadd.f32 %v2544, %v2566
        %s2569 = sld [smem:[#allocation2 + $0x137]]
        %v2570 = vstv %s2569
        %v2571 = vmul.f32 %v2570, %v2444
        %2573 = vrot.lane.b32.xlu0 %v2571, 123
        %v2574 = vpop.permute.xlu0 %2573
        %v2576 = vadd.f32 %v2552, %v2574
        %s2577 = sld [smem:[#allocation2 + $0x138]]
        %v2578 = vstv %s2577
        %v2579 = vmul.f32 %v2578, %v2444
        %2581 = vrot.lane.b32.xlu0 %v2579, 122
        %v2582 = vpop.permute.xlu0 %2581
        %v2584 = vadd.f32 %v2560, %v2582
        %s2585 = sld [smem:[#allocation2 + $0x139]]
        %v2586 = vstv %s2585
        %v2587 = vmul.f32 %v2586, %v2444
        %2589 = vrot.lane.b32.xlu0 %v2587, 122
        %v2590 = vpop.permute.xlu0 %2589
        %v2592 = vadd.f32 %v2568, %v2590
        %s2593 = sld [smem:[#allocation2 + $0x13a]]
        %v2594 = vstv %s2593
        %v2595 = vmul.f32 %v2594, %v2444
        %2597 = vrot.lane.b32.xlu0 %v2595, 122
        %v2598 = vpop.permute.xlu0 %2597
        %v2600 = vadd.f32 %v2576, %v2598
        %s2601 = sadd.s32 %s375, 48
        %s2602 = scalar_lea.vmem %s209, %s2601
        %v2603 = vld [vmem:[%s2602] sm:$0xff]
        %s2604 = sld [smem:[#allocation2 + $0x13b]]
        %v2605 = vstv %s2604
        %v2606 = vmul.f32 %v2605, %v2603
        %v2607 = vadd.f32 %v2584, %v2606
        %s2608 = sld [smem:[#allocation2 + $0x13c]]
        %v2609 = vstv %s2608
        %v2610 = vmul.f32 %v2609, %v2603
        %v2611 = vadd.f32 %v2592, %v2610
        %s2612 = sld [smem:[#allocation2 + $0x13d]]
        %v2613 = vstv %s2612
        %v2614 = vmul.f32 %v2613, %v2603
        %v2615 = vadd.f32 %v2600, %v2614
        %s2616 = sld [smem:[#allocation2 + $0x13e]]
        %v2617 = vstv %s2616
        %v2618 = vmul.f32 %v2617, %v2603
        %2620 = vrot.lane.b32.xlu0 %v2618, 127
        %v2621 = vpop.permute.xlu0 %2620
        %v2623 = vadd.f32 %v2607, %v2621
        %s2624 = sld [smem:[#allocation2 + $0x13f]]
        %v2625 = vstv %s2624
        %v2626 = vmul.f32 %v2625, %v2603
        %2628 = vrot.lane.b32.xlu0 %v2626, 127
        %v2629 = vpop.permute.xlu0 %2628
        %v2631 = vadd.f32 %v2611, %v2629
        %s2632 = sld [smem:[#allocation2 + $0x140]]
        %v2633 = vstv %s2632
        %v2634 = vmul.f32 %v2633, %v2603
        %2636 = vrot.lane.b32.xlu0 %v2634, 127
        %v2637 = vpop.permute.xlu0 %2636
        %v2639 = vadd.f32 %v2615, %v2637
        %s2640 = sld [smem:[#allocation2 + $0x141]]
        %v2641 = vstv %s2640
        %v2642 = vmul.f32 %v2641, %v2603
        %2644 = vrot.lane.b32.xlu0 %v2642, 126
        %v2645 = vpop.permute.xlu0 %2644
        %v2647 = vadd.f32 %v2623, %v2645
        %s2648 = sld [smem:[#allocation2 + $0x142]]
        %v2649 = vstv %s2648
        %v2650 = vmul.f32 %v2649, %v2603
        %2652 = vrot.lane.b32.xlu0 %v2650, 126
        %v2653 = vpop.permute.xlu0 %2652
        %v2655 = vadd.f32 %v2631, %v2653
        %s2656 = sld [smem:[#allocation2 + $0x143]]
        %v2657 = vstv %s2656
        %v2658 = vmul.f32 %v2657, %v2603
        %2660 = vrot.lane.b32.xlu0 %v2658, 126
        %v2661 = vpop.permute.xlu0 %2660
        %v2663 = vadd.f32 %v2639, %v2661
        %s2664 = sld [smem:[#allocation2 + $0x144]]
        %v2665 = vstv %s2664
        %v2666 = vmul.f32 %v2665, %v2603
        %2668 = vrot.lane.b32.xlu0 %v2666, 125
        %v2669 = vpop.permute.xlu0 %2668
        %v2671 = vadd.f32 %v2647, %v2669
        %s2672 = sld [smem:[#allocation2 + $0x145]]
        %v2673 = vstv %s2672
        %v2674 = vmul.f32 %v2673, %v2603
        %2676 = vrot.lane.b32.xlu0 %v2674, 125
        %v2677 = vpop.permute.xlu0 %2676
        %v2679 = vadd.f32 %v2655, %v2677
        %s2680 = sld [smem:[#allocation2 + $0x146]]
        %v2681 = vstv %s2680
        %v2682 = vmul.f32 %v2681, %v2603
        %2684 = vrot.lane.b32.xlu0 %v2682, 125
        %v2685 = vpop.permute.xlu0 %2684
        %v2687 = vadd.f32 %v2663, %v2685
        %s2688 = sld [smem:[#allocation2 + $0x147]]
        %v2689 = vstv %s2688
        %v2690 = vmul.f32 %v2689, %v2603
        %2692 = vrot.lane.b32.xlu0 %v2690, 124
        %v2693 = vpop.permute.xlu0 %2692
        %v2695 = vadd.f32 %v2671, %v2693
        %s2696 = sld [smem:[#allocation2 + $0x148]]
        %v2697 = vstv %s2696
        %v2698 = vmul.f32 %v2697, %v2603
        %2700 = vrot.lane.b32.xlu0 %v2698, 124
        %v2701 = vpop.permute.xlu0 %2700
        %v2703 = vadd.f32 %v2679, %v2701
        %s2704 = sld [smem:[#allocation2 + $0x149]]
        %v2705 = vstv %s2704
        %v2706 = vmul.f32 %v2705, %v2603
        %2708 = vrot.lane.b32.xlu0 %v2706, 124
        %v2709 = vpop.permute.xlu0 %2708
        %v2711 = vadd.f32 %v2687, %v2709
        %s2712 = sld [smem:[#allocation2 + $0x14a]]
        %v2713 = vstv %s2712
        %v2714 = vmul.f32 %v2713, %v2603
        %2716 = vrot.lane.b32.xlu0 %v2714, 123
        %v2717 = vpop.permute.xlu0 %2716
        %v2719 = vadd.f32 %v2695, %v2717
        %s2720 = sld [smem:[#allocation2 + $0x14b]]
        %v2721 = vstv %s2720
        %v2722 = vmul.f32 %v2721, %v2603
        %2724 = vrot.lane.b32.xlu0 %v2722, 123
        %v2725 = vpop.permute.xlu0 %2724
        %v2727 = vadd.f32 %v2703, %v2725
        %s2728 = sld [smem:[#allocation2 + $0x14c]]
        %v2729 = vstv %s2728
        %v2730 = vmul.f32 %v2729, %v2603
        %2732 = vrot.lane.b32.xlu0 %v2730, 123
        %v2733 = vpop.permute.xlu0 %2732
        %v2735 = vadd.f32 %v2711, %v2733
        %s2736 = sld [smem:[#allocation2 + $0x14d]]
        %v2737 = vstv %s2736
        %v2738 = vmul.f32 %v2737, %v2603
        %2740 = vrot.lane.b32.xlu0 %v2738, 122
        %v2741 = vpop.permute.xlu0 %2740
        %v2743 = vadd.f32 %v2719, %v2741
        %s2744 = sld [smem:[#allocation2 + $0x14e]]
        %v2745 = vstv %s2744
        %v2746 = vmul.f32 %v2745, %v2603
        %2748 = vrot.lane.b32.xlu0 %v2746, 122
        %v2749 = vpop.permute.xlu0 %2748
        %v2751 = vadd.f32 %v2727, %v2749
        %s2752 = sld [smem:[#allocation2 + $0x14f]]
        %v2753 = vstv %s2752
        %v2754 = vmul.f32 %v2753, %v2603
        %2756 = vrot.lane.b32.xlu0 %v2754, 122
        %v2757 = vpop.permute.xlu0 %2756
        %v2759 = vadd.f32 %v2735, %v2757
        %s2760 = sadd.s32 %s534, 48
        %s2761 = scalar_lea.vmem %s209, %s2760
        %v2762 = vld [vmem:[%s2761] sm:$0xff]
        %s2763 = sld [smem:[#allocation2 + $0x150]]
        %v2764 = vstv %s2763
        %v2765 = vmul.f32 %v2764, %v2762
        %v2766 = vadd.f32 %v2743, %v2765
        %s2767 = sld [smem:[#allocation2 + $0x151]]
        %v2768 = vstv %s2767
        %v2769 = vmul.f32 %v2768, %v2762
        %v2770 = vadd.f32 %v2751, %v2769
        %s2771 = sld [smem:[#allocation2 + $0x152]]
        %v2772 = vstv %s2771
        %v2773 = vmul.f32 %v2772, %v2762
        %v2774 = vadd.f32 %v2759, %v2773
        %s2775 = sld [smem:[#allocation2 + $0x153]]
        %v2776 = vstv %s2775
        %v2777 = vmul.f32 %v2776, %v2762
        %2779 = vrot.lane.b32.xlu0 %v2777, 127
        %v2780 = vpop.permute.xlu0 %2779
        %v2782 = vadd.f32 %v2766, %v2780
        %s2783 = sld [smem:[#allocation2 + $0x154]]
        %v2784 = vstv %s2783
        %v2785 = vmul.f32 %v2784, %v2762
        %2787 = vrot.lane.b32.xlu0 %v2785, 127
        %v2788 = vpop.permute.xlu0 %2787
        %v2790 = vadd.f32 %v2770, %v2788
        %s2791 = sld [smem:[#allocation2 + $0x155]]
        %v2792 = vstv %s2791
        %v2793 = vmul.f32 %v2792, %v2762
        %2795 = vrot.lane.b32.xlu0 %v2793, 127
        %v2796 = vpop.permute.xlu0 %2795
        %v2798 = vadd.f32 %v2774, %v2796
        %s2799 = sld [smem:[#allocation2 + $0x156]]
        %v2800 = vstv %s2799
        %v2801 = vmul.f32 %v2800, %v2762
        %2803 = vrot.lane.b32.xlu0 %v2801, 126
        %v2804 = vpop.permute.xlu0 %2803
        %v2806 = vadd.f32 %v2782, %v2804
        %s2807 = sld [smem:[#allocation2 + $0x157]]
        %v2808 = vstv %s2807
        %v2809 = vmul.f32 %v2808, %v2762
        %2811 = vrot.lane.b32.xlu0 %v2809, 126
        %v2812 = vpop.permute.xlu0 %2811
        %v2814 = vadd.f32 %v2790, %v2812
        %s2815 = sld [smem:[#allocation2 + $0x158]]
        %v2816 = vstv %s2815
        %v2817 = vmul.f32 %v2816, %v2762
        %2819 = vrot.lane.b32.xlu0 %v2817, 126
        %v2820 = vpop.permute.xlu0 %2819
        %v2822 = vadd.f32 %v2798, %v2820
        %s2823 = sld [smem:[#allocation2 + $0x159]]
        %v2824 = vstv %s2823
        %v2825 = vmul.f32 %v2824, %v2762
        %2827 = vrot.lane.b32.xlu0 %v2825, 125
        %v2828 = vpop.permute.xlu0 %2827
        %v2830 = vadd.f32 %v2806, %v2828
        %s2831 = sld [smem:[#allocation2 + $0x15a]]
        %v2832 = vstv %s2831
        %v2833 = vmul.f32 %v2832, %v2762
        %2835 = vrot.lane.b32.xlu0 %v2833, 125
        %v2836 = vpop.permute.xlu0 %2835
        %v2838 = vadd.f32 %v2814, %v2836
        %s2839 = sld [smem:[#allocation2 + $0x15b]]
        %v2840 = vstv %s2839
        %v2841 = vmul.f32 %v2840, %v2762
        %2843 = vrot.lane.b32.xlu0 %v2841, 125
        %v2844 = vpop.permute.xlu0 %2843
        %v2846 = vadd.f32 %v2822, %v2844
        %s2847 = sld [smem:[#allocation2 + $0x15c]]
        %v2848 = vstv %s2847
        %v2849 = vmul.f32 %v2848, %v2762
        %2851 = vrot.lane.b32.xlu0 %v2849, 124
        %v2852 = vpop.permute.xlu0 %2851
        %v2854 = vadd.f32 %v2830, %v2852
        %s2855 = sld [smem:[#allocation2 + $0x15d]]
        %v2856 = vstv %s2855
        %v2857 = vmul.f32 %v2856, %v2762
        %2859 = vrot.lane.b32.xlu0 %v2857, 124
        %v2860 = vpop.permute.xlu0 %2859
        %v2862 = vadd.f32 %v2838, %v2860
        %s2863 = sld [smem:[#allocation2 + $0x15e]]
        %v2864 = vstv %s2863
        %v2865 = vmul.f32 %v2864, %v2762
        %2867 = vrot.lane.b32.xlu0 %v2865, 124
        %v2868 = vpop.permute.xlu0 %2867
        %v2870 = vadd.f32 %v2846, %v2868
        %s2871 = sld [smem:[#allocation2 + $0x15f]]
        %v2872 = vstv %s2871
        %v2873 = vmul.f32 %v2872, %v2762
        %2875 = vrot.lane.b32.xlu0 %v2873, 123
        %v2876 = vpop.permute.xlu0 %2875
        %v2878 = vadd.f32 %v2854, %v2876
        %s2879 = sld [smem:[#allocation2 + $0x160]]
        %v2880 = vstv %s2879
        %v2881 = vmul.f32 %v2880, %v2762
        %2883 = vrot.lane.b32.xlu0 %v2881, 123
        %v2884 = vpop.permute.xlu0 %2883
        %v2886 = vadd.f32 %v2862, %v2884
        %s2887 = sld [smem:[#allocation2 + $0x161]]
        %v2888 = vstv %s2887
        %v2889 = vmul.f32 %v2888, %v2762
        %2891 = vrot.lane.b32.xlu0 %v2889, 123
        %v2892 = vpop.permute.xlu0 %2891
        %v2894 = vadd.f32 %v2870, %v2892
        %s2895 = sld [smem:[#allocation2 + $0x162]]
        %v2896 = vstv %s2895
        %v2897 = vmul.f32 %v2896, %v2762
        %2899 = vrot.lane.b32.xlu0 %v2897, 122
        %v2900 = vpop.permute.xlu0 %2899
        %v2902 = vadd.f32 %v2878, %v2900
        %s2903 = sld [smem:[#allocation2 + $0x163]]
        %v2904 = vstv %s2903
        %v2905 = vmul.f32 %v2904, %v2762
        %2907 = vrot.lane.b32.xlu0 %v2905, 122
        %v2908 = vpop.permute.xlu0 %2907
        %v2910 = vadd.f32 %v2886, %v2908
        %s2911 = sld [smem:[#allocation2 + $0x164]]
        %v2912 = vstv %s2911
        %v2913 = vmul.f32 %v2912, %v2762
        %2915 = vrot.lane.b32.xlu0 %v2913, 122
        %v2916 = vpop.permute.xlu0 %2915
        %v2918 = vadd.f32 %v2894, %v2916
        %s2919 = sadd.s32 %s693, 48
        %s2920 = scalar_lea.vmem %s209, %s2919
        %v2921 = vld [vmem:[%s2920] sm:$0xff]
        %s2922 = sld [smem:[#allocation2 + $0x165]]
        %v2923 = vstv %s2922
        %v2924 = vmul.f32 %v2923, %v2921
        %v2925 = vadd.f32 %v2902, %v2924
        %s2926 = sld [smem:[#allocation2 + $0x166]]
        %v2927 = vstv %s2926
        %v2928 = vmul.f32 %v2927, %v2921
        %v2929 = vadd.f32 %v2910, %v2928
        %s2930 = sld [smem:[#allocation2 + $0x167]]
        %v2931 = vstv %s2930
        %v2932 = vmul.f32 %v2931, %v2921
        %v2933 = vadd.f32 %v2918, %v2932
        %s2934 = sld [smem:[#allocation2 + $0x168]]
        %v2935 = vstv %s2934
        %v2936 = vmul.f32 %v2935, %v2921
        %2938 = vrot.lane.b32.xlu0 %v2936, 127
        %v2939 = vpop.permute.xlu0 %2938
        %v2941 = vadd.f32 %v2925, %v2939
        %s2942 = sld [smem:[#allocation2 + $0x169]]
        %v2943 = vstv %s2942
        %v2944 = vmul.f32 %v2943, %v2921
        %2946 = vrot.lane.b32.xlu0 %v2944, 127
        %v2947 = vpop.permute.xlu0 %2946
        %v2949 = vadd.f32 %v2929, %v2947
        %s2950 = sld [smem:[#allocation2 + $0x16a]]
        %v2951 = vstv %s2950
        %v2952 = vmul.f32 %v2951, %v2921
        %2954 = vrot.lane.b32.xlu0 %v2952, 127
        %v2955 = vpop.permute.xlu0 %2954
        %v2957 = vadd.f32 %v2933, %v2955
        %s2958 = sld [smem:[#allocation2 + $0x16b]]
        %v2959 = vstv %s2958
        %v2960 = vmul.f32 %v2959, %v2921
        %2962 = vrot.lane.b32.xlu0 %v2960, 126
        %v2963 = vpop.permute.xlu0 %2962
        %v2965 = vadd.f32 %v2941, %v2963
        %s2966 = sld [smem:[#allocation2 + $0x16c]]
        %v2967 = vstv %s2966
        %v2968 = vmul.f32 %v2967, %v2921
        %2970 = vrot.lane.b32.xlu0 %v2968, 126
        %v2971 = vpop.permute.xlu0 %2970
        %v2973 = vadd.f32 %v2949, %v2971
        %s2974 = sld [smem:[#allocation2 + $0x16d]]
        %v2975 = vstv %s2974
        %v2976 = vmul.f32 %v2975, %v2921
        %2978 = vrot.lane.b32.xlu0 %v2976, 126
        %v2979 = vpop.permute.xlu0 %2978
        %v2981 = vadd.f32 %v2957, %v2979
        %s2982 = sld [smem:[#allocation2 + $0x16e]]
        %v2983 = vstv %s2982
        %v2984 = vmul.f32 %v2983, %v2921
        %2986 = vrot.lane.b32.xlu0 %v2984, 125
        %v2987 = vpop.permute.xlu0 %2986
        %v2989 = vadd.f32 %v2965, %v2987
        %s2990 = sld [smem:[#allocation2 + $0x16f]]
        %v2991 = vstv %s2990
        %v2992 = vmul.f32 %v2991, %v2921
        %2994 = vrot.lane.b32.xlu0 %v2992, 125
        %v2995 = vpop.permute.xlu0 %2994
        %v2997 = vadd.f32 %v2973, %v2995
        %s2998 = sld [smem:[#allocation2 + $0x170]]
        %v2999 = vstv %s2998
        %v3000 = vmul.f32 %v2999, %v2921
        %3002 = vrot.lane.b32.xlu0 %v3000, 125
        %v3003 = vpop.permute.xlu0 %3002
        %v3005 = vadd.f32 %v2981, %v3003
        %s3006 = sld [smem:[#allocation2 + $0x171]]
        %v3007 = vstv %s3006
        %v3008 = vmul.f32 %v3007, %v2921
        %3010 = vrot.lane.b32.xlu0 %v3008, 124
        %v3011 = vpop.permute.xlu0 %3010
        %v3013 = vadd.f32 %v2989, %v3011
        %s3014 = sld [smem:[#allocation2 + $0x172]]
        %v3015 = vstv %s3014
        %v3016 = vmul.f32 %v3015, %v2921
        %3018 = vrot.lane.b32.xlu0 %v3016, 124
        %v3019 = vpop.permute.xlu0 %3018
        %v3021 = vadd.f32 %v2997, %v3019
        %s3022 = sld [smem:[#allocation2 + $0x173]]
        %v3023 = vstv %s3022
        %v3024 = vmul.f32 %v3023, %v2921
        %3026 = vrot.lane.b32.xlu0 %v3024, 124
        %v3027 = vpop.permute.xlu0 %3026
        %v3029 = vadd.f32 %v3005, %v3027
        %s3030 = sld [smem:[#allocation2 + $0x174]]
        %v3031 = vstv %s3030
        %v3032 = vmul.f32 %v3031, %v2921
        %3034 = vrot.lane.b32.xlu0 %v3032, 123
        %v3035 = vpop.permute.xlu0 %3034
        %v3037 = vadd.f32 %v3013, %v3035
        %s3038 = sld [smem:[#allocation2 + $0x175]]
        %v3039 = vstv %s3038
        %v3040 = vmul.f32 %v3039, %v2921
        %3042 = vrot.lane.b32.xlu0 %v3040, 123
        %v3043 = vpop.permute.xlu0 %3042
        %v3045 = vadd.f32 %v3021, %v3043
        %s3046 = sld [smem:[#allocation2 + $0x176]]
        %v3047 = vstv %s3046
        %v3048 = vmul.f32 %v3047, %v2921
        %3050 = vrot.lane.b32.xlu0 %v3048, 123
        %v3051 = vpop.permute.xlu0 %3050
        %v3053 = vadd.f32 %v3029, %v3051
        %s3054 = sld [smem:[#allocation2 + $0x177]]
        %v3055 = vstv %s3054
        %v3056 = vmul.f32 %v3055, %v2921
        %3058 = vrot.lane.b32.xlu0 %v3056, 122
        %v3059 = vpop.permute.xlu0 %3058
        %v3061 = vadd.f32 %v3037, %v3059
        %s3062 = sld [smem:[#allocation2 + $0x178]]
        %v3063 = vstv %s3062
        %v3064 = vmul.f32 %v3063, %v2921
        %3066 = vrot.lane.b32.xlu0 %v3064, 122
        %v3067 = vpop.permute.xlu0 %3066
        %v3069 = vadd.f32 %v3045, %v3067
        %s3070 = sld [smem:[#allocation2 + $0x179]]
        %v3071 = vstv %s3070
        %v3072 = vmul.f32 %v3071, %v2921
        %3074 = vrot.lane.b32.xlu0 %v3072, 122
        %v3075 = vpop.permute.xlu0 %3074
        %v3077 = vadd.f32 %v3053, %v3075
        %s3078 = sadd.s32 %s852, 48
        %s3079 = scalar_lea.vmem %s209, %s3078
        %v3080 = vld [vmem:[%s3079] sm:$0xff]
        %s3081 = sld [smem:[#allocation2 + $0x17a]]
        %v3082 = vstv %s3081
        %v3083 = vmul.f32 %v3082, %v3080
        %v3084 = vadd.f32 %v3061, %v3083
        %s3085 = sld [smem:[#allocation2 + $0x17b]]
        %v3086 = vstv %s3085
        %v3087 = vmul.f32 %v3086, %v3080
        %v3088 = vadd.f32 %v3069, %v3087
        %s3089 = sld [smem:[#allocation2 + $0x17c]]
        %v3090 = vstv %s3089
        %v3091 = vmul.f32 %v3090, %v3080
        %v3092 = vadd.f32 %v3077, %v3091
        %s3093 = sld [smem:[#allocation2 + $0x17d]]
        %v3094 = vstv %s3093
        %v3095 = vmul.f32 %v3094, %v3080
        %3097 = vrot.lane.b32.xlu0 %v3095, 127
        %v3098 = vpop.permute.xlu0 %3097
        %v3100 = vadd.f32 %v3084, %v3098
        %s3101 = sld [smem:[#allocation2 + $0x17e]]
        %v3102 = vstv %s3101
        %v3103 = vmul.f32 %v3102, %v3080
        %3105 = vrot.lane.b32.xlu0 %v3103, 127
        %v3106 = vpop.permute.xlu0 %3105
        %v3108 = vadd.f32 %v3088, %v3106
        %s3109 = sld [smem:[#allocation2 + $0x17f]]
        %v3110 = vstv %s3109
        %v3111 = vmul.f32 %v3110, %v3080
        %3113 = vrot.lane.b32.xlu0 %v3111, 127
        %v3114 = vpop.permute.xlu0 %3113
        %v3116 = vadd.f32 %v3092, %v3114
        %s3117 = sld [smem:[#allocation2 + $0x180]]
        %v3118 = vstv %s3117
        %v3119 = vmul.f32 %v3118, %v3080
        %3121 = vrot.lane.b32.xlu0 %v3119, 126
        %v3122 = vpop.permute.xlu0 %3121
        %v3124 = vadd.f32 %v3100, %v3122
        %s3125 = sld [smem:[#allocation2 + $0x181]]
        %v3126 = vstv %s3125
        %v3127 = vmul.f32 %v3126, %v3080
        %3129 = vrot.lane.b32.xlu0 %v3127, 126
        %v3130 = vpop.permute.xlu0 %3129
        %v3132 = vadd.f32 %v3108, %v3130
        %s3133 = sld [smem:[#allocation2 + $0x182]]
        %v3134 = vstv %s3133
        %v3135 = vmul.f32 %v3134, %v3080
        %3137 = vrot.lane.b32.xlu0 %v3135, 126
        %v3138 = vpop.permute.xlu0 %3137
        %v3140 = vadd.f32 %v3116, %v3138
        %s3141 = sld [smem:[#allocation2 + $0x183]]
        %v3142 = vstv %s3141
        %v3143 = vmul.f32 %v3142, %v3080
        %3145 = vrot.lane.b32.xlu0 %v3143, 125
        %v3146 = vpop.permute.xlu0 %3145
        %v3148 = vadd.f32 %v3124, %v3146
        %s3149 = sld [smem:[#allocation2 + $0x184]]
        %v3150 = vstv %s3149
        %v3151 = vmul.f32 %v3150, %v3080
        %3153 = vrot.lane.b32.xlu0 %v3151, 125
        %v3154 = vpop.permute.xlu0 %3153
        %v3156 = vadd.f32 %v3132, %v3154
        %s3157 = sld [smem:[#allocation2 + $0x185]]
        %v3158 = vstv %s3157
        %v3159 = vmul.f32 %v3158, %v3080
        %3161 = vrot.lane.b32.xlu0 %v3159, 125
        %v3162 = vpop.permute.xlu0 %3161
        %v3164 = vadd.f32 %v3140, %v3162
        %s3165 = sld [smem:[#allocation2 + $0x186]]
        %v3166 = vstv %s3165
        %v3167 = vmul.f32 %v3166, %v3080
        %3169 = vrot.lane.b32.xlu0 %v3167, 124
        %v3170 = vpop.permute.xlu0 %3169
        %v3172 = vadd.f32 %v3148, %v3170
        %s3173 = sld [smem:[#allocation2 + $0x187]]
        %v3174 = vstv %s3173
        %v3175 = vmul.f32 %v3174, %v3080
        %3177 = vrot.lane.b32.xlu0 %v3175, 124
        %v3178 = vpop.permute.xlu0 %3177
        %v3180 = vadd.f32 %v3156, %v3178
        %s3181 = sld [smem:[#allocation2 + $0x188]]
        %v3182 = vstv %s3181
        %v3183 = vmul.f32 %v3182, %v3080
        %3185 = vrot.lane.b32.xlu0 %v3183, 124
        %v3186 = vpop.permute.xlu0 %3185
        %v3188 = vadd.f32 %v3164, %v3186
        %s3189 = sld [smem:[#allocation2 + $0x189]]
        %v3190 = vstv %s3189
        %v3191 = vmul.f32 %v3190, %v3080
        %3193 = vrot.lane.b32.xlu0 %v3191, 123
        %v3194 = vpop.permute.xlu0 %3193
        %v3196 = vadd.f32 %v3172, %v3194
        %s3197 = sld [smem:[#allocation2 + $0x18a]]
        %v3198 = vstv %s3197
        %v3199 = vmul.f32 %v3198, %v3080
        %3201 = vrot.lane.b32.xlu0 %v3199, 123
        %v3202 = vpop.permute.xlu0 %3201
        %v3204 = vadd.f32 %v3180, %v3202
        %s3205 = sld [smem:[#allocation2 + $0x18b]]
        %v3206 = vstv %s3205
        %v3207 = vmul.f32 %v3206, %v3080
        %3209 = vrot.lane.b32.xlu0 %v3207, 123
        %v3210 = vpop.permute.xlu0 %3209
        %v3212 = vadd.f32 %v3188, %v3210
        %s3213 = sld [smem:[#allocation2 + $0x18c]]
        %v3214 = vstv %s3213
        %v3215 = vmul.f32 %v3214, %v3080
        %3217 = vrot.lane.b32.xlu0 %v3215, 122
        %v3218 = vpop.permute.xlu0 %3217
        %v3220 = vadd.f32 %v3196, %v3218
        %s3221 = sld [smem:[#allocation2 + $0x18d]]
        %v3222 = vstv %s3221
        %v3223 = vmul.f32 %v3222, %v3080
        %3225 = vrot.lane.b32.xlu0 %v3223, 122
        %v3226 = vpop.permute.xlu0 %3225
        %v3228 = vadd.f32 %v3204, %v3226
        %s3229 = sld [smem:[#allocation2 + $0x18e]]
        %v3230 = vstv %s3229
        %v3231 = vmul.f32 %v3230, %v3080
        %3233 = vrot.lane.b32.xlu0 %v3231, 122
        %v3234 = vpop.permute.xlu0 %3233
        %v3236 = vadd.f32 %v3212, %v3234
        %s3237 = sadd.s32 %s1011, 48
        %s3238 = scalar_lea.vmem %s209, %s3237
        %v3239 = vld [vmem:[%s3238] sm:$0xff]
        %s3240 = sld [smem:[#allocation2 + $0x18f]]
        %v3241 = vstv %s3240
        %v3242 = vmul.f32 %v3241, %v3239
        %v3243 = vadd.f32 %v3220, %v3242
        %s3244 = sld [smem:[#allocation2 + $0x190]]
        %v3245 = vstv %s3244
        %v3246 = vmul.f32 %v3245, %v3239
        %v3247 = vadd.f32 %v3228, %v3246
        %s3248 = sld [smem:[#allocation2 + $0x191]]
        %v3249 = vstv %s3248
        %v3250 = vmul.f32 %v3249, %v3239
        %v3251 = vadd.f32 %v3236, %v3250
        %s3252 = sld [smem:[#allocation2 + $0x192]]
        %v3253 = vstv %s3252
        %v3254 = vmul.f32 %v3253, %v3239
        %3256 = vrot.lane.b32.xlu0 %v3254, 127
        %v3257 = vpop.permute.xlu0 %3256
        %v3259 = vadd.f32 %v3243, %v3257
        %s3260 = sld [smem:[#allocation2 + $0x193]]
        %v3261 = vstv %s3260
        %v3262 = vmul.f32 %v3261, %v3239
        %3264 = vrot.lane.b32.xlu0 %v3262, 127
        %v3265 = vpop.permute.xlu0 %3264
        %v3267 = vadd.f32 %v3247, %v3265
        %s3268 = sld [smem:[#allocation2 + $0x194]]
        %v3269 = vstv %s3268
        %v3270 = vmul.f32 %v3269, %v3239
        %3272 = vrot.lane.b32.xlu0 %v3270, 127
        %v3273 = vpop.permute.xlu0 %3272
        %v3275 = vadd.f32 %v3251, %v3273
        %s3276 = sld [smem:[#allocation2 + $0x195]]
        %v3277 = vstv %s3276
        %v3278 = vmul.f32 %v3277, %v3239
        %3280 = vrot.lane.b32.xlu0 %v3278, 126
        %v3281 = vpop.permute.xlu0 %3280
        %v3283 = vadd.f32 %v3259, %v3281
        %s3284 = sld [smem:[#allocation2 + $0x196]]
        %v3285 = vstv %s3284
        %v3286 = vmul.f32 %v3285, %v3239
        %3288 = vrot.lane.b32.xlu0 %v3286, 126
        %v3289 = vpop.permute.xlu0 %3288
        %v3291 = vadd.f32 %v3267, %v3289
        %s3292 = sld [smem:[#allocation2 + $0x197]]
        %v3293 = vstv %s3292
        %v3294 = vmul.f32 %v3293, %v3239
        %3296 = vrot.lane.b32.xlu0 %v3294, 126
        %v3297 = vpop.permute.xlu0 %3296
        %v3299 = vadd.f32 %v3275, %v3297
        %s3300 = sld [smem:[#allocation2 + $0x198]]
        %v3301 = vstv %s3300
        %v3302 = vmul.f32 %v3301, %v3239
        %3304 = vrot.lane.b32.xlu0 %v3302, 125
        %v3305 = vpop.permute.xlu0 %3304
        %v3307 = vadd.f32 %v3283, %v3305
        %s3308 = sld [smem:[#allocation2 + $0x199]]
        %v3309 = vstv %s3308
        %v3310 = vmul.f32 %v3309, %v3239
        %3312 = vrot.lane.b32.xlu0 %v3310, 125
        %v3313 = vpop.permute.xlu0 %3312
        %v3315 = vadd.f32 %v3291, %v3313
        %s3316 = sld [smem:[#allocation2 + $0x19a]]
        %v3317 = vstv %s3316
        %v3318 = vmul.f32 %v3317, %v3239
        %3320 = vrot.lane.b32.xlu0 %v3318, 125
        %v3321 = vpop.permute.xlu0 %3320
        %v3323 = vadd.f32 %v3299, %v3321
        %s3324 = sld [smem:[#allocation2 + $0x19b]]
        %v3325 = vstv %s3324
        %v3326 = vmul.f32 %v3325, %v3239
        %3328 = vrot.lane.b32.xlu0 %v3326, 124
        %v3329 = vpop.permute.xlu0 %3328
        %v3331 = vadd.f32 %v3307, %v3329
        %s3332 = sld [smem:[#allocation2 + $0x19c]]
        %v3333 = vstv %s3332
        %v3334 = vmul.f32 %v3333, %v3239
        %3336 = vrot.lane.b32.xlu0 %v3334, 124
        %v3337 = vpop.permute.xlu0 %3336
        %v3339 = vadd.f32 %v3315, %v3337
        %s3340 = sld [smem:[#allocation2 + $0x19d]]
        %v3341 = vstv %s3340
        %v3342 = vmul.f32 %v3341, %v3239
        %3344 = vrot.lane.b32.xlu0 %v3342, 124
        %v3345 = vpop.permute.xlu0 %3344
        %v3347 = vadd.f32 %v3323, %v3345
        %s3348 = sld [smem:[#allocation2 + $0x19e]]
        %v3349 = vstv %s3348
        %v3350 = vmul.f32 %v3349, %v3239
        %3352 = vrot.lane.b32.xlu0 %v3350, 123
        %v3353 = vpop.permute.xlu0 %3352
        %v3355 = vadd.f32 %v3331, %v3353
        %s3356 = sld [smem:[#allocation2 + $0x19f]]
        %v3357 = vstv %s3356
        %v3358 = vmul.f32 %v3357, %v3239
        %3360 = vrot.lane.b32.xlu0 %v3358, 123
        %v3361 = vpop.permute.xlu0 %3360
        %v3363 = vadd.f32 %v3339, %v3361
        %s3364 = sld [smem:[#allocation2 + $0x1a0]]
        %v3365 = vstv %s3364
        %v3366 = vmul.f32 %v3365, %v3239
        %3368 = vrot.lane.b32.xlu0 %v3366, 123
        %v3369 = vpop.permute.xlu0 %3368
        %v3371 = vadd.f32 %v3347, %v3369
        %s3372 = sld [smem:[#allocation2 + $0x1a1]]
        %v3373 = vstv %s3372
        %v3374 = vmul.f32 %v3373, %v3239
        %3376 = vrot.lane.b32.xlu0 %v3374, 122
        %v3377 = vpop.permute.xlu0 %3376
        %v3379 = vadd.f32 %v3355, %v3377
        %s3380 = sld [smem:[#allocation2 + $0x1a2]]
        %v3381 = vstv %s3380
        %v3382 = vmul.f32 %v3381, %v3239
        %3384 = vrot.lane.b32.xlu0 %v3382, 122
        %v3385 = vpop.permute.xlu0 %3384
        %v3387 = vadd.f32 %v3363, %v3385
        %s3388 = sld [smem:[#allocation2 + $0x1a3]]
        %v3389 = vstv %s3388
        %v3390 = vmul.f32 %v3389, %v3239
        %3392 = vrot.lane.b32.xlu0 %v3390, 122
        %v3393 = vpop.permute.xlu0 %3392
        %v3395 = vadd.f32 %v3371, %v3393
        %s3396 = sadd.s32 %s1170, 48
        %s3397 = scalar_lea.vmem %s209, %s3396
        %v3398 = vld [vmem:[%s3397] sm:$0xff]
        %s3399 = sld [smem:[#allocation2 + $0x1a4]]
        %v3400 = vstv %s3399
        %v3401 = vmul.f32 %v3400, %v3398
        %v3402 = vadd.f32 %v3379, %v3401
        %s3403 = sld [smem:[#allocation2 + $0x1a5]]
        %v3404 = vstv %s3403
        %v3405 = vmul.f32 %v3404, %v3398
        %v3406 = vadd.f32 %v3387, %v3405
        %s3407 = sld [smem:[#allocation2 + $0x1a6]]
        %v3408 = vstv %s3407
        %v3409 = vmul.f32 %v3408, %v3398
        %v3410 = vadd.f32 %v3395, %v3409
        %s3411 = sld [smem:[#allocation2 + $0x1a7]]
        %v3412 = vstv %s3411
        %v3413 = vmul.f32 %v3412, %v3398
        %3415 = vrot.lane.b32.xlu0 %v3413, 127
        %v3416 = vpop.permute.xlu0 %3415
        %v3418 = vadd.f32 %v3402, %v3416
        %s3419 = sld [smem:[#allocation2 + $0x1a8]]
        %v3420 = vstv %s3419
        %v3421 = vmul.f32 %v3420, %v3398
        %3423 = vrot.lane.b32.xlu0 %v3421, 127
        %v3424 = vpop.permute.xlu0 %3423
        %v3426 = vadd.f32 %v3406, %v3424
        %s3427 = sld [smem:[#allocation2 + $0x1a9]]
        %v3428 = vstv %s3427
        %v3429 = vmul.f32 %v3428, %v3398
        %3431 = vrot.lane.b32.xlu0 %v3429, 127
        %v3432 = vpop.permute.xlu0 %3431
        %v3434 = vadd.f32 %v3410, %v3432
        %s3435 = sld [smem:[#allocation2 + $0x1aa]]
        %v3436 = vstv %s3435
        %v3437 = vmul.f32 %v3436, %v3398
        %3439 = vrot.lane.b32.xlu0 %v3437, 126
        %v3440 = vpop.permute.xlu0 %3439
        %v3442 = vadd.f32 %v3418, %v3440
        %s3443 = sld [smem:[#allocation2 + $0x1ab]]
        %v3444 = vstv %s3443
        %v3445 = vmul.f32 %v3444, %v3398
        %3447 = vrot.lane.b32.xlu0 %v3445, 126
        %v3448 = vpop.permute.xlu0 %3447
        %v3450 = vadd.f32 %v3426, %v3448
        %s3451 = sld [smem:[#allocation2 + $0x1ac]]
        %v3452 = vstv %s3451
        %v3453 = vmul.f32 %v3452, %v3398
        %3455 = vrot.lane.b32.xlu0 %v3453, 126
        %v3456 = vpop.permute.xlu0 %3455
        %v3458 = vadd.f32 %v3434, %v3456
        %s3459 = sld [smem:[#allocation2 + $0x1ad]]
        %v3460 = vstv %s3459
        %v3461 = vmul.f32 %v3460, %v3398
        %3463 = vrot.lane.b32.xlu0 %v3461, 125
        %v3464 = vpop.permute.xlu0 %3463
        %v3466 = vadd.f32 %v3442, %v3464
        %s3467 = sld [smem:[#allocation2 + $0x1ae]]
        %v3468 = vstv %s3467
        %v3469 = vmul.f32 %v3468, %v3398
        %3471 = vrot.lane.b32.xlu0 %v3469, 125
        %v3472 = vpop.permute.xlu0 %3471
        %v3474 = vadd.f32 %v3450, %v3472
        %s3475 = sld [smem:[#allocation2 + $0x1af]]
        %v3476 = vstv %s3475
        %v3477 = vmul.f32 %v3476, %v3398
        %3479 = vrot.lane.b32.xlu0 %v3477, 125
        %v3480 = vpop.permute.xlu0 %3479
        %v3482 = vadd.f32 %v3458, %v3480
        %s3483 = sld [smem:[#allocation2 + $0x1b0]]
        %v3484 = vstv %s3483
        %v3485 = vmul.f32 %v3484, %v3398
        %3487 = vrot.lane.b32.xlu0 %v3485, 124
        %v3488 = vpop.permute.xlu0 %3487
        %v3490 = vadd.f32 %v3466, %v3488
        %s3491 = sld [smem:[#allocation2 + $0x1b1]]
        %v3492 = vstv %s3491
        %v3493 = vmul.f32 %v3492, %v3398
        %3495 = vrot.lane.b32.xlu0 %v3493, 124
        %v3496 = vpop.permute.xlu0 %3495
        %v3498 = vadd.f32 %v3474, %v3496
        %s3499 = sld [smem:[#allocation2 + $0x1b2]]
        %v3500 = vstv %s3499
        %v3501 = vmul.f32 %v3500, %v3398
        %3503 = vrot.lane.b32.xlu0 %v3501, 124
        %v3504 = vpop.permute.xlu0 %3503
        %v3506 = vadd.f32 %v3482, %v3504
        %s3507 = sld [smem:[#allocation2 + $0x1b3]]
        %v3508 = vstv %s3507
        %v3509 = vmul.f32 %v3508, %v3398
        %3511 = vrot.lane.b32.xlu0 %v3509, 123
        %v3512 = vpop.permute.xlu0 %3511
        %v3514 = vadd.f32 %v3490, %v3512
        %s3515 = sld [smem:[#allocation2 + $0x1b4]]
        %v3516 = vstv %s3515
        %v3517 = vmul.f32 %v3516, %v3398
        %3519 = vrot.lane.b32.xlu0 %v3517, 123
        %v3520 = vpop.permute.xlu0 %3519
        %v3522 = vadd.f32 %v3498, %v3520
        %s3523 = sld [smem:[#allocation2 + $0x1b5]]
        %v3524 = vstv %s3523
        %v3525 = vmul.f32 %v3524, %v3398
        %3527 = vrot.lane.b32.xlu0 %v3525, 123
        %v3528 = vpop.permute.xlu0 %3527
        %v3530 = vadd.f32 %v3506, %v3528
        %s3531 = sld [smem:[#allocation2 + $0x1b6]]
        %v3532 = vstv %s3531
        %v3533 = vmul.f32 %v3532, %v3398
        %3535 = vrot.lane.b32.xlu0 %v3533, 122
        %v3536 = vpop.permute.xlu0 %3535
        %v3538 = vadd.f32 %v3514, %v3536
        %s3539 = sld [smem:[#allocation2 + $0x1b7]]
        %v3540 = vstv %s3539
        %v3541 = vmul.f32 %v3540, %v3398
        %3543 = vrot.lane.b32.xlu0 %v3541, 122
        %v3544 = vpop.permute.xlu0 %3543
        %v3546 = vadd.f32 %v3522, %v3544
        %s3547 = sld [smem:[#allocation2 + $0x1b8]]
        %v3548 = vstv %s3547
        %v3549 = vmul.f32 %v3548, %v3398
        %3551 = vrot.lane.b32.xlu0 %v3549, 122
        %v3552 = vpop.permute.xlu0 %3551
        %v3554 = vadd.f32 %v3530, %v3552
        %s3555 = sadd.s32 %s210, 72
        %s3556 = scalar_lea.vmem %s209, %s3555
        %v3557 = vld [vmem:[%s3556] sm:$0xff]
        %s3558 = sld [smem:[#allocation2 + $0x1b9]]
        %v3559 = vstv %s3558
        %v3560 = vmul.f32 %v3559, %v3557
        %v3561 = vadd.f32 %v3538, %v3560
        %s3562 = sld [smem:[#allocation2 + $0x1ba]]
        %v3563 = vstv %s3562
        %v3564 = vmul.f32 %v3563, %v3557
        %v3565 = vadd.f32 %v3546, %v3564
        %s3566 = sld [smem:[#allocation2 + $0x1bb]]
        %v3567 = vstv %s3566
        %v3568 = vmul.f32 %v3567, %v3557
        %v3569 = vadd.f32 %v3554, %v3568
        %s3570 = sld [smem:[#allocation2 + $0x1bc]]
        %v3571 = vstv %s3570
        %v3572 = vmul.f32 %v3571, %v3557
        %3574 = vrot.lane.b32.xlu0 %v3572, 127
        %v3575 = vpop.permute.xlu0 %3574
        %v3577 = vadd.f32 %v3561, %v3575
        %s3578 = sld [smem:[#allocation2 + $0x1bd]]
        %v3579 = vstv %s3578
        %v3580 = vmul.f32 %v3579, %v3557
        %3582 = vrot.lane.b32.xlu0 %v3580, 127
        %v3583 = vpop.permute.xlu0 %3582
        %v3585 = vadd.f32 %v3565, %v3583
        %s3586 = sld [smem:[#allocation2 + $0x1be]]
        %v3587 = vstv %s3586
        %v3588 = vmul.f32 %v3587, %v3557
        %3590 = vrot.lane.b32.xlu0 %v3588, 127
        %v3591 = vpop.permute.xlu0 %3590
        %v3593 = vadd.f32 %v3569, %v3591
        %s3594 = sld [smem:[#allocation2 + $0x1bf]]
        %v3595 = vstv %s3594
        %v3596 = vmul.f32 %v3595, %v3557
        %3598 = vrot.lane.b32.xlu0 %v3596, 126
        %v3599 = vpop.permute.xlu0 %3598
        %v3601 = vadd.f32 %v3577, %v3599
        %s3602 = sld [smem:[#allocation2 + $0x1c0]]
        %v3603 = vstv %s3602
        %v3604 = vmul.f32 %v3603, %v3557
        %3606 = vrot.lane.b32.xlu0 %v3604, 126
        %v3607 = vpop.permute.xlu0 %3606
        %v3609 = vadd.f32 %v3585, %v3607
        %s3610 = sld [smem:[#allocation2 + $0x1c1]]
        %v3611 = vstv %s3610
        %v3612 = vmul.f32 %v3611, %v3557
        %3614 = vrot.lane.b32.xlu0 %v3612, 126
        %v3615 = vpop.permute.xlu0 %3614
        %v3617 = vadd.f32 %v3593, %v3615
        %s3618 = sld [smem:[#allocation2 + $0x1c2]]
        %v3619 = vstv %s3618
        %v3620 = vmul.f32 %v3619, %v3557
        %3622 = vrot.lane.b32.xlu0 %v3620, 125
        %v3623 = vpop.permute.xlu0 %3622
        %v3625 = vadd.f32 %v3601, %v3623
        %s3626 = sld [smem:[#allocation2 + $0x1c3]]
        %v3627 = vstv %s3626
        %v3628 = vmul.f32 %v3627, %v3557
        %3630 = vrot.lane.b32.xlu0 %v3628, 125
        %v3631 = vpop.permute.xlu0 %3630
        %v3633 = vadd.f32 %v3609, %v3631
        %s3634 = sld [smem:[#allocation2 + $0x1c4]]
        %v3635 = vstv %s3634
        %v3636 = vmul.f32 %v3635, %v3557
        %3638 = vrot.lane.b32.xlu0 %v3636, 125
        %v3639 = vpop.permute.xlu0 %3638
        %v3641 = vadd.f32 %v3617, %v3639
        %s3642 = sld [smem:[#allocation2 + $0x1c5]]
        %v3643 = vstv %s3642
        %v3644 = vmul.f32 %v3643, %v3557
        %3646 = vrot.lane.b32.xlu0 %v3644, 124
        %v3647 = vpop.permute.xlu0 %3646
        %v3649 = vadd.f32 %v3625, %v3647
        %s3650 = sld [smem:[#allocation2 + $0x1c6]]
        %v3651 = vstv %s3650
        %v3652 = vmul.f32 %v3651, %v3557
        %3654 = vrot.lane.b32.xlu0 %v3652, 124
        %v3655 = vpop.permute.xlu0 %3654
        %v3657 = vadd.f32 %v3633, %v3655
        %s3658 = sld [smem:[#allocation2 + $0x1c7]]
        %v3659 = vstv %s3658
        %v3660 = vmul.f32 %v3659, %v3557
        %3662 = vrot.lane.b32.xlu0 %v3660, 124
        %v3663 = vpop.permute.xlu0 %3662
        %v3665 = vadd.f32 %v3641, %v3663
        %s3666 = sld [smem:[#allocation2 + $0x1c8]]
        %v3667 = vstv %s3666
        %v3668 = vmul.f32 %v3667, %v3557
        %3670 = vrot.lane.b32.xlu0 %v3668, 123
        %v3671 = vpop.permute.xlu0 %3670
        %v3673 = vadd.f32 %v3649, %v3671
        %s3674 = sld [smem:[#allocation2 + $0x1c9]]
        %v3675 = vstv %s3674
        %v3676 = vmul.f32 %v3675, %v3557
        %3678 = vrot.lane.b32.xlu0 %v3676, 123
        %v3679 = vpop.permute.xlu0 %3678
        %v3681 = vadd.f32 %v3657, %v3679
        %s3682 = sld [smem:[#allocation2 + $0x1ca]]
        %v3683 = vstv %s3682
        %v3684 = vmul.f32 %v3683, %v3557
        %3686 = vrot.lane.b32.xlu0 %v3684, 123
        %v3687 = vpop.permute.xlu0 %3686
        %v3689 = vadd.f32 %v3665, %v3687
        %s3690 = sld [smem:[#allocation2 + $0x1cb]]
        %v3691 = vstv %s3690
        %v3692 = vmul.f32 %v3691, %v3557
        %3694 = vrot.lane.b32.xlu0 %v3692, 122
        %v3695 = vpop.permute.xlu0 %3694
        %v3697 = vadd.f32 %v3673, %v3695
        %s3698 = sld [smem:[#allocation2 + $0x1cc]]
        %v3699 = vstv %s3698
        %v3700 = vmul.f32 %v3699, %v3557
        %3702 = vrot.lane.b32.xlu0 %v3700, 122
        %v3703 = vpop.permute.xlu0 %3702
        %v3705 = vadd.f32 %v3681, %v3703
        %s3706 = sld [smem:[#allocation2 + $0x1cd]]
        %v3707 = vstv %s3706
        %v3708 = vmul.f32 %v3707, %v3557
        %3710 = vrot.lane.b32.xlu0 %v3708, 122
        %v3711 = vpop.permute.xlu0 %3710
        %v3713 = vadd.f32 %v3689, %v3711
        %s3714 = sadd.s32 %s375, 72
        %s3715 = scalar_lea.vmem %s209, %s3714
        %v3716 = vld [vmem:[%s3715] sm:$0xff]
        %s3717 = sld [smem:[#allocation2 + $0x1ce]]
        %v3718 = vstv %s3717
        %v3719 = vmul.f32 %v3718, %v3716
        %v3720 = vadd.f32 %v3697, %v3719
        %s3721 = sld [smem:[#allocation2 + $0x1cf]]
        %v3722 = vstv %s3721
        %v3723 = vmul.f32 %v3722, %v3716
        %v3724 = vadd.f32 %v3705, %v3723
        %s3725 = sld [smem:[#allocation2 + $0x1d0]]
        %v3726 = vstv %s3725
        %v3727 = vmul.f32 %v3726, %v3716
        %v3728 = vadd.f32 %v3713, %v3727
        %s3729 = sld [smem:[#allocation2 + $0x1d1]]
        %v3730 = vstv %s3729
        %v3731 = vmul.f32 %v3730, %v3716
        %3733 = vrot.lane.b32.xlu0 %v3731, 127
        %v3734 = vpop.permute.xlu0 %3733
        %v3736 = vadd.f32 %v3720, %v3734
        %s3737 = sld [smem:[#allocation2 + $0x1d2]]
        %v3738 = vstv %s3737
        %v3739 = vmul.f32 %v3738, %v3716
        %3741 = vrot.lane.b32.xlu0 %v3739, 127
        %v3742 = vpop.permute.xlu0 %3741
        %v3744 = vadd.f32 %v3724, %v3742
        %s3745 = sld [smem:[#allocation2 + $0x1d3]]
        %v3746 = vstv %s3745
        %v3747 = vmul.f32 %v3746, %v3716
        %3749 = vrot.lane.b32.xlu0 %v3747, 127
        %v3750 = vpop.permute.xlu0 %3749
        %v3752 = vadd.f32 %v3728, %v3750
        %s3753 = sld [smem:[#allocation2 + $0x1d4]]
        %v3754 = vstv %s3753
        %v3755 = vmul.f32 %v3754, %v3716
        %3757 = vrot.lane.b32.xlu0 %v3755, 126
        %v3758 = vpop.permute.xlu0 %3757
        %v3760 = vadd.f32 %v3736, %v3758
        %s3761 = sld [smem:[#allocation2 + $0x1d5]]
        %v3762 = vstv %s3761
        %v3763 = vmul.f32 %v3762, %v3716
        %3765 = vrot.lane.b32.xlu0 %v3763, 126
        %v3766 = vpop.permute.xlu0 %3765
        %v3768 = vadd.f32 %v3744, %v3766
        %s3769 = sld [smem:[#allocation2 + $0x1d6]]
        %v3770 = vstv %s3769
        %v3771 = vmul.f32 %v3770, %v3716
        %3773 = vrot.lane.b32.xlu0 %v3771, 126
        %v3774 = vpop.permute.xlu0 %3773
        %v3776 = vadd.f32 %v3752, %v3774
        %s3777 = sld [smem:[#allocation2 + $0x1d7]]
        %v3778 = vstv %s3777
        %v3779 = vmul.f32 %v3778, %v3716
        %3781 = vrot.lane.b32.xlu0 %v3779, 125
        %v3782 = vpop.permute.xlu0 %3781
        %v3784 = vadd.f32 %v3760, %v3782
        %s3785 = sld [smem:[#allocation2 + $0x1d8]]
        %v3786 = vstv %s3785
        %v3787 = vmul.f32 %v3786, %v3716
        %3789 = vrot.lane.b32.xlu0 %v3787, 125
        %v3790 = vpop.permute.xlu0 %3789
        %v3792 = vadd.f32 %v3768, %v3790
        %s3793 = sld [smem:[#allocation2 + $0x1d9]]
        %v3794 = vstv %s3793
        %v3795 = vmul.f32 %v3794, %v3716
        %3797 = vrot.lane.b32.xlu0 %v3795, 125
        %v3798 = vpop.permute.xlu0 %3797
        %v3800 = vadd.f32 %v3776, %v3798
        %s3801 = sld [smem:[#allocation2 + $0x1da]]
        %v3802 = vstv %s3801
        %v3803 = vmul.f32 %v3802, %v3716
        %3805 = vrot.lane.b32.xlu0 %v3803, 124
        %v3806 = vpop.permute.xlu0 %3805
        %v3808 = vadd.f32 %v3784, %v3806
        %s3809 = sld [smem:[#allocation2 + $0x1db]]
        %v3810 = vstv %s3809
        %v3811 = vmul.f32 %v3810, %v3716
        %3813 = vrot.lane.b32.xlu0 %v3811, 124
        %v3814 = vpop.permute.xlu0 %3813
        %v3816 = vadd.f32 %v3792, %v3814
        %s3817 = sld [smem:[#allocation2 + $0x1dc]]
        %v3818 = vstv %s3817
        %v3819 = vmul.f32 %v3818, %v3716
        %3821 = vrot.lane.b32.xlu0 %v3819, 124
        %v3822 = vpop.permute.xlu0 %3821
        %v3824 = vadd.f32 %v3800, %v3822
        %s3825 = sld [smem:[#allocation2 + $0x1dd]]
        %v3826 = vstv %s3825
        %v3827 = vmul.f32 %v3826, %v3716
        %3829 = vrot.lane.b32.xlu0 %v3827, 123
        %v3830 = vpop.permute.xlu0 %3829
        %v3832 = vadd.f32 %v3808, %v3830
        %s3833 = sld [smem:[#allocation2 + $0x1de]]
        %v3834 = vstv %s3833
        %v3835 = vmul.f32 %v3834, %v3716
        %3837 = vrot.lane.b32.xlu0 %v3835, 123
        %v3838 = vpop.permute.xlu0 %3837
        %v3840 = vadd.f32 %v3816, %v3838
        %s3841 = sld [smem:[#allocation2 + $0x1df]]
        %v3842 = vstv %s3841
        %v3843 = vmul.f32 %v3842, %v3716
        %3845 = vrot.lane.b32.xlu0 %v3843, 123
        %v3846 = vpop.permute.xlu0 %3845
        %v3848 = vadd.f32 %v3824, %v3846
        %s3849 = sld [smem:[#allocation2 + $0x1e0]]
        %v3850 = vstv %s3849
        %v3851 = vmul.f32 %v3850, %v3716
        %3853 = vrot.lane.b32.xlu0 %v3851, 122
        %v3854 = vpop.permute.xlu0 %3853
        %v3856 = vadd.f32 %v3832, %v3854
        %s3857 = sld [smem:[#allocation2 + $0x1e1]]
        %v3858 = vstv %s3857
        %v3859 = vmul.f32 %v3858, %v3716
        %3861 = vrot.lane.b32.xlu0 %v3859, 122
        %v3862 = vpop.permute.xlu0 %3861
        %v3864 = vadd.f32 %v3840, %v3862
        %s3865 = sld [smem:[#allocation2 + $0x1e2]]
        %v3866 = vstv %s3865
        %v3867 = vmul.f32 %v3866, %v3716
        %3869 = vrot.lane.b32.xlu0 %v3867, 122
        %v3870 = vpop.permute.xlu0 %3869
        %v3872 = vadd.f32 %v3848, %v3870
        %s3873 = sadd.s32 %s534, 72
        %s3874 = scalar_lea.vmem %s209, %s3873
        %v3875 = vld [vmem:[%s3874] sm:$0xff]
        %s3876 = sld [smem:[#allocation2 + $0x1e3]]
        %v3877 = vstv %s3876
        %v3878 = vmul.f32 %v3877, %v3875
        %v3879 = vadd.f32 %v3856, %v3878
        %s3880 = sld [smem:[#allocation2 + $0x1e4]]
        %v3881 = vstv %s3880
        %v3882 = vmul.f32 %v3881, %v3875
        %v3883 = vadd.f32 %v3864, %v3882
        %s3884 = sld [smem:[#allocation2 + $0x1e5]]
        %v3885 = vstv %s3884
        %v3886 = vmul.f32 %v3885, %v3875
        %v3887 = vadd.f32 %v3872, %v3886
        %s3888 = sld [smem:[#allocation2 + $0x1e6]]
        %v3889 = vstv %s3888
        %v3890 = vmul.f32 %v3889, %v3875
        %3892 = vrot.lane.b32.xlu0 %v3890, 127
        %v3893 = vpop.permute.xlu0 %3892
        %v3895 = vadd.f32 %v3879, %v3893
        %s3896 = sld [smem:[#allocation2 + $0x1e7]]
        %v3897 = vstv %s3896
        %v3898 = vmul.f32 %v3897, %v3875
        %3900 = vrot.lane.b32.xlu0 %v3898, 127
        %v3901 = vpop.permute.xlu0 %3900
        %v3903 = vadd.f32 %v3883, %v3901
        %s3904 = sld [smem:[#allocation2 + $0x1e8]]
        %v3905 = vstv %s3904
        %v3906 = vmul.f32 %v3905, %v3875
        %3908 = vrot.lane.b32.xlu0 %v3906, 127
        %v3909 = vpop.permute.xlu0 %3908
        %v3911 = vadd.f32 %v3887, %v3909
        %s3912 = sld [smem:[#allocation2 + $0x1e9]]
        %v3913 = vstv %s3912
        %v3914 = vmul.f32 %v3913, %v3875
        %3916 = vrot.lane.b32.xlu0 %v3914, 126
        %v3917 = vpop.permute.xlu0 %3916
        %v3919 = vadd.f32 %v3895, %v3917
        %s3920 = sld [smem:[#allocation2 + $0x1ea]]
        %v3921 = vstv %s3920
        %v3922 = vmul.f32 %v3921, %v3875
        %3924 = vrot.lane.b32.xlu0 %v3922, 126
        %v3925 = vpop.permute.xlu0 %3924
        %v3927 = vadd.f32 %v3903, %v3925
        %s3928 = sld [smem:[#allocation2 + $0x1eb]]
        %v3929 = vstv %s3928
        %v3930 = vmul.f32 %v3929, %v3875
        %3932 = vrot.lane.b32.xlu0 %v3930, 126
        %v3933 = vpop.permute.xlu0 %3932
        %v3935 = vadd.f32 %v3911, %v3933
        %s3936 = sld [smem:[#allocation2 + $0x1ec]]
        %v3937 = vstv %s3936
        %v3938 = vmul.f32 %v3937, %v3875
        %3940 = vrot.lane.b32.xlu0 %v3938, 125
        %v3941 = vpop.permute.xlu0 %3940
        %v3943 = vadd.f32 %v3919, %v3941
        %s3944 = sld [smem:[#allocation2 + $0x1ed]]
        %v3945 = vstv %s3944
        %v3946 = vmul.f32 %v3945, %v3875
        %3948 = vrot.lane.b32.xlu0 %v3946, 125
        %v3949 = vpop.permute.xlu0 %3948
        %v3951 = vadd.f32 %v3927, %v3949
        %s3952 = sld [smem:[#allocation2 + $0x1ee]]
        %v3953 = vstv %s3952
        %v3954 = vmul.f32 %v3953, %v3875
        %3956 = vrot.lane.b32.xlu0 %v3954, 125
        %v3957 = vpop.permute.xlu0 %3956
        %v3959 = vadd.f32 %v3935, %v3957
        %s3960 = sld [smem:[#allocation2 + $0x1ef]]
        %v3961 = vstv %s3960
        %v3962 = vmul.f32 %v3961, %v3875
        %3964 = vrot.lane.b32.xlu0 %v3962, 124
        %v3965 = vpop.permute.xlu0 %3964
        %v3967 = vadd.f32 %v3943, %v3965
        %s3968 = sld [smem:[#allocation2 + $0x1f0]]
        %v3969 = vstv %s3968
        %v3970 = vmul.f32 %v3969, %v3875
        %3972 = vrot.lane.b32.xlu0 %v3970, 124
        %v3973 = vpop.permute.xlu0 %3972
        %v3975 = vadd.f32 %v3951, %v3973
        %s3976 = sld [smem:[#allocation2 + $0x1f1]]
        %v3977 = vstv %s3976
        %v3978 = vmul.f32 %v3977, %v3875
        %3980 = vrot.lane.b32.xlu0 %v3978, 124
        %v3981 = vpop.permute.xlu0 %3980
        %v3983 = vadd.f32 %v3959, %v3981
        %s3984 = sld [smem:[#allocation2 + $0x1f2]]
        %v3985 = vstv %s3984
        %v3986 = vmul.f32 %v3985, %v3875
        %3988 = vrot.lane.b32.xlu0 %v3986, 123
        %v3989 = vpop.permute.xlu0 %3988
        %v3991 = vadd.f32 %v3967, %v3989
        %s3992 = sld [smem:[#allocation2 + $0x1f3]]
        %v3993 = vstv %s3992
        %v3994 = vmul.f32 %v3993, %v3875
        %3996 = vrot.lane.b32.xlu0 %v3994, 123
        %v3997 = vpop.permute.xlu0 %3996
        %v3999 = vadd.f32 %v3975, %v3997
        %s4000 = sld [smem:[#allocation2 + $0x1f4]]
        %v4001 = vstv %s4000
        %v4002 = vmul.f32 %v4001, %v3875
        %4004 = vrot.lane.b32.xlu0 %v4002, 123
        %v4005 = vpop.permute.xlu0 %4004
        %v4007 = vadd.f32 %v3983, %v4005
        %s4008 = sld [smem:[#allocation2 + $0x1f5]]
        %v4009 = vstv %s4008
        %v4010 = vmul.f32 %v4009, %v3875
        %4012 = vrot.lane.b32.xlu0 %v4010, 122
        %v4013 = vpop.permute.xlu0 %4012
        %v4015 = vadd.f32 %v3991, %v4013
        %s4016 = sld [smem:[#allocation2 + $0x1f6]]
        %v4017 = vstv %s4016
        %v4018 = vmul.f32 %v4017, %v3875
        %4020 = vrot.lane.b32.xlu0 %v4018, 122
        %v4021 = vpop.permute.xlu0 %4020
        %v4023 = vadd.f32 %v3999, %v4021
        %s4024 = sld [smem:[#allocation2 + $0x1f7]]
        %v4025 = vstv %s4024
        %v4026 = vmul.f32 %v4025, %v3875
        %4028 = vrot.lane.b32.xlu0 %v4026, 122
        %v4029 = vpop.permute.xlu0 %4028
        %v4031 = vadd.f32 %v4007, %v4029
        %s4032 = sadd.s32 %s693, 72
        %s4033 = scalar_lea.vmem %s209, %s4032
        %v4034 = vld [vmem:[%s4033] sm:$0xff]
        %s4035 = sld [smem:[#allocation2 + $0x1f8]]
        %v4036 = vstv %s4035
        %v4037 = vmul.f32 %v4036, %v4034
        %v4038 = vadd.f32 %v4015, %v4037
        %s4039 = sld [smem:[#allocation2 + $0x1f9]]
        %v4040 = vstv %s4039
        %v4041 = vmul.f32 %v4040, %v4034
        %v4042 = vadd.f32 %v4023, %v4041
        %s4043 = sld [smem:[#allocation2 + $0x1fa]]
        %v4044 = vstv %s4043
        %v4045 = vmul.f32 %v4044, %v4034
        %v4046 = vadd.f32 %v4031, %v4045
        %s4047 = sld [smem:[#allocation2 + $0x1fb]]
        %v4048 = vstv %s4047
        %v4049 = vmul.f32 %v4048, %v4034
        %4051 = vrot.lane.b32.xlu0 %v4049, 127
        %v4052 = vpop.permute.xlu0 %4051
        %v4054 = vadd.f32 %v4038, %v4052
        %s4055 = sld [smem:[#allocation2 + $0x1fc]]
        %v4056 = vstv %s4055
        %v4057 = vmul.f32 %v4056, %v4034
        %4059 = vrot.lane.b32.xlu0 %v4057, 127
        %v4060 = vpop.permute.xlu0 %4059
        %v4062 = vadd.f32 %v4042, %v4060
        %s4063 = sld [smem:[#allocation2 + $0x1fd]]
        %v4064 = vstv %s4063
        %v4065 = vmul.f32 %v4064, %v4034
        %4067 = vrot.lane.b32.xlu0 %v4065, 127
        %v4068 = vpop.permute.xlu0 %4067
        %v4070 = vadd.f32 %v4046, %v4068
        %s4071 = sld [smem:[#allocation2 + $0x1fe]]
        %v4072 = vstv %s4071
        %v4073 = vmul.f32 %v4072, %v4034
        %4075 = vrot.lane.b32.xlu0 %v4073, 126
        %v4076 = vpop.permute.xlu0 %4075
        %v4078 = vadd.f32 %v4054, %v4076
        %s4079 = sld [smem:[#allocation2 + $0x1ff]]
        %v4080 = vstv %s4079
        %v4081 = vmul.f32 %v4080, %v4034
        %4083 = vrot.lane.b32.xlu0 %v4081, 126
        %v4084 = vpop.permute.xlu0 %4083
        %v4086 = vadd.f32 %v4062, %v4084
        %s4087 = sld [smem:[#allocation2 + $0x200]]
        %v4088 = vstv %s4087
        %v4089 = vmul.f32 %v4088, %v4034
        %4091 = vrot.lane.b32.xlu0 %v4089, 126
        %v4092 = vpop.permute.xlu0 %4091
        %v4094 = vadd.f32 %v4070, %v4092
        %s4095 = sld [smem:[#allocation2 + $0x201]]
        %v4096 = vstv %s4095
        %v4097 = vmul.f32 %v4096, %v4034
        %4099 = vrot.lane.b32.xlu0 %v4097, 125
        %v4100 = vpop.permute.xlu0 %4099
        %v4102 = vadd.f32 %v4078, %v4100
        %s4103 = sld [smem:[#allocation2 + $0x202]]
        %v4104 = vstv %s4103
        %v4105 = vmul.f32 %v4104, %v4034
        %4107 = vrot.lane.b32.xlu0 %v4105, 125
        %v4108 = vpop.permute.xlu0 %4107
        %v4110 = vadd.f32 %v4086, %v4108
        %s4111 = sld [smem:[#allocation2 + $0x203]]
        %v4112 = vstv %s4111
        %v4113 = vmul.f32 %v4112, %v4034
        %4115 = vrot.lane.b32.xlu0 %v4113, 125
        %v4116 = vpop.permute.xlu0 %4115
        %v4118 = vadd.f32 %v4094, %v4116
        %s4119 = sld [smem:[#allocation2 + $0x204]]
        %v4120 = vstv %s4119
        %v4121 = vmul.f32 %v4120, %v4034
        %4123 = vrot.lane.b32.xlu0 %v4121, 124
        %v4124 = vpop.permute.xlu0 %4123
        %v4126 = vadd.f32 %v4102, %v4124
        %s4127 = sld [smem:[#allocation2 + $0x205]]
        %v4128 = vstv %s4127
        %v4129 = vmul.f32 %v4128, %v4034
        %4131 = vrot.lane.b32.xlu0 %v4129, 124
        %v4132 = vpop.permute.xlu0 %4131
        %v4134 = vadd.f32 %v4110, %v4132
        %s4135 = sld [smem:[#allocation2 + $0x206]]
        %v4136 = vstv %s4135
        %v4137 = vmul.f32 %v4136, %v4034
        %4139 = vrot.lane.b32.xlu0 %v4137, 124
        %v4140 = vpop.permute.xlu0 %4139
        %v4142 = vadd.f32 %v4118, %v4140
        %s4143 = sld [smem:[#allocation2 + $0x207]]
        %v4144 = vstv %s4143
        %v4145 = vmul.f32 %v4144, %v4034
        %4147 = vrot.lane.b32.xlu0 %v4145, 123
        %v4148 = vpop.permute.xlu0 %4147
        %v4150 = vadd.f32 %v4126, %v4148
        %s4151 = sld [smem:[#allocation2 + $0x208]]
        %v4152 = vstv %s4151
        %v4153 = vmul.f32 %v4152, %v4034
        %4155 = vrot.lane.b32.xlu0 %v4153, 123
        %v4156 = vpop.permute.xlu0 %4155
        %v4158 = vadd.f32 %v4134, %v4156
        %s4159 = sld [smem:[#allocation2 + $0x209]]
        %v4160 = vstv %s4159
        %v4161 = vmul.f32 %v4160, %v4034
        %4163 = vrot.lane.b32.xlu0 %v4161, 123
        %v4164 = vpop.permute.xlu0 %4163
        %v4166 = vadd.f32 %v4142, %v4164
        %s4167 = sld [smem:[#allocation2 + $0x20a]]
        %v4168 = vstv %s4167
        %v4169 = vmul.f32 %v4168, %v4034
        %4171 = vrot.lane.b32.xlu0 %v4169, 122
        %v4172 = vpop.permute.xlu0 %4171
        %v4174 = vadd.f32 %v4150, %v4172
        %s4175 = sld [smem:[#allocation2 + $0x20b]]
        %v4176 = vstv %s4175
        %v4177 = vmul.f32 %v4176, %v4034
        %4179 = vrot.lane.b32.xlu0 %v4177, 122
        %v4180 = vpop.permute.xlu0 %4179
        %v4182 = vadd.f32 %v4158, %v4180
        %s4183 = sld [smem:[#allocation2 + $0x20c]]
        %v4184 = vstv %s4183
        %v4185 = vmul.f32 %v4184, %v4034
        %4187 = vrot.lane.b32.xlu0 %v4185, 122
        %v4188 = vpop.permute.xlu0 %4187
        %v4190 = vadd.f32 %v4166, %v4188
        %s4191 = sadd.s32 %s852, 72
        %s4192 = scalar_lea.vmem %s209, %s4191
        %v4193 = vld [vmem:[%s4192] sm:$0xff]
        %s4194 = sld [smem:[#allocation2 + $0x20d]]
        %v4195 = vstv %s4194
        %v4196 = vmul.f32 %v4195, %v4193
        %v4197 = vadd.f32 %v4174, %v4196
        %s4198 = sld [smem:[#allocation2 + $0x20e]]
        %v4199 = vstv %s4198
        %v4200 = vmul.f32 %v4199, %v4193
        %v4201 = vadd.f32 %v4182, %v4200
        %s4202 = sld [smem:[#allocation2 + $0x20f]]
        %v4203 = vstv %s4202
        %v4204 = vmul.f32 %v4203, %v4193
        %v4205 = vadd.f32 %v4190, %v4204
        %s4206 = sld [smem:[#allocation2 + $0x210]]
        %v4207 = vstv %s4206
        %v4208 = vmul.f32 %v4207, %v4193
        %4210 = vrot.lane.b32.xlu0 %v4208, 127
        %v4211 = vpop.permute.xlu0 %4210
        %v4213 = vadd.f32 %v4197, %v4211
        %s4214 = sld [smem:[#allocation2 + $0x211]]
        %v4215 = vstv %s4214
        %v4216 = vmul.f32 %v4215, %v4193
        %4218 = vrot.lane.b32.xlu0 %v4216, 127
        %v4219 = vpop.permute.xlu0 %4218
        %v4221 = vadd.f32 %v4201, %v4219
        %s4222 = sld [smem:[#allocation2 + $0x212]]
        %v4223 = vstv %s4222
        %v4224 = vmul.f32 %v4223, %v4193
        %4226 = vrot.lane.b32.xlu0 %v4224, 127
        %v4227 = vpop.permute.xlu0 %4226
        %v4229 = vadd.f32 %v4205, %v4227
        %s4230 = sld [smem:[#allocation2 + $0x213]]
        %v4231 = vstv %s4230
        %v4232 = vmul.f32 %v4231, %v4193
        %4234 = vrot.lane.b32.xlu0 %v4232, 126
        %v4235 = vpop.permute.xlu0 %4234
        %v4237 = vadd.f32 %v4213, %v4235
        %s4238 = sld [smem:[#allocation2 + $0x214]]
        %v4239 = vstv %s4238
        %v4240 = vmul.f32 %v4239, %v4193
        %4242 = vrot.lane.b32.xlu0 %v4240, 126
        %v4243 = vpop.permute.xlu0 %4242
        %v4245 = vadd.f32 %v4221, %v4243
        %s4246 = sld [smem:[#allocation2 + $0x215]]
        %v4247 = vstv %s4246
        %v4248 = vmul.f32 %v4247, %v4193
        %4250 = vrot.lane.b32.xlu0 %v4248, 126
        %v4251 = vpop.permute.xlu0 %4250
        %v4253 = vadd.f32 %v4229, %v4251
        %s4254 = sld [smem:[#allocation2 + $0x216]]
        %v4255 = vstv %s4254
        %v4256 = vmul.f32 %v4255, %v4193
        %4258 = vrot.lane.b32.xlu0 %v4256, 125
        %v4259 = vpop.permute.xlu0 %4258
        %v4261 = vadd.f32 %v4237, %v4259
        %s4262 = sld [smem:[#allocation2 + $0x217]]
        %v4263 = vstv %s4262
        %v4264 = vmul.f32 %v4263, %v4193
        %4266 = vrot.lane.b32.xlu0 %v4264, 125
        %v4267 = vpop.permute.xlu0 %4266
        %v4269 = vadd.f32 %v4245, %v4267
        %s4270 = sld [smem:[#allocation2 + $0x218]]
        %v4271 = vstv %s4270
        %v4272 = vmul.f32 %v4271, %v4193
        %4274 = vrot.lane.b32.xlu0 %v4272, 125
        %v4275 = vpop.permute.xlu0 %4274
        %v4277 = vadd.f32 %v4253, %v4275
        %s4278 = sld [smem:[#allocation2 + $0x219]]
        %v4279 = vstv %s4278
        %v4280 = vmul.f32 %v4279, %v4193
        %4282 = vrot.lane.b32.xlu0 %v4280, 124
        %v4283 = vpop.permute.xlu0 %4282
        %v4285 = vadd.f32 %v4261, %v4283
        %s4286 = sld [smem:[#allocation2 + $0x21a]]
        %v4287 = vstv %s4286
        %v4288 = vmul.f32 %v4287, %v4193
        %4290 = vrot.lane.b32.xlu0 %v4288, 124
        %v4291 = vpop.permute.xlu0 %4290
        %v4293 = vadd.f32 %v4269, %v4291
        %s4294 = sld [smem:[#allocation2 + $0x21b]]
        %v4295 = vstv %s4294
        %v4296 = vmul.f32 %v4295, %v4193
        %4298 = vrot.lane.b32.xlu0 %v4296, 124
        %v4299 = vpop.permute.xlu0 %4298
        %v4301 = vadd.f32 %v4277, %v4299
        %s4302 = sld [smem:[#allocation2 + $0x21c]]
        %v4303 = vstv %s4302
        %v4304 = vmul.f32 %v4303, %v4193
        %4306 = vrot.lane.b32.xlu0 %v4304, 123
        %v4307 = vpop.permute.xlu0 %4306
        %v4309 = vadd.f32 %v4285, %v4307
        %s4310 = sld [smem:[#allocation2 + $0x21d]]
        %v4311 = vstv %s4310
        %v4312 = vmul.f32 %v4311, %v4193
        %4314 = vrot.lane.b32.xlu0 %v4312, 123
        %v4315 = vpop.permute.xlu0 %4314
        %v4317 = vadd.f32 %v4293, %v4315
        %s4318 = sld [smem:[#allocation2 + $0x21e]]
        %v4319 = vstv %s4318
        %v4320 = vmul.f32 %v4319, %v4193
        %4322 = vrot.lane.b32.xlu0 %v4320, 123
        %v4323 = vpop.permute.xlu0 %4322
        %v4325 = vadd.f32 %v4301, %v4323
        %s4326 = sld [smem:[#allocation2 + $0x21f]]
        %v4327 = vstv %s4326
        %v4328 = vmul.f32 %v4327, %v4193
        %4330 = vrot.lane.b32.xlu0 %v4328, 122
        %v4331 = vpop.permute.xlu0 %4330
        %v4333 = vadd.f32 %v4309, %v4331
        %s4334 = sld [smem:[#allocation2 + $0x220]]
        %v4335 = vstv %s4334
        %v4336 = vmul.f32 %v4335, %v4193
        %4338 = vrot.lane.b32.xlu0 %v4336, 122
        %v4339 = vpop.permute.xlu0 %4338
        %v4341 = vadd.f32 %v4317, %v4339
        %s4342 = sld [smem:[#allocation2 + $0x221]]
        %v4343 = vstv %s4342
        %v4344 = vmul.f32 %v4343, %v4193
        %4346 = vrot.lane.b32.xlu0 %v4344, 122
        %v4347 = vpop.permute.xlu0 %4346
        %v4349 = vadd.f32 %v4325, %v4347
        %s4350 = sadd.s32 %s1011, 72
        %s4351 = scalar_lea.vmem %s209, %s4350
        %v4352 = vld [vmem:[%s4351] sm:$0xff]
        %s4353 = sld [smem:[#allocation2 + $0x222]]
        %v4354 = vstv %s4353
        %v4355 = vmul.f32 %v4354, %v4352
        %v4356 = vadd.f32 %v4333, %v4355
        %s4357 = sld [smem:[#allocation2 + $0x223]]
        %v4358 = vstv %s4357
        %v4359 = vmul.f32 %v4358, %v4352
        %v4360 = vadd.f32 %v4341, %v4359
        %s4361 = sld [smem:[#allocation2 + $0x224]]
        %v4362 = vstv %s4361
        %v4363 = vmul.f32 %v4362, %v4352
        %v4364 = vadd.f32 %v4349, %v4363
        %s4365 = sld [smem:[#allocation2 + $0x225]]
        %v4366 = vstv %s4365
        %v4367 = vmul.f32 %v4366, %v4352
        %4369 = vrot.lane.b32.xlu0 %v4367, 127
        %v4370 = vpop.permute.xlu0 %4369
        %v4372 = vadd.f32 %v4356, %v4370
        %s4373 = sld [smem:[#allocation2 + $0x226]]
        %v4374 = vstv %s4373
        %v4375 = vmul.f32 %v4374, %v4352
        %4377 = vrot.lane.b32.xlu0 %v4375, 127
        %v4378 = vpop.permute.xlu0 %4377
        %v4380 = vadd.f32 %v4360, %v4378
        %s4381 = sld [smem:[#allocation2 + $0x227]]
        %v4382 = vstv %s4381
        %v4383 = vmul.f32 %v4382, %v4352
        %4385 = vrot.lane.b32.xlu0 %v4383, 127
        %v4386 = vpop.permute.xlu0 %4385
        %v4388 = vadd.f32 %v4364, %v4386
        %s4389 = sld [smem:[#allocation2 + $0x228]]
        %v4390 = vstv %s4389
        %v4391 = vmul.f32 %v4390, %v4352
        %4393 = vrot.lane.b32.xlu0 %v4391, 126
        %v4394 = vpop.permute.xlu0 %4393
        %v4396 = vadd.f32 %v4372, %v4394
        %s4397 = sld [smem:[#allocation2 + $0x229]]
        %v4398 = vstv %s4397
        %v4399 = vmul.f32 %v4398, %v4352
        %4401 = vrot.lane.b32.xlu0 %v4399, 126
        %v4402 = vpop.permute.xlu0 %4401
        %v4404 = vadd.f32 %v4380, %v4402
        %s4405 = sld [smem:[#allocation2 + $0x22a]]
        %v4406 = vstv %s4405
        %v4407 = vmul.f32 %v4406, %v4352
        %4409 = vrot.lane.b32.xlu0 %v4407, 126
        %v4410 = vpop.permute.xlu0 %4409
        %v4412 = vadd.f32 %v4388, %v4410
        %s4413 = sld [smem:[#allocation2 + $0x22b]]
        %v4414 = vstv %s4413
        %v4415 = vmul.f32 %v4414, %v4352
        %4417 = vrot.lane.b32.xlu0 %v4415, 125
        %v4418 = vpop.permute.xlu0 %4417
        %v4420 = vadd.f32 %v4396, %v4418
        %s4421 = sld [smem:[#allocation2 + $0x22c]]
        %v4422 = vstv %s4421
        %v4423 = vmul.f32 %v4422, %v4352
        %4425 = vrot.lane.b32.xlu0 %v4423, 125
        %v4426 = vpop.permute.xlu0 %4425
        %v4428 = vadd.f32 %v4404, %v4426
        %s4429 = sld [smem:[#allocation2 + $0x22d]]
        %v4430 = vstv %s4429
        %v4431 = vmul.f32 %v4430, %v4352
        %4433 = vrot.lane.b32.xlu0 %v4431, 125
        %v4434 = vpop.permute.xlu0 %4433
        %v4436 = vadd.f32 %v4412, %v4434
        %s4437 = sld [smem:[#allocation2 + $0x22e]]
        %v4438 = vstv %s4437
        %v4439 = vmul.f32 %v4438, %v4352
        %4441 = vrot.lane.b32.xlu0 %v4439, 124
        %v4442 = vpop.permute.xlu0 %4441
        %v4444 = vadd.f32 %v4420, %v4442
        %s4445 = sld [smem:[#allocation2 + $0x22f]]
        %v4446 = vstv %s4445
        %v4447 = vmul.f32 %v4446, %v4352
        %4449 = vrot.lane.b32.xlu0 %v4447, 124
        %v4450 = vpop.permute.xlu0 %4449
        %v4452 = vadd.f32 %v4428, %v4450
        %s4453 = sld [smem:[#allocation2 + $0x230]]
        %v4454 = vstv %s4453
        %v4455 = vmul.f32 %v4454, %v4352
        %4457 = vrot.lane.b32.xlu0 %v4455, 124
        %v4458 = vpop.permute.xlu0 %4457
        %v4460 = vadd.f32 %v4436, %v4458
        %s4461 = sld [smem:[#allocation2 + $0x231]]
        %v4462 = vstv %s4461
        %v4463 = vmul.f32 %v4462, %v4352
        %4465 = vrot.lane.b32.xlu0 %v4463, 123
        %v4466 = vpop.permute.xlu0 %4465
        %v4468 = vadd.f32 %v4444, %v4466
        %s4469 = sld [smem:[#allocation2 + $0x232]]
        %v4470 = vstv %s4469
        %v4471 = vmul.f32 %v4470, %v4352
        %4473 = vrot.lane.b32.xlu0 %v4471, 123
        %v4474 = vpop.permute.xlu0 %4473
        %v4476 = vadd.f32 %v4452, %v4474
        %s4477 = sld [smem:[#allocation2 + $0x233]]
        %v4478 = vstv %s4477
        %v4479 = vmul.f32 %v4478, %v4352
        %4481 = vrot.lane.b32.xlu0 %v4479, 123
        %v4482 = vpop.permute.xlu0 %4481
        %v4484 = vadd.f32 %v4460, %v4482
        %s4485 = sld [smem:[#allocation2 + $0x234]]
        %v4486 = vstv %s4485
        %v4487 = vmul.f32 %v4486, %v4352
        %4489 = vrot.lane.b32.xlu0 %v4487, 122
        %v4490 = vpop.permute.xlu0 %4489
        %v4492 = vadd.f32 %v4468, %v4490
        %s4493 = sld [smem:[#allocation2 + $0x235]]
        %v4494 = vstv %s4493
        %v4495 = vmul.f32 %v4494, %v4352
        %4497 = vrot.lane.b32.xlu0 %v4495, 122
        %v4498 = vpop.permute.xlu0 %4497
        %v4500 = vadd.f32 %v4476, %v4498
        %s4501 = sld [smem:[#allocation2 + $0x236]]
        %v4502 = vstv %s4501
        %v4503 = vmul.f32 %v4502, %v4352
        %4505 = vrot.lane.b32.xlu0 %v4503, 122
        %v4506 = vpop.permute.xlu0 %4505
        %v4508 = vadd.f32 %v4484, %v4506
        %s4509 = sadd.s32 %s1170, 72
        %s4510 = scalar_lea.vmem %s209, %s4509
        %v4511 = vld [vmem:[%s4510] sm:$0xff]
        %s4512 = sld [smem:[#allocation2 + $0x237]]
        %v4513 = vstv %s4512
        %v4514 = vmul.f32 %v4513, %v4511
        %v4515 = vadd.f32 %v4492, %v4514
        %s4516 = sld [smem:[#allocation2 + $0x238]]
        %v4517 = vstv %s4516
        %v4518 = vmul.f32 %v4517, %v4511
        %v4519 = vadd.f32 %v4500, %v4518
        %s4520 = sld [smem:[#allocation2 + $0x239]]
        %v4521 = vstv %s4520
        %v4522 = vmul.f32 %v4521, %v4511
        %v4523 = vadd.f32 %v4508, %v4522
        %s4524 = sld [smem:[#allocation2 + $0x23a]]
        %v4525 = vstv %s4524
        %v4526 = vmul.f32 %v4525, %v4511
        %4528 = vrot.lane.b32.xlu0 %v4526, 127
        %v4529 = vpop.permute.xlu0 %4528
        %v4531 = vadd.f32 %v4515, %v4529
        %s4532 = sld [smem:[#allocation2 + $0x23b]]
        %v4533 = vstv %s4532
        %v4534 = vmul.f32 %v4533, %v4511
        %4536 = vrot.lane.b32.xlu0 %v4534, 127
        %v4537 = vpop.permute.xlu0 %4536
        %v4539 = vadd.f32 %v4519, %v4537
        %s4540 = sld [smem:[#allocation2 + $0x23c]]
        %v4541 = vstv %s4540
        %v4542 = vmul.f32 %v4541, %v4511
        %4544 = vrot.lane.b32.xlu0 %v4542, 127
        %v4545 = vpop.permute.xlu0 %4544
        %v4547 = vadd.f32 %v4523, %v4545
        %s4548 = sld [smem:[#allocation2 + $0x23d]]
        %v4549 = vstv %s4548
        %v4550 = vmul.f32 %v4549, %v4511
        %4552 = vrot.lane.b32.xlu0 %v4550, 126
        %v4553 = vpop.permute.xlu0 %4552
        %v4555 = vadd.f32 %v4531, %v4553
        %s4556 = sld [smem:[#allocation2 + $0x23e]]
        %v4557 = vstv %s4556
        %v4558 = vmul.f32 %v4557, %v4511
        %4560 = vrot.lane.b32.xlu0 %v4558, 126
        %v4561 = vpop.permute.xlu0 %4560
        %v4563 = vadd.f32 %v4539, %v4561
        %s4564 = sld [smem:[#allocation2 + $0x23f]]
        %v4565 = vstv %s4564
        %v4566 = vmul.f32 %v4565, %v4511
        %4568 = vrot.lane.b32.xlu0 %v4566, 126
        %v4569 = vpop.permute.xlu0 %4568
        %v4571 = vadd.f32 %v4547, %v4569
        %s4572 = sld [smem:[#allocation2 + $0x240]]
        %v4573 = vstv %s4572
        %v4574 = vmul.f32 %v4573, %v4511
        %4576 = vrot.lane.b32.xlu0 %v4574, 125
        %v4577 = vpop.permute.xlu0 %4576
        %v4579 = vadd.f32 %v4555, %v4577
        %s4580 = sld [smem:[#allocation2 + $0x241]]
        %v4581 = vstv %s4580
        %v4582 = vmul.f32 %v4581, %v4511
        %4584 = vrot.lane.b32.xlu0 %v4582, 125
        %v4585 = vpop.permute.xlu0 %4584
        %v4587 = vadd.f32 %v4563, %v4585
        %s4588 = sld [smem:[#allocation2 + $0x242]]
        %v4589 = vstv %s4588
        %v4590 = vmul.f32 %v4589, %v4511
        %4592 = vrot.lane.b32.xlu0 %v4590, 125
        %v4593 = vpop.permute.xlu0 %4592
        %v4595 = vadd.f32 %v4571, %v4593
        %s4596 = sld [smem:[#allocation2 + $0x243]]
        %v4597 = vstv %s4596
        %v4598 = vmul.f32 %v4597, %v4511
        %4600 = vrot.lane.b32.xlu0 %v4598, 124
        %v4601 = vpop.permute.xlu0 %4600
        %v4603 = vadd.f32 %v4579, %v4601
        %s4604 = sld [smem:[#allocation2 + $0x244]]
        %v4605 = vstv %s4604
        %v4606 = vmul.f32 %v4605, %v4511
        %4608 = vrot.lane.b32.xlu0 %v4606, 124
        %v4609 = vpop.permute.xlu0 %4608
        %v4611 = vadd.f32 %v4587, %v4609
        %s4612 = sld [smem:[#allocation2 + $0x245]]
        %v4613 = vstv %s4612
        %v4614 = vmul.f32 %v4613, %v4511
        %4616 = vrot.lane.b32.xlu0 %v4614, 124
        %v4617 = vpop.permute.xlu0 %4616
        %v4619 = vadd.f32 %v4595, %v4617
        %s4620 = sld [smem:[#allocation2 + $0x246]]
        %v4621 = vstv %s4620
        %v4622 = vmul.f32 %v4621, %v4511
        %4624 = vrot.lane.b32.xlu0 %v4622, 123
        %v4625 = vpop.permute.xlu0 %4624
        %v4627 = vadd.f32 %v4603, %v4625
        %s4628 = sld [smem:[#allocation2 + $0x247]]
        %v4629 = vstv %s4628
        %v4630 = vmul.f32 %v4629, %v4511
        %4632 = vrot.lane.b32.xlu0 %v4630, 123
        %v4633 = vpop.permute.xlu0 %4632
        %v4635 = vadd.f32 %v4611, %v4633
        %s4636 = sld [smem:[#allocation2 + $0x248]]
        %v4637 = vstv %s4636
        %v4638 = vmul.f32 %v4637, %v4511
        %4640 = vrot.lane.b32.xlu0 %v4638, 123
        %v4641 = vpop.permute.xlu0 %4640
        %v4643 = vadd.f32 %v4619, %v4641
        %s4644 = sld [smem:[#allocation2 + $0x249]]
        %v4645 = vstv %s4644
        %v4646 = vmul.f32 %v4645, %v4511
        %4648 = vrot.lane.b32.xlu0 %v4646, 122
        %v4649 = vpop.permute.xlu0 %4648
        %v4651 = vadd.f32 %v4627, %v4649
        %s4652 = sld [smem:[#allocation2 + $0x24a]]
        %v4653 = vstv %s4652
        %v4654 = vmul.f32 %v4653, %v4511
        %4656 = vrot.lane.b32.xlu0 %v4654, 122
        %v4657 = vpop.permute.xlu0 %4656
        %v4659 = vadd.f32 %v4635, %v4657
        %s4660 = sld [smem:[#allocation2 + $0x24b]]
        %v4661 = vstv %s4660
        %v4662 = vmul.f32 %v4661, %v4511
        %4664 = vrot.lane.b32.xlu0 %v4662, 122
        %v4665 = vpop.permute.xlu0 %4664
        %v4667 = vadd.f32 %v4643, %v4665
        %vm4668 = vcmask 130048
        %4669 = vst.msk [vmem:[%s204] sm:$0xff] %vm4668, %v4651
        %s4670 = scalar_lea.vmem %s204, 8 [#allocation7]
        %4671 = vst.msk [vmem:[%s4670] sm:$0xff] %vm4668, %v4659
        %s4672 = scalar_lea.vmem %s204, 16 [#allocation7]
        %4673 = vst.msk [vmem:[%s4672] sm:$0xff] %vm4668, %v4667
        %s4674 = sand.u32 %s109, 1
        %s4675 = scalar_lea.sflag [#allocation3], %s4674
        %s4676 = sand.u32 %s109, 1
        %s4677 = smul.addr %s4676, 24
        %s4678 = scalar_lea.vmem [#allocation7], %s4677
        // Predicated region
        $region41: #{feature_map_block.1} parent=31 // pred_check
          %p4679 = pneg %p119
        $region42: #{feature_map_block.1} parent=31 // pred_check_branch
          %4681 = sbr.rel (%p4679) target = $region44
        $region43: #{feature_map_block.1} parent=31 // pred_region
          %4683 = vsyncadd %s4675, 0
          %s4684 = smul.addr %s23, 6
          %s4685 = sadd.s32 %s24, %s4684
          %s4686 = smul.addr %s4685, 8
          %s4687 = scalar_lea.hbm %s3, %s4686
          %s4688 = sshll.u32 %s4678, 4
          %s4689 = int_to_ptr.vmem [resolvable:$true] %s4688
          %s4690 = sshll.u32 %s4687, 4
          %s4691 = int_to_ptr.hbm [resolvable:$true] %s4690
          %4696 = dma.vmem_to_hbm [thread:$0]  %s4689, 384, %s4691, %s4675, 128, 256, 8
        $region44: #{feature_map_block.1} parent=31 // pred_fallthru
          _
      $region32: #{feature_map_block.1} parent=5 // pred_fallthru
        _
      %p4697 = scmp.le.s32.totalorder 2, %s14
      // Predicated region
      $region45: #{feature_map_block.1} parent=5 // pred_check
        %p4698 = pneg %p4697
      $region46: #{feature_map_block.1} parent=5 // pred_check_branch
        %4700 = sbr.rel (%p4698) target = $region48
      $region47: #{feature_map_block.1} parent=5 // pred_region
        %s4701 = ssub.s32 %s14, 2
        // Predicated region
        $region49: #{feature_map_block.1} parent=47 // pred_check
          %p4702 = pneg %p125
        $region50: #{feature_map_block.1} parent=47 // pred_check_branch
          %4704 = sbr.rel (%p4702) target = $region52
        $region51: #{feature_map_block.1} parent=47 // pred_region
          %s4705 = sand.u32 %s110, 1
          %s4706 = scalar_lea.sflag [#allocation3], %s4705
          %s4707 = sand.u32 %s110, 1
          %s4708 = smul.addr %s4707, 24
          %s4709 = scalar_lea.vmem [#allocation7], %s4708
          %4711 = dma.done %s4706, 384
        $region52: #{feature_map_block.1} parent=47 // pred_fallthru
          _
      $region48: #{feature_map_block.1} parent=5 // pred_fallthru
        _
    $region6: #{feature_map_block.1} parent=1 // loop_footer
      %s18 = sadd.s32 1, %s14
    $region7: #{feature_map_block.1} parent=1 // loop_footer_branch
      %13 = sbr.rel target = $region3
    $region8: #{feature_map_block.1} parent=1 // loop_exit
      _
    %4712 = vsyncpa [#allocation3], 1
    %s4713 = scalar_lea.sflag [#allocation3], 1
    %4714 = vsyncpa %s4713, 1
    %4715 = vsyncpa [#allocation4], 1
    %s4716 = scalar_lea.sflag [#allocation4], 1
    %4717 = vsyncpa %s4716, 1
    %4718 = vsyncpa [#allocation6], 1

</llo_original>
